<compile_context>
chip_gen: v7x
topology: tpu7x:2x2x1
jax: 0.10.0
libtpu: 0.0.40
codegen_flags: <defaults>
</compile_context>

<pallas_src>
import functools

import numpy as np
import jax
import jax.numpy as jnp
from jax import lax
from jax.experimental import pallas as pl
from jax.experimental.pallas import tpu as pltpu


def _spectral_mul_kernel(xr_ref, xi_ref, wr_ref, wd_ref, ws_ref,
                         or_ref, oi_ref, acc_r, acc_i):
    """Per-mode complex channel contraction on the MXU (Karatsuba, 3 matmuls).

    Block shapes (leading axis = Fourier-mode tile = matmul batch axis):
      xr/xi : (MT, BT, CiT)   activations (bf16)
      wr    : (MT, CiT, CoT)  W_real                (bf16)
      wd    : (MT, CiT, CoT)  W_imag - W_real       (bf16)
      ws    : (MT, CiT, CoT)  W_real + W_imag       (bf16)
      or/oi : (MT, BT, CoT)   outputs (f32)
      acc_* : (MT, BT, CoT)   f32 VMEM accumulators across the Ci grid axis
    """
    k = pl.program_id(3)

    @pl.when(k == 0)
    def _():
        acc_r[...] = jnp.zeros_like(acc_r)
        acc_i[...] = jnp.zeros_like(acc_i)

    xr = xr_ref[...]
    xi = xi_ref[...]
    xs = xr + xi                          # VPU add; MXU-bound kernel has slack

    # Gauss/Karatsuba: 3 real batched matmuls instead of 4 (f32 accumulation).
    k1 = jnp.einsum("mbi,mio->mbo", xs, wr_ref[...],
                    preferred_element_type=jnp.float32)
    k2 = jnp.einsum("mbi,mio->mbo", xr, wd_ref[...],
                    preferred_element_type=jnp.float32)
    k3 = jnp.einsum("mbi,mio->mbo", xi, ws_ref[...],
                    preferred_element_type=jnp.float32)

    acc_r[...] += k1 - k3                 # Re = Xr.Wr - Xi.Wi
    acc_i[...] += k1 + k2                 # Im = Xr.Wi + Xi.Wr

    @pl.when(k == pl.num_programs(3) - 1)
    def _():
        or_ref[...] = acc_r[...].astype(or_ref.dtype)
        oi_ref[...] = acc_i[...].astype(oi_ref.dtype)


def _ceil_to(a, b):
    return -(-a // b) * b


def _pick_tiles(m_tot, b, ci, co):
    """Tiles honoring the (8,128) minor-dim rule, VMEM-budgeted for v7x."""
    def _tile(dim, target, align):
        if dim <= target:
            return dim                    # full dim is always legal
        t = (target // align) * align
        while t >= align:
            if dim % t == 0:
                return t
            t -= align
        return dim

    bt = _tile(b, 128, 8)                 # sublane dim of x / out blocks
    cit = _tile(ci, 256, 128)             # lane dim of x, sublane dim of w
    cot = _tile(co, 256, 128)             # lane dim of w / out blocks
    # NOTE: on v5e a 128-wide Co/Ci tile matches the 4x128^2 MXU better; 256
    # targets favor v6e/v7x (2x256^2).  Both lower correctly everywhere.

    def _vmem(mt):                        # live bytes for one grid step
        x_blk = mt * bt * cit * 2 * 2     # xr, xi          (bf16)
        w_blk = mt * cit * cot * 2 * 3    # wr, wd, ws      (bf16)
        o_blk = mt * bt * cot * 4 * 2     # out_r, out_i    (f32)
        acc = mt * bt * cot * 4 * 2       # scratch accs    (f32)
        return 2 * (x_blk + w_blk + o_blk) + acc   # 2x = double buffering

    mt = 8
    while mt < 512 and _vmem(2 * mt) <= 24 * 1024 * 1024:  # v7x: 64 MiB VMEM/TC
        mt *= 2
    mt = min(mt, _ceil_to(m_tot, 8))      # don't pad the mode axis past 1 tile
    vmem_limit = min(64 * 1024 * 1024, max(2 * _vmem(mt), 16 * 1024 * 1024))
    return mt, bt, cit, cot, vmem_limit


def _spectral_mul(xr, xi, wr, wd, ws, tiles, vmem_limit):
    """Batched complex contraction: (Mp,B,Ci) x (Mp,Ci,Co) -> 2x (Mp,B,Co) f32."""
    mt, bt, cit, cot = tiles
    mp, b, ci = xr.shape
    co = wr.shape[2]
    grid = (co // cot, mp // mt, b // bt, ci // cit)      # (o, m, b, k)

    x_spec = pl.BlockSpec((mt, bt, cit), lambda o, m, bb, k: (m, bb, k))
    w_spec = pl.BlockSpec((mt, cit, cot), lambda o, m, bb, k: (m, k, o))
    o_spec = pl.BlockSpec((mt, bt, cot), lambda o, m, bb, k: (m, bb, o))

    return pl.pallas_call(
        _spectral_mul_kernel,
        out_shape=(jax.ShapeDtypeStruct((mp, b, co), jnp.float32),
                   jax.ShapeDtypeStruct((mp, b, co), jnp.float32)),
        grid_spec=pltpu.PrefetchScalarGridSpec(
            num_scalar_prefetch=0,
            grid=grid,
            in_specs=[x_spec, x_spec, w_spec, w_spec, w_spec],
            out_specs=[o_spec, o_spec],
            scratch_shapes=[pltpu.VMEM((mt, bt, cot), jnp.float32),
                            pltpu.VMEM((mt, bt, cot), jnp.float32)]),
        compiler_params=pltpu.CompilerParams(
            dimension_semantics=("parallel", "parallel", "parallel", "arbitrary"),
            vmem_limit_bytes=vmem_limit),
    )(xr, xi, wr, wd, ws)


@functools.partial(jax.jit, static_argnums=(5, 6))
def spectral_conv2d(x, w1_r, w1_i, w2_r, w2_i, modes1, modes2):
    """Forward pass matching the PyTorch SpectralConv2d exactly (NCHW)."""
    B, C, H, W = x.shape
    Ci, Co, m1, m2 = w1_r.shape
    assert C == Ci and m1 == modes1 and m2 == modes2
    assert H >= 2 * m1 and (W // 2 + 1) >= m2, "frequency slabs must not overlap"
    Wf = W // 2 + 1
    M = m1 * m2
    Mtot = 2 * M                                   # low + high frequency slabs

    Bp, Cip, Cop = _ceil_to(B, 8), _ceil_to(Ci, 8), _ceil_to(Co, 8)
    mt, bt, cit, cot, vmem_limit = _pick_tiles(Mtot, Bp, Cip, Cop)
    Mp = _ceil_to(Mtot, mt)

    # TODO(synk): rfft2/irfft2 have no Pallas TPU primitive; kept as XLA FFT ops.
    x_ft = jnp.fft.rfft2(x.astype(jnp.float32), axes=(-2, -1))  # (B,Ci,H,Wf) c64

    # Kept modes, mode-major for the MXU batch axis: (Mp, Bp, Cip), bf16.
    xm = jnp.concatenate(
        [x_ft[:, :, :m1, :m2], x_ft[:, :, H - m1:, :m2]], axis=2)   # (B,Ci,2m1,m2)
    xm = jnp.transpose(xm.reshape(B, Ci, Mtot), (2, 0, 1))           # (Mtot,B,Ci)
    pad_x = ((0, Mp - Mtot), (0, Bp - B), (0, Cip - Ci))
    xr = jnp.pad(xm.real, pad_x).astype(jnp.bfloat16)
    xi = jnp.pad(xm.imag, pad_x).astype(jnp.bfloat16)

    def pack_w(w_lo, w_hi):                                          # (Mp,Cip,Cop) f32
        w = jnp.concatenate([w_lo.reshape(Ci, Co, M),
                             w_hi.reshape(Ci, Co, M)], axis=2)       # (Ci,Co,Mtot)
        w = jnp.transpose(w, (2, 0, 1))                              # (Mtot,Ci,Co)
        return jnp.pad(w, ((0, Mp - Mtot), (0, Cip - Ci), (0, Cop - Co)))

    w_r = pack_w(w1_r, w2_r)
    w_i = pack_w(w1_i, w2_i)
    wr = w_r.astype(jnp.bfloat16)
    wd = (w_i - w_r).astype(jnp.bfloat16)   # Karatsuba combos, precomputed once
    ws = (w_r + w_i).astype(jnp.bfloat16)   # per weight in f32

    out_r, out_i = _spectral_mul(xr, xi, wr, wd, ws,
                                 (mt, bt, cit, cot), vmem_limit)     # (Mp,Bp,Cop)

    out_c = lax.complex(out_r[:Mtot, :B, :Co], out_i[:Mtot, :B, :Co])  # (Mtot,B,Co)
    out_c = jnp.transpose(out_c, (1, 2, 0)).reshape(B, Co, 2 * m1, m2)

    # Build out_ft with concat + pad (no zeros-alloc + scatter round trips).
    zero_mid = jnp.zeros((B, Co, H - 2 * m1, m2), jnp.complex64)
    out_rows = jnp.concatenate(
        [out_c[:, :, :m1], zero_mid, out_c[:, :, m1:]], axis=2)      # (B,Co,H,m2)
    out_ft = jnp.pad(out_rows, ((0, 0), (0, 0), (0, 0), (0, Wf - m2)))

    return jnp.fft.irfft2(out_ft, s=(H, W), axes=(-2, -1)).astype(jnp.float32)


def _reference(x, w1_r, w1_i, w2_r, w2_i, m1, m2):
    """Pure-JAX f32 reference (mirrors the torch code) for correctness checking."""
    B, C, H, W = x.shape
    Co = w1_r.shape[1]
    x_ft = jnp.fft.rfft2(x, axes=(-2, -1))
    w1 = w1_r + 1j * w1_i
    w2 = w2_r + 1j * w2_i
    out_ft = jnp.zeros((B, Co, H, W // 2 + 1), dtype=jnp.complex64)
    out_ft = out_ft.at[:, :, :m1, :m2].set(
        jnp.einsum('bixy,ioxy->boxy', x_ft[..., :m1, :m2], w1))
    out_ft = out_ft.at[:, :, H - m1:, :m2].set(
        jnp.einsum('bixy,ioxy->boxy', x_ft[..., H - m1:, :m2], w2))
    return jnp.fft.irfft2(out_ft, s=(H, W), axes=(-2, -1))


if __name__ == "__main__":
    B, C_in, C_out = 2, 4, 4
    H, W = 16, 16
    modes1, modes2 = 6, 6

    key = jax.random.PRNGKey(0)
    kx, k1r, k1i, k2r, k2i = jax.random.split(key, 5)

    scale = 1.0 / (C_in * C_out)
    x = jax.random.normal(kx, (B, C_in, H, W), dtype=jnp.float32)
    w_shape = (C_in, C_out, modes1, modes2)
    w1_r = scale * jax.random.normal(k1r, w_shape, dtype=jnp.float32)
    w1_i = scale * jax.random.normal(k1i, w_shape, dtype=jnp.float32)
    w2_r = scale * jax.random.normal(k2r, w_shape, dtype=jnp.float32)
    w2_i = scale * jax.random.normal(k2i, w_shape, dtype=jnp.float32)

    y = spectral_conv2d(x, w1_r, w1_i, w2_r, w2_i, modes1, modes2)
    y = jax.block_until_ready(y)

    y_ref = _reference(x, w1_r, w1_i, w2_r, w2_i, modes1, modes2)
    assert y.shape == (B, C_out, H, W)
    # bf16 MXU inputs (f32 accumulation) -> tolerance loosened vs f32 reference.
    assert np.allclose(np.asarray(y), np.asarray(y_ref), atol=2e-2, rtol=2e-2)

    print("KERNEL_OK")
</pallas_src>

<mosaic_0001>
module attributes {stable_mosaic.version = 11 : i64} {
  func.func @_spectral_mul_kernel(%arg0: i32, %arg1: i32, %arg2: i32, %arg3: i32, %arg4: memref<72x8x8xbf16, #tpu.memory_space<vmem>>, %arg5: memref<72x8x8xbf16, #tpu.memory_space<vmem>>, %arg6: memref<72x8x8xbf16, #tpu.memory_space<vmem>>, %arg7: memref<72x8x8xbf16, #tpu.memory_space<vmem>>, %arg8: memref<72x8x8xbf16, #tpu.memory_space<vmem>>, %arg9: memref<72x8x8xf32, #tpu.memory_space<vmem>>, %arg10: memref<72x8x8xf32, #tpu.memory_space<vmem>>, %arg11: memref<72x8x8xf32, #tpu.memory_space<vmem>>, %arg12: memref<72x8x8xf32, #tpu.memory_space<vmem>>) attributes {dimension_semantics = [#tpu.dimension_semantics<parallel>, #tpu.dimension_semantics<parallel>, #tpu.dimension_semantics<parallel>, #tpu.dimension_semantics<arbitrary>], iteration_bounds = array<i64: 1, 1, 1, 1>, scalar_prefetch = 0 : i64, scratch_operands = 2 : i64, tpu.core_type = #tpu.core_type<tc>, window_params = [{transform_indices = @transform_0, window_bounds = array<i64: 72, 8, 8>}, {transform_indices = @transform_1, window_bounds = array<i64: 72, 8, 8>}, {transform_indices = @transform_2, window_bounds = array<i64: 72, 8, 8>}, {transform_indices = @transform_3, window_bounds = array<i64: 72, 8, 8>}, {transform_indices = @transform_4, window_bounds = array<i64: 72, 8, 8>}, {transform_indices = @transform_5, window_bounds = array<i64: 72, 8, 8>}, {transform_indices = @transform_6, window_bounds = array<i64: 72, 8, 8>}]} {
    %c0_i32 = arith.constant 0 : i32
    %0 = arith.cmpi eq, %arg3, %c0_i32 : i32
    %1 = arith.extui %0 : i1 to i32
    %c0_i32_0 = arith.constant 0 : i32
    %2 = arith.cmpi ne, %1, %c0_i32_0 : i32
    scf.if %2 {
      %cst_31 = arith.constant 0.000000e+00 : f32
      %23 = vector.broadcast %cst_31 : f32 to vector<72x8x8xf32>
      %c0_32 = arith.constant 0 : index
      %c0_33 = arith.constant 0 : index
      %c0_34 = arith.constant 0 : index
      %24 = vector.load %arg11[%c0_32, %c0_33, %c0_34] : memref<72x8x8xf32, #tpu.memory_space<vmem>>, vector<72x8x8xf32>
      tpu.vector_store %arg11[%c0_32, %c0_33, %c0_34], %23 {strides = array<i32>} : memref<72x8x8xf32, #tpu.memory_space<vmem>>, vector<72x8x8xf32>,
      %cst_35 = arith.constant 0.000000e+00 : f32
      %25 = vector.broadcast %cst_35 : f32 to vector<72x8x8xf32>
      %c0_36 = arith.constant 0 : index
      %c0_37 = arith.constant 0 : index
      %c0_38 = arith.constant 0 : index
      %26 = vector.load %arg12[%c0_36, %c0_37, %c0_38] : memref<72x8x8xf32, #tpu.memory_space<vmem>>, vector<72x8x8xf32>
      tpu.vector_store %arg12[%c0_36, %c0_37, %c0_38], %25 {strides = array<i32>} : memref<72x8x8xf32, #tpu.memory_space<vmem>>, vector<72x8x8xf32>,
    } else {
    }
    %c0 = arith.constant 0 : index
    %c0_1 = arith.constant 0 : index
    %c0_2 = arith.constant 0 : index
    %3 = vector.load %arg4[%c0, %c0_1, %c0_2] : memref<72x8x8xbf16, #tpu.memory_space<vmem>>, vector<72x8x8xbf16>
    %c0_3 = arith.constant 0 : index
    %c0_4 = arith.constant 0 : index
    %c0_5 = arith.constant 0 : index
    %4 = vector.load %arg5[%c0_3, %c0_4, %c0_5] : memref<72x8x8xbf16, #tpu.memory_space<vmem>>, vector<72x8x8xbf16>
    %5 = arith.addf %3, %4 : vector<72x8x8xbf16>
    %c0_6 = arith.constant 0 : index
    %c0_7 = arith.constant 0 : index
    %c0_8 = arith.constant 0 : index
    %6 = vector.load %arg6[%c0_6, %c0_7, %c0_8] : memref<72x8x8xbf16, #tpu.memory_space<vmem>>, vector<72x8x8xbf16>
    "tpu.trace_start"() <{level = 10 : i32, message = "mbi,mio->mbo"}> : () -> ()
    %cst = arith.constant dense<0.000000e+00> : vector<72x8x8xf32>
    %7 = tpu.matmul %5, %6, %cst {dimension_numbers = #tpu.dot_dimension_numbers<[2], [1], [1], [2], [0, 0, 0, 1, 1, 2], [0], [0]>} : vector<72x8x8xbf16>, vector<72x8x8xbf16>, vector<72x8x8xf32> -> vector<72x8x8xf32>
    "tpu.trace_stop"() : () -> ()
    %c0_9 = arith.constant 0 : index
    %c0_10 = arith.constant 0 : index
    %c0_11 = arith.constant 0 : index
    %8 = vector.load %arg7[%c0_9, %c0_10, %c0_11] : memref<72x8x8xbf16, #tpu.memory_space<vmem>>, vector<72x8x8xbf16>
    "tpu.trace_start"() <{level = 10 : i32, message = "mbi,mio->mbo"}> : () -> ()
    %cst_12 = arith.constant dense<0.000000e+00> : vector<72x8x8xf32>
    %9 = tpu.matmul %3, %8, %cst_12 {dimension_numbers = #tpu.dot_dimension_numbers<[2], [1], [1], [2], [0, 0, 0, 1, 1, 2], [0], [0]>} : vector<72x8x8xbf16>, vector<72x8x8xbf16>, vector<72x8x8xf32> -> vector<72x8x8xf32>
    "tpu.trace_stop"() : () -> ()
    %c0_13 = arith.constant 0 : index
    %c0_14 = arith.constant 0 : index
    %c0_15 = arith.constant 0 : index
    %10 = vector.load %arg8[%c0_13, %c0_14, %c0_15] : memref<72x8x8xbf16, #tpu.memory_space<vmem>>, vector<72x8x8xbf16>
    "tpu.trace_start"() <{level = 10 : i32, message = "mbi,mio->mbo"}> : () -> ()
    %cst_16 = arith.constant dense<0.000000e+00> : vector<72x8x8xf32>
    %11 = tpu.matmul %4, %10, %cst_16 {dimension_numbers = #tpu.dot_dimension_numbers<[2], [1], [1], [2], [0, 0, 0, 1, 1, 2], [0], [0]>} : vector<72x8x8xbf16>, vector<72x8x8xbf16>, vector<72x8x8xf32> -> vector<72x8x8xf32>
    "tpu.trace_stop"() : () -> ()
    %c0_17 = arith.constant 0 : index
    %c0_18 = arith.constant 0 : index
    %c0_19 = arith.constant 0 : index
    %12 = vector.load %arg11[%c0_17, %c0_18, %c0_19] : memref<72x8x8xf32, #tpu.memory_space<vmem>>, vector<72x8x8xf32>
    %13 = arith.subf %7, %11 : vector<72x8x8xf32>
    %14 = arith.addf %12, %13 : vector<72x8x8xf32>
    %c0_20 = arith.constant 0 : index
    %c0_21 = arith.constant 0 : index
    %c0_22 = arith.constant 0 : index
    %15 = vector.load %arg11[%c0_20, %c0_21, %c0_22] : memref<72x8x8xf32, #tpu.memory_space<vmem>>, vector<72x8x8xf32>
    tpu.vector_store %arg11[%c0_20, %c0_21, %c0_22], %14 {strides = array<i32>} : memref<72x8x8xf32, #tpu.memory_space<vmem>>, vector<72x8x8xf32>,
    %c0_23 = arith.constant 0 : index
    %c0_24 = arith.constant 0 : index
    %c0_25 = arith.constant 0 : index
    %16 = vector.load %arg12[%c0_23, %c0_24, %c0_25] : memref<72x8x8xf32, #tpu.memory_space<vmem>>, vector<72x8x8xf32>
    %17 = arith.addf %7, %9 : vector<72x8x8xf32>
    %18 = arith.addf %16, %17 : vector<72x8x8xf32>
    %c0_26 = arith.constant 0 : index
    %c0_27 = arith.constant 0 : index
    %c0_28 = arith.constant 0 : index
    %19 = vector.load %arg12[%c0_26, %c0_27, %c0_28] : memref<72x8x8xf32, #tpu.memory_space<vmem>>, vector<72x8x8xf32>
    tpu.vector_store %arg12[%c0_26, %c0_27, %c0_28], %18 {strides = array<i32>} : memref<72x8x8xf32, #tpu.memory_space<vmem>>, vector<72x8x8xf32>,
    %c0_i32_29 = arith.constant 0 : i32
    %20 = arith.cmpi eq, %arg3, %c0_i32_29 : i32
    %21 = arith.extui %20 : i1 to i32
    %c0_i32_30 = arith.constant 0 : i32
    %22 = arith.cmpi ne, %21, %c0_i32_30 : i32
    scf.if %22 {
      %c0_31 = arith.constant 0 : index
      %c0_32 = arith.constant 0 : index
      %c0_33 = arith.constant 0 : index
      %23 = vector.load %arg11[%c0_31, %c0_32, %c0_33] : memref<72x8x8xf32, #tpu.memory_space<vmem>>, vector<72x8x8xf32>
      %c0_34 = arith.constant 0 : index
      %c0_35 = arith.constant 0 : index
      %c0_36 = arith.constant 0 : index
      %24 = vector.load %arg9[%c0_34, %c0_35, %c0_36] : memref<72x8x8xf32, #tpu.memory_space<vmem>>, vector<72x8x8xf32>
      tpu.vector_store %arg9[%c0_34, %c0_35, %c0_36], %23 {strides = array<i32>} : memref<72x8x8xf32, #tpu.memory_space<vmem>>, vector<72x8x8xf32>,
      %c0_37 = arith.constant 0 : index
      %c0_38 = arith.constant 0 : index
      %c0_39 = arith.constant 0 : index
      %25 = vector.load %arg12[%c0_37, %c0_38, %c0_39] : memref<72x8x8xf32, #tpu.memory_space<vmem>>, vector<72x8x8xf32>
      %c0_40 = arith.constant 0 : index
      %c0_41 = arith.constant 0 : index
      %c0_42 = arith.constant 0 : index
      %26 = vector.load %arg10[%c0_40, %c0_41, %c0_42] : memref<72x8x8xf32, #tpu.memory_space<vmem>>, vector<72x8x8xf32>
      tpu.vector_store %arg10[%c0_40, %c0_41, %c0_42], %25 {strides = array<i32>} : memref<72x8x8xf32, #tpu.memory_space<vmem>>, vector<72x8x8xf32>,
    } else {
    }
    return
  }
  func.func @transform_0(%arg0: i32, %arg1: i32, %arg2: i32, %arg3: i32) -> (i32, i32, i32) {
    %c0_i32 = arith.constant 0 : i32
    return %arg1, %arg2, %arg3 : i32, i32, i32
  }
  func.func @transform_1(%arg0: i32, %arg1: i32, %arg2: i32, %arg3: i32) -> (i32, i32, i32) {
    %c0_i32 = arith.constant 0 : i32
    return %arg1, %arg2, %arg3 : i32, i32, i32
  }
  func.func @transform_2(%arg0: i32, %arg1: i32, %arg2: i32, %arg3: i32) -> (i32, i32, i32) {
    %c0_i32 = arith.constant 0 : i32
    return %arg1, %arg3, %arg0 : i32, i32, i32
  }
  func.func @transform_3(%arg0: i32, %arg1: i32, %arg2: i32, %arg3: i32) -> (i32, i32, i32) {
    %c0_i32 = arith.constant 0 : i32
    return %arg1, %arg3, %arg0 : i32, i32, i32
  }
  func.func @transform_4(%arg0: i32, %arg1: i32, %arg2: i32, %arg3: i32) -> (i32, i32, i32) {
    %c0_i32 = arith.constant 0 : i32
    return %arg1, %arg3, %arg0 : i32, i32, i32
  }
  func.func @transform_5(%arg0: i32, %arg1: i32, %arg2: i32, %arg3: i32) -> (i32, i32, i32) {
    %c0_i32 = arith.constant 0 : i32
    return %arg1, %arg2, %arg0 : i32, i32, i32
  }
  func.func @transform_6(%arg0: i32, %arg1: i32, %arg2: i32, %arg3: i32) -> (i32, i32, i32) {
    %c0_i32 = arith.constant 0 : i32
    return %arg1, %arg2, %arg0 : i32, i32, i32
  }
}

</mosaic_0001>

<llo_original>
// kernel: reverse.0
$region0: #{reverse.0}
  %s0 = inlined_call_operand.vmem [shape: f32[2,4,16,7], index: 0, kind: input, shape index: {}]
  %s1 = inlined_call_operand.vmem [shape: f32[2,4,16,7], index: 1, kind: output, shape index: {}]
  $region1: #{reverse.0} parent=0
    #allocation0 [shape = 'u8[65536]{0}', space=vmem, size = 0x10000, scoped, tag = 'operand span for operand 0']
    #allocation1 [shape = 'u8[32768]{0}', space=vmem, size = 0x8000, scoped, tag = 'operand span for operand 1']
    %s2 = scalar_lea.vmem [#allocation0], 8
    // Predicated region
    $region2: #{reverse.0} parent=1 // pred_check
      _
    $region3: #{reverse.0} parent=1 // pred_check_branch
      %4 = sbr.rel (0) target = $region5
    $region4: #{reverse.0} parent=1 // pred_region
      // Predicated region
      $region6: #{reverse.0} parent=4 // pred_check
        _
      $region7: #{reverse.0} parent=4 // pred_check_branch
        %6 = sbr.rel (0) target = $region9
      $region8: #{reverse.0} parent=4 // pred_region
        // Predicated region
        $region21: #{reverse.0} parent=8 // pred_check
          _
        $region22: #{reverse.0} parent=8 // pred_check_branch
          %35 = sbr.rel (0) target = $region24
        $region23: #{reverse.0} parent=8 // pred_region
          loop: start=0, step=1, limit=1
          $region25: #{reverse.0} parent=23 // loop_pre_header
            _
          $region26: #{reverse.0} parent=23 // loop_header
            %s37 = sphi 0, %s41
            %p38 = scmp.ge.s32.totalorder %s37, 1
            %s42 = sphi %s0, %s0
            %s43 = sphi %s2, %s2
          $region27: #{reverse.0} parent=23 // loop_header_branch
            %40 = sbr.rel (%p38) target = $region31
          $region28: #{reverse.0} parent=23 // loop_body
            %v44 = vld [vmem:[%s42] sm:$0xff]
            %45 = vst [vmem:[%s43] sm:$0xff] %v44
            %v46 = vld [vmem:[%s42 + $0x8] sm:$0xff]
            %47 = vst [vmem:[%s43 + $0x10] sm:$0xff] %v46
            %v48 = vld [vmem:[%s42 + $0x10] sm:$0xff]
            %49 = vst [vmem:[%s43 + $0x20] sm:$0xff] %v48
            %v50 = vld [vmem:[%s42 + $0x18] sm:$0xff]
            %51 = vst [vmem:[%s43 + $0x30] sm:$0xff] %v50
            %v52 = vld [vmem:[%s42 + $0x20] sm:$0xff]
            %53 = vst [vmem:[%s43 + $0x40] sm:$0xff] %v52
            %v54 = vld [vmem:[%s42 + $0x28] sm:$0xff]
            %55 = vst [vmem:[%s43 + $0x50] sm:$0xff] %v54
            %v56 = vld [vmem:[%s42 + $0x30] sm:$0xff]
            %57 = vst [vmem:[%s43 + $0x60] sm:$0xff] %v56
            %v58 = vld [vmem:[%s42 + $0x38] sm:$0xff]
            %59 = vst [vmem:[%s43 + $0x70] sm:$0xff] %v58
          $region29: #{reverse.0} parent=23 // loop_footer
            %s41 = sadd.s32 1, %s37
          $region30: #{reverse.0} parent=23 // loop_footer_branch
            %36 = sbr.rel target = $region26
          $region31: #{reverse.0} parent=23 // loop_exit
            _
        $region24: #{reverse.0} parent=8 // pred_fallthru
          _
        // Predicated region
        $region32: #{reverse.0} parent=8 // pred_check
          _
        $region33: #{reverse.0} parent=8 // pred_check_branch
          %61 = sbr.rel target = $region35
        $region34: #{reverse.0} parent=8 // pred_region
          _
        $region35: #{reverse.0} parent=8 // pred_fallthru
          _
      $region9: #{reverse.0} parent=4 // pred_fallthru
        _
      // Predicated region
      $region10: #{reverse.0} parent=4 // pred_check
        _
      $region11: #{reverse.0} parent=4 // pred_check_branch
        %8 = sbr.rel target = $region13
      $region12: #{reverse.0} parent=4 // pred_region
        loop: start=0, step=1, limit=1
        $region14: #{reverse.0} parent=12 // loop_pre_header
          _
        $region15: #{reverse.0} parent=12 // loop_header
          %s11 = sphi 0, %s15
          %p12 = scmp.ge.s32.totalorder %s11, 1
          %s16 = sphi %s0, %s0
          %s17 = sphi %s2, %s2
        $region16: #{reverse.0} parent=12 // loop_header_branch
          %14 = sbr.rel (%p12) target = $region20
        $region17: #{reverse.0} parent=12 // loop_body
          %v18 = vld [vmem:[%s16] sm:$0xff]
          %19 = vst [vmem:[%s17] sm:$0xff] %v18
          %v20 = vld [vmem:[%s16 + $0x8] sm:$0xff]
          %21 = vst [vmem:[%s17 + $0x10] sm:$0xff] %v20
          %v22 = vld [vmem:[%s16 + $0x10] sm:$0xff]
          %23 = vst [vmem:[%s17 + $0x20] sm:$0xff] %v22
          %v24 = vld [vmem:[%s16 + $0x18] sm:$0xff]
          %25 = vst [vmem:[%s17 + $0x30] sm:$0xff] %v24
          %v26 = vld [vmem:[%s16 + $0x20] sm:$0xff]
          %27 = vst [vmem:[%s17 + $0x40] sm:$0xff] %v26
          %v28 = vld [vmem:[%s16 + $0x28] sm:$0xff]
          %29 = vst [vmem:[%s17 + $0x50] sm:$0xff] %v28
          %v30 = vld [vmem:[%s16 + $0x30] sm:$0xff]
          %31 = vst [vmem:[%s17 + $0x60] sm:$0xff] %v30
          %v32 = vld [vmem:[%s16 + $0x38] sm:$0xff]
          %33 = vst [vmem:[%s17 + $0x70] sm:$0xff] %v32
        $region18: #{reverse.0} parent=12 // loop_footer
          %s15 = sadd.s32 1, %s11
        $region19: #{reverse.0} parent=12 // loop_footer_branch
          %10 = sbr.rel target = $region15
        $region20: #{reverse.0} parent=12 // loop_exit
          _
      $region13: #{reverse.0} parent=4 // pred_fallthru
        _
    $region5: #{reverse.0} parent=1 // pred_fallthru
      _
    %62 = vnop
    %s63 = scalar_lea.vmem [#allocation0], 7
    %v64 = vld [vmem:[%s63] ss:$-1 sm:$0xff]
    %v65 = vrot.slane %v64, 1
    %66 = vst [vmem:[#allocation1] sm:$0xff] %v65
    %s67 = scalar_lea.vmem [#allocation0], 8
    %s68 = scalar_lea.vmem %s67, 7 [#allocation0]
    %v69 = vld [vmem:[%s68] ss:$-1 sm:$0xff]
    %v70 = vrot.slane %v69, 1
    %v71 = vlaneseq
    %v72 = vshrl.u32 %v71, 7
    %vm73 = vcmp.lt.s32.totalorder %v72, 7
    %74 = vst.msk [vmem:[#allocation1] sm:$0xff] %vm73, %v70
    %s75 = scalar_lea.vmem [#allocation1], 8
    %s76 = scalar_lea.vmem [#allocation0], 16
    %s77 = scalar_lea.vmem %s76, 7 [#allocation0]
    %v78 = vld [vmem:[%s77] ss:$-1 sm:$0xff]
    %v79 = vrot.slane %v78, 1
    %80 = vst [vmem:[%s75] sm:$0xff] %v79
    %s81 = scalar_lea.vmem %s76, 8 [#allocation0]
    %s82 = scalar_lea.vmem %s81, 7 [#allocation0]
    %v83 = vld [vmem:[%s82] ss:$-1 sm:$0xff]
    %v84 = vrot.slane %v83, 1
    %v85 = vlaneseq
    %v86 = vshrl.u32 %v85, 7
    %vm87 = vcmp.lt.s32.totalorder %v86, 7
    %88 = vst.msk [vmem:[%s75] sm:$0xff] %vm87, %v84
    %s89 = scalar_lea.vmem [#allocation1], 16
    %s90 = scalar_lea.vmem [#allocation0], 32
    %s91 = scalar_lea.vmem %s90, 7 [#allocation0]
    %v92 = vld [vmem:[%s91] ss:$-1 sm:$0xff]
    %v93 = vrot.slane %v92, 1
    %94 = vst [vmem:[%s89] sm:$0xff] %v93
    %s95 = scalar_lea.vmem %s90, 8 [#allocation0]
    %s96 = scalar_lea.vmem %s95, 7 [#allocation0]
    %v97 = vld [vmem:[%s96] ss:$-1 sm:$0xff]
    %v98 = vrot.slane %v97, 1
    %v99 = vlaneseq
    %v100 = vshrl.u32 %v99, 7
    %vm101 = vcmp.lt.s32.totalorder %v100, 7
    %102 = vst.msk [vmem:[%s89] sm:$0xff] %vm101, %v98
    %s103 = scalar_lea.vmem [#allocation1], 24
    %s104 = scalar_lea.vmem [#allocation0], 48
    %s105 = scalar_lea.vmem %s104, 7 [#allocation0]
    %v106 = vld [vmem:[%s105] ss:$-1 sm:$0xff]
    %v107 = vrot.slane %v106, 1
    %108 = vst [vmem:[%s103] sm:$0xff] %v107
    %s109 = scalar_lea.vmem %s104, 8 [#allocation0]
    %s110 = scalar_lea.vmem %s109, 7 [#allocation0]
    %v111 = vld [vmem:[%s110] ss:$-1 sm:$0xff]
    %v112 = vrot.slane %v111, 1
    %v113 = vlaneseq
    %v114 = vshrl.u32 %v113, 7
    %vm115 = vcmp.lt.s32.totalorder %v114, 7
    %116 = vst.msk [vmem:[%s103] sm:$0xff] %vm115, %v112
    %s117 = scalar_lea.vmem [#allocation1], 32
    %s118 = scalar_lea.vmem [#allocation0], 64
    %s119 = scalar_lea.vmem %s118, 7 [#allocation0]
    %v120 = vld [vmem:[%s119] ss:$-1 sm:$0xff]
    %v121 = vrot.slane %v120, 1
    %122 = vst [vmem:[%s117] sm:$0xff] %v121
    %s123 = scalar_lea.vmem %s118, 8 [#allocation0]
    %s124 = scalar_lea.vmem %s123, 7 [#allocation0]
    %v125 = vld [vmem:[%s124] ss:$-1 sm:$0xff]
    %v126 = vrot.slane %v125, 1
    %v127 = vlaneseq
    %v128 = vshrl.u32 %v127, 7
    %vm129 = vcmp.lt.s32.totalorder %v128, 7
    %130 = vst.msk [vmem:[%s117] sm:$0xff] %vm129, %v126
    %s131 = scalar_lea.vmem [#allocation1], 40
    %s132 = scalar_lea.vmem [#allocation0], 80
    %s133 = scalar_lea.vmem %s132, 7 [#allocation0]
    %v134 = vld [vmem:[%s133] ss:$-1 sm:$0xff]
    %v135 = vrot.slane %v134, 1
    %136 = vst [vmem:[%s131] sm:$0xff] %v135
    %s137 = scalar_lea.vmem %s132, 8 [#allocation0]
    %s138 = scalar_lea.vmem %s137, 7 [#allocation0]
    %v139 = vld [vmem:[%s138] ss:$-1 sm:$0xff]
    %v140 = vrot.slane %v139, 1
    %v141 = vlaneseq
    %v142 = vshrl.u32 %v141, 7
    %vm143 = vcmp.lt.s32.totalorder %v142, 7
    %144 = vst.msk [vmem:[%s131] sm:$0xff] %vm143, %v140
    %s145 = scalar_lea.vmem [#allocation1], 48
    %s146 = scalar_lea.vmem [#allocation0], 96
    %s147 = scalar_lea.vmem %s146, 7 [#allocation0]
    %v148 = vld [vmem:[%s147] ss:$-1 sm:$0xff]
    %v149 = vrot.slane %v148, 1
    %150 = vst [vmem:[%s145] sm:$0xff] %v149
    %s151 = scalar_lea.vmem %s146, 8 [#allocation0]
    %s152 = scalar_lea.vmem %s151, 7 [#allocation0]
    %v153 = vld [vmem:[%s152] ss:$-1 sm:$0xff]
    %v154 = vrot.slane %v153, 1
    %v155 = vlaneseq
    %v156 = vshrl.u32 %v155, 7
    %vm157 = vcmp.lt.s32.totalorder %v156, 7
    %158 = vst.msk [vmem:[%s145] sm:$0xff] %vm157, %v154
    %s159 = scalar_lea.vmem [#allocation1], 56
    %s160 = scalar_lea.vmem [#allocation0], 112
    %s161 = scalar_lea.vmem %s160, 7 [#allocation0]
    %v162 = vld [vmem:[%s161] ss:$-1 sm:$0xff]
    %v163 = vrot.slane %v162, 1
    %164 = vst [vmem:[%s159] sm:$0xff] %v163
    %s165 = scalar_lea.vmem %s160, 8 [#allocation0]
    %s166 = scalar_lea.vmem %s165, 7 [#allocation0]
    %v167 = vld [vmem:[%s166] ss:$-1 sm:$0xff]
    %v168 = vrot.slane %v167, 1
    %v169 = vlaneseq
    %v170 = vshrl.u32 %v169, 7
    %vm171 = vcmp.lt.s32.totalorder %v170, 7
    %172 = vst.msk [vmem:[%s159] sm:$0xff] %vm171, %v168
    // Predicated region
    $region36: #{reverse.0} parent=1 // pred_check
      _
    $region37: #{reverse.0} parent=1 // pred_check_branch
      %174 = sbr.rel (0) target = $region39
    $region38: #{reverse.0} parent=1 // pred_region
      // Predicated region
      $region40: #{reverse.0} parent=38 // pred_check
        _
      $region41: #{reverse.0} parent=38 // pred_check_branch
        %176 = sbr.rel (0) target = $region43
      $region42: #{reverse.0} parent=38 // pred_region
        // Predicated region
        $region55: #{reverse.0} parent=42 // pred_check
          _
        $region56: #{reverse.0} parent=42 // pred_check_branch
          %205 = sbr.rel (0) target = $region58
        $region57: #{reverse.0} parent=42 // pred_region
          loop: start=0, step=1, limit=1
          $region59: #{reverse.0} parent=57 // loop_pre_header
            _
          $region60: #{reverse.0} parent=57 // loop_header
            %s207 = sphi 0, %s211
            %p208 = scmp.ge.s32.totalorder %s207, 1
            %s212 = sphi [#allocation1], [#allocation1]
            %s213 = sphi %s1, %s1
          $region61: #{reverse.0} parent=57 // loop_header_branch
            %210 = sbr.rel (%p208) target = $region65
          $region62: #{reverse.0} parent=57 // loop_body
            %v214 = vld [vmem:[%s212] sm:$0xff]
            %215 = vst [vmem:[%s213] sm:$0xff] %v214
            %v216 = vld [vmem:[%s212 + $0x8] sm:$0xff]
            %217 = vst [vmem:[%s213 + $0x8] sm:$0xff] %v216
            %v218 = vld [vmem:[%s212 + $0x10] sm:$0xff]
            %219 = vst [vmem:[%s213 + $0x10] sm:$0xff] %v218
            %v220 = vld [vmem:[%s212 + $0x18] sm:$0xff]
            %221 = vst [vmem:[%s213 + $0x18] sm:$0xff] %v220
            %v222 = vld [vmem:[%s212 + $0x20] sm:$0xff]
            %223 = vst [vmem:[%s213 + $0x20] sm:$0xff] %v222
            %v224 = vld [vmem:[%s212 + $0x28] sm:$0xff]
            %225 = vst [vmem:[%s213 + $0x28] sm:$0xff] %v224
            %v226 = vld [vmem:[%s212 + $0x30] sm:$0xff]
            %227 = vst [vmem:[%s213 + $0x30] sm:$0xff] %v226
            %v228 = vld [vmem:[%s212 + $0x38] sm:$0xff]
            %229 = vst [vmem:[%s213 + $0x38] sm:$0xff] %v228
          $region63: #{reverse.0} parent=57 // loop_footer
            %s211 = sadd.s32 1, %s207
          $region64: #{reverse.0} parent=57 // loop_footer_branch
            %206 = sbr.rel target = $region60
          $region65: #{reverse.0} parent=57 // loop_exit
            _
        $region58: #{reverse.0} parent=42 // pred_fallthru
          _
        // Predicated region
        $region66: #{reverse.0} parent=42 // pred_check
          _
        $region67: #{reverse.0} parent=42 // pred_check_branch
          %231 = sbr.rel target = $region69
        $region68: #{reverse.0} parent=42 // pred_region
          _
        $region69: #{reverse.0} parent=42 // pred_fallthru
          _
      $region43: #{reverse.0} parent=38 // pred_fallthru
        _
      // Predicated region
      $region44: #{reverse.0} parent=38 // pred_check
        _
      $region45: #{reverse.0} parent=38 // pred_check_branch
        %178 = sbr.rel target = $region47
      $region46: #{reverse.0} parent=38 // pred_region
        loop: start=0, step=1, limit=1
        $region48: #{reverse.0} parent=46 // loop_pre_header
          _
        $region49: #{reverse.0} parent=46 // loop_header
          %s181 = sphi 0, %s185
          %p182 = scmp.ge.s32.totalorder %s181, 1
          %s186 = sphi [#allocation1], [#allocation1]
          %s187 = sphi %s1, %s1
        $region50: #{reverse.0} parent=46 // loop_header_branch
          %184 = sbr.rel (%p182) target = $region54
        $region51: #{reverse.0} parent=46 // loop_body
          %v188 = vld [vmem:[%s186] sm:$0xff]
          %189 = vst [vmem:[%s187] sm:$0xff] %v188
          %v190 = vld [vmem:[%s186 + $0x8] sm:$0xff]
          %191 = vst [vmem:[%s187 + $0x8] sm:$0xff] %v190
          %v192 = vld [vmem:[%s186 + $0x10] sm:$0xff]
          %193 = vst [vmem:[%s187 + $0x10] sm:$0xff] %v192
          %v194 = vld [vmem:[%s186 + $0x18] sm:$0xff]
          %195 = vst [vmem:[%s187 + $0x18] sm:$0xff] %v194
          %v196 = vld [vmem:[%s186 + $0x20] sm:$0xff]
          %197 = vst [vmem:[%s187 + $0x20] sm:$0xff] %v196
          %v198 = vld [vmem:[%s186 + $0x28] sm:$0xff]
          %199 = vst [vmem:[%s187 + $0x28] sm:$0xff] %v198
          %v200 = vld [vmem:[%s186 + $0x30] sm:$0xff]
          %201 = vst [vmem:[%s187 + $0x30] sm:$0xff] %v200
          %v202 = vld [vmem:[%s186 + $0x38] sm:$0xff]
          %203 = vst [vmem:[%s187 + $0x38] sm:$0xff] %v202
        $region52: #{reverse.0} parent=46 // loop_footer
          %s185 = sadd.s32 1, %s181
        $region53: #{reverse.0} parent=46 // loop_footer_branch
          %180 = sbr.rel target = $region49
        $region54: #{reverse.0} parent=46 // loop_exit
          _
      $region47: #{reverse.0} parent=38 // pred_fallthru
        _
    $region39: #{reverse.0} parent=1 // pred_fallthru
      _
    %232 = vnop

// kernel: spectral_conv2d.1
$region0: #{spectral_conv2d.1}
  #allocation0 [shape = 'u32[]', space=smem, size = 0x4, offset = 0x4, fixed_abs, tag = 'smem constant byte address 0x4 - core index']
  #allocation1 [shape = 'u32[144,128]{1,0:T(1,128)}', space=vmem, size = 0x12000, scoped, tag = 'internal scratch']
  #allocation2 [shape = 'f32[72,8,8]{2,1,0:T(8,128)}', space=vmem, size = 0x48000, scoped, tag = 'scratch operand']
  #allocation3 [shape = 'f32[72,8,8]{2,1,0:T(8,128)}', space=vmem, size = 0x48000, scoped, tag = 'scratch operand']
  %s0 = inlined_call_operand.vmem [shape: bf16[72,8,8], index: 0, kind: input, shape index: {}]
  %s1 = inlined_call_operand.vmem [shape: bf16[72,8,8], index: 1, kind: input, shape index: {}]
  %s2 = inlined_call_operand.vmem [shape: bf16[72,8,8], index: 2, kind: input, shape index: {}]
  %s3 = inlined_call_operand.vmem [shape: bf16[72,8,8], index: 3, kind: input, shape index: {}]
  %s4 = inlined_call_operand.vmem [shape: bf16[72,8,8], index: 4, kind: input, shape index: {}]
  %s5 = inlined_call_operand.vmem [shape: f32[72,8,8], index: 5, kind: output, shape index: {0}]
  %s6 = inlined_call_operand.vmem [shape: f32[72,8,8], index: 6, kind: output, shape index: {1}]
  %7 = xla_tuple %s5, %s6
  %s8 = sld [smem:[#allocation0]]
  $region46: #{spectral_conv2d.1} parent=0
    _
  %s10 = ssub.s32 1, %s8
  %s11 = scalar_select 0, %s10, %s8
  // Predicated region
  $region2: #{spectral_conv2d.1} parent=0 // pred_check
    _
  $region3: #{spectral_conv2d.1} parent=0 // pred_check_branch
    %13 = sbr.rel (0) target = $region5
  $region4: #{spectral_conv2d.1} parent=0 // pred_region
    _
  $region5: #{spectral_conv2d.1} parent=0 // pred_fallthru
    _
  // Predicated region
  $region6: #{spectral_conv2d.1} parent=0 // pred_check
    _
  $region7: #{spectral_conv2d.1} parent=0 // pred_check_branch
    %15 = sbr.rel (0) target = $region9
  $region8: #{spectral_conv2d.1} parent=0 // pred_region
    _
  $region9: #{spectral_conv2d.1} parent=0 // pred_fallthru
    _
  // Predicated region
  $region10: #{spectral_conv2d.1} parent=0 // pred_check
    _
  $region11: #{spectral_conv2d.1} parent=0 // pred_check_branch
    %17 = sbr.rel (0) target = $region13
  $region12: #{spectral_conv2d.1} parent=0 // pred_region
    _
  $region13: #{spectral_conv2d.1} parent=0 // pred_fallthru
    _
  // Predicated region
  $region14: #{spectral_conv2d.1} parent=0 // pred_check
    _
  $region15: #{spectral_conv2d.1} parent=0 // pred_check_branch
    %19 = sbr.rel (0) target = $region17
  $region16: #{spectral_conv2d.1} parent=0 // pred_region
    _
  $region17: #{spectral_conv2d.1} parent=0 // pred_fallthru
    _
  // Predicated region
  $region18: #{spectral_conv2d.1} parent=0 // pred_check
    _
  $region19: #{spectral_conv2d.1} parent=0 // pred_check_branch
    %21 = sbr.rel (0) target = $region21
  $region20: #{spectral_conv2d.1} parent=0 // pred_region
    _
  $region21: #{spectral_conv2d.1} parent=0 // pred_fallthru
    _
  %p23 = scmp.eq.s32.totalorder 0, 0
  // Predicated region
  $region22: #{spectral_conv2d.1} parent=0 // pred_check
    %p24 = pneg %p23
  $region23: #{spectral_conv2d.1} parent=0 // pred_check_branch
    %26 = sbr.rel (%p24) target = $region25
  $region24: #{spectral_conv2d.1} parent=0 // pred_region
    %vm27 = vcmask 64512
    %28 = vst.msk [vmem:[#allocation2] sm:$0xff] %vm27, 0.0
    %29 = vst.msk [vmem:[#allocation2 + $0x8] sm:$0xff] %vm27, 0.0
    %30 = vst.msk [vmem:[#allocation2 + $0x10] sm:$0xff] %vm27, 0.0
    %31 = vst.msk [vmem:[#allocation2 + $0x18] sm:$0xff] %vm27, 0.0
    %32 = vst.msk [vmem:[#allocation2 + $0x20] sm:$0xff] %vm27, 0.0
    %33 = vst.msk [vmem:[#allocation2 + $0x28] sm:$0xff] %vm27, 0.0
    %34 = vst.msk [vmem:[#allocation2 + $0x30] sm:$0xff] %vm27, 0.0
    %35 = vst.msk [vmem:[#allocation2 + $0x38] sm:$0xff] %vm27, 0.0
    %36 = vst.msk [vmem:[#allocation2 + $0x40] sm:$0xff] %vm27, 0.0
    %37 = vst.msk [vmem:[#allocation2 + $0x48] sm:$0xff] %vm27, 0.0
    %38 = vst.msk [vmem:[#allocation2 + $0x50] sm:$0xff] %vm27, 0.0
    %39 = vst.msk [vmem:[#allocation2 + $0x58] sm:$0xff] %vm27, 0.0
    %40 = vst.msk [vmem:[#allocation2 + $0x60] sm:$0xff] %vm27, 0.0
    %41 = vst.msk [vmem:[#allocation2 + $0x68] sm:$0xff] %vm27, 0.0
    %42 = vst.msk [vmem:[#allocation2 + $0x70] sm:$0xff] %vm27, 0.0
    %43 = vst.msk [vmem:[#allocation2 + $0x78] sm:$0xff] %vm27, 0.0
    %44 = vst.msk [vmem:[#allocation2 + $0x80] sm:$0xff] %vm27, 0.0
    %45 = vst.msk [vmem:[#allocation2 + $0x88] sm:$0xff] %vm27, 0.0
    %46 = vst.msk [vmem:[#allocation2 + $0x90] sm:$0xff] %vm27, 0.0
    %47 = vst.msk [vmem:[#allocation2 + $0x98] sm:$0xff] %vm27, 0.0
    %48 = vst.msk [vmem:[#allocation2 + $0xa0] sm:$0xff] %vm27, 0.0
    %49 = vst.msk [vmem:[#allocation2 + $0xa8] sm:$0xff] %vm27, 0.0
    %50 = vst.msk [vmem:[#allocation2 + $0xb0] sm:$0xff] %vm27, 0.0
    %51 = vst.msk [vmem:[#allocation2 + $0xb8] sm:$0xff] %vm27, 0.0
    %52 = vst.msk [vmem:[#allocation2 + $0xc0] sm:$0xff] %vm27, 0.0
    %53 = vst.msk [vmem:[#allocation2 + $0xc8] sm:$0xff] %vm27, 0.0
    %54 = vst.msk [vmem:[#allocation2 + $0xd0] sm:$0xff] %vm27, 0.0
    %55 = vst.msk [vmem:[#allocation2 + $0xd8] sm:$0xff] %vm27, 0.0
    %56 = vst.msk [vmem:[#allocation2 + $0xe0] sm:$0xff] %vm27, 0.0
    %57 = vst.msk [vmem:[#allocation2 + $0xe8] sm:$0xff] %vm27, 0.0
    %58 = vst.msk [vmem:[#allocation2 + $0xf0] sm:$0xff] %vm27, 0.0
    %59 = vst.msk [vmem:[#allocation2 + $0xf8] sm:$0xff] %vm27, 0.0
    %60 = vst.msk [vmem:[#allocation2 + $0x100] sm:$0xff] %vm27, 0.0
    %61 = vst.msk [vmem:[#allocation2 + $0x108] sm:$0xff] %vm27, 0.0
    %62 = vst.msk [vmem:[#allocation2 + $0x110] sm:$0xff] %vm27, 0.0
    %63 = vst.msk [vmem:[#allocation2 + $0x118] sm:$0xff] %vm27, 0.0
    %64 = vst.msk [vmem:[#allocation2 + $0x120] sm:$0xff] %vm27, 0.0
    %65 = vst.msk [vmem:[#allocation2 + $0x128] sm:$0xff] %vm27, 0.0
    %66 = vst.msk [vmem:[#allocation2 + $0x130] sm:$0xff] %vm27, 0.0
    %67 = vst.msk [vmem:[#allocation2 + $0x138] sm:$0xff] %vm27, 0.0
    %68 = vst.msk [vmem:[#allocation2 + $0x140] sm:$0xff] %vm27, 0.0
    %69 = vst.msk [vmem:[#allocation2 + $0x148] sm:$0xff] %vm27, 0.0
    %70 = vst.msk [vmem:[#allocation2 + $0x150] sm:$0xff] %vm27, 0.0
    %71 = vst.msk [vmem:[#allocation2 + $0x158] sm:$0xff] %vm27, 0.0
    %72 = vst.msk [vmem:[#allocation2 + $0x160] sm:$0xff] %vm27, 0.0
    %73 = vst.msk [vmem:[#allocation2 + $0x168] sm:$0xff] %vm27, 0.0
    %74 = vst.msk [vmem:[#allocation2 + $0x170] sm:$0xff] %vm27, 0.0
    %75 = vst.msk [vmem:[#allocation2 + $0x178] sm:$0xff] %vm27, 0.0
    %76 = vst.msk [vmem:[#allocation2 + $0x180] sm:$0xff] %vm27, 0.0
    %77 = vst.msk [vmem:[#allocation2 + $0x188] sm:$0xff] %vm27, 0.0
    %78 = vst.msk [vmem:[#allocation2 + $0x190] sm:$0xff] %vm27, 0.0
    %79 = vst.msk [vmem:[#allocation2 + $0x198] sm:$0xff] %vm27, 0.0
    %80 = vst.msk [vmem:[#allocation2 + $0x1a0] sm:$0xff] %vm27, 0.0
    %81 = vst.msk [vmem:[#allocation2 + $0x1a8] sm:$0xff] %vm27, 0.0
    %82 = vst.msk [vmem:[#allocation2 + $0x1b0] sm:$0xff] %vm27, 0.0
    %83 = vst.msk [vmem:[#allocation2 + $0x1b8] sm:$0xff] %vm27, 0.0
    %84 = vst.msk [vmem:[#allocation2 + $0x1c0] sm:$0xff] %vm27, 0.0
    %85 = vst.msk [vmem:[#allocation2 + $0x1c8] sm:$0xff] %vm27, 0.0
    %86 = vst.msk [vmem:[#allocation2 + $0x1d0] sm:$0xff] %vm27, 0.0
    %87 = vst.msk [vmem:[#allocation2 + $0x1d8] sm:$0xff] %vm27, 0.0
    %88 = vst.msk [vmem:[#allocation2 + $0x1e0] sm:$0xff] %vm27, 0.0
    %89 = vst.msk [vmem:[#allocation2 + $0x1e8] sm:$0xff] %vm27, 0.0
    %90 = vst.msk [vmem:[#allocation2 + $0x1f0] sm:$0xff] %vm27, 0.0
    %91 = vst.msk [vmem:[#allocation2 + $0x1f8] sm:$0xff] %vm27, 0.0
    %92 = vst.msk [vmem:[#allocation2 + $0x200] sm:$0xff] %vm27, 0.0
    %93 = vst.msk [vmem:[#allocation2 + $0x208] sm:$0xff] %vm27, 0.0
    %94 = vst.msk [vmem:[#allocation2 + $0x210] sm:$0xff] %vm27, 0.0
    %95 = vst.msk [vmem:[#allocation2 + $0x218] sm:$0xff] %vm27, 0.0
    %96 = vst.msk [vmem:[#allocation2 + $0x220] sm:$0xff] %vm27, 0.0
    %97 = vst.msk [vmem:[#allocation2 + $0x228] sm:$0xff] %vm27, 0.0
    %98 = vst.msk [vmem:[#allocation2 + $0x230] sm:$0xff] %vm27, 0.0
    %99 = vst.msk [vmem:[#allocation2 + $0x238] sm:$0xff] %vm27, 0.0
    %100 = vst.msk [vmem:[#allocation3] sm:$0xff] %vm27, 0.0
    %101 = vst.msk [vmem:[#allocation3 + $0x8] sm:$0xff] %vm27, 0.0
    %102 = vst.msk [vmem:[#allocation3 + $0x10] sm:$0xff] %vm27, 0.0
    %103 = vst.msk [vmem:[#allocation3 + $0x18] sm:$0xff] %vm27, 0.0
    %104 = vst.msk [vmem:[#allocation3 + $0x20] sm:$0xff] %vm27, 0.0
    %105 = vst.msk [vmem:[#allocation3 + $0x28] sm:$0xff] %vm27, 0.0
    %106 = vst.msk [vmem:[#allocation3 + $0x30] sm:$0xff] %vm27, 0.0
    %107 = vst.msk [vmem:[#allocation3 + $0x38] sm:$0xff] %vm27, 0.0
    %108 = vst.msk [vmem:[#allocation3 + $0x40] sm:$0xff] %vm27, 0.0
    %109 = vst.msk [vmem:[#allocation3 + $0x48] sm:$0xff] %vm27, 0.0
    %110 = vst.msk [vmem:[#allocation3 + $0x50] sm:$0xff] %vm27, 0.0
    %111 = vst.msk [vmem:[#allocation3 + $0x58] sm:$0xff] %vm27, 0.0
    %112 = vst.msk [vmem:[#allocation3 + $0x60] sm:$0xff] %vm27, 0.0
    %113 = vst.msk [vmem:[#allocation3 + $0x68] sm:$0xff] %vm27, 0.0
    %114 = vst.msk [vmem:[#allocation3 + $0x70] sm:$0xff] %vm27, 0.0
    %115 = vst.msk [vmem:[#allocation3 + $0x78] sm:$0xff] %vm27, 0.0
    %116 = vst.msk [vmem:[#allocation3 + $0x80] sm:$0xff] %vm27, 0.0
    %117 = vst.msk [vmem:[#allocation3 + $0x88] sm:$0xff] %vm27, 0.0
    %118 = vst.msk [vmem:[#allocation3 + $0x90] sm:$0xff] %vm27, 0.0
    %119 = vst.msk [vmem:[#allocation3 + $0x98] sm:$0xff] %vm27, 0.0
    %120 = vst.msk [vmem:[#allocation3 + $0xa0] sm:$0xff] %vm27, 0.0
    %121 = vst.msk [vmem:[#allocation3 + $0xa8] sm:$0xff] %vm27, 0.0
    %122 = vst.msk [vmem:[#allocation3 + $0xb0] sm:$0xff] %vm27, 0.0
    %123 = vst.msk [vmem:[#allocation3 + $0xb8] sm:$0xff] %vm27, 0.0
    %124 = vst.msk [vmem:[#allocation3 + $0xc0] sm:$0xff] %vm27, 0.0
    %125 = vst.msk [vmem:[#allocation3 + $0xc8] sm:$0xff] %vm27, 0.0
    %126 = vst.msk [vmem:[#allocation3 + $0xd0] sm:$0xff] %vm27, 0.0
    %127 = vst.msk [vmem:[#allocation3 + $0xd8] sm:$0xff] %vm27, 0.0
    %128 = vst.msk [vmem:[#allocation3 + $0xe0] sm:$0xff] %vm27, 0.0
    %129 = vst.msk [vmem:[#allocation3 + $0xe8] sm:$0xff] %vm27, 0.0
    %130 = vst.msk [vmem:[#allocation3 + $0xf0] sm:$0xff] %vm27, 0.0
    %131 = vst.msk [vmem:[#allocation3 + $0xf8] sm:$0xff] %vm27, 0.0
    %132 = vst.msk [vmem:[#allocation3 + $0x100] sm:$0xff] %vm27, 0.0
    %133 = vst.msk [vmem:[#allocation3 + $0x108] sm:$0xff] %vm27, 0.0
    %134 = vst.msk [vmem:[#allocation3 + $0x110] sm:$0xff] %vm27, 0.0
    %135 = vst.msk [vmem:[#allocation3 + $0x118] sm:$0xff] %vm27, 0.0
    %136 = vst.msk [vmem:[#allocation3 + $0x120] sm:$0xff] %vm27, 0.0
    %137 = vst.msk [vmem:[#allocation3 + $0x128] sm:$0xff] %vm27, 0.0
    %138 = vst.msk [vmem:[#allocation3 + $0x130] sm:$0xff] %vm27, 0.0
    %139 = vst.msk [vmem:[#allocation3 + $0x138] sm:$0xff] %vm27, 0.0
    %140 = vst.msk [vmem:[#allocation3 + $0x140] sm:$0xff] %vm27, 0.0
    %141 = vst.msk [vmem:[#allocation3 + $0x148] sm:$0xff] %vm27, 0.0
    %142 = vst.msk [vmem:[#allocation3 + $0x150] sm:$0xff] %vm27, 0.0
    %143 = vst.msk [vmem:[#allocation3 + $0x158] sm:$0xff] %vm27, 0.0
    %144 = vst.msk [vmem:[#allocation3 + $0x160] sm:$0xff] %vm27, 0.0
    %145 = vst.msk [vmem:[#allocation3 + $0x168] sm:$0xff] %vm27, 0.0
    %146 = vst.msk [vmem:[#allocation3 + $0x170] sm:$0xff] %vm27, 0.0
    %147 = vst.msk [vmem:[#allocation3 + $0x178] sm:$0xff] %vm27, 0.0
    %148 = vst.msk [vmem:[#allocation3 + $0x180] sm:$0xff] %vm27, 0.0
    %149 = vst.msk [vmem:[#allocation3 + $0x188] sm:$0xff] %vm27, 0.0
    %150 = vst.msk [vmem:[#allocation3 + $0x190] sm:$0xff] %vm27, 0.0
    %151 = vst.msk [vmem:[#allocation3 + $0x198] sm:$0xff] %vm27, 0.0
    %152 = vst.msk [vmem:[#allocation3 + $0x1a0] sm:$0xff] %vm27, 0.0
    %153 = vst.msk [vmem:[#allocation3 + $0x1a8] sm:$0xff] %vm27, 0.0
    %154 = vst.msk [vmem:[#allocation3 + $0x1b0] sm:$0xff] %vm27, 0.0
    %155 = vst.msk [vmem:[#allocation3 + $0x1b8] sm:$0xff] %vm27, 0.0
    %156 = vst.msk [vmem:[#allocation3 + $0x1c0] sm:$0xff] %vm27, 0.0
    %157 = vst.msk [vmem:[#allocation3 + $0x1c8] sm:$0xff] %vm27, 0.0
    %158 = vst.msk [vmem:[#allocation3 + $0x1d0] sm:$0xff] %vm27, 0.0
    %159 = vst.msk [vmem:[#allocation3 + $0x1d8] sm:$0xff] %vm27, 0.0
    %160 = vst.msk [vmem:[#allocation3 + $0x1e0] sm:$0xff] %vm27, 0.0
    %161 = vst.msk [vmem:[#allocation3 + $0x1e8] sm:$0xff] %vm27, 0.0
    %162 = vst.msk [vmem:[#allocation3 + $0x1f0] sm:$0xff] %vm27, 0.0
    %163 = vst.msk [vmem:[#allocation3 + $0x1f8] sm:$0xff] %vm27, 0.0
    %164 = vst.msk [vmem:[#allocation3 + $0x200] sm:$0xff] %vm27, 0.0
    %165 = vst.msk [vmem:[#allocation3 + $0x208] sm:$0xff] %vm27, 0.0
    %166 = vst.msk [vmem:[#allocation3 + $0x210] sm:$0xff] %vm27, 0.0
    %167 = vst.msk [vmem:[#allocation3 + $0x218] sm:$0xff] %vm27, 0.0
    %168 = vst.msk [vmem:[#allocation3 + $0x220] sm:$0xff] %vm27, 0.0
    %169 = vst.msk [vmem:[#allocation3 + $0x228] sm:$0xff] %vm27, 0.0
    %170 = vst.msk [vmem:[#allocation3 + $0x230] sm:$0xff] %vm27, 0.0
    %171 = vst.msk [vmem:[#allocation3 + $0x238] sm:$0xff] %vm27, 0.0
  $region25: #{spectral_conv2d.1} parent=0 // pred_fallthru
    _
  %v172 = vld [vmem:[%s0] sm:$0xf]
  %v173 = vld [vmem:[%s0 + $0x4] sm:$0xf]
  %v174 = vld [vmem:[%s0 + $0x8] sm:$0xf]
  %v175 = vld [vmem:[%s0 + $0xc] sm:$0xf]
  %v176 = vld [vmem:[%s0 + $0x10] sm:$0xf]
  %v177 = vld [vmem:[%s0 + $0x14] sm:$0xf]
  %v178 = vld [vmem:[%s0 + $0x18] sm:$0xf]
  %v179 = vld [vmem:[%s0 + $0x1c] sm:$0xf]
  %v180 = vld [vmem:[%s0 + $0x20] sm:$0xf]
  %v181 = vld [vmem:[%s0 + $0x24] sm:$0xf]
  %v182 = vld [vmem:[%s0 + $0x28] sm:$0xf]
  %v183 = vld [vmem:[%s0 + $0x2c] sm:$0xf]
  %v184 = vld [vmem:[%s0 + $0x30] sm:$0xf]
  %v185 = vld [vmem:[%s0 + $0x34] sm:$0xf]
  %v186 = vld [vmem:[%s0 + $0x38] sm:$0xf]
  %v187 = vld [vmem:[%s0 + $0x3c] sm:$0xf]
  %v188 = vld [vmem:[%s0 + $0x40] sm:$0xf]
  %v189 = vld [vmem:[%s0 + $0x44] sm:$0xf]
  %v190 = vld [vmem:[%s0 + $0x48] sm:$0xf]
  %v191 = vld [vmem:[%s0 + $0x4c] sm:$0xf]
  %v192 = vld [vmem:[%s0 + $0x50] sm:$0xf]
  %v193 = vld [vmem:[%s0 + $0x54] sm:$0xf]
  %v194 = vld [vmem:[%s0 + $0x58] sm:$0xf]
  %v195 = vld [vmem:[%s0 + $0x5c] sm:$0xf]
  %v196 = vld [vmem:[%s0 + $0x60] sm:$0xf]
  %v197 = vld [vmem:[%s0 + $0x64] sm:$0xf]
  %v198 = vld [vmem:[%s0 + $0x68] sm:$0xf]
  %v199 = vld [vmem:[%s0 + $0x6c] sm:$0xf]
  %v200 = vld [vmem:[%s0 + $0x70] sm:$0xf]
  %v201 = vld [vmem:[%s0 + $0x74] sm:$0xf]
  %v202 = vld [vmem:[%s0 + $0x78] sm:$0xf]
  %v203 = vld [vmem:[%s0 + $0x7c] sm:$0xf]
  %v204 = vld [vmem:[%s0 + $0x80] sm:$0xf]
  %v205 = vld [vmem:[%s0 + $0x84] sm:$0xf]
  %v206 = vld [vmem:[%s0 + $0x88] sm:$0xf]
  %v207 = vld [vmem:[%s0 + $0x8c] sm:$0xf]
  %v208 = vld [vmem:[%s0 + $0x90] sm:$0xf]
  %v209 = vld [vmem:[%s0 + $0x94] sm:$0xf]
  %v210 = vld [vmem:[%s0 + $0x98] sm:$0xf]
  %v211 = vld [vmem:[%s0 + $0x9c] sm:$0xf]
  %v212 = vld [vmem:[%s0 + $0xa0] sm:$0xf]
  %v213 = vld [vmem:[%s0 + $0xa4] sm:$0xf]
  %v214 = vld [vmem:[%s0 + $0xa8] sm:$0xf]
  %v215 = vld [vmem:[%s0 + $0xac] sm:$0xf]
  %v216 = vld [vmem:[%s0 + $0xb0] sm:$0xf]
  %v217 = vld [vmem:[%s0 + $0xb4] sm:$0xf]
  %v218 = vld [vmem:[%s0 + $0xb8] sm:$0xf]
  %v219 = vld [vmem:[%s0 + $0xbc] sm:$0xf]
  %v220 = vld [vmem:[%s0 + $0xc0] sm:$0xf]
  %v221 = vld [vmem:[%s0 + $0xc4] sm:$0xf]
  %v222 = vld [vmem:[%s0 + $0xc8] sm:$0xf]
  %v223 = vld [vmem:[%s0 + $0xcc] sm:$0xf]
  %v224 = vld [vmem:[%s0 + $0xd0] sm:$0xf]
  %v225 = vld [vmem:[%s0 + $0xd4] sm:$0xf]
  %v226 = vld [vmem:[%s0 + $0xd8] sm:$0xf]
  %v227 = vld [vmem:[%s0 + $0xdc] sm:$0xf]
  %v228 = vld [vmem:[%s0 + $0xe0] sm:$0xf]
  %v229 = vld [vmem:[%s0 + $0xe4] sm:$0xf]
  %v230 = vld [vmem:[%s0 + $0xe8] sm:$0xf]
  %v231 = vld [vmem:[%s0 + $0xec] sm:$0xf]
  %v232 = vld [vmem:[%s0 + $0xf0] sm:$0xf]
  %v233 = vld [vmem:[%s0 + $0xf4] sm:$0xf]
  %v234 = vld [vmem:[%s0 + $0xf8] sm:$0xf]
  %v235 = vld [vmem:[%s0 + $0xfc] sm:$0xf]
  %v236 = vld [vmem:[%s0 + $0x100] sm:$0xf]
  %v237 = vld [vmem:[%s0 + $0x104] sm:$0xf]
  %v238 = vld [vmem:[%s0 + $0x108] sm:$0xf]
  %v239 = vld [vmem:[%s0 + $0x10c] sm:$0xf]
  %v240 = vld [vmem:[%s0 + $0x110] sm:$0xf]
  %v241 = vld [vmem:[%s0 + $0x114] sm:$0xf]
  %v242 = vld [vmem:[%s0 + $0x118] sm:$0xf]
  %v243 = vld [vmem:[%s0 + $0x11c] sm:$0xf]
  %v244 = vld [vmem:[%s1] sm:$0xf]
  %v245 = vld [vmem:[%s1 + $0x4] sm:$0xf]
  %v246 = vld [vmem:[%s1 + $0x8] sm:$0xf]
  %v247 = vld [vmem:[%s1 + $0xc] sm:$0xf]
  %v248 = vld [vmem:[%s1 + $0x10] sm:$0xf]
  %v249 = vld [vmem:[%s1 + $0x14] sm:$0xf]
  %v250 = vld [vmem:[%s1 + $0x18] sm:$0xf]
  %v251 = vld [vmem:[%s1 + $0x1c] sm:$0xf]
  %v252 = vld [vmem:[%s1 + $0x20] sm:$0xf]
  %v253 = vld [vmem:[%s1 + $0x24] sm:$0xf]
  %v254 = vld [vmem:[%s1 + $0x28] sm:$0xf]
  %v255 = vld [vmem:[%s1 + $0x2c] sm:$0xf]
  %v256 = vld [vmem:[%s1 + $0x30] sm:$0xf]
  %v257 = vld [vmem:[%s1 + $0x34] sm:$0xf]
  %v258 = vld [vmem:[%s1 + $0x38] sm:$0xf]
  %v259 = vld [vmem:[%s1 + $0x3c] sm:$0xf]
  %v260 = vld [vmem:[%s1 + $0x40] sm:$0xf]
  %v261 = vld [vmem:[%s1 + $0x44] sm:$0xf]
  %v262 = vld [vmem:[%s1 + $0x48] sm:$0xf]
  %v263 = vld [vmem:[%s1 + $0x4c] sm:$0xf]
  %v264 = vld [vmem:[%s1 + $0x50] sm:$0xf]
  %v265 = vld [vmem:[%s1 + $0x54] sm:$0xf]
  %v266 = vld [vmem:[%s1 + $0x58] sm:$0xf]
  %v267 = vld [vmem:[%s1 + $0x5c] sm:$0xf]
  %v268 = vld [vmem:[%s1 + $0x60] sm:$0xf]
  %v269 = vld [vmem:[%s1 + $0x64] sm:$0xf]
  %v270 = vld [vmem:[%s1 + $0x68] sm:$0xf]
  %v271 = vld [vmem:[%s1 + $0x6c] sm:$0xf]
  %v272 = vld [vmem:[%s1 + $0x70] sm:$0xf]
  %v273 = vld [vmem:[%s1 + $0x74] sm:$0xf]
  %v274 = vld [vmem:[%s1 + $0x78] sm:$0xf]
  %v275 = vld [vmem:[%s1 + $0x7c] sm:$0xf]
  %v276 = vld [vmem:[%s1 + $0x80] sm:$0xf]
  %v277 = vld [vmem:[%s1 + $0x84] sm:$0xf]
  %v278 = vld [vmem:[%s1 + $0x88] sm:$0xf]
  %v279 = vld [vmem:[%s1 + $0x8c] sm:$0xf]
  %v280 = vld [vmem:[%s1 + $0x90] sm:$0xf]
  %v281 = vld [vmem:[%s1 + $0x94] sm:$0xf]
  %v282 = vld [vmem:[%s1 + $0x98] sm:$0xf]
  %v283 = vld [vmem:[%s1 + $0x9c] sm:$0xf]
  %v284 = vld [vmem:[%s1 + $0xa0] sm:$0xf]
  %v285 = vld [vmem:[%s1 + $0xa4] sm:$0xf]
  %v286 = vld [vmem:[%s1 + $0xa8] sm:$0xf]
  %v287 = vld [vmem:[%s1 + $0xac] sm:$0xf]
  %v288 = vld [vmem:[%s1 + $0xb0] sm:$0xf]
  %v289 = vld [vmem:[%s1 + $0xb4] sm:$0xf]
  %v290 = vld [vmem:[%s1 + $0xb8] sm:$0xf]
  %v291 = vld [vmem:[%s1 + $0xbc] sm:$0xf]
  %v292 = vld [vmem:[%s1 + $0xc0] sm:$0xf]
  %v293 = vld [vmem:[%s1 + $0xc4] sm:$0xf]
  %v294 = vld [vmem:[%s1 + $0xc8] sm:$0xf]
  %v295 = vld [vmem:[%s1 + $0xcc] sm:$0xf]
  %v296 = vld [vmem:[%s1 + $0xd0] sm:$0xf]
  %v297 = vld [vmem:[%s1 + $0xd4] sm:$0xf]
  %v298 = vld [vmem:[%s1 + $0xd8] sm:$0xf]
  %v299 = vld [vmem:[%s1 + $0xdc] sm:$0xf]
  %v300 = vld [vmem:[%s1 + $0xe0] sm:$0xf]
  %v301 = vld [vmem:[%s1 + $0xe4] sm:$0xf]
  %v302 = vld [vmem:[%s1 + $0xe8] sm:$0xf]
  %v303 = vld [vmem:[%s1 + $0xec] sm:$0xf]
  %v304 = vld [vmem:[%s1 + $0xf0] sm:$0xf]
  %v305 = vld [vmem:[%s1 + $0xf4] sm:$0xf]
  %v306 = vld [vmem:[%s1 + $0xf8] sm:$0xf]
  %v307 = vld [vmem:[%s1 + $0xfc] sm:$0xf]
  %v308 = vld [vmem:[%s1 + $0x100] sm:$0xf]
  %v309 = vld [vmem:[%s1 + $0x104] sm:$0xf]
  %v310 = vld [vmem:[%s1 + $0x108] sm:$0xf]
  %v311 = vld [vmem:[%s1 + $0x10c] sm:$0xf]
  %v312 = vld [vmem:[%s1 + $0x110] sm:$0xf]
  %v313 = vld [vmem:[%s1 + $0x114] sm:$0xf]
  %v314 = vld [vmem:[%s1 + $0x118] sm:$0xf]
  %v315 = vld [vmem:[%s1 + $0x11c] sm:$0xf]
  %v316 = vadd.bf16 %v172, %v244
  %v317 = vadd.bf16 %v173, %v245
  %v318 = vadd.bf16 %v174, %v246
  %v319 = vadd.bf16 %v175, %v247
  %v320 = vadd.bf16 %v176, %v248
  %v321 = vadd.bf16 %v177, %v249
  %v322 = vadd.bf16 %v178, %v250
  %v323 = vadd.bf16 %v179, %v251
  %v324 = vadd.bf16 %v180, %v252
  %v325 = vadd.bf16 %v181, %v253
  %v326 = vadd.bf16 %v182, %v254
  %v327 = vadd.bf16 %v183, %v255
  %v328 = vadd.bf16 %v184, %v256
  %v329 = vadd.bf16 %v185, %v257
  %v330 = vadd.bf16 %v186, %v258
  %v331 = vadd.bf16 %v187, %v259
  %v332 = vadd.bf16 %v188, %v260
  %v333 = vadd.bf16 %v189, %v261
  %v334 = vadd.bf16 %v190, %v262
  %v335 = vadd.bf16 %v191, %v263
  %v336 = vadd.bf16 %v192, %v264
  %v337 = vadd.bf16 %v193, %v265
  %v338 = vadd.bf16 %v194, %v266
  %v339 = vadd.bf16 %v195, %v267
  %v340 = vadd.bf16 %v196, %v268
  %v341 = vadd.bf16 %v197, %v269
  %v342 = vadd.bf16 %v198, %v270
  %v343 = vadd.bf16 %v199, %v271
  %v344 = vadd.bf16 %v200, %v272
  %v345 = vadd.bf16 %v201, %v273
  %v346 = vadd.bf16 %v202, %v274
  %v347 = vadd.bf16 %v203, %v275
  %v348 = vadd.bf16 %v204, %v276
  %v349 = vadd.bf16 %v205, %v277
  %v350 = vadd.bf16 %v206, %v278
  %v351 = vadd.bf16 %v207, %v279
  %v352 = vadd.bf16 %v208, %v280
  %v353 = vadd.bf16 %v209, %v281
  %v354 = vadd.bf16 %v210, %v282
  %v355 = vadd.bf16 %v211, %v283
  %v356 = vadd.bf16 %v212, %v284
  %v357 = vadd.bf16 %v213, %v285
  %v358 = vadd.bf16 %v214, %v286
  %v359 = vadd.bf16 %v215, %v287
  %v360 = vadd.bf16 %v216, %v288
  %v361 = vadd.bf16 %v217, %v289
  %v362 = vadd.bf16 %v218, %v290
  %v363 = vadd.bf16 %v219, %v291
  %v364 = vadd.bf16 %v220, %v292
  %v365 = vadd.bf16 %v221, %v293
  %v366 = vadd.bf16 %v222, %v294
  %v367 = vadd.bf16 %v223, %v295
  %v368 = vadd.bf16 %v224, %v296
  %v369 = vadd.bf16 %v225, %v297
  %v370 = vadd.bf16 %v226, %v298
  %v371 = vadd.bf16 %v227, %v299
  %v372 = vadd.bf16 %v228, %v300
  %v373 = vadd.bf16 %v229, %v301
  %v374 = vadd.bf16 %v230, %v302
  %v375 = vadd.bf16 %v231, %v303
  %v376 = vadd.bf16 %v232, %v304
  %v377 = vadd.bf16 %v233, %v305
  %v378 = vadd.bf16 %v234, %v306
  %v379 = vadd.bf16 %v235, %v307
  %v380 = vadd.bf16 %v236, %v308
  %v381 = vadd.bf16 %v237, %v309
  %v382 = vadd.bf16 %v238, %v310
  %v383 = vadd.bf16 %v239, %v311
  %v384 = vadd.bf16 %v240, %v312
  %v385 = vadd.bf16 %v241, %v313
  %v386 = vadd.bf16 %v242, %v314
  %v387 = vadd.bf16 %v243, %v315
  %v388 = vld [vmem:[%s2] sm:$0xf]
  %v389 = vld [vmem:[%s2 + $0x4] sm:$0xf]
  %v390 = vld [vmem:[%s2 + $0x8] sm:$0xf]
  %v391 = vld [vmem:[%s2 + $0xc] sm:$0xf]
  %v392 = vld [vmem:[%s2 + $0x10] sm:$0xf]
  %v393 = vld [vmem:[%s2 + $0x14] sm:$0xf]
  %v394 = vld [vmem:[%s2 + $0x18] sm:$0xf]
  %v395 = vld [vmem:[%s2 + $0x1c] sm:$0xf]
  %v396 = vld [vmem:[%s2 + $0x20] sm:$0xf]
  %v397 = vld [vmem:[%s2 + $0x24] sm:$0xf]
  %v398 = vld [vmem:[%s2 + $0x28] sm:$0xf]
  %v399 = vld [vmem:[%s2 + $0x2c] sm:$0xf]
  %v400 = vld [vmem:[%s2 + $0x30] sm:$0xf]
  %v401 = vld [vmem:[%s2 + $0x34] sm:$0xf]
  %v402 = vld [vmem:[%s2 + $0x38] sm:$0xf]
  %v403 = vld [vmem:[%s2 + $0x3c] sm:$0xf]
  %v404 = vld [vmem:[%s2 + $0x40] sm:$0xf]
  %v405 = vld [vmem:[%s2 + $0x44] sm:$0xf]
  %v406 = vld [vmem:[%s2 + $0x48] sm:$0xf]
  %v407 = vld [vmem:[%s2 + $0x4c] sm:$0xf]
  %v408 = vld [vmem:[%s2 + $0x50] sm:$0xf]
  %v409 = vld [vmem:[%s2 + $0x54] sm:$0xf]
  %v410 = vld [vmem:[%s2 + $0x58] sm:$0xf]
  %v411 = vld [vmem:[%s2 + $0x5c] sm:$0xf]
  %v412 = vld [vmem:[%s2 + $0x60] sm:$0xf]
  %v413 = vld [vmem:[%s2 + $0x64] sm:$0xf]
  %v414 = vld [vmem:[%s2 + $0x68] sm:$0xf]
  %v415 = vld [vmem:[%s2 + $0x6c] sm:$0xf]
  %v416 = vld [vmem:[%s2 + $0x70] sm:$0xf]
  %v417 = vld [vmem:[%s2 + $0x74] sm:$0xf]
  %v418 = vld [vmem:[%s2 + $0x78] sm:$0xf]
  %v419 = vld [vmem:[%s2 + $0x7c] sm:$0xf]
  %v420 = vld [vmem:[%s2 + $0x80] sm:$0xf]
  %v421 = vld [vmem:[%s2 + $0x84] sm:$0xf]
  %v422 = vld [vmem:[%s2 + $0x88] sm:$0xf]
  %v423 = vld [vmem:[%s2 + $0x8c] sm:$0xf]
  %v424 = vld [vmem:[%s2 + $0x90] sm:$0xf]
  %v425 = vld [vmem:[%s2 + $0x94] sm:$0xf]
  %v426 = vld [vmem:[%s2 + $0x98] sm:$0xf]
  %v427 = vld [vmem:[%s2 + $0x9c] sm:$0xf]
  %v428 = vld [vmem:[%s2 + $0xa0] sm:$0xf]
  %v429 = vld [vmem:[%s2 + $0xa4] sm:$0xf]
  %v430 = vld [vmem:[%s2 + $0xa8] sm:$0xf]
  %v431 = vld [vmem:[%s2 + $0xac] sm:$0xf]
  %v432 = vld [vmem:[%s2 + $0xb0] sm:$0xf]
  %v433 = vld [vmem:[%s2 + $0xb4] sm:$0xf]
  %v434 = vld [vmem:[%s2 + $0xb8] sm:$0xf]
  %v435 = vld [vmem:[%s2 + $0xbc] sm:$0xf]
  %v436 = vld [vmem:[%s2 + $0xc0] sm:$0xf]
  %v437 = vld [vmem:[%s2 + $0xc4] sm:$0xf]
  %v438 = vld [vmem:[%s2 + $0xc8] sm:$0xf]
  %v439 = vld [vmem:[%s2 + $0xcc] sm:$0xf]
  %v440 = vld [vmem:[%s2 + $0xd0] sm:$0xf]
  %v441 = vld [vmem:[%s2 + $0xd4] sm:$0xf]
  %v442 = vld [vmem:[%s2 + $0xd8] sm:$0xf]
  %v443 = vld [vmem:[%s2 + $0xdc] sm:$0xf]
  %v444 = vld [vmem:[%s2 + $0xe0] sm:$0xf]
  %v445 = vld [vmem:[%s2 + $0xe4] sm:$0xf]
  %v446 = vld [vmem:[%s2 + $0xe8] sm:$0xf]
  %v447 = vld [vmem:[%s2 + $0xec] sm:$0xf]
  %v448 = vld [vmem:[%s2 + $0xf0] sm:$0xf]
  %v449 = vld [vmem:[%s2 + $0xf4] sm:$0xf]
  %v450 = vld [vmem:[%s2 + $0xf8] sm:$0xf]
  %v451 = vld [vmem:[%s2 + $0xfc] sm:$0xf]
  %v452 = vld [vmem:[%s2 + $0x100] sm:$0xf]
  %v453 = vld [vmem:[%s2 + $0x104] sm:$0xf]
  %v454 = vld [vmem:[%s2 + $0x108] sm:$0xf]
  %v455 = vld [vmem:[%s2 + $0x10c] sm:$0xf]
  %v456 = vld [vmem:[%s2 + $0x110] sm:$0xf]
  %v457 = vld [vmem:[%s2 + $0x114] sm:$0xf]
  %v458 = vld [vmem:[%s2 + $0x118] sm:$0xf]
  %v459 = vld [vmem:[%s2 + $0x11c] sm:$0xf]
  %vm460 = vcmask 64512
  %v462 = vsel %vm460, %v316, 0
  %vm464 = vcmask 1043456
  %v466 = vsel %vm464, %v388, 0
  %468 = vmatprep.subr.bf16.mxu0 0
  %469 = vmatpush1.bf16.msra.mxu0 %v466
  %470 = vmatprep.subr.bf16.mxu0 0
  %471 = vmatpush1.bf16.msra.mxu0 0
  %472 = vmatprep.subr.bf16.mxu0 0
  %473 = vmatpush1.bf16.msra.mxu0 0
  %474 = vmatprep.subr.bf16.mxu0 0
  %475 = vmatpush1.bf16.msra.mxu0 0
  %476 = vmatprep.subr.bf16.mxu0 0
  %477 = vmatpush1.bf16.msra.mxu0 0
  %478 = vmatprep.subr.bf16.mxu0 0
  %479 = vmatpush1.bf16.msra.mxu0 0
  %480 = vmatprep.subr.bf16.mxu0 0
  %481 = vmatpush1.bf16.msra.mxu0 0
  %482 = vmatprep.subr.bf16.mxu0 0
  %483 = vmatpush1.bf16.msra.mxu0 0
  %484 = vmatprep.subr.bf16.mxu0 0
  %485 = vmatpush1.bf16.msra.mxu0 0
  %486 = vmatprep.subr.bf16.mxu0 0
  %487 = vmatpush1.bf16.msra.mxu0 0
  %488 = vmatprep.subr.bf16.mxu0 0
  %489 = vmatpush1.bf16.msra.mxu0 0
  %490 = vmatprep.subr.bf16.mxu0 0
  %491 = vmatpush1.bf16.msra.mxu0 0
  %492 = vmatprep.subr.bf16.mxu0 0
  %493 = vmatpush1.bf16.msra.mxu0 0
  %494 = vmatprep.subr.bf16.mxu0 0
  %495 = vmatpush1.bf16.msra.mxu0 0
  %496 = vmatprep.subr.bf16.mxu0 0
  %497 = vmatpush1.bf16.msra.mxu0 0
  %498 = vmatprep.subr.bf16.mxu0 0
  %499 = vmatpush1.bf16.msra.mxu0 0
  %500 = vmatprep.mubr.bf16.mxu0 0
  %501 = vmatmul.mubr.bf16.gmra.mrb[0].mxu0 %v462
  %v502 = vpop.f32.mrb[0].mxu0
  %v503 = vadd.f32 0.0, %v502
  %v504 = vpop.f32.mrb[0].mxu0
  %v505 = vpop.f32.mrb[0].mxu0
  %v506 = vpop.f32.mrb[0].mxu0
  %507 = vdwg.mxu0
  %v509 = vsel %vm460, %v317, 0
  %v512 = vsel %vm464, %v389, 0
  %514 = vmatprep.subr.bf16.mxu0 0
  %515 = vmatpush1.bf16.msra.mxu0 %v512
  %516 = vmatprep.subr.bf16.mxu0 0
  %517 = vmatpush1.bf16.msra.mxu0 0
  %518 = vmatprep.subr.bf16.mxu0 0
  %519 = vmatpush1.bf16.msra.mxu0 0
  %520 = vmatprep.subr.bf16.mxu0 0
  %521 = vmatpush1.bf16.msra.mxu0 0
  %522 = vmatprep.subr.bf16.mxu0 0
  %523 = vmatpush1.bf16.msra.mxu0 0
  %524 = vmatprep.subr.bf16.mxu0 0
  %525 = vmatpush1.bf16.msra.mxu0 0
  %526 = vmatprep.subr.bf16.mxu0 0
  %527 = vmatpush1.bf16.msra.mxu0 0
  %528 = vmatprep.subr.bf16.mxu0 0
  %529 = vmatpush1.bf16.msra.mxu0 0
  %530 = vmatprep.subr.bf16.mxu0 0
  %531 = vmatpush1.bf16.msra.mxu0 0
  %532 = vmatprep.subr.bf16.mxu0 0
  %533 = vmatpush1.bf16.msra.mxu0 0
  %534 = vmatprep.subr.bf16.mxu0 0
  %535 = vmatpush1.bf16.msra.mxu0 0
  %536 = vmatprep.subr.bf16.mxu0 0
  %537 = vmatpush1.bf16.msra.mxu0 0
  %538 = vmatprep.subr.bf16.mxu0 0
  %539 = vmatpush1.bf16.msra.mxu0 0
  %540 = vmatprep.subr.bf16.mxu0 0
  %541 = vmatpush1.bf16.msra.mxu0 0
  %542 = vmatprep.subr.bf16.mxu0 0
  %543 = vmatpush1.bf16.msra.mxu0 0
  %544 = vmatprep.subr.bf16.mxu0 0
  %545 = vmatpush1.bf16.msra.mxu0 0
  %546 = vmatprep.mubr.bf16.mxu0 0
  %547 = vmatmul.mubr.bf16.gmra.mrb[0].mxu0 %v509
  %v548 = vpop.f32.mrb[0].mxu0
  %v549 = vadd.f32 0.0, %v548
  %v550 = vpop.f32.mrb[0].mxu0
  %v551 = vpop.f32.mrb[0].mxu0
  %v552 = vpop.f32.mrb[0].mxu0
  %553 = vdwg.mxu0
  %v555 = vsel %vm460, %v318, 0
  %v558 = vsel %vm464, %v390, 0
  %560 = vmatprep.subr.bf16.mxu0 0
  %561 = vmatpush1.bf16.msra.mxu0 %v558
  %562 = vmatprep.subr.bf16.mxu0 0
  %563 = vmatpush1.bf16.msra.mxu0 0
  %564 = vmatprep.subr.bf16.mxu0 0
  %565 = vmatpush1.bf16.msra.mxu0 0
  %566 = vmatprep.subr.bf16.mxu0 0
  %567 = vmatpush1.bf16.msra.mxu0 0
  %568 = vmatprep.subr.bf16.mxu0 0
  %569 = vmatpush1.bf16.msra.mxu0 0
  %570 = vmatprep.subr.bf16.mxu0 0
  %571 = vmatpush1.bf16.msra.mxu0 0
  %572 = vmatprep.subr.bf16.mxu0 0
  %573 = vmatpush1.bf16.msra.mxu0 0
  %574 = vmatprep.subr.bf16.mxu0 0
  %575 = vmatpush1.bf16.msra.mxu0 0
  %576 = vmatprep.subr.bf16.mxu0 0
  %577 = vmatpush1.bf16.msra.mxu0 0
  %578 = vmatprep.subr.bf16.mxu0 0
  %579 = vmatpush1.bf16.msra.mxu0 0
  %580 = vmatprep.subr.bf16.mxu0 0
  %581 = vmatpush1.bf16.msra.mxu0 0
  %582 = vmatprep.subr.bf16.mxu0 0
  %583 = vmatpush1.bf16.msra.mxu0 0
  %584 = vmatprep.subr.bf16.mxu0 0
  %585 = vmatpush1.bf16.msra.mxu0 0
  %586 = vmatprep.subr.bf16.mxu0 0
  %587 = vmatpush1.bf16.msra.mxu0 0
  %588 = vmatprep.subr.bf16.mxu0 0
  %589 = vmatpush1.bf16.msra.mxu0 0
  %590 = vmatprep.subr.bf16.mxu0 0
  %591 = vmatpush1.bf16.msra.mxu0 0
  %592 = vmatprep.mubr.bf16.mxu0 0
  %593 = vmatmul.mubr.bf16.gmra.mrb[0].mxu0 %v555
  %v594 = vpop.f32.mrb[0].mxu0
  %v595 = vadd.f32 0.0, %v594
  %v596 = vpop.f32.mrb[0].mxu0
  %v597 = vpop.f32.mrb[0].mxu0
  %v598 = vpop.f32.mrb[0].mxu0
  %599 = vdwg.mxu0
  %v601 = vsel %vm460, %v319, 0
  %v604 = vsel %vm464, %v391, 0
  %606 = vmatprep.subr.bf16.mxu0 0
  %607 = vmatpush1.bf16.msra.mxu0 %v604
  %608 = vmatprep.subr.bf16.mxu0 0
  %609 = vmatpush1.bf16.msra.mxu0 0
  %610 = vmatprep.subr.bf16.mxu0 0
  %611 = vmatpush1.bf16.msra.mxu0 0
  %612 = vmatprep.subr.bf16.mxu0 0
  %613 = vmatpush1.bf16.msra.mxu0 0
  %614 = vmatprep.subr.bf16.mxu0 0
  %615 = vmatpush1.bf16.msra.mxu0 0
  %616 = vmatprep.subr.bf16.mxu0 0
  %617 = vmatpush1.bf16.msra.mxu0 0
  %618 = vmatprep.subr.bf16.mxu0 0
  %619 = vmatpush1.bf16.msra.mxu0 0
  %620 = vmatprep.subr.bf16.mxu0 0
  %621 = vmatpush1.bf16.msra.mxu0 0
  %622 = vmatprep.subr.bf16.mxu0 0
  %623 = vmatpush1.bf16.msra.mxu0 0
  %624 = vmatprep.subr.bf16.mxu0 0
  %625 = vmatpush1.bf16.msra.mxu0 0
  %626 = vmatprep.subr.bf16.mxu0 0
  %627 = vmatpush1.bf16.msra.mxu0 0
  %628 = vmatprep.subr.bf16.mxu0 0
  %629 = vmatpush1.bf16.msra.mxu0 0
  %630 = vmatprep.subr.bf16.mxu0 0
  %631 = vmatpush1.bf16.msra.mxu0 0
  %632 = vmatprep.subr.bf16.mxu0 0
  %633 = vmatpush1.bf16.msra.mxu0 0
  %634 = vmatprep.subr.bf16.mxu0 0
  %635 = vmatpush1.bf16.msra.mxu0 0
  %636 = vmatprep.subr.bf16.mxu0 0
  %637 = vmatpush1.bf16.msra.mxu0 0
  %638 = vmatprep.mubr.bf16.mxu0 0
  %639 = vmatmul.mubr.bf16.gmra.mrb[0].mxu0 %v601
  %v640 = vpop.f32.mrb[0].mxu0
  %v641 = vadd.f32 0.0, %v640
  %v642 = vpop.f32.mrb[0].mxu0
  %v643 = vpop.f32.mrb[0].mxu0
  %v644 = vpop.f32.mrb[0].mxu0
  %645 = vdwg.mxu0
  %v647 = vsel %vm460, %v320, 0
  %v650 = vsel %vm464, %v392, 0
  %652 = vmatprep.subr.bf16.mxu0 0
  %653 = vmatpush1.bf16.msra.mxu0 %v650
  %654 = vmatprep.subr.bf16.mxu0 0
  %655 = vmatpush1.bf16.msra.mxu0 0
  %656 = vmatprep.subr.bf16.mxu0 0
  %657 = vmatpush1.bf16.msra.mxu0 0
  %658 = vmatprep.subr.bf16.mxu0 0
  %659 = vmatpush1.bf16.msra.mxu0 0
  %660 = vmatprep.subr.bf16.mxu0 0
  %661 = vmatpush1.bf16.msra.mxu0 0
  %662 = vmatprep.subr.bf16.mxu0 0
  %663 = vmatpush1.bf16.msra.mxu0 0
  %664 = vmatprep.subr.bf16.mxu0 0
  %665 = vmatpush1.bf16.msra.mxu0 0
  %666 = vmatprep.subr.bf16.mxu0 0
  %667 = vmatpush1.bf16.msra.mxu0 0
  %668 = vmatprep.subr.bf16.mxu0 0
  %669 = vmatpush1.bf16.msra.mxu0 0
  %670 = vmatprep.subr.bf16.mxu0 0
  %671 = vmatpush1.bf16.msra.mxu0 0
  %672 = vmatprep.subr.bf16.mxu0 0
  %673 = vmatpush1.bf16.msra.mxu0 0
  %674 = vmatprep.subr.bf16.mxu0 0
  %675 = vmatpush1.bf16.msra.mxu0 0
  %676 = vmatprep.subr.bf16.mxu0 0
  %677 = vmatpush1.bf16.msra.mxu0 0
  %678 = vmatprep.subr.bf16.mxu0 0
  %679 = vmatpush1.bf16.msra.mxu0 0
  %680 = vmatprep.subr.bf16.mxu0 0
  %681 = vmatpush1.bf16.msra.mxu0 0
  %682 = vmatprep.subr.bf16.mxu0 0
  %683 = vmatpush1.bf16.msra.mxu0 0
  %684 = vmatprep.mubr.bf16.mxu0 0
  %685 = vmatmul.mubr.bf16.gmra.mrb[0].mxu0 %v647
  %v686 = vpop.f32.mrb[0].mxu0
  %v687 = vadd.f32 0.0, %v686
  %v688 = vpop.f32.mrb[0].mxu0
  %v689 = vpop.f32.mrb[0].mxu0
  %v690 = vpop.f32.mrb[0].mxu0
  %691 = vdwg.mxu0
  %v693 = vsel %vm460, %v321, 0
  %v696 = vsel %vm464, %v393, 0
  %698 = vmatprep.subr.bf16.mxu0 0
  %699 = vmatpush1.bf16.msra.mxu0 %v696
  %700 = vmatprep.subr.bf16.mxu0 0
  %701 = vmatpush1.bf16.msra.mxu0 0
  %702 = vmatprep.subr.bf16.mxu0 0
  %703 = vmatpush1.bf16.msra.mxu0 0
  %704 = vmatprep.subr.bf16.mxu0 0
  %705 = vmatpush1.bf16.msra.mxu0 0
  %706 = vmatprep.subr.bf16.mxu0 0
  %707 = vmatpush1.bf16.msra.mxu0 0
  %708 = vmatprep.subr.bf16.mxu0 0
  %709 = vmatpush1.bf16.msra.mxu0 0
  %710 = vmatprep.subr.bf16.mxu0 0
  %711 = vmatpush1.bf16.msra.mxu0 0
  %712 = vmatprep.subr.bf16.mxu0 0
  %713 = vmatpush1.bf16.msra.mxu0 0
  %714 = vmatprep.subr.bf16.mxu0 0
  %715 = vmatpush1.bf16.msra.mxu0 0
  %716 = vmatprep.subr.bf16.mxu0 0
  %717 = vmatpush1.bf16.msra.mxu0 0
  %718 = vmatprep.subr.bf16.mxu0 0
  %719 = vmatpush1.bf16.msra.mxu0 0
  %720 = vmatprep.subr.bf16.mxu0 0
  %721 = vmatpush1.bf16.msra.mxu0 0
  %722 = vmatprep.subr.bf16.mxu0 0
  %723 = vmatpush1.bf16.msra.mxu0 0
  %724 = vmatprep.subr.bf16.mxu0 0
  %725 = vmatpush1.bf16.msra.mxu0 0
  %726 = vmatprep.subr.bf16.mxu0 0
  %727 = vmatpush1.bf16.msra.mxu0 0
  %728 = vmatprep.subr.bf16.mxu0 0
  %729 = vmatpush1.bf16.msra.mxu0 0
  %730 = vmatprep.mubr.bf16.mxu0 0
  %731 = vmatmul.mubr.bf16.gmra.mrb[0].mxu0 %v693
  %v732 = vpop.f32.mrb[0].mxu0
  %v733 = vadd.f32 0.0, %v732
  %v734 = vpop.f32.mrb[0].mxu0
  %v735 = vpop.f32.mrb[0].mxu0
  %v736 = vpop.f32.mrb[0].mxu0
  %737 = vdwg.mxu0
  %v739 = vsel %vm460, %v322, 0
  %v742 = vsel %vm464, %v394, 0
  %744 = vmatprep.subr.bf16.mxu0 0
  %745 = vmatpush1.bf16.msra.mxu0 %v742
  %746 = vmatprep.subr.bf16.mxu0 0
  %747 = vmatpush1.bf16.msra.mxu0 0
  %748 = vmatprep.subr.bf16.mxu0 0
  %749 = vmatpush1.bf16.msra.mxu0 0
  %750 = vmatprep.subr.bf16.mxu0 0
  %751 = vmatpush1.bf16.msra.mxu0 0
  %752 = vmatprep.subr.bf16.mxu0 0
  %753 = vmatpush1.bf16.msra.mxu0 0
  %754 = vmatprep.subr.bf16.mxu0 0
  %755 = vmatpush1.bf16.msra.mxu0 0
  %756 = vmatprep.subr.bf16.mxu0 0
  %757 = vmatpush1.bf16.msra.mxu0 0
  %758 = vmatprep.subr.bf16.mxu0 0
  %759 = vmatpush1.bf16.msra.mxu0 0
  %760 = vmatprep.subr.bf16.mxu0 0
  %761 = vmatpush1.bf16.msra.mxu0 0
  %762 = vmatprep.subr.bf16.mxu0 0
  %763 = vmatpush1.bf16.msra.mxu0 0
  %764 = vmatprep.subr.bf16.mxu0 0
  %765 = vmatpush1.bf16.msra.mxu0 0
  %766 = vmatprep.subr.bf16.mxu0 0
  %767 = vmatpush1.bf16.msra.mxu0 0
  %768 = vmatprep.subr.bf16.mxu0 0
  %769 = vmatpush1.bf16.msra.mxu0 0
  %770 = vmatprep.subr.bf16.mxu0 0
  %771 = vmatpush1.bf16.msra.mxu0 0
  %772 = vmatprep.subr.bf16.mxu0 0
  %773 = vmatpush1.bf16.msra.mxu0 0
  %774 = vmatprep.subr.bf16.mxu0 0
  %775 = vmatpush1.bf16.msra.mxu0 0
  %776 = vmatprep.mubr.bf16.mxu0 0
  %777 = vmatmul.mubr.bf16.gmra.mrb[0].mxu0 %v739
  %v778 = vpop.f32.mrb[0].mxu0
  %v779 = vadd.f32 0.0, %v778
  %v780 = vpop.f32.mrb[0].mxu0
  %v781 = vpop.f32.mrb[0].mxu0
  %v782 = vpop.f32.mrb[0].mxu0
  %783 = vdwg.mxu0
  %v785 = vsel %vm460, %v323, 0
  %v788 = vsel %vm464, %v395, 0
  %790 = vmatprep.subr.bf16.mxu0 0
  %791 = vmatpush1.bf16.msra.mxu0 %v788
  %792 = vmatprep.subr.bf16.mxu0 0
  %793 = vmatpush1.bf16.msra.mxu0 0
  %794 = vmatprep.subr.bf16.mxu0 0
  %795 = vmatpush1.bf16.msra.mxu0 0
  %796 = vmatprep.subr.bf16.mxu0 0
  %797 = vmatpush1.bf16.msra.mxu0 0
  %798 = vmatprep.subr.bf16.mxu0 0
  %799 = vmatpush1.bf16.msra.mxu0 0
  %800 = vmatprep.subr.bf16.mxu0 0
  %801 = vmatpush1.bf16.msra.mxu0 0
  %802 = vmatprep.subr.bf16.mxu0 0
  %803 = vmatpush1.bf16.msra.mxu0 0
  %804 = vmatprep.subr.bf16.mxu0 0
  %805 = vmatpush1.bf16.msra.mxu0 0
  %806 = vmatprep.subr.bf16.mxu0 0
  %807 = vmatpush1.bf16.msra.mxu0 0
  %808 = vmatprep.subr.bf16.mxu0 0
  %809 = vmatpush1.bf16.msra.mxu0 0
  %810 = vmatprep.subr.bf16.mxu0 0
  %811 = vmatpush1.bf16.msra.mxu0 0
  %812 = vmatprep.subr.bf16.mxu0 0
  %813 = vmatpush1.bf16.msra.mxu0 0
  %814 = vmatprep.subr.bf16.mxu0 0
  %815 = vmatpush1.bf16.msra.mxu0 0
  %816 = vmatprep.subr.bf16.mxu0 0
  %817 = vmatpush1.bf16.msra.mxu0 0
  %818 = vmatprep.subr.bf16.mxu0 0
  %819 = vmatpush1.bf16.msra.mxu0 0
  %820 = vmatprep.subr.bf16.mxu0 0
  %821 = vmatpush1.bf16.msra.mxu0 0
  %822 = vmatprep.mubr.bf16.mxu0 0
  %823 = vmatmul.mubr.bf16.gmra.mrb[0].mxu0 %v785
  %v824 = vpop.f32.mrb[0].mxu0
  %v825 = vadd.f32 0.0, %v824
  %v826 = vpop.f32.mrb[0].mxu0
  %v827 = vpop.f32.mrb[0].mxu0
  %v828 = vpop.f32.mrb[0].mxu0
  %829 = vdwg.mxu0
  %v831 = vsel %vm460, %v324, 0
  %v834 = vsel %vm464, %v396, 0
  %836 = vmatprep.subr.bf16.mxu0 0
  %837 = vmatpush1.bf16.msra.mxu0 %v834
  %838 = vmatprep.subr.bf16.mxu0 0
  %839 = vmatpush1.bf16.msra.mxu0 0
  %840 = vmatprep.subr.bf16.mxu0 0
  %841 = vmatpush1.bf16.msra.mxu0 0
  %842 = vmatprep.subr.bf16.mxu0 0
  %843 = vmatpush1.bf16.msra.mxu0 0
  %844 = vmatprep.subr.bf16.mxu0 0
  %845 = vmatpush1.bf16.msra.mxu0 0
  %846 = vmatprep.subr.bf16.mxu0 0
  %847 = vmatpush1.bf16.msra.mxu0 0
  %848 = vmatprep.subr.bf16.mxu0 0
  %849 = vmatpush1.bf16.msra.mxu0 0
  %850 = vmatprep.subr.bf16.mxu0 0
  %851 = vmatpush1.bf16.msra.mxu0 0
  %852 = vmatprep.subr.bf16.mxu0 0
  %853 = vmatpush1.bf16.msra.mxu0 0
  %854 = vmatprep.subr.bf16.mxu0 0
  %855 = vmatpush1.bf16.msra.mxu0 0
  %856 = vmatprep.subr.bf16.mxu0 0
  %857 = vmatpush1.bf16.msra.mxu0 0
  %858 = vmatprep.subr.bf16.mxu0 0
  %859 = vmatpush1.bf16.msra.mxu0 0
  %860 = vmatprep.subr.bf16.mxu0 0
  %861 = vmatpush1.bf16.msra.mxu0 0
  %862 = vmatprep.subr.bf16.mxu0 0
  %863 = vmatpush1.bf16.msra.mxu0 0
  %864 = vmatprep.subr.bf16.mxu0 0
  %865 = vmatpush1.bf16.msra.mxu0 0
  %866 = vmatprep.subr.bf16.mxu0 0
  %867 = vmatpush1.bf16.msra.mxu0 0
  %868 = vmatprep.mubr.bf16.mxu0 0
  %869 = vmatmul.mubr.bf16.gmra.mrb[0].mxu0 %v831
  %v870 = vpop.f32.mrb[0].mxu0
  %v871 = vadd.f32 0.0, %v870
  %v872 = vpop.f32.mrb[0].mxu0
  %v873 = vpop.f32.mrb[0].mxu0
  %v874 = vpop.f32.mrb[0].mxu0
  %875 = vdwg.mxu0
  %v877 = vsel %vm460, %v325, 0
  %v880 = vsel %vm464, %v397, 0
  %882 = vmatprep.subr.bf16.mxu0 0
  %883 = vmatpush1.bf16.msra.mxu0 %v880
  %884 = vmatprep.subr.bf16.mxu0 0
  %885 = vmatpush1.bf16.msra.mxu0 0
  %886 = vmatprep.subr.bf16.mxu0 0
  %887 = vmatpush1.bf16.msra.mxu0 0
  %888 = vmatprep.subr.bf16.mxu0 0
  %889 = vmatpush1.bf16.msra.mxu0 0
  %890 = vmatprep.subr.bf16.mxu0 0
  %891 = vmatpush1.bf16.msra.mxu0 0
  %892 = vmatprep.subr.bf16.mxu0 0
  %893 = vmatpush1.bf16.msra.mxu0 0
  %894 = vmatprep.subr.bf16.mxu0 0
  %895 = vmatpush1.bf16.msra.mxu0 0
  %896 = vmatprep.subr.bf16.mxu0 0
  %897 = vmatpush1.bf16.msra.mxu0 0
  %898 = vmatprep.subr.bf16.mxu0 0
  %899 = vmatpush1.bf16.msra.mxu0 0
  %900 = vmatprep.subr.bf16.mxu0 0
  %901 = vmatpush1.bf16.msra.mxu0 0
  %902 = vmatprep.subr.bf16.mxu0 0
  %903 = vmatpush1.bf16.msra.mxu0 0
  %904 = vmatprep.subr.bf16.mxu0 0
  %905 = vmatpush1.bf16.msra.mxu0 0
  %906 = vmatprep.subr.bf16.mxu0 0
  %907 = vmatpush1.bf16.msra.mxu0 0
  %908 = vmatprep.subr.bf16.mxu0 0
  %909 = vmatpush1.bf16.msra.mxu0 0
  %910 = vmatprep.subr.bf16.mxu0 0
  %911 = vmatpush1.bf16.msra.mxu0 0
  %912 = vmatprep.subr.bf16.mxu0 0
  %913 = vmatpush1.bf16.msra.mxu0 0
  %914 = vmatprep.mubr.bf16.mxu0 0
  %915 = vmatmul.mubr.bf16.gmra.mrb[0].mxu0 %v877
  %v916 = vpop.f32.mrb[0].mxu0
  %v917 = vadd.f32 0.0, %v916
  %v918 = vpop.f32.mrb[0].mxu0
  %v919 = vpop.f32.mrb[0].mxu0
  %v920 = vpop.f32.mrb[0].mxu0
  %921 = vdwg.mxu0
  %v923 = vsel %vm460, %v326, 0
  %v926 = vsel %vm464, %v398, 0
  %928 = vmatprep.subr.bf16.mxu0 0
  %929 = vmatpush1.bf16.msra.mxu0 %v926
  %930 = vmatprep.subr.bf16.mxu0 0
  %931 = vmatpush1.bf16.msra.mxu0 0
  %932 = vmatprep.subr.bf16.mxu0 0
  %933 = vmatpush1.bf16.msra.mxu0 0
  %934 = vmatprep.subr.bf16.mxu0 0
  %935 = vmatpush1.bf16.msra.mxu0 0
  %936 = vmatprep.subr.bf16.mxu0 0
  %937 = vmatpush1.bf16.msra.mxu0 0
  %938 = vmatprep.subr.bf16.mxu0 0
  %939 = vmatpush1.bf16.msra.mxu0 0
  %940 = vmatprep.subr.bf16.mxu0 0
  %941 = vmatpush1.bf16.msra.mxu0 0
  %942 = vmatprep.subr.bf16.mxu0 0
  %943 = vmatpush1.bf16.msra.mxu0 0
  %944 = vmatprep.subr.bf16.mxu0 0
  %945 = vmatpush1.bf16.msra.mxu0 0
  %946 = vmatprep.subr.bf16.mxu0 0
  %947 = vmatpush1.bf16.msra.mxu0 0
  %948 = vmatprep.subr.bf16.mxu0 0
  %949 = vmatpush1.bf16.msra.mxu0 0
  %950 = vmatprep.subr.bf16.mxu0 0
  %951 = vmatpush1.bf16.msra.mxu0 0
  %952 = vmatprep.subr.bf16.mxu0 0
  %953 = vmatpush1.bf16.msra.mxu0 0
  %954 = vmatprep.subr.bf16.mxu0 0
  %955 = vmatpush1.bf16.msra.mxu0 0
  %956 = vmatprep.subr.bf16.mxu0 0
  %957 = vmatpush1.bf16.msra.mxu0 0
  %958 = vmatprep.subr.bf16.mxu0 0
  %959 = vmatpush1.bf16.msra.mxu0 0
  %960 = vmatprep.mubr.bf16.mxu0 0
  %961 = vmatmul.mubr.bf16.gmra.mrb[0].mxu0 %v923
  %v962 = vpop.f32.mrb[0].mxu0
  %v963 = vadd.f32 0.0, %v962
  %v964 = vpop.f32.mrb[0].mxu0
  %v965 = vpop.f32.mrb[0].mxu0
  %v966 = vpop.f32.mrb[0].mxu0
  %967 = vdwg.mxu0
  %v969 = vsel %vm460, %v327, 0
  %v972 = vsel %vm464, %v399, 0
  %974 = vmatprep.subr.bf16.mxu0 0
  %975 = vmatpush1.bf16.msra.mxu0 %v972
  %976 = vmatprep.subr.bf16.mxu0 0
  %977 = vmatpush1.bf16.msra.mxu0 0
  %978 = vmatprep.subr.bf16.mxu0 0
  %979 = vmatpush1.bf16.msra.mxu0 0
  %980 = vmatprep.subr.bf16.mxu0 0
  %981 = vmatpush1.bf16.msra.mxu0 0
  %982 = vmatprep.subr.bf16.mxu0 0
  %983 = vmatpush1.bf16.msra.mxu0 0
  %984 = vmatprep.subr.bf16.mxu0 0
  %985 = vmatpush1.bf16.msra.mxu0 0
  %986 = vmatprep.subr.bf16.mxu0 0
  %987 = vmatpush1.bf16.msra.mxu0 0
  %988 = vmatprep.subr.bf16.mxu0 0
  %989 = vmatpush1.bf16.msra.mxu0 0
  %990 = vmatprep.subr.bf16.mxu0 0
  %991 = vmatpush1.bf16.msra.mxu0 0
  %992 = vmatprep.subr.bf16.mxu0 0
  %993 = vmatpush1.bf16.msra.mxu0 0
  %994 = vmatprep.subr.bf16.mxu0 0
  %995 = vmatpush1.bf16.msra.mxu0 0
  %996 = vmatprep.subr.bf16.mxu0 0
  %997 = vmatpush1.bf16.msra.mxu0 0
  %998 = vmatprep.subr.bf16.mxu0 0
  %999 = vmatpush1.bf16.msra.mxu0 0
  %1000 = vmatprep.subr.bf16.mxu0 0
  %1001 = vmatpush1.bf16.msra.mxu0 0
  %1002 = vmatprep.subr.bf16.mxu0 0
  %1003 = vmatpush1.bf16.msra.mxu0 0
  %1004 = vmatprep.subr.bf16.mxu0 0
  %1005 = vmatpush1.bf16.msra.mxu0 0
  %1006 = vmatprep.mubr.bf16.mxu0 0
  %1007 = vmatmul.mubr.bf16.gmra.mrb[0].mxu0 %v969
  %v1008 = vpop.f32.mrb[0].mxu0
  %v1009 = vadd.f32 0.0, %v1008
  %v1010 = vpop.f32.mrb[0].mxu0
  %v1011 = vpop.f32.mrb[0].mxu0
  %v1012 = vpop.f32.mrb[0].mxu0
  %1013 = vdwg.mxu0
  %v1015 = vsel %vm460, %v328, 0
  %v1018 = vsel %vm464, %v400, 0
  %1020 = vmatprep.subr.bf16.mxu0 0
  %1021 = vmatpush1.bf16.msra.mxu0 %v1018
  %1022 = vmatprep.subr.bf16.mxu0 0
  %1023 = vmatpush1.bf16.msra.mxu0 0
  %1024 = vmatprep.subr.bf16.mxu0 0
  %1025 = vmatpush1.bf16.msra.mxu0 0
  %1026 = vmatprep.subr.bf16.mxu0 0
  %1027 = vmatpush1.bf16.msra.mxu0 0
  %1028 = vmatprep.subr.bf16.mxu0 0
  %1029 = vmatpush1.bf16.msra.mxu0 0
  %1030 = vmatprep.subr.bf16.mxu0 0
  %1031 = vmatpush1.bf16.msra.mxu0 0
  %1032 = vmatprep.subr.bf16.mxu0 0
  %1033 = vmatpush1.bf16.msra.mxu0 0
  %1034 = vmatprep.subr.bf16.mxu0 0
  %1035 = vmatpush1.bf16.msra.mxu0 0
  %1036 = vmatprep.subr.bf16.mxu0 0
  %1037 = vmatpush1.bf16.msra.mxu0 0
  %1038 = vmatprep.subr.bf16.mxu0 0
  %1039 = vmatpush1.bf16.msra.mxu0 0
  %1040 = vmatprep.subr.bf16.mxu0 0
  %1041 = vmatpush1.bf16.msra.mxu0 0
  %1042 = vmatprep.subr.bf16.mxu0 0
  %1043 = vmatpush1.bf16.msra.mxu0 0
  %1044 = vmatprep.subr.bf16.mxu0 0
  %1045 = vmatpush1.bf16.msra.mxu0 0
  %1046 = vmatprep.subr.bf16.mxu0 0
  %1047 = vmatpush1.bf16.msra.mxu0 0
  %1048 = vmatprep.subr.bf16.mxu0 0
  %1049 = vmatpush1.bf16.msra.mxu0 0
  %1050 = vmatprep.subr.bf16.mxu0 0
  %1051 = vmatpush1.bf16.msra.mxu0 0
  %1052 = vmatprep.mubr.bf16.mxu0 0
  %1053 = vmatmul.mubr.bf16.gmra.mrb[0].mxu0 %v1015
  %v1054 = vpop.f32.mrb[0].mxu0
  %v1055 = vadd.f32 0.0, %v1054
  %v1056 = vpop.f32.mrb[0].mxu0
  %v1057 = vpop.f32.mrb[0].mxu0
  %v1058 = vpop.f32.mrb[0].mxu0
  %1059 = vdwg.mxu0
  %v1061 = vsel %vm460, %v329, 0
  %v1064 = vsel %vm464, %v401, 0
  %1066 = vmatprep.subr.bf16.mxu0 0
  %1067 = vmatpush1.bf16.msra.mxu0 %v1064
  %1068 = vmatprep.subr.bf16.mxu0 0
  %1069 = vmatpush1.bf16.msra.mxu0 0
  %1070 = vmatprep.subr.bf16.mxu0 0
  %1071 = vmatpush1.bf16.msra.mxu0 0
  %1072 = vmatprep.subr.bf16.mxu0 0
  %1073 = vmatpush1.bf16.msra.mxu0 0
  %1074 = vmatprep.subr.bf16.mxu0 0
  %1075 = vmatpush1.bf16.msra.mxu0 0
  %1076 = vmatprep.subr.bf16.mxu0 0
  %1077 = vmatpush1.bf16.msra.mxu0 0
  %1078 = vmatprep.subr.bf16.mxu0 0
  %1079 = vmatpush1.bf16.msra.mxu0 0
  %1080 = vmatprep.subr.bf16.mxu0 0
  %1081 = vmatpush1.bf16.msra.mxu0 0
  %1082 = vmatprep.subr.bf16.mxu0 0
  %1083 = vmatpush1.bf16.msra.mxu0 0
  %1084 = vmatprep.subr.bf16.mxu0 0
  %1085 = vmatpush1.bf16.msra.mxu0 0
  %1086 = vmatprep.subr.bf16.mxu0 0
  %1087 = vmatpush1.bf16.msra.mxu0 0
  %1088 = vmatprep.subr.bf16.mxu0 0
  %1089 = vmatpush1.bf16.msra.mxu0 0
  %1090 = vmatprep.subr.bf16.mxu0 0
  %1091 = vmatpush1.bf16.msra.mxu0 0
  %1092 = vmatprep.subr.bf16.mxu0 0
  %1093 = vmatpush1.bf16.msra.mxu0 0
  %1094 = vmatprep.subr.bf16.mxu0 0
  %1095 = vmatpush1.bf16.msra.mxu0 0
  %1096 = vmatprep.subr.bf16.mxu0 0
  %1097 = vmatpush1.bf16.msra.mxu0 0
  %1098 = vmatprep.mubr.bf16.mxu0 0
  %1099 = vmatmul.mubr.bf16.gmra.mrb[0].mxu0 %v1061
  %v1100 = vpop.f32.mrb[0].mxu0
  %v1101 = vadd.f32 0.0, %v1100
  %v1102 = vpop.f32.mrb[0].mxu0
  %v1103 = vpop.f32.mrb[0].mxu0
  %v1104 = vpop.f32.mrb[0].mxu0
  %1105 = vdwg.mxu0
  %v1107 = vsel %vm460, %v330, 0
  %v1110 = vsel %vm464, %v402, 0
  %1112 = vmatprep.subr.bf16.mxu0 0
  %1113 = vmatpush1.bf16.msra.mxu0 %v1110
  %1114 = vmatprep.subr.bf16.mxu0 0
  %1115 = vmatpush1.bf16.msra.mxu0 0
  %1116 = vmatprep.subr.bf16.mxu0 0
  %1117 = vmatpush1.bf16.msra.mxu0 0
  %1118 = vmatprep.subr.bf16.mxu0 0
  %1119 = vmatpush1.bf16.msra.mxu0 0
  %1120 = vmatprep.subr.bf16.mxu0 0
  %1121 = vmatpush1.bf16.msra.mxu0 0
  %1122 = vmatprep.subr.bf16.mxu0 0
  %1123 = vmatpush1.bf16.msra.mxu0 0
  %1124 = vmatprep.subr.bf16.mxu0 0
  %1125 = vmatpush1.bf16.msra.mxu0 0
  %1126 = vmatprep.subr.bf16.mxu0 0
  %1127 = vmatpush1.bf16.msra.mxu0 0
  %1128 = vmatprep.subr.bf16.mxu0 0
  %1129 = vmatpush1.bf16.msra.mxu0 0
  %1130 = vmatprep.subr.bf16.mxu0 0
  %1131 = vmatpush1.bf16.msra.mxu0 0
  %1132 = vmatprep.subr.bf16.mxu0 0
  %1133 = vmatpush1.bf16.msra.mxu0 0
  %1134 = vmatprep.subr.bf16.mxu0 0
  %1135 = vmatpush1.bf16.msra.mxu0 0
  %1136 = vmatprep.subr.bf16.mxu0 0
  %1137 = vmatpush1.bf16.msra.mxu0 0
  %1138 = vmatprep.subr.bf16.mxu0 0
  %1139 = vmatpush1.bf16.msra.mxu0 0
  %1140 = vmatprep.subr.bf16.mxu0 0
  %1141 = vmatpush1.bf16.msra.mxu0 0
  %1142 = vmatprep.subr.bf16.mxu0 0
  %1143 = vmatpush1.bf16.msra.mxu0 0
  %1144 = vmatprep.mubr.bf16.mxu0 0
  %1145 = vmatmul.mubr.bf16.gmra.mrb[0].mxu0 %v1107
  %v1146 = vpop.f32.mrb[0].mxu0
  %v1147 = vadd.f32 0.0, %v1146
  %v1148 = vpop.f32.mrb[0].mxu0
  %v1149 = vpop.f32.mrb[0].mxu0
  %v1150 = vpop.f32.mrb[0].mxu0
  %1151 = vdwg.mxu0
  %v1153 = vsel %vm460, %v331, 0
  %v1156 = vsel %vm464, %v403, 0
  %1158 = vmatprep.subr.bf16.mxu0 0
  %1159 = vmatpush1.bf16.msra.mxu0 %v1156
  %1160 = vmatprep.subr.bf16.mxu0 0
  %1161 = vmatpush1.bf16.msra.mxu0 0
  %1162 = vmatprep.subr.bf16.mxu0 0
  %1163 = vmatpush1.bf16.msra.mxu0 0
  %1164 = vmatprep.subr.bf16.mxu0 0
  %1165 = vmatpush1.bf16.msra.mxu0 0
  %1166 = vmatprep.subr.bf16.mxu0 0
  %1167 = vmatpush1.bf16.msra.mxu0 0
  %1168 = vmatprep.subr.bf16.mxu0 0
  %1169 = vmatpush1.bf16.msra.mxu0 0
  %1170 = vmatprep.subr.bf16.mxu0 0
  %1171 = vmatpush1.bf16.msra.mxu0 0
  %1172 = vmatprep.subr.bf16.mxu0 0
  %1173 = vmatpush1.bf16.msra.mxu0 0
  %1174 = vmatprep.subr.bf16.mxu0 0
  %1175 = vmatpush1.bf16.msra.mxu0 0
  %1176 = vmatprep.subr.bf16.mxu0 0
  %1177 = vmatpush1.bf16.msra.mxu0 0
  %1178 = vmatprep.subr.bf16.mxu0 0
  %1179 = vmatpush1.bf16.msra.mxu0 0
  %1180 = vmatprep.subr.bf16.mxu0 0
  %1181 = vmatpush1.bf16.msra.mxu0 0
  %1182 = vmatprep.subr.bf16.mxu0 0
  %1183 = vmatpush1.bf16.msra.mxu0 0
  %1184 = vmatprep.subr.bf16.mxu0 0
  %1185 = vmatpush1.bf16.msra.mxu0 0
  %1186 = vmatprep.subr.bf16.mxu0 0
  %1187 = vmatpush1.bf16.msra.mxu0 0
  %1188 = vmatprep.subr.bf16.mxu0 0
  %1189 = vmatpush1.bf16.msra.mxu0 0
  %1190 = vmatprep.mubr.bf16.mxu0 0
  %1191 = vmatmul.mubr.bf16.gmra.mrb[0].mxu0 %v1153
  %v1192 = vpop.f32.mrb[0].mxu0
  %v1193 = vadd.f32 0.0, %v1192
  %v1194 = vpop.f32.mrb[0].mxu0
  %v1195 = vpop.f32.mrb[0].mxu0
  %v1196 = vpop.f32.mrb[0].mxu0
  %1197 = vdwg.mxu0
  %v1199 = vsel %vm460, %v332, 0
  %v1202 = vsel %vm464, %v404, 0
  %1204 = vmatprep.subr.bf16.mxu0 0
  %1205 = vmatpush1.bf16.msra.mxu0 %v1202
  %1206 = vmatprep.subr.bf16.mxu0 0
  %1207 = vmatpush1.bf16.msra.mxu0 0
  %1208 = vmatprep.subr.bf16.mxu0 0
  %1209 = vmatpush1.bf16.msra.mxu0 0
  %1210 = vmatprep.subr.bf16.mxu0 0
  %1211 = vmatpush1.bf16.msra.mxu0 0
  %1212 = vmatprep.subr.bf16.mxu0 0
  %1213 = vmatpush1.bf16.msra.mxu0 0
  %1214 = vmatprep.subr.bf16.mxu0 0
  %1215 = vmatpush1.bf16.msra.mxu0 0
  %1216 = vmatprep.subr.bf16.mxu0 0
  %1217 = vmatpush1.bf16.msra.mxu0 0
  %1218 = vmatprep.subr.bf16.mxu0 0
  %1219 = vmatpush1.bf16.msra.mxu0 0
  %1220 = vmatprep.subr.bf16.mxu0 0
  %1221 = vmatpush1.bf16.msra.mxu0 0
  %1222 = vmatprep.subr.bf16.mxu0 0
  %1223 = vmatpush1.bf16.msra.mxu0 0
  %1224 = vmatprep.subr.bf16.mxu0 0
  %1225 = vmatpush1.bf16.msra.mxu0 0
  %1226 = vmatprep.subr.bf16.mxu0 0
  %1227 = vmatpush1.bf16.msra.mxu0 0
  %1228 = vmatprep.subr.bf16.mxu0 0
  %1229 = vmatpush1.bf16.msra.mxu0 0
  %1230 = vmatprep.subr.bf16.mxu0 0
  %1231 = vmatpush1.bf16.msra.mxu0 0
  %1232 = vmatprep.subr.bf16.mxu0 0
  %1233 = vmatpush1.bf16.msra.mxu0 0
  %1234 = vmatprep.subr.bf16.mxu0 0
  %1235 = vmatpush1.bf16.msra.mxu0 0
  %1236 = vmatprep.mubr.bf16.mxu0 0
  %1237 = vmatmul.mubr.bf16.gmra.mrb[0].mxu0 %v1199
  %v1238 = vpop.f32.mrb[0].mxu0
  %v1239 = vadd.f32 0.0, %v1238
  %v1240 = vpop.f32.mrb[0].mxu0
  %v1241 = vpop.f32.mrb[0].mxu0
  %v1242 = vpop.f32.mrb[0].mxu0
  %1243 = vdwg.mxu0
  %v1245 = vsel %vm460, %v333, 0
  %v1248 = vsel %vm464, %v405, 0
  %1250 = vmatprep.subr.bf16.mxu0 0
  %1251 = vmatpush1.bf16.msra.mxu0 %v1248
  %1252 = vmatprep.subr.bf16.mxu0 0
  %1253 = vmatpush1.bf16.msra.mxu0 0
  %1254 = vmatprep.subr.bf16.mxu0 0
  %1255 = vmatpush1.bf16.msra.mxu0 0
  %1256 = vmatprep.subr.bf16.mxu0 0
  %1257 = vmatpush1.bf16.msra.mxu0 0
  %1258 = vmatprep.subr.bf16.mxu0 0
  %1259 = vmatpush1.bf16.msra.mxu0 0
  %1260 = vmatprep.subr.bf16.mxu0 0
  %1261 = vmatpush1.bf16.msra.mxu0 0
  %1262 = vmatprep.subr.bf16.mxu0 0
  %1263 = vmatpush1.bf16.msra.mxu0 0
  %1264 = vmatprep.subr.bf16.mxu0 0
  %1265 = vmatpush1.bf16.msra.mxu0 0
  %1266 = vmatprep.subr.bf16.mxu0 0
  %1267 = vmatpush1.bf16.msra.mxu0 0
  %1268 = vmatprep.subr.bf16.mxu0 0
  %1269 = vmatpush1.bf16.msra.mxu0 0
  %1270 = vmatprep.subr.bf16.mxu0 0
  %1271 = vmatpush1.bf16.msra.mxu0 0
  %1272 = vmatprep.subr.bf16.mxu0 0
  %1273 = vmatpush1.bf16.msra.mxu0 0
  %1274 = vmatprep.subr.bf16.mxu0 0
  %1275 = vmatpush1.bf16.msra.mxu0 0
  %1276 = vmatprep.subr.bf16.mxu0 0
  %1277 = vmatpush1.bf16.msra.mxu0 0
  %1278 = vmatprep.subr.bf16.mxu0 0
  %1279 = vmatpush1.bf16.msra.mxu0 0
  %1280 = vmatprep.subr.bf16.mxu0 0
  %1281 = vmatpush1.bf16.msra.mxu0 0
  %1282 = vmatprep.mubr.bf16.mxu0 0
  %1283 = vmatmul.mubr.bf16.gmra.mrb[0].mxu0 %v1245
  %v1284 = vpop.f32.mrb[0].mxu0
  %v1285 = vadd.f32 0.0, %v1284
  %v1286 = vpop.f32.mrb[0].mxu0
  %v1287 = vpop.f32.mrb[0].mxu0
  %v1288 = vpop.f32.mrb[0].mxu0
  %1289 = vdwg.mxu0
  %v1291 = vsel %vm460, %v334, 0
  %v1294 = vsel %vm464, %v406, 0
  %1296 = vmatprep.subr.bf16.mxu0 0
  %1297 = vmatpush1.bf16.msra.mxu0 %v1294
  %1298 = vmatprep.subr.bf16.mxu0 0
  %1299 = vmatpush1.bf16.msra.mxu0 0
  %1300 = vmatprep.subr.bf16.mxu0 0
  %1301 = vmatpush1.bf16.msra.mxu0 0
  %1302 = vmatprep.subr.bf16.mxu0 0
  %1303 = vmatpush1.bf16.msra.mxu0 0
  %1304 = vmatprep.subr.bf16.mxu0 0
  %1305 = vmatpush1.bf16.msra.mxu0 0
  %1306 = vmatprep.subr.bf16.mxu0 0
  %1307 = vmatpush1.bf16.msra.mxu0 0
  %1308 = vmatprep.subr.bf16.mxu0 0
  %1309 = vmatpush1.bf16.msra.mxu0 0
  %1310 = vmatprep.subr.bf16.mxu0 0
  %1311 = vmatpush1.bf16.msra.mxu0 0
  %1312 = vmatprep.subr.bf16.mxu0 0
  %1313 = vmatpush1.bf16.msra.mxu0 0
  %1314 = vmatprep.subr.bf16.mxu0 0
  %1315 = vmatpush1.bf16.msra.mxu0 0
  %1316 = vmatprep.subr.bf16.mxu0 0
  %1317 = vmatpush1.bf16.msra.mxu0 0
  %1318 = vmatprep.subr.bf16.mxu0 0
  %1319 = vmatpush1.bf16.msra.mxu0 0
  %1320 = vmatprep.subr.bf16.mxu0 0
  %1321 = vmatpush1.bf16.msra.mxu0 0
  %1322 = vmatprep.subr.bf16.mxu0 0
  %1323 = vmatpush1.bf16.msra.mxu0 0
  %1324 = vmatprep.subr.bf16.mxu0 0
  %1325 = vmatpush1.bf16.msra.mxu0 0
  %1326 = vmatprep.subr.bf16.mxu0 0
  %1327 = vmatpush1.bf16.msra.mxu0 0
  %1328 = vmatprep.mubr.bf16.mxu0 0
  %1329 = vmatmul.mubr.bf16.gmra.mrb[0].mxu0 %v1291
  %v1330 = vpop.f32.mrb[0].mxu0
  %v1331 = vadd.f32 0.0, %v1330
  %v1332 = vpop.f32.mrb[0].mxu0
  %v1333 = vpop.f32.mrb[0].mxu0
  %v1334 = vpop.f32.mrb[0].mxu0
  %1335 = vdwg.mxu0
  %v1337 = vsel %vm460, %v335, 0
  %v1340 = vsel %vm464, %v407, 0
  %1342 = vmatprep.subr.bf16.mxu0 0
  %1343 = vmatpush1.bf16.msra.mxu0 %v1340
  %1344 = vmatprep.subr.bf16.mxu0 0
  %1345 = vmatpush1.bf16.msra.mxu0 0
  %1346 = vmatprep.subr.bf16.mxu0 0
  %1347 = vmatpush1.bf16.msra.mxu0 0
  %1348 = vmatprep.subr.bf16.mxu0 0
  %1349 = vmatpush1.bf16.msra.mxu0 0
  %1350 = vmatprep.subr.bf16.mxu0 0
  %1351 = vmatpush1.bf16.msra.mxu0 0
  %1352 = vmatprep.subr.bf16.mxu0 0
  %1353 = vmatpush1.bf16.msra.mxu0 0
  %1354 = vmatprep.subr.bf16.mxu0 0
  %1355 = vmatpush1.bf16.msra.mxu0 0
  %1356 = vmatprep.subr.bf16.mxu0 0
  %1357 = vmatpush1.bf16.msra.mxu0 0
  %1358 = vmatprep.subr.bf16.mxu0 0
  %1359 = vmatpush1.bf16.msra.mxu0 0
  %1360 = vmatprep.subr.bf16.mxu0 0
  %1361 = vmatpush1.bf16.msra.mxu0 0
  %1362 = vmatprep.subr.bf16.mxu0 0
  %1363 = vmatpush1.bf16.msra.mxu0 0
  %1364 = vmatprep.subr.bf16.mxu0 0
  %1365 = vmatpush1.bf16.msra.mxu0 0
  %1366 = vmatprep.subr.bf16.mxu0 0
  %1367 = vmatpush1.bf16.msra.mxu0 0
  %1368 = vmatprep.subr.bf16.mxu0 0
  %1369 = vmatpush1.bf16.msra.mxu0 0
  %1370 = vmatprep.subr.bf16.mxu0 0
  %1371 = vmatpush1.bf16.msra.mxu0 0
  %1372 = vmatprep.subr.bf16.mxu0 0
  %1373 = vmatpush1.bf16.msra.mxu0 0
  %1374 = vmatprep.mubr.bf16.mxu0 0
  %1375 = vmatmul.mubr.bf16.gmra.mrb[0].mxu0 %v1337
  %v1376 = vpop.f32.mrb[0].mxu0
  %v1377 = vadd.f32 0.0, %v1376
  %v1378 = vpop.f32.mrb[0].mxu0
  %v1379 = vpop.f32.mrb[0].mxu0
  %v1380 = vpop.f32.mrb[0].mxu0
  %1381 = vdwg.mxu0
  %v1383 = vsel %vm460, %v336, 0
  %v1386 = vsel %vm464, %v408, 0
  %1388 = vmatprep.subr.bf16.mxu0 0
  %1389 = vmatpush1.bf16.msra.mxu0 %v1386
  %1390 = vmatprep.subr.bf16.mxu0 0
  %1391 = vmatpush1.bf16.msra.mxu0 0
  %1392 = vmatprep.subr.bf16.mxu0 0
  %1393 = vmatpush1.bf16.msra.mxu0 0
  %1394 = vmatprep.subr.bf16.mxu0 0
  %1395 = vmatpush1.bf16.msra.mxu0 0
  %1396 = vmatprep.subr.bf16.mxu0 0
  %1397 = vmatpush1.bf16.msra.mxu0 0
  %1398 = vmatprep.subr.bf16.mxu0 0
  %1399 = vmatpush1.bf16.msra.mxu0 0
  %1400 = vmatprep.subr.bf16.mxu0 0
  %1401 = vmatpush1.bf16.msra.mxu0 0
  %1402 = vmatprep.subr.bf16.mxu0 0
  %1403 = vmatpush1.bf16.msra.mxu0 0
  %1404 = vmatprep.subr.bf16.mxu0 0
  %1405 = vmatpush1.bf16.msra.mxu0 0
  %1406 = vmatprep.subr.bf16.mxu0 0
  %1407 = vmatpush1.bf16.msra.mxu0 0
  %1408 = vmatprep.subr.bf16.mxu0 0
  %1409 = vmatpush1.bf16.msra.mxu0 0
  %1410 = vmatprep.subr.bf16.mxu0 0
  %1411 = vmatpush1.bf16.msra.mxu0 0
  %1412 = vmatprep.subr.bf16.mxu0 0
  %1413 = vmatpush1.bf16.msra.mxu0 0
  %1414 = vmatprep.subr.bf16.mxu0 0
  %1415 = vmatpush1.bf16.msra.mxu0 0
  %1416 = vmatprep.subr.bf16.mxu0 0
  %1417 = vmatpush1.bf16.msra.mxu0 0
  %1418 = vmatprep.subr.bf16.mxu0 0
  %1419 = vmatpush1.bf16.msra.mxu0 0
  %1420 = vmatprep.mubr.bf16.mxu0 0
  %1421 = vmatmul.mubr.bf16.gmra.mrb[0].mxu0 %v1383
  %v1422 = vpop.f32.mrb[0].mxu0
  %v1423 = vadd.f32 0.0, %v1422
  %v1424 = vpop.f32.mrb[0].mxu0
  %v1425 = vpop.f32.mrb[0].mxu0
  %v1426 = vpop.f32.mrb[0].mxu0
  %1427 = vdwg.mxu0
  %v1429 = vsel %vm460, %v337, 0
  %v1432 = vsel %vm464, %v409, 0
  %1434 = vmatprep.subr.bf16.mxu0 0
  %1435 = vmatpush1.bf16.msra.mxu0 %v1432
  %1436 = vmatprep.subr.bf16.mxu0 0
  %1437 = vmatpush1.bf16.msra.mxu0 0
  %1438 = vmatprep.subr.bf16.mxu0 0
  %1439 = vmatpush1.bf16.msra.mxu0 0
  %1440 = vmatprep.subr.bf16.mxu0 0
  %1441 = vmatpush1.bf16.msra.mxu0 0
  %1442 = vmatprep.subr.bf16.mxu0 0
  %1443 = vmatpush1.bf16.msra.mxu0 0
  %1444 = vmatprep.subr.bf16.mxu0 0
  %1445 = vmatpush1.bf16.msra.mxu0 0
  %1446 = vmatprep.subr.bf16.mxu0 0
  %1447 = vmatpush1.bf16.msra.mxu0 0
  %1448 = vmatprep.subr.bf16.mxu0 0
  %1449 = vmatpush1.bf16.msra.mxu0 0
  %1450 = vmatprep.subr.bf16.mxu0 0
  %1451 = vmatpush1.bf16.msra.mxu0 0
  %1452 = vmatprep.subr.bf16.mxu0 0
  %1453 = vmatpush1.bf16.msra.mxu0 0
  %1454 = vmatprep.subr.bf16.mxu0 0
  %1455 = vmatpush1.bf16.msra.mxu0 0
  %1456 = vmatprep.subr.bf16.mxu0 0
  %1457 = vmatpush1.bf16.msra.mxu0 0
  %1458 = vmatprep.subr.bf16.mxu0 0
  %1459 = vmatpush1.bf16.msra.mxu0 0
  %1460 = vmatprep.subr.bf16.mxu0 0
  %1461 = vmatpush1.bf16.msra.mxu0 0
  %1462 = vmatprep.subr.bf16.mxu0 0
  %1463 = vmatpush1.bf16.msra.mxu0 0
  %1464 = vmatprep.subr.bf16.mxu0 0
  %1465 = vmatpush1.bf16.msra.mxu0 0
  %1466 = vmatprep.mubr.bf16.mxu0 0
  %1467 = vmatmul.mubr.bf16.gmra.mrb[0].mxu0 %v1429
  %v1468 = vpop.f32.mrb[0].mxu0
  %v1469 = vadd.f32 0.0, %v1468
  %v1470 = vpop.f32.mrb[0].mxu0
  %v1471 = vpop.f32.mrb[0].mxu0
  %v1472 = vpop.f32.mrb[0].mxu0
  %1473 = vdwg.mxu0
  %v1475 = vsel %vm460, %v338, 0
  %v1478 = vsel %vm464, %v410, 0
  %1480 = vmatprep.subr.bf16.mxu0 0
  %1481 = vmatpush1.bf16.msra.mxu0 %v1478
  %1482 = vmatprep.subr.bf16.mxu0 0
  %1483 = vmatpush1.bf16.msra.mxu0 0
  %1484 = vmatprep.subr.bf16.mxu0 0
  %1485 = vmatpush1.bf16.msra.mxu0 0
  %1486 = vmatprep.subr.bf16.mxu0 0
  %1487 = vmatpush1.bf16.msra.mxu0 0
  %1488 = vmatprep.subr.bf16.mxu0 0
  %1489 = vmatpush1.bf16.msra.mxu0 0
  %1490 = vmatprep.subr.bf16.mxu0 0
  %1491 = vmatpush1.bf16.msra.mxu0 0
  %1492 = vmatprep.subr.bf16.mxu0 0
  %1493 = vmatpush1.bf16.msra.mxu0 0
  %1494 = vmatprep.subr.bf16.mxu0 0
  %1495 = vmatpush1.bf16.msra.mxu0 0
  %1496 = vmatprep.subr.bf16.mxu0 0
  %1497 = vmatpush1.bf16.msra.mxu0 0
  %1498 = vmatprep.subr.bf16.mxu0 0
  %1499 = vmatpush1.bf16.msra.mxu0 0
  %1500 = vmatprep.subr.bf16.mxu0 0
  %1501 = vmatpush1.bf16.msra.mxu0 0
  %1502 = vmatprep.subr.bf16.mxu0 0
  %1503 = vmatpush1.bf16.msra.mxu0 0
  %1504 = vmatprep.subr.bf16.mxu0 0
  %1505 = vmatpush1.bf16.msra.mxu0 0
  %1506 = vmatprep.subr.bf16.mxu0 0
  %1507 = vmatpush1.bf16.msra.mxu0 0
  %1508 = vmatprep.subr.bf16.mxu0 0
  %1509 = vmatpush1.bf16.msra.mxu0 0
  %1510 = vmatprep.subr.bf16.mxu0 0
  %1511 = vmatpush1.bf16.msra.mxu0 0
  %1512 = vmatprep.mubr.bf16.mxu0 0
  %1513 = vmatmul.mubr.bf16.gmra.mrb[0].mxu0 %v1475
  %v1514 = vpop.f32.mrb[0].mxu0
  %v1515 = vadd.f32 0.0, %v1514
  %v1516 = vpop.f32.mrb[0].mxu0
  %v1517 = vpop.f32.mrb[0].mxu0
  %v1518 = vpop.f32.mrb[0].mxu0
  %1519 = vdwg.mxu0
  %v1521 = vsel %vm460, %v339, 0
  %v1524 = vsel %vm464, %v411, 0
  %1526 = vmatprep.subr.bf16.mxu0 0
  %1527 = vmatpush1.bf16.msra.mxu0 %v1524
  %1528 = vmatprep.subr.bf16.mxu0 0
  %1529 = vmatpush1.bf16.msra.mxu0 0
  %1530 = vmatprep.subr.bf16.mxu0 0
  %1531 = vmatpush1.bf16.msra.mxu0 0
  %1532 = vmatprep.subr.bf16.mxu0 0
  %1533 = vmatpush1.bf16.msra.mxu0 0
  %1534 = vmatprep.subr.bf16.mxu0 0
  %1535 = vmatpush1.bf16.msra.mxu0 0
  %1536 = vmatprep.subr.bf16.mxu0 0
  %1537 = vmatpush1.bf16.msra.mxu0 0
  %1538 = vmatprep.subr.bf16.mxu0 0
  %1539 = vmatpush1.bf16.msra.mxu0 0
  %1540 = vmatprep.subr.bf16.mxu0 0
  %1541 = vmatpush1.bf16.msra.mxu0 0
  %1542 = vmatprep.subr.bf16.mxu0 0
  %1543 = vmatpush1.bf16.msra.mxu0 0
  %1544 = vmatprep.subr.bf16.mxu0 0
  %1545 = vmatpush1.bf16.msra.mxu0 0
  %1546 = vmatprep.subr.bf16.mxu0 0
  %1547 = vmatpush1.bf16.msra.mxu0 0
  %1548 = vmatprep.subr.bf16.mxu0 0
  %1549 = vmatpush1.bf16.msra.mxu0 0
  %1550 = vmatprep.subr.bf16.mxu0 0
  %1551 = vmatpush1.bf16.msra.mxu0 0
  %1552 = vmatprep.subr.bf16.mxu0 0
  %1553 = vmatpush1.bf16.msra.mxu0 0
  %1554 = vmatprep.subr.bf16.mxu0 0
  %1555 = vmatpush1.bf16.msra.mxu0 0
  %1556 = vmatprep.subr.bf16.mxu0 0
  %1557 = vmatpush1.bf16.msra.mxu0 0
  %1558 = vmatprep.mubr.bf16.mxu0 0
  %1559 = vmatmul.mubr.bf16.gmra.mrb[0].mxu0 %v1521
  %v1560 = vpop.f32.mrb[0].mxu0
  %v1561 = vadd.f32 0.0, %v1560
  %v1562 = vpop.f32.mrb[0].mxu0
  %v1563 = vpop.f32.mrb[0].mxu0
  %v1564 = vpop.f32.mrb[0].mxu0
  %1565 = vdwg.mxu0
  %v1567 = vsel %vm460, %v340, 0
  %v1570 = vsel %vm464, %v412, 0
  %1572 = vmatprep.subr.bf16.mxu0 0
  %1573 = vmatpush1.bf16.msra.mxu0 %v1570
  %1574 = vmatprep.subr.bf16.mxu0 0
  %1575 = vmatpush1.bf16.msra.mxu0 0
  %1576 = vmatprep.subr.bf16.mxu0 0
  %1577 = vmatpush1.bf16.msra.mxu0 0
  %1578 = vmatprep.subr.bf16.mxu0 0
  %1579 = vmatpush1.bf16.msra.mxu0 0
  %1580 = vmatprep.subr.bf16.mxu0 0
  %1581 = vmatpush1.bf16.msra.mxu0 0
  %1582 = vmatprep.subr.bf16.mxu0 0
  %1583 = vmatpush1.bf16.msra.mxu0 0
  %1584 = vmatprep.subr.bf16.mxu0 0
  %1585 = vmatpush1.bf16.msra.mxu0 0
  %1586 = vmatprep.subr.bf16.mxu0 0
  %1587 = vmatpush1.bf16.msra.mxu0 0
  %1588 = vmatprep.subr.bf16.mxu0 0
  %1589 = vmatpush1.bf16.msra.mxu0 0
  %1590 = vmatprep.subr.bf16.mxu0 0
  %1591 = vmatpush1.bf16.msra.mxu0 0
  %1592 = vmatprep.subr.bf16.mxu0 0
  %1593 = vmatpush1.bf16.msra.mxu0 0
  %1594 = vmatprep.subr.bf16.mxu0 0
  %1595 = vmatpush1.bf16.msra.mxu0 0
  %1596 = vmatprep.subr.bf16.mxu0 0
  %1597 = vmatpush1.bf16.msra.mxu0 0
  %1598 = vmatprep.subr.bf16.mxu0 0
  %1599 = vmatpush1.bf16.msra.mxu0 0
  %1600 = vmatprep.subr.bf16.mxu0 0
  %1601 = vmatpush1.bf16.msra.mxu0 0
  %1602 = vmatprep.subr.bf16.mxu0 0
  %1603 = vmatpush1.bf16.msra.mxu0 0
  %1604 = vmatprep.mubr.bf16.mxu0 0
  %1605 = vmatmul.mubr.bf16.gmra.mrb[0].mxu0 %v1567
  %v1606 = vpop.f32.mrb[0].mxu0
  %v1607 = vadd.f32 0.0, %v1606
  %v1608 = vpop.f32.mrb[0].mxu0
  %v1609 = vpop.f32.mrb[0].mxu0
  %v1610 = vpop.f32.mrb[0].mxu0
  %1611 = vdwg.mxu0
  %v1613 = vsel %vm460, %v341, 0
  %v1616 = vsel %vm464, %v413, 0
  %1618 = vmatprep.subr.bf16.mxu0 0
  %1619 = vmatpush1.bf16.msra.mxu0 %v1616
  %1620 = vmatprep.subr.bf16.mxu0 0
  %1621 = vmatpush1.bf16.msra.mxu0 0
  %1622 = vmatprep.subr.bf16.mxu0 0
  %1623 = vmatpush1.bf16.msra.mxu0 0
  %1624 = vmatprep.subr.bf16.mxu0 0
  %1625 = vmatpush1.bf16.msra.mxu0 0
  %1626 = vmatprep.subr.bf16.mxu0 0
  %1627 = vmatpush1.bf16.msra.mxu0 0
  %1628 = vmatprep.subr.bf16.mxu0 0
  %1629 = vmatpush1.bf16.msra.mxu0 0
  %1630 = vmatprep.subr.bf16.mxu0 0
  %1631 = vmatpush1.bf16.msra.mxu0 0
  %1632 = vmatprep.subr.bf16.mxu0 0
  %1633 = vmatpush1.bf16.msra.mxu0 0
  %1634 = vmatprep.subr.bf16.mxu0 0
  %1635 = vmatpush1.bf16.msra.mxu0 0
  %1636 = vmatprep.subr.bf16.mxu0 0
  %1637 = vmatpush1.bf16.msra.mxu0 0
  %1638 = vmatprep.subr.bf16.mxu0 0
  %1639 = vmatpush1.bf16.msra.mxu0 0
  %1640 = vmatprep.subr.bf16.mxu0 0
  %1641 = vmatpush1.bf16.msra.mxu0 0
  %1642 = vmatprep.subr.bf16.mxu0 0
  %1643 = vmatpush1.bf16.msra.mxu0 0
  %1644 = vmatprep.subr.bf16.mxu0 0
  %1645 = vmatpush1.bf16.msra.mxu0 0
  %1646 = vmatprep.subr.bf16.mxu0 0
  %1647 = vmatpush1.bf16.msra.mxu0 0
  %1648 = vmatprep.subr.bf16.mxu0 0
  %1649 = vmatpush1.bf16.msra.mxu0 0
  %1650 = vmatprep.mubr.bf16.mxu0 0
  %1651 = vmatmul.mubr.bf16.gmra.mrb[0].mxu0 %v1613
  %v1652 = vpop.f32.mrb[0].mxu0
  %v1653 = vadd.f32 0.0, %v1652
  %v1654 = vpop.f32.mrb[0].mxu0
  %v1655 = vpop.f32.mrb[0].mxu0
  %v1656 = vpop.f32.mrb[0].mxu0
  %1657 = vdwg.mxu0
  %v1659 = vsel %vm460, %v342, 0
  %v1662 = vsel %vm464, %v414, 0
  %1664 = vmatprep.subr.bf16.mxu0 0
  %1665 = vmatpush1.bf16.msra.mxu0 %v1662
  %1666 = vmatprep.subr.bf16.mxu0 0
  %1667 = vmatpush1.bf16.msra.mxu0 0
  %1668 = vmatprep.subr.bf16.mxu0 0
  %1669 = vmatpush1.bf16.msra.mxu0 0
  %1670 = vmatprep.subr.bf16.mxu0 0
  %1671 = vmatpush1.bf16.msra.mxu0 0
  %1672 = vmatprep.subr.bf16.mxu0 0
  %1673 = vmatpush1.bf16.msra.mxu0 0
  %1674 = vmatprep.subr.bf16.mxu0 0
  %1675 = vmatpush1.bf16.msra.mxu0 0
  %1676 = vmatprep.subr.bf16.mxu0 0
  %1677 = vmatpush1.bf16.msra.mxu0 0
  %1678 = vmatprep.subr.bf16.mxu0 0
  %1679 = vmatpush1.bf16.msra.mxu0 0
  %1680 = vmatprep.subr.bf16.mxu0 0
  %1681 = vmatpush1.bf16.msra.mxu0 0
  %1682 = vmatprep.subr.bf16.mxu0 0
  %1683 = vmatpush1.bf16.msra.mxu0 0
  %1684 = vmatprep.subr.bf16.mxu0 0
  %1685 = vmatpush1.bf16.msra.mxu0 0
  %1686 = vmatprep.subr.bf16.mxu0 0
  %1687 = vmatpush1.bf16.msra.mxu0 0
  %1688 = vmatprep.subr.bf16.mxu0 0
  %1689 = vmatpush1.bf16.msra.mxu0 0
  %1690 = vmatprep.subr.bf16.mxu0 0
  %1691 = vmatpush1.bf16.msra.mxu0 0
  %1692 = vmatprep.subr.bf16.mxu0 0
  %1693 = vmatpush1.bf16.msra.mxu0 0
  %1694 = vmatprep.subr.bf16.mxu0 0
  %1695 = vmatpush1.bf16.msra.mxu0 0
  %1696 = vmatprep.mubr.bf16.mxu0 0
  %1697 = vmatmul.mubr.bf16.gmra.mrb[0].mxu0 %v1659
  %v1698 = vpop.f32.mrb[0].mxu0
  %v1699 = vadd.f32 0.0, %v1698
  %v1700 = vpop.f32.mrb[0].mxu0
  %v1701 = vpop.f32.mrb[0].mxu0
  %v1702 = vpop.f32.mrb[0].mxu0
  %1703 = vdwg.mxu0
  %v1705 = vsel %vm460, %v343, 0
  %v1708 = vsel %vm464, %v415, 0
  %1710 = vmatprep.subr.bf16.mxu0 0
  %1711 = vmatpush1.bf16.msra.mxu0 %v1708
  %1712 = vmatprep.subr.bf16.mxu0 0
  %1713 = vmatpush1.bf16.msra.mxu0 0
  %1714 = vmatprep.subr.bf16.mxu0 0
  %1715 = vmatpush1.bf16.msra.mxu0 0
  %1716 = vmatprep.subr.bf16.mxu0 0
  %1717 = vmatpush1.bf16.msra.mxu0 0
  %1718 = vmatprep.subr.bf16.mxu0 0
  %1719 = vmatpush1.bf16.msra.mxu0 0
  %1720 = vmatprep.subr.bf16.mxu0 0
  %1721 = vmatpush1.bf16.msra.mxu0 0
  %1722 = vmatprep.subr.bf16.mxu0 0
  %1723 = vmatpush1.bf16.msra.mxu0 0
  %1724 = vmatprep.subr.bf16.mxu0 0
  %1725 = vmatpush1.bf16.msra.mxu0 0
  %1726 = vmatprep.subr.bf16.mxu0 0
  %1727 = vmatpush1.bf16.msra.mxu0 0
  %1728 = vmatprep.subr.bf16.mxu0 0
  %1729 = vmatpush1.bf16.msra.mxu0 0
  %1730 = vmatprep.subr.bf16.mxu0 0
  %1731 = vmatpush1.bf16.msra.mxu0 0
  %1732 = vmatprep.subr.bf16.mxu0 0
  %1733 = vmatpush1.bf16.msra.mxu0 0
  %1734 = vmatprep.subr.bf16.mxu0 0
  %1735 = vmatpush1.bf16.msra.mxu0 0
  %1736 = vmatprep.subr.bf16.mxu0 0
  %1737 = vmatpush1.bf16.msra.mxu0 0
  %1738 = vmatprep.subr.bf16.mxu0 0
  %1739 = vmatpush1.bf16.msra.mxu0 0
  %1740 = vmatprep.subr.bf16.mxu0 0
  %1741 = vmatpush1.bf16.msra.mxu0 0
  %1742 = vmatprep.mubr.bf16.mxu0 0
  %1743 = vmatmul.mubr.bf16.gmra.mrb[0].mxu0 %v1705
  %v1744 = vpop.f32.mrb[0].mxu0
  %v1745 = vadd.f32 0.0, %v1744
  %v1746 = vpop.f32.mrb[0].mxu0
  %v1747 = vpop.f32.mrb[0].mxu0
  %v1748 = vpop.f32.mrb[0].mxu0
  %1749 = vdwg.mxu0
  %v1751 = vsel %vm460, %v344, 0
  %v1754 = vsel %vm464, %v416, 0
  %1756 = vmatprep.subr.bf16.mxu0 0
  %1757 = vmatpush1.bf16.msra.mxu0 %v1754
  %1758 = vmatprep.subr.bf16.mxu0 0
  %1759 = vmatpush1.bf16.msra.mxu0 0
  %1760 = vmatprep.subr.bf16.mxu0 0
  %1761 = vmatpush1.bf16.msra.mxu0 0
  %1762 = vmatprep.subr.bf16.mxu0 0
  %1763 = vmatpush1.bf16.msra.mxu0 0
  %1764 = vmatprep.subr.bf16.mxu0 0
  %1765 = vmatpush1.bf16.msra.mxu0 0
  %1766 = vmatprep.subr.bf16.mxu0 0
  %1767 = vmatpush1.bf16.msra.mxu0 0
  %1768 = vmatprep.subr.bf16.mxu0 0
  %1769 = vmatpush1.bf16.msra.mxu0 0
  %1770 = vmatprep.subr.bf16.mxu0 0
  %1771 = vmatpush1.bf16.msra.mxu0 0
  %1772 = vmatprep.subr.bf16.mxu0 0
  %1773 = vmatpush1.bf16.msra.mxu0 0
  %1774 = vmatprep.subr.bf16.mxu0 0
  %1775 = vmatpush1.bf16.msra.mxu0 0
  %1776 = vmatprep.subr.bf16.mxu0 0
  %1777 = vmatpush1.bf16.msra.mxu0 0
  %1778 = vmatprep.subr.bf16.mxu0 0
  %1779 = vmatpush1.bf16.msra.mxu0 0
  %1780 = vmatprep.subr.bf16.mxu0 0
  %1781 = vmatpush1.bf16.msra.mxu0 0
  %1782 = vmatprep.subr.bf16.mxu0 0
  %1783 = vmatpush1.bf16.msra.mxu0 0
  %1784 = vmatprep.subr.bf16.mxu0 0
  %1785 = vmatpush1.bf16.msra.mxu0 0
  %1786 = vmatprep.subr.bf16.mxu0 0
  %1787 = vmatpush1.bf16.msra.mxu0 0
  %1788 = vmatprep.mubr.bf16.mxu0 0
  %1789 = vmatmul.mubr.bf16.gmra.mrb[0].mxu0 %v1751
  %v1790 = vpop.f32.mrb[0].mxu0
  %v1791 = vadd.f32 0.0, %v1790
  %v1792 = vpop.f32.mrb[0].mxu0
  %v1793 = vpop.f32.mrb[0].mxu0
  %v1794 = vpop.f32.mrb[0].mxu0
  %1795 = vdwg.mxu0
  %v1797 = vsel %vm460, %v345, 0
  %v1800 = vsel %vm464, %v417, 0
  %1802 = vmatprep.subr.bf16.mxu0 0
  %1803 = vmatpush1.bf16.msra.mxu0 %v1800
  %1804 = vmatprep.subr.bf16.mxu0 0
  %1805 = vmatpush1.bf16.msra.mxu0 0
  %1806 = vmatprep.subr.bf16.mxu0 0
  %1807 = vmatpush1.bf16.msra.mxu0 0
  %1808 = vmatprep.subr.bf16.mxu0 0
  %1809 = vmatpush1.bf16.msra.mxu0 0
  %1810 = vmatprep.subr.bf16.mxu0 0
  %1811 = vmatpush1.bf16.msra.mxu0 0
  %1812 = vmatprep.subr.bf16.mxu0 0
  %1813 = vmatpush1.bf16.msra.mxu0 0
  %1814 = vmatprep.subr.bf16.mxu0 0
  %1815 = vmatpush1.bf16.msra.mxu0 0
  %1816 = vmatprep.subr.bf16.mxu0 0
  %1817 = vmatpush1.bf16.msra.mxu0 0
  %1818 = vmatprep.subr.bf16.mxu0 0
  %1819 = vmatpush1.bf16.msra.mxu0 0
  %1820 = vmatprep.subr.bf16.mxu0 0
  %1821 = vmatpush1.bf16.msra.mxu0 0
  %1822 = vmatprep.subr.bf16.mxu0 0
  %1823 = vmatpush1.bf16.msra.mxu0 0
  %1824 = vmatprep.subr.bf16.mxu0 0
  %1825 = vmatpush1.bf16.msra.mxu0 0
  %1826 = vmatprep.subr.bf16.mxu0 0
  %1827 = vmatpush1.bf16.msra.mxu0 0
  %1828 = vmatprep.subr.bf16.mxu0 0
  %1829 = vmatpush1.bf16.msra.mxu0 0
  %1830 = vmatprep.subr.bf16.mxu0 0
  %1831 = vmatpush1.bf16.msra.mxu0 0
  %1832 = vmatprep.subr.bf16.mxu0 0
  %1833 = vmatpush1.bf16.msra.mxu0 0
  %1834 = vmatprep.mubr.bf16.mxu0 0
  %1835 = vmatmul.mubr.bf16.gmra.mrb[0].mxu0 %v1797
  %v1836 = vpop.f32.mrb[0].mxu0
  %v1837 = vadd.f32 0.0, %v1836
  %v1838 = vpop.f32.mrb[0].mxu0
  %v1839 = vpop.f32.mrb[0].mxu0
  %v1840 = vpop.f32.mrb[0].mxu0
  %1841 = vdwg.mxu0
  %v1843 = vsel %vm460, %v346, 0
  %v1846 = vsel %vm464, %v418, 0
  %1848 = vmatprep.subr.bf16.mxu0 0
  %1849 = vmatpush1.bf16.msra.mxu0 %v1846
  %1850 = vmatprep.subr.bf16.mxu0 0
  %1851 = vmatpush1.bf16.msra.mxu0 0
  %1852 = vmatprep.subr.bf16.mxu0 0
  %1853 = vmatpush1.bf16.msra.mxu0 0
  %1854 = vmatprep.subr.bf16.mxu0 0
  %1855 = vmatpush1.bf16.msra.mxu0 0
  %1856 = vmatprep.subr.bf16.mxu0 0
  %1857 = vmatpush1.bf16.msra.mxu0 0
  %1858 = vmatprep.subr.bf16.mxu0 0
  %1859 = vmatpush1.bf16.msra.mxu0 0
  %1860 = vmatprep.subr.bf16.mxu0 0
  %1861 = vmatpush1.bf16.msra.mxu0 0
  %1862 = vmatprep.subr.bf16.mxu0 0
  %1863 = vmatpush1.bf16.msra.mxu0 0
  %1864 = vmatprep.subr.bf16.mxu0 0
  %1865 = vmatpush1.bf16.msra.mxu0 0
  %1866 = vmatprep.subr.bf16.mxu0 0
  %1867 = vmatpush1.bf16.msra.mxu0 0
  %1868 = vmatprep.subr.bf16.mxu0 0
  %1869 = vmatpush1.bf16.msra.mxu0 0
  %1870 = vmatprep.subr.bf16.mxu0 0
  %1871 = vmatpush1.bf16.msra.mxu0 0
  %1872 = vmatprep.subr.bf16.mxu0 0
  %1873 = vmatpush1.bf16.msra.mxu0 0
  %1874 = vmatprep.subr.bf16.mxu0 0
  %1875 = vmatpush1.bf16.msra.mxu0 0
  %1876 = vmatprep.subr.bf16.mxu0 0
  %1877 = vmatpush1.bf16.msra.mxu0 0
  %1878 = vmatprep.subr.bf16.mxu0 0
  %1879 = vmatpush1.bf16.msra.mxu0 0
  %1880 = vmatprep.mubr.bf16.mxu0 0
  %1881 = vmatmul.mubr.bf16.gmra.mrb[0].mxu0 %v1843
  %v1882 = vpop.f32.mrb[0].mxu0
  %v1883 = vadd.f32 0.0, %v1882
  %v1884 = vpop.f32.mrb[0].mxu0
  %v1885 = vpop.f32.mrb[0].mxu0
  %v1886 = vpop.f32.mrb[0].mxu0
  %1887 = vdwg.mxu0
  %v1889 = vsel %vm460, %v347, 0
  %v1892 = vsel %vm464, %v419, 0
  %1894 = vmatprep.subr.bf16.mxu0 0
  %1895 = vmatpush1.bf16.msra.mxu0 %v1892
  %1896 = vmatprep.subr.bf16.mxu0 0
  %1897 = vmatpush1.bf16.msra.mxu0 0
  %1898 = vmatprep.subr.bf16.mxu0 0
  %1899 = vmatpush1.bf16.msra.mxu0 0
  %1900 = vmatprep.subr.bf16.mxu0 0
  %1901 = vmatpush1.bf16.msra.mxu0 0
  %1902 = vmatprep.subr.bf16.mxu0 0
  %1903 = vmatpush1.bf16.msra.mxu0 0
  %1904 = vmatprep.subr.bf16.mxu0 0
  %1905 = vmatpush1.bf16.msra.mxu0 0
  %1906 = vmatprep.subr.bf16.mxu0 0
  %1907 = vmatpush1.bf16.msra.mxu0 0
  %1908 = vmatprep.subr.bf16.mxu0 0
  %1909 = vmatpush1.bf16.msra.mxu0 0
  %1910 = vmatprep.subr.bf16.mxu0 0
  %1911 = vmatpush1.bf16.msra.mxu0 0
  %1912 = vmatprep.subr.bf16.mxu0 0
  %1913 = vmatpush1.bf16.msra.mxu0 0
  %1914 = vmatprep.subr.bf16.mxu0 0
  %1915 = vmatpush1.bf16.msra.mxu0 0
  %1916 = vmatprep.subr.bf16.mxu0 0
  %1917 = vmatpush1.bf16.msra.mxu0 0
  %1918 = vmatprep.subr.bf16.mxu0 0
  %1919 = vmatpush1.bf16.msra.mxu0 0
  %1920 = vmatprep.subr.bf16.mxu0 0
  %1921 = vmatpush1.bf16.msra.mxu0 0
  %1922 = vmatprep.subr.bf16.mxu0 0
  %1923 = vmatpush1.bf16.msra.mxu0 0
  %1924 = vmatprep.subr.bf16.mxu0 0
  %1925 = vmatpush1.bf16.msra.mxu0 0
  %1926 = vmatprep.mubr.bf16.mxu0 0
  %1927 = vmatmul.mubr.bf16.gmra.mrb[0].mxu0 %v1889
  %v1928 = vpop.f32.mrb[0].mxu0
  %v1929 = vadd.f32 0.0, %v1928
  %v1930 = vpop.f32.mrb[0].mxu0
  %v1931 = vpop.f32.mrb[0].mxu0
  %v1932 = vpop.f32.mrb[0].mxu0
  %1933 = vdwg.mxu0
  %v1935 = vsel %vm460, %v348, 0
  %v1938 = vsel %vm464, %v420, 0
  %1940 = vmatprep.subr.bf16.mxu0 0
  %1941 = vmatpush1.bf16.msra.mxu0 %v1938
  %1942 = vmatprep.subr.bf16.mxu0 0
  %1943 = vmatpush1.bf16.msra.mxu0 0
  %1944 = vmatprep.subr.bf16.mxu0 0
  %1945 = vmatpush1.bf16.msra.mxu0 0
  %1946 = vmatprep.subr.bf16.mxu0 0
  %1947 = vmatpush1.bf16.msra.mxu0 0
  %1948 = vmatprep.subr.bf16.mxu0 0
  %1949 = vmatpush1.bf16.msra.mxu0 0
  %1950 = vmatprep.subr.bf16.mxu0 0
  %1951 = vmatpush1.bf16.msra.mxu0 0
  %1952 = vmatprep.subr.bf16.mxu0 0
  %1953 = vmatpush1.bf16.msra.mxu0 0
  %1954 = vmatprep.subr.bf16.mxu0 0
  %1955 = vmatpush1.bf16.msra.mxu0 0
  %1956 = vmatprep.subr.bf16.mxu0 0
  %1957 = vmatpush1.bf16.msra.mxu0 0
  %1958 = vmatprep.subr.bf16.mxu0 0
  %1959 = vmatpush1.bf16.msra.mxu0 0
  %1960 = vmatprep.subr.bf16.mxu0 0
  %1961 = vmatpush1.bf16.msra.mxu0 0
  %1962 = vmatprep.subr.bf16.mxu0 0
  %1963 = vmatpush1.bf16.msra.mxu0 0
  %1964 = vmatprep.subr.bf16.mxu0 0
  %1965 = vmatpush1.bf16.msra.mxu0 0
  %1966 = vmatprep.subr.bf16.mxu0 0
  %1967 = vmatpush1.bf16.msra.mxu0 0
  %1968 = vmatprep.subr.bf16.mxu0 0
  %1969 = vmatpush1.bf16.msra.mxu0 0
  %1970 = vmatprep.subr.bf16.mxu0 0
  %1971 = vmatpush1.bf16.msra.mxu0 0
  %1972 = vmatprep.mubr.bf16.mxu0 0
  %1973 = vmatmul.mubr.bf16.gmra.mrb[0].mxu0 %v1935
  %v1974 = vpop.f32.mrb[0].mxu0
  %v1975 = vadd.f32 0.0, %v1974
  %v1976 = vpop.f32.mrb[0].mxu0
  %v1977 = vpop.f32.mrb[0].mxu0
  %v1978 = vpop.f32.mrb[0].mxu0
  %1979 = vdwg.mxu0
  %v1981 = vsel %vm460, %v349, 0
  %v1984 = vsel %vm464, %v421, 0
  %1986 = vmatprep.subr.bf16.mxu0 0
  %1987 = vmatpush1.bf16.msra.mxu0 %v1984
  %1988 = vmatprep.subr.bf16.mxu0 0
  %1989 = vmatpush1.bf16.msra.mxu0 0
  %1990 = vmatprep.subr.bf16.mxu0 0
  %1991 = vmatpush1.bf16.msra.mxu0 0
  %1992 = vmatprep.subr.bf16.mxu0 0
  %1993 = vmatpush1.bf16.msra.mxu0 0
  %1994 = vmatprep.subr.bf16.mxu0 0
  %1995 = vmatpush1.bf16.msra.mxu0 0
  %1996 = vmatprep.subr.bf16.mxu0 0
  %1997 = vmatpush1.bf16.msra.mxu0 0
  %1998 = vmatprep.subr.bf16.mxu0 0
  %1999 = vmatpush1.bf16.msra.mxu0 0
  %2000 = vmatprep.subr.bf16.mxu0 0
  %2001 = vmatpush1.bf16.msra.mxu0 0
  %2002 = vmatprep.subr.bf16.mxu0 0
  %2003 = vmatpush1.bf16.msra.mxu0 0
  %2004 = vmatprep.subr.bf16.mxu0 0
  %2005 = vmatpush1.bf16.msra.mxu0 0
  %2006 = vmatprep.subr.bf16.mxu0 0
  %2007 = vmatpush1.bf16.msra.mxu0 0
  %2008 = vmatprep.subr.bf16.mxu0 0
  %2009 = vmatpush1.bf16.msra.mxu0 0
  %2010 = vmatprep.subr.bf16.mxu0 0
  %2011 = vmatpush1.bf16.msra.mxu0 0
  %2012 = vmatprep.subr.bf16.mxu0 0
  %2013 = vmatpush1.bf16.msra.mxu0 0
  %2014 = vmatprep.subr.bf16.mxu0 0
  %2015 = vmatpush1.bf16.msra.mxu0 0
  %2016 = vmatprep.subr.bf16.mxu0 0
  %2017 = vmatpush1.bf16.msra.mxu0 0
  %2018 = vmatprep.mubr.bf16.mxu0 0
  %2019 = vmatmul.mubr.bf16.gmra.mrb[0].mxu0 %v1981
  %v2020 = vpop.f32.mrb[0].mxu0
  %v2021 = vadd.f32 0.0, %v2020
  %v2022 = vpop.f32.mrb[0].mxu0
  %v2023 = vpop.f32.mrb[0].mxu0
  %v2024 = vpop.f32.mrb[0].mxu0
  %2025 = vdwg.mxu0
  %v2027 = vsel %vm460, %v350, 0
  %v2030 = vsel %vm464, %v422, 0
  %2032 = vmatprep.subr.bf16.mxu0 0
  %2033 = vmatpush1.bf16.msra.mxu0 %v2030
  %2034 = vmatprep.subr.bf16.mxu0 0
  %2035 = vmatpush1.bf16.msra.mxu0 0
  %2036 = vmatprep.subr.bf16.mxu0 0
  %2037 = vmatpush1.bf16.msra.mxu0 0
  %2038 = vmatprep.subr.bf16.mxu0 0
  %2039 = vmatpush1.bf16.msra.mxu0 0
  %2040 = vmatprep.subr.bf16.mxu0 0
  %2041 = vmatpush1.bf16.msra.mxu0 0
  %2042 = vmatprep.subr.bf16.mxu0 0
  %2043 = vmatpush1.bf16.msra.mxu0 0
  %2044 = vmatprep.subr.bf16.mxu0 0
  %2045 = vmatpush1.bf16.msra.mxu0 0
  %2046 = vmatprep.subr.bf16.mxu0 0
  %2047 = vmatpush1.bf16.msra.mxu0 0
  %2048 = vmatprep.subr.bf16.mxu0 0
  %2049 = vmatpush1.bf16.msra.mxu0 0
  %2050 = vmatprep.subr.bf16.mxu0 0
  %2051 = vmatpush1.bf16.msra.mxu0 0
  %2052 = vmatprep.subr.bf16.mxu0 0
  %2053 = vmatpush1.bf16.msra.mxu0 0
  %2054 = vmatprep.subr.bf16.mxu0 0
  %2055 = vmatpush1.bf16.msra.mxu0 0
  %2056 = vmatprep.subr.bf16.mxu0 0
  %2057 = vmatpush1.bf16.msra.mxu0 0
  %2058 = vmatprep.subr.bf16.mxu0 0
  %2059 = vmatpush1.bf16.msra.mxu0 0
  %2060 = vmatprep.subr.bf16.mxu0 0
  %2061 = vmatpush1.bf16.msra.mxu0 0
  %2062 = vmatprep.subr.bf16.mxu0 0
  %2063 = vmatpush1.bf16.msra.mxu0 0
  %2064 = vmatprep.mubr.bf16.mxu0 0
  %2065 = vmatmul.mubr.bf16.gmra.mrb[0].mxu0 %v2027
  %v2066 = vpop.f32.mrb[0].mxu0
  %v2067 = vadd.f32 0.0, %v2066
  %v2068 = vpop.f32.mrb[0].mxu0
  %v2069 = vpop.f32.mrb[0].mxu0
  %v2070 = vpop.f32.mrb[0].mxu0
  %2071 = vdwg.mxu0
  %v2073 = vsel %vm460, %v351, 0
  %v2076 = vsel %vm464, %v423, 0
  %2078 = vmatprep.subr.bf16.mxu0 0
  %2079 = vmatpush1.bf16.msra.mxu0 %v2076
  %2080 = vmatprep.subr.bf16.mxu0 0
  %2081 = vmatpush1.bf16.msra.mxu0 0
  %2082 = vmatprep.subr.bf16.mxu0 0
  %2083 = vmatpush1.bf16.msra.mxu0 0
  %2084 = vmatprep.subr.bf16.mxu0 0
  %2085 = vmatpush1.bf16.msra.mxu0 0
  %2086 = vmatprep.subr.bf16.mxu0 0
  %2087 = vmatpush1.bf16.msra.mxu0 0
  %2088 = vmatprep.subr.bf16.mxu0 0
  %2089 = vmatpush1.bf16.msra.mxu0 0
  %2090 = vmatprep.subr.bf16.mxu0 0
  %2091 = vmatpush1.bf16.msra.mxu0 0
  %2092 = vmatprep.subr.bf16.mxu0 0
  %2093 = vmatpush1.bf16.msra.mxu0 0
  %2094 = vmatprep.subr.bf16.mxu0 0
  %2095 = vmatpush1.bf16.msra.mxu0 0
  %2096 = vmatprep.subr.bf16.mxu0 0
  %2097 = vmatpush1.bf16.msra.mxu0 0
  %2098 = vmatprep.subr.bf16.mxu0 0
  %2099 = vmatpush1.bf16.msra.mxu0 0
  %2100 = vmatprep.subr.bf16.mxu0 0
  %2101 = vmatpush1.bf16.msra.mxu0 0
  %2102 = vmatprep.subr.bf16.mxu0 0
  %2103 = vmatpush1.bf16.msra.mxu0 0
  %2104 = vmatprep.subr.bf16.mxu0 0
  %2105 = vmatpush1.bf16.msra.mxu0 0
  %2106 = vmatprep.subr.bf16.mxu0 0
  %2107 = vmatpush1.bf16.msra.mxu0 0
  %2108 = vmatprep.subr.bf16.mxu0 0
  %2109 = vmatpush1.bf16.msra.mxu0 0
  %2110 = vmatprep.mubr.bf16.mxu0 0
  %2111 = vmatmul.mubr.bf16.gmra.mrb[0].mxu0 %v2073
  %v2112 = vpop.f32.mrb[0].mxu0
  %v2113 = vadd.f32 0.0, %v2112
  %v2114 = vpop.f32.mrb[0].mxu0
  %v2115 = vpop.f32.mrb[0].mxu0
  %v2116 = vpop.f32.mrb[0].mxu0
  %2117 = vdwg.mxu0
  %v2119 = vsel %vm460, %v352, 0
  %v2122 = vsel %vm464, %v424, 0
  %2124 = vmatprep.subr.bf16.mxu0 0
  %2125 = vmatpush1.bf16.msra.mxu0 %v2122
  %2126 = vmatprep.subr.bf16.mxu0 0
  %2127 = vmatpush1.bf16.msra.mxu0 0
  %2128 = vmatprep.subr.bf16.mxu0 0
  %2129 = vmatpush1.bf16.msra.mxu0 0
  %2130 = vmatprep.subr.bf16.mxu0 0
  %2131 = vmatpush1.bf16.msra.mxu0 0
  %2132 = vmatprep.subr.bf16.mxu0 0
  %2133 = vmatpush1.bf16.msra.mxu0 0
  %2134 = vmatprep.subr.bf16.mxu0 0
  %2135 = vmatpush1.bf16.msra.mxu0 0
  %2136 = vmatprep.subr.bf16.mxu0 0
  %2137 = vmatpush1.bf16.msra.mxu0 0
  %2138 = vmatprep.subr.bf16.mxu0 0
  %2139 = vmatpush1.bf16.msra.mxu0 0
  %2140 = vmatprep.subr.bf16.mxu0 0
  %2141 = vmatpush1.bf16.msra.mxu0 0
  %2142 = vmatprep.subr.bf16.mxu0 0
  %2143 = vmatpush1.bf16.msra.mxu0 0
  %2144 = vmatprep.subr.bf16.mxu0 0
  %2145 = vmatpush1.bf16.msra.mxu0 0
  %2146 = vmatprep.subr.bf16.mxu0 0
  %2147 = vmatpush1.bf16.msra.mxu0 0
  %2148 = vmatprep.subr.bf16.mxu0 0
  %2149 = vmatpush1.bf16.msra.mxu0 0
  %2150 = vmatprep.subr.bf16.mxu0 0
  %2151 = vmatpush1.bf16.msra.mxu0 0
  %2152 = vmatprep.subr.bf16.mxu0 0
  %2153 = vmatpush1.bf16.msra.mxu0 0
  %2154 = vmatprep.subr.bf16.mxu0 0
  %2155 = vmatpush1.bf16.msra.mxu0 0
  %2156 = vmatprep.mubr.bf16.mxu0 0
  %2157 = vmatmul.mubr.bf16.gmra.mrb[0].mxu0 %v2119
  %v2158 = vpop.f32.mrb[0].mxu0
  %v2159 = vadd.f32 0.0, %v2158
  %v2160 = vpop.f32.mrb[0].mxu0
  %v2161 = vpop.f32.mrb[0].mxu0
  %v2162 = vpop.f32.mrb[0].mxu0
  %2163 = vdwg.mxu0
  %v2165 = vsel %vm460, %v353, 0
  %v2168 = vsel %vm464, %v425, 0
  %2170 = vmatprep.subr.bf16.mxu0 0
  %2171 = vmatpush1.bf16.msra.mxu0 %v2168
  %2172 = vmatprep.subr.bf16.mxu0 0
  %2173 = vmatpush1.bf16.msra.mxu0 0
  %2174 = vmatprep.subr.bf16.mxu0 0
  %2175 = vmatpush1.bf16.msra.mxu0 0
  %2176 = vmatprep.subr.bf16.mxu0 0
  %2177 = vmatpush1.bf16.msra.mxu0 0
  %2178 = vmatprep.subr.bf16.mxu0 0
  %2179 = vmatpush1.bf16.msra.mxu0 0
  %2180 = vmatprep.subr.bf16.mxu0 0
  %2181 = vmatpush1.bf16.msra.mxu0 0
  %2182 = vmatprep.subr.bf16.mxu0 0
  %2183 = vmatpush1.bf16.msra.mxu0 0
  %2184 = vmatprep.subr.bf16.mxu0 0
  %2185 = vmatpush1.bf16.msra.mxu0 0
  %2186 = vmatprep.subr.bf16.mxu0 0
  %2187 = vmatpush1.bf16.msra.mxu0 0
  %2188 = vmatprep.subr.bf16.mxu0 0
  %2189 = vmatpush1.bf16.msra.mxu0 0
  %2190 = vmatprep.subr.bf16.mxu0 0
  %2191 = vmatpush1.bf16.msra.mxu0 0
  %2192 = vmatprep.subr.bf16.mxu0 0
  %2193 = vmatpush1.bf16.msra.mxu0 0
  %2194 = vmatprep.subr.bf16.mxu0 0
  %2195 = vmatpush1.bf16.msra.mxu0 0
  %2196 = vmatprep.subr.bf16.mxu0 0
  %2197 = vmatpush1.bf16.msra.mxu0 0
  %2198 = vmatprep.subr.bf16.mxu0 0
  %2199 = vmatpush1.bf16.msra.mxu0 0
  %2200 = vmatprep.subr.bf16.mxu0 0
  %2201 = vmatpush1.bf16.msra.mxu0 0
  %2202 = vmatprep.mubr.bf16.mxu0 0
  %2203 = vmatmul.mubr.bf16.gmra.mrb[0].mxu0 %v2165
  %v2204 = vpop.f32.mrb[0].mxu0
  %v2205 = vadd.f32 0.0, %v2204
  %v2206 = vpop.f32.mrb[0].mxu0
  %v2207 = vpop.f32.mrb[0].mxu0
  %v2208 = vpop.f32.mrb[0].mxu0
  %2209 = vdwg.mxu0
  %v2211 = vsel %vm460, %v354, 0
  %v2214 = vsel %vm464, %v426, 0
  %2216 = vmatprep.subr.bf16.mxu0 0
  %2217 = vmatpush1.bf16.msra.mxu0 %v2214
  %2218 = vmatprep.subr.bf16.mxu0 0
  %2219 = vmatpush1.bf16.msra.mxu0 0
  %2220 = vmatprep.subr.bf16.mxu0 0
  %2221 = vmatpush1.bf16.msra.mxu0 0
  %2222 = vmatprep.subr.bf16.mxu0 0
  %2223 = vmatpush1.bf16.msra.mxu0 0
  %2224 = vmatprep.subr.bf16.mxu0 0
  %2225 = vmatpush1.bf16.msra.mxu0 0
  %2226 = vmatprep.subr.bf16.mxu0 0
  %2227 = vmatpush1.bf16.msra.mxu0 0
  %2228 = vmatprep.subr.bf16.mxu0 0
  %2229 = vmatpush1.bf16.msra.mxu0 0
  %2230 = vmatprep.subr.bf16.mxu0 0
  %2231 = vmatpush1.bf16.msra.mxu0 0
  %2232 = vmatprep.subr.bf16.mxu0 0
  %2233 = vmatpush1.bf16.msra.mxu0 0
  %2234 = vmatprep.subr.bf16.mxu0 0
  %2235 = vmatpush1.bf16.msra.mxu0 0
  %2236 = vmatprep.subr.bf16.mxu0 0
  %2237 = vmatpush1.bf16.msra.mxu0 0
  %2238 = vmatprep.subr.bf16.mxu0 0
  %2239 = vmatpush1.bf16.msra.mxu0 0
  %2240 = vmatprep.subr.bf16.mxu0 0
  %2241 = vmatpush1.bf16.msra.mxu0 0
  %2242 = vmatprep.subr.bf16.mxu0 0
  %2243 = vmatpush1.bf16.msra.mxu0 0
  %2244 = vmatprep.subr.bf16.mxu0 0
  %2245 = vmatpush1.bf16.msra.mxu0 0
  %2246 = vmatprep.subr.bf16.mxu0 0
  %2247 = vmatpush1.bf16.msra.mxu0 0
  %2248 = vmatprep.mubr.bf16.mxu0 0
  %2249 = vmatmul.mubr.bf16.gmra.mrb[0].mxu0 %v2211
  %v2250 = vpop.f32.mrb[0].mxu0
  %v2251 = vadd.f32 0.0, %v2250
  %v2252 = vpop.f32.mrb[0].mxu0
  %v2253 = vpop.f32.mrb[0].mxu0
  %v2254 = vpop.f32.mrb[0].mxu0
  %2255 = vdwg.mxu0
  %v2257 = vsel %vm460, %v355, 0
  %v2260 = vsel %vm464, %v427, 0
  %2262 = vmatprep.subr.bf16.mxu0 0
  %2263 = vmatpush1.bf16.msra.mxu0 %v2260
  %2264 = vmatprep.subr.bf16.mxu0 0
  %2265 = vmatpush1.bf16.msra.mxu0 0
  %2266 = vmatprep.subr.bf16.mxu0 0
  %2267 = vmatpush1.bf16.msra.mxu0 0
  %2268 = vmatprep.subr.bf16.mxu0 0
  %2269 = vmatpush1.bf16.msra.mxu0 0
  %2270 = vmatprep.subr.bf16.mxu0 0
  %2271 = vmatpush1.bf16.msra.mxu0 0
  %2272 = vmatprep.subr.bf16.mxu0 0
  %2273 = vmatpush1.bf16.msra.mxu0 0
  %2274 = vmatprep.subr.bf16.mxu0 0
  %2275 = vmatpush1.bf16.msra.mxu0 0
  %2276 = vmatprep.subr.bf16.mxu0 0
  %2277 = vmatpush1.bf16.msra.mxu0 0
  %2278 = vmatprep.subr.bf16.mxu0 0
  %2279 = vmatpush1.bf16.msra.mxu0 0
  %2280 = vmatprep.subr.bf16.mxu0 0
  %2281 = vmatpush1.bf16.msra.mxu0 0
  %2282 = vmatprep.subr.bf16.mxu0 0
  %2283 = vmatpush1.bf16.msra.mxu0 0
  %2284 = vmatprep.subr.bf16.mxu0 0
  %2285 = vmatpush1.bf16.msra.mxu0 0
  %2286 = vmatprep.subr.bf16.mxu0 0
  %2287 = vmatpush1.bf16.msra.mxu0 0
  %2288 = vmatprep.subr.bf16.mxu0 0
  %2289 = vmatpush1.bf16.msra.mxu0 0
  %2290 = vmatprep.subr.bf16.mxu0 0
  %2291 = vmatpush1.bf16.msra.mxu0 0
  %2292 = vmatprep.subr.bf16.mxu0 0
  %2293 = vmatpush1.bf16.msra.mxu0 0
  %2294 = vmatprep.mubr.bf16.mxu0 0
  %2295 = vmatmul.mubr.bf16.gmra.mrb[0].mxu0 %v2257
  %v2296 = vpop.f32.mrb[0].mxu0
  %v2297 = vadd.f32 0.0, %v2296
  %v2298 = vpop.f32.mrb[0].mxu0
  %v2299 = vpop.f32.mrb[0].mxu0
  %v2300 = vpop.f32.mrb[0].mxu0
  %2301 = vdwg.mxu0
  %v2303 = vsel %vm460, %v356, 0
  %v2306 = vsel %vm464, %v428, 0
  %2308 = vmatprep.subr.bf16.mxu0 0
  %2309 = vmatpush1.bf16.msra.mxu0 %v2306
  %2310 = vmatprep.subr.bf16.mxu0 0
  %2311 = vmatpush1.bf16.msra.mxu0 0
  %2312 = vmatprep.subr.bf16.mxu0 0
  %2313 = vmatpush1.bf16.msra.mxu0 0
  %2314 = vmatprep.subr.bf16.mxu0 0
  %2315 = vmatpush1.bf16.msra.mxu0 0
  %2316 = vmatprep.subr.bf16.mxu0 0
  %2317 = vmatpush1.bf16.msra.mxu0 0
  %2318 = vmatprep.subr.bf16.mxu0 0
  %2319 = vmatpush1.bf16.msra.mxu0 0
  %2320 = vmatprep.subr.bf16.mxu0 0
  %2321 = vmatpush1.bf16.msra.mxu0 0
  %2322 = vmatprep.subr.bf16.mxu0 0
  %2323 = vmatpush1.bf16.msra.mxu0 0
  %2324 = vmatprep.subr.bf16.mxu0 0
  %2325 = vmatpush1.bf16.msra.mxu0 0
  %2326 = vmatprep.subr.bf16.mxu0 0
  %2327 = vmatpush1.bf16.msra.mxu0 0
  %2328 = vmatprep.subr.bf16.mxu0 0
  %2329 = vmatpush1.bf16.msra.mxu0 0
  %2330 = vmatprep.subr.bf16.mxu0 0
  %2331 = vmatpush1.bf16.msra.mxu0 0
  %2332 = vmatprep.subr.bf16.mxu0 0
  %2333 = vmatpush1.bf16.msra.mxu0 0
  %2334 = vmatprep.subr.bf16.mxu0 0
  %2335 = vmatpush1.bf16.msra.mxu0 0
  %2336 = vmatprep.subr.bf16.mxu0 0
  %2337 = vmatpush1.bf16.msra.mxu0 0
  %2338 = vmatprep.subr.bf16.mxu0 0
  %2339 = vmatpush1.bf16.msra.mxu0 0
  %2340 = vmatprep.mubr.bf16.mxu0 0
  %2341 = vmatmul.mubr.bf16.gmra.mrb[0].mxu0 %v2303
  %v2342 = vpop.f32.mrb[0].mxu0
  %v2343 = vadd.f32 0.0, %v2342
  %v2344 = vpop.f32.mrb[0].mxu0
  %v2345 = vpop.f32.mrb[0].mxu0
  %v2346 = vpop.f32.mrb[0].mxu0
  %2347 = vdwg.mxu0
  %v2349 = vsel %vm460, %v357, 0
  %v2352 = vsel %vm464, %v429, 0
  %2354 = vmatprep.subr.bf16.mxu0 0
  %2355 = vmatpush1.bf16.msra.mxu0 %v2352
  %2356 = vmatprep.subr.bf16.mxu0 0
  %2357 = vmatpush1.bf16.msra.mxu0 0
  %2358 = vmatprep.subr.bf16.mxu0 0
  %2359 = vmatpush1.bf16.msra.mxu0 0
  %2360 = vmatprep.subr.bf16.mxu0 0
  %2361 = vmatpush1.bf16.msra.mxu0 0
  %2362 = vmatprep.subr.bf16.mxu0 0
  %2363 = vmatpush1.bf16.msra.mxu0 0
  %2364 = vmatprep.subr.bf16.mxu0 0
  %2365 = vmatpush1.bf16.msra.mxu0 0
  %2366 = vmatprep.subr.bf16.mxu0 0
  %2367 = vmatpush1.bf16.msra.mxu0 0
  %2368 = vmatprep.subr.bf16.mxu0 0
  %2369 = vmatpush1.bf16.msra.mxu0 0
  %2370 = vmatprep.subr.bf16.mxu0 0
  %2371 = vmatpush1.bf16.msra.mxu0 0
  %2372 = vmatprep.subr.bf16.mxu0 0
  %2373 = vmatpush1.bf16.msra.mxu0 0
  %2374 = vmatprep.subr.bf16.mxu0 0
  %2375 = vmatpush1.bf16.msra.mxu0 0
  %2376 = vmatprep.subr.bf16.mxu0 0
  %2377 = vmatpush1.bf16.msra.mxu0 0
  %2378 = vmatprep.subr.bf16.mxu0 0
  %2379 = vmatpush1.bf16.msra.mxu0 0
  %2380 = vmatprep.subr.bf16.mxu0 0
  %2381 = vmatpush1.bf16.msra.mxu0 0
  %2382 = vmatprep.subr.bf16.mxu0 0
  %2383 = vmatpush1.bf16.msra.mxu0 0
  %2384 = vmatprep.subr.bf16.mxu0 0
  %2385 = vmatpush1.bf16.msra.mxu0 0
  %2386 = vmatprep.mubr.bf16.mxu0 0
  %2387 = vmatmul.mubr.bf16.gmra.mrb[0].mxu0 %v2349
  %v2388 = vpop.f32.mrb[0].mxu0
  %v2389 = vadd.f32 0.0, %v2388
  %v2390 = vpop.f32.mrb[0].mxu0
  %v2391 = vpop.f32.mrb[0].mxu0
  %v2392 = vpop.f32.mrb[0].mxu0
  %2393 = vdwg.mxu0
  %v2395 = vsel %vm460, %v358, 0
  %v2398 = vsel %vm464, %v430, 0
  %2400 = vmatprep.subr.bf16.mxu0 0
  %2401 = vmatpush1.bf16.msra.mxu0 %v2398
  %2402 = vmatprep.subr.bf16.mxu0 0
  %2403 = vmatpush1.bf16.msra.mxu0 0
  %2404 = vmatprep.subr.bf16.mxu0 0
  %2405 = vmatpush1.bf16.msra.mxu0 0
  %2406 = vmatprep.subr.bf16.mxu0 0
  %2407 = vmatpush1.bf16.msra.mxu0 0
  %2408 = vmatprep.subr.bf16.mxu0 0
  %2409 = vmatpush1.bf16.msra.mxu0 0
  %2410 = vmatprep.subr.bf16.mxu0 0
  %2411 = vmatpush1.bf16.msra.mxu0 0
  %2412 = vmatprep.subr.bf16.mxu0 0
  %2413 = vmatpush1.bf16.msra.mxu0 0
  %2414 = vmatprep.subr.bf16.mxu0 0
  %2415 = vmatpush1.bf16.msra.mxu0 0
  %2416 = vmatprep.subr.bf16.mxu0 0
  %2417 = vmatpush1.bf16.msra.mxu0 0
  %2418 = vmatprep.subr.bf16.mxu0 0
  %2419 = vmatpush1.bf16.msra.mxu0 0
  %2420 = vmatprep.subr.bf16.mxu0 0
  %2421 = vmatpush1.bf16.msra.mxu0 0
  %2422 = vmatprep.subr.bf16.mxu0 0
  %2423 = vmatpush1.bf16.msra.mxu0 0
  %2424 = vmatprep.subr.bf16.mxu0 0
  %2425 = vmatpush1.bf16.msra.mxu0 0
  %2426 = vmatprep.subr.bf16.mxu0 0
  %2427 = vmatpush1.bf16.msra.mxu0 0
  %2428 = vmatprep.subr.bf16.mxu0 0
  %2429 = vmatpush1.bf16.msra.mxu0 0
  %2430 = vmatprep.subr.bf16.mxu0 0
  %2431 = vmatpush1.bf16.msra.mxu0 0
  %2432 = vmatprep.mubr.bf16.mxu0 0
  %2433 = vmatmul.mubr.bf16.gmra.mrb[0].mxu0 %v2395
  %v2434 = vpop.f32.mrb[0].mxu0
  %v2435 = vadd.f32 0.0, %v2434
  %v2436 = vpop.f32.mrb[0].mxu0
  %v2437 = vpop.f32.mrb[0].mxu0
  %v2438 = vpop.f32.mrb[0].mxu0
  %2439 = vdwg.mxu0
  %v2441 = vsel %vm460, %v359, 0
  %v2444 = vsel %vm464, %v431, 0
  %2446 = vmatprep.subr.bf16.mxu0 0
  %2447 = vmatpush1.bf16.msra.mxu0 %v2444
  %2448 = vmatprep.subr.bf16.mxu0 0
  %2449 = vmatpush1.bf16.msra.mxu0 0
  %2450 = vmatprep.subr.bf16.mxu0 0
  %2451 = vmatpush1.bf16.msra.mxu0 0
  %2452 = vmatprep.subr.bf16.mxu0 0
  %2453 = vmatpush1.bf16.msra.mxu0 0
  %2454 = vmatprep.subr.bf16.mxu0 0
  %2455 = vmatpush1.bf16.msra.mxu0 0
  %2456 = vmatprep.subr.bf16.mxu0 0
  %2457 = vmatpush1.bf16.msra.mxu0 0
  %2458 = vmatprep.subr.bf16.mxu0 0
  %2459 = vmatpush1.bf16.msra.mxu0 0
  %2460 = vmatprep.subr.bf16.mxu0 0
  %2461 = vmatpush1.bf16.msra.mxu0 0
  %2462 = vmatprep.subr.bf16.mxu0 0
  %2463 = vmatpush1.bf16.msra.mxu0 0
  %2464 = vmatprep.subr.bf16.mxu0 0
  %2465 = vmatpush1.bf16.msra.mxu0 0
  %2466 = vmatprep.subr.bf16.mxu0 0
  %2467 = vmatpush1.bf16.msra.mxu0 0
  %2468 = vmatprep.subr.bf16.mxu0 0
  %2469 = vmatpush1.bf16.msra.mxu0 0
  %2470 = vmatprep.subr.bf16.mxu0 0
  %2471 = vmatpush1.bf16.msra.mxu0 0
  %2472 = vmatprep.subr.bf16.mxu0 0
  %2473 = vmatpush1.bf16.msra.mxu0 0
  %2474 = vmatprep.subr.bf16.mxu0 0
  %2475 = vmatpush1.bf16.msra.mxu0 0
  %2476 = vmatprep.subr.bf16.mxu0 0
  %2477 = vmatpush1.bf16.msra.mxu0 0
  %2478 = vmatprep.mubr.bf16.mxu0 0
  %2479 = vmatmul.mubr.bf16.gmra.mrb[0].mxu0 %v2441
  %v2480 = vpop.f32.mrb[0].mxu0
  %v2481 = vadd.f32 0.0, %v2480
  %v2482 = vpop.f32.mrb[0].mxu0
  %v2483 = vpop.f32.mrb[0].mxu0
  %v2484 = vpop.f32.mrb[0].mxu0
  %2485 = vdwg.mxu0
  %v2487 = vsel %vm460, %v360, 0
  %v2490 = vsel %vm464, %v432, 0
  %2492 = vmatprep.subr.bf16.mxu0 0
  %2493 = vmatpush1.bf16.msra.mxu0 %v2490
  %2494 = vmatprep.subr.bf16.mxu0 0
  %2495 = vmatpush1.bf16.msra.mxu0 0
  %2496 = vmatprep.subr.bf16.mxu0 0
  %2497 = vmatpush1.bf16.msra.mxu0 0
  %2498 = vmatprep.subr.bf16.mxu0 0
  %2499 = vmatpush1.bf16.msra.mxu0 0
  %2500 = vmatprep.subr.bf16.mxu0 0
  %2501 = vmatpush1.bf16.msra.mxu0 0
  %2502 = vmatprep.subr.bf16.mxu0 0
  %2503 = vmatpush1.bf16.msra.mxu0 0
  %2504 = vmatprep.subr.bf16.mxu0 0
  %2505 = vmatpush1.bf16.msra.mxu0 0
  %2506 = vmatprep.subr.bf16.mxu0 0
  %2507 = vmatpush1.bf16.msra.mxu0 0
  %2508 = vmatprep.subr.bf16.mxu0 0
  %2509 = vmatpush1.bf16.msra.mxu0 0
  %2510 = vmatprep.subr.bf16.mxu0 0
  %2511 = vmatpush1.bf16.msra.mxu0 0
  %2512 = vmatprep.subr.bf16.mxu0 0
  %2513 = vmatpush1.bf16.msra.mxu0 0
  %2514 = vmatprep.subr.bf16.mxu0 0
  %2515 = vmatpush1.bf16.msra.mxu0 0
  %2516 = vmatprep.subr.bf16.mxu0 0
  %2517 = vmatpush1.bf16.msra.mxu0 0
  %2518 = vmatprep.subr.bf16.mxu0 0
  %2519 = vmatpush1.bf16.msra.mxu0 0
  %2520 = vmatprep.subr.bf16.mxu0 0
  %2521 = vmatpush1.bf16.msra.mxu0 0
  %2522 = vmatprep.subr.bf16.mxu0 0
  %2523 = vmatpush1.bf16.msra.mxu0 0
  %2524 = vmatprep.mubr.bf16.mxu0 0
  %2525 = vmatmul.mubr.bf16.gmra.mrb[0].mxu0 %v2487
  %v2526 = vpop.f32.mrb[0].mxu0
  %v2527 = vadd.f32 0.0, %v2526
  %v2528 = vpop.f32.mrb[0].mxu0
  %v2529 = vpop.f32.mrb[0].mxu0
  %v2530 = vpop.f32.mrb[0].mxu0
  %2531 = vdwg.mxu0
  %v2533 = vsel %vm460, %v361, 0
  %v2536 = vsel %vm464, %v433, 0
  %2538 = vmatprep.subr.bf16.mxu0 0
  %2539 = vmatpush1.bf16.msra.mxu0 %v2536
  %2540 = vmatprep.subr.bf16.mxu0 0
  %2541 = vmatpush1.bf16.msra.mxu0 0
  %2542 = vmatprep.subr.bf16.mxu0 0
  %2543 = vmatpush1.bf16.msra.mxu0 0
  %2544 = vmatprep.subr.bf16.mxu0 0
  %2545 = vmatpush1.bf16.msra.mxu0 0
  %2546 = vmatprep.subr.bf16.mxu0 0
  %2547 = vmatpush1.bf16.msra.mxu0 0
  %2548 = vmatprep.subr.bf16.mxu0 0
  %2549 = vmatpush1.bf16.msra.mxu0 0
  %2550 = vmatprep.subr.bf16.mxu0 0
  %2551 = vmatpush1.bf16.msra.mxu0 0
  %2552 = vmatprep.subr.bf16.mxu0 0
  %2553 = vmatpush1.bf16.msra.mxu0 0
  %2554 = vmatprep.subr.bf16.mxu0 0
  %2555 = vmatpush1.bf16.msra.mxu0 0
  %2556 = vmatprep.subr.bf16.mxu0 0
  %2557 = vmatpush1.bf16.msra.mxu0 0
  %2558 = vmatprep.subr.bf16.mxu0 0
  %2559 = vmatpush1.bf16.msra.mxu0 0
  %2560 = vmatprep.subr.bf16.mxu0 0
  %2561 = vmatpush1.bf16.msra.mxu0 0
  %2562 = vmatprep.subr.bf16.mxu0 0
  %2563 = vmatpush1.bf16.msra.mxu0 0
  %2564 = vmatprep.subr.bf16.mxu0 0
  %2565 = vmatpush1.bf16.msra.mxu0 0
  %2566 = vmatprep.subr.bf16.mxu0 0
  %2567 = vmatpush1.bf16.msra.mxu0 0
  %2568 = vmatprep.subr.bf16.mxu0 0
  %2569 = vmatpush1.bf16.msra.mxu0 0
  %2570 = vmatprep.mubr.bf16.mxu0 0
  %2571 = vmatmul.mubr.bf16.gmra.mrb[0].mxu0 %v2533
  %v2572 = vpop.f32.mrb[0].mxu0
  %v2573 = vadd.f32 0.0, %v2572
  %v2574 = vpop.f32.mrb[0].mxu0
  %v2575 = vpop.f32.mrb[0].mxu0
  %v2576 = vpop.f32.mrb[0].mxu0
  %2577 = vdwg.mxu0
  %v2579 = vsel %vm460, %v362, 0
  %v2582 = vsel %vm464, %v434, 0
  %2584 = vmatprep.subr.bf16.mxu0 0
  %2585 = vmatpush1.bf16.msra.mxu0 %v2582
  %2586 = vmatprep.subr.bf16.mxu0 0
  %2587 = vmatpush1.bf16.msra.mxu0 0
  %2588 = vmatprep.subr.bf16.mxu0 0
  %2589 = vmatpush1.bf16.msra.mxu0 0
  %2590 = vmatprep.subr.bf16.mxu0 0
  %2591 = vmatpush1.bf16.msra.mxu0 0
  %2592 = vmatprep.subr.bf16.mxu0 0
  %2593 = vmatpush1.bf16.msra.mxu0 0
  %2594 = vmatprep.subr.bf16.mxu0 0
  %2595 = vmatpush1.bf16.msra.mxu0 0
  %2596 = vmatprep.subr.bf16.mxu0 0
  %2597 = vmatpush1.bf16.msra.mxu0 0
  %2598 = vmatprep.subr.bf16.mxu0 0
  %2599 = vmatpush1.bf16.msra.mxu0 0
  %2600 = vmatprep.subr.bf16.mxu0 0
  %2601 = vmatpush1.bf16.msra.mxu0 0
  %2602 = vmatprep.subr.bf16.mxu0 0
  %2603 = vmatpush1.bf16.msra.mxu0 0
  %2604 = vmatprep.subr.bf16.mxu0 0
  %2605 = vmatpush1.bf16.msra.mxu0 0
  %2606 = vmatprep.subr.bf16.mxu0 0
  %2607 = vmatpush1.bf16.msra.mxu0 0
  %2608 = vmatprep.subr.bf16.mxu0 0
  %2609 = vmatpush1.bf16.msra.mxu0 0
  %2610 = vmatprep.subr.bf16.mxu0 0
  %2611 = vmatpush1.bf16.msra.mxu0 0
  %2612 = vmatprep.subr.bf16.mxu0 0
  %2613 = vmatpush1.bf16.msra.mxu0 0
  %2614 = vmatprep.subr.bf16.mxu0 0
  %2615 = vmatpush1.bf16.msra.mxu0 0
  %2616 = vmatprep.mubr.bf16.mxu0 0
  %2617 = vmatmul.mubr.bf16.gmra.mrb[0].mxu0 %v2579
  %v2618 = vpop.f32.mrb[0].mxu0
  %v2619 = vadd.f32 0.0, %v2618
  %v2620 = vpop.f32.mrb[0].mxu0
  %v2621 = vpop.f32.mrb[0].mxu0
  %v2622 = vpop.f32.mrb[0].mxu0
  %2623 = vdwg.mxu0
  %v2625 = vsel %vm460, %v363, 0
  %v2628 = vsel %vm464, %v435, 0
  %2630 = vmatprep.subr.bf16.mxu0 0
  %2631 = vmatpush1.bf16.msra.mxu0 %v2628
  %2632 = vmatprep.subr.bf16.mxu0 0
  %2633 = vmatpush1.bf16.msra.mxu0 0
  %2634 = vmatprep.subr.bf16.mxu0 0
  %2635 = vmatpush1.bf16.msra.mxu0 0
  %2636 = vmatprep.subr.bf16.mxu0 0
  %2637 = vmatpush1.bf16.msra.mxu0 0
  %2638 = vmatprep.subr.bf16.mxu0 0
  %2639 = vmatpush1.bf16.msra.mxu0 0
  %2640 = vmatprep.subr.bf16.mxu0 0
  %2641 = vmatpush1.bf16.msra.mxu0 0
  %2642 = vmatprep.subr.bf16.mxu0 0
  %2643 = vmatpush1.bf16.msra.mxu0 0
  %2644 = vmatprep.subr.bf16.mxu0 0
  %2645 = vmatpush1.bf16.msra.mxu0 0
  %2646 = vmatprep.subr.bf16.mxu0 0
  %2647 = vmatpush1.bf16.msra.mxu0 0
  %2648 = vmatprep.subr.bf16.mxu0 0
  %2649 = vmatpush1.bf16.msra.mxu0 0
  %2650 = vmatprep.subr.bf16.mxu0 0
  %2651 = vmatpush1.bf16.msra.mxu0 0
  %2652 = vmatprep.subr.bf16.mxu0 0
  %2653 = vmatpush1.bf16.msra.mxu0 0
  %2654 = vmatprep.subr.bf16.mxu0 0
  %2655 = vmatpush1.bf16.msra.mxu0 0
  %2656 = vmatprep.subr.bf16.mxu0 0
  %2657 = vmatpush1.bf16.msra.mxu0 0
  %2658 = vmatprep.subr.bf16.mxu0 0
  %2659 = vmatpush1.bf16.msra.mxu0 0
  %2660 = vmatprep.subr.bf16.mxu0 0
  %2661 = vmatpush1.bf16.msra.mxu0 0
  %2662 = vmatprep.mubr.bf16.mxu0 0
  %2663 = vmatmul.mubr.bf16.gmra.mrb[0].mxu0 %v2625
  %v2664 = vpop.f32.mrb[0].mxu0
  %v2665 = vadd.f32 0.0, %v2664
  %v2666 = vpop.f32.mrb[0].mxu0
  %v2667 = vpop.f32.mrb[0].mxu0
  %v2668 = vpop.f32.mrb[0].mxu0
  %2669 = vdwg.mxu0
  %v2671 = vsel %vm460, %v364, 0
  %v2674 = vsel %vm464, %v436, 0
  %2676 = vmatprep.subr.bf16.mxu0 0
  %2677 = vmatpush1.bf16.msra.mxu0 %v2674
  %2678 = vmatprep.subr.bf16.mxu0 0
  %2679 = vmatpush1.bf16.msra.mxu0 0
  %2680 = vmatprep.subr.bf16.mxu0 0
  %2681 = vmatpush1.bf16.msra.mxu0 0
  %2682 = vmatprep.subr.bf16.mxu0 0
  %2683 = vmatpush1.bf16.msra.mxu0 0
  %2684 = vmatprep.subr.bf16.mxu0 0
  %2685 = vmatpush1.bf16.msra.mxu0 0
  %2686 = vmatprep.subr.bf16.mxu0 0
  %2687 = vmatpush1.bf16.msra.mxu0 0
  %2688 = vmatprep.subr.bf16.mxu0 0
  %2689 = vmatpush1.bf16.msra.mxu0 0
  %2690 = vmatprep.subr.bf16.mxu0 0
  %2691 = vmatpush1.bf16.msra.mxu0 0
  %2692 = vmatprep.subr.bf16.mxu0 0
  %2693 = vmatpush1.bf16.msra.mxu0 0
  %2694 = vmatprep.subr.bf16.mxu0 0
  %2695 = vmatpush1.bf16.msra.mxu0 0
  %2696 = vmatprep.subr.bf16.mxu0 0
  %2697 = vmatpush1.bf16.msra.mxu0 0
  %2698 = vmatprep.subr.bf16.mxu0 0
  %2699 = vmatpush1.bf16.msra.mxu0 0
  %2700 = vmatprep.subr.bf16.mxu0 0
  %2701 = vmatpush1.bf16.msra.mxu0 0
  %2702 = vmatprep.subr.bf16.mxu0 0
  %2703 = vmatpush1.bf16.msra.mxu0 0
  %2704 = vmatprep.subr.bf16.mxu0 0
  %2705 = vmatpush1.bf16.msra.mxu0 0
  %2706 = vmatprep.subr.bf16.mxu0 0
  %2707 = vmatpush1.bf16.msra.mxu0 0
  %2708 = vmatprep.mubr.bf16.mxu0 0
  %2709 = vmatmul.mubr.bf16.gmra.mrb[0].mxu0 %v2671
  %v2710 = vpop.f32.mrb[0].mxu0
  %v2711 = vadd.f32 0.0, %v2710
  %v2712 = vpop.f32.mrb[0].mxu0
  %v2713 = vpop.f32.mrb[0].mxu0
  %v2714 = vpop.f32.mrb[0].mxu0
  %2715 = vdwg.mxu0
  %v2717 = vsel %vm460, %v365, 0
  %v2720 = vsel %vm464, %v437, 0
  %2722 = vmatprep.subr.bf16.mxu0 0
  %2723 = vmatpush1.bf16.msra.mxu0 %v2720
  %2724 = vmatprep.subr.bf16.mxu0 0
  %2725 = vmatpush1.bf16.msra.mxu0 0
  %2726 = vmatprep.subr.bf16.mxu0 0
  %2727 = vmatpush1.bf16.msra.mxu0 0
  %2728 = vmatprep.subr.bf16.mxu0 0
  %2729 = vmatpush1.bf16.msra.mxu0 0
  %2730 = vmatprep.subr.bf16.mxu0 0
  %2731 = vmatpush1.bf16.msra.mxu0 0
  %2732 = vmatprep.subr.bf16.mxu0 0
  %2733 = vmatpush1.bf16.msra.mxu0 0
  %2734 = vmatprep.subr.bf16.mxu0 0
  %2735 = vmatpush1.bf16.msra.mxu0 0
  %2736 = vmatprep.subr.bf16.mxu0 0
  %2737 = vmatpush1.bf16.msra.mxu0 0
  %2738 = vmatprep.subr.bf16.mxu0 0
  %2739 = vmatpush1.bf16.msra.mxu0 0
  %2740 = vmatprep.subr.bf16.mxu0 0
  %2741 = vmatpush1.bf16.msra.mxu0 0
  %2742 = vmatprep.subr.bf16.mxu0 0
  %2743 = vmatpush1.bf16.msra.mxu0 0
  %2744 = vmatprep.subr.bf16.mxu0 0
  %2745 = vmatpush1.bf16.msra.mxu0 0
  %2746 = vmatprep.subr.bf16.mxu0 0
  %2747 = vmatpush1.bf16.msra.mxu0 0
  %2748 = vmatprep.subr.bf16.mxu0 0
  %2749 = vmatpush1.bf16.msra.mxu0 0
  %2750 = vmatprep.subr.bf16.mxu0 0
  %2751 = vmatpush1.bf16.msra.mxu0 0
  %2752 = vmatprep.subr.bf16.mxu0 0
  %2753 = vmatpush1.bf16.msra.mxu0 0
  %2754 = vmatprep.mubr.bf16.mxu0 0
  %2755 = vmatmul.mubr.bf16.gmra.mrb[0].mxu0 %v2717
  %v2756 = vpop.f32.mrb[0].mxu0
  %v2757 = vadd.f32 0.0, %v2756
  %v2758 = vpop.f32.mrb[0].mxu0
  %v2759 = vpop.f32.mrb[0].mxu0
  %v2760 = vpop.f32.mrb[0].mxu0
  %2761 = vdwg.mxu0
  %v2763 = vsel %vm460, %v366, 0
  %v2766 = vsel %vm464, %v438, 0
  %2768 = vmatprep.subr.bf16.mxu0 0
  %2769 = vmatpush1.bf16.msra.mxu0 %v2766
  %2770 = vmatprep.subr.bf16.mxu0 0
  %2771 = vmatpush1.bf16.msra.mxu0 0
  %2772 = vmatprep.subr.bf16.mxu0 0
  %2773 = vmatpush1.bf16.msra.mxu0 0
  %2774 = vmatprep.subr.bf16.mxu0 0
  %2775 = vmatpush1.bf16.msra.mxu0 0
  %2776 = vmatprep.subr.bf16.mxu0 0
  %2777 = vmatpush1.bf16.msra.mxu0 0
  %2778 = vmatprep.subr.bf16.mxu0 0
  %2779 = vmatpush1.bf16.msra.mxu0 0
  %2780 = vmatprep.subr.bf16.mxu0 0
  %2781 = vmatpush1.bf16.msra.mxu0 0
  %2782 = vmatprep.subr.bf16.mxu0 0
  %2783 = vmatpush1.bf16.msra.mxu0 0
  %2784 = vmatprep.subr.bf16.mxu0 0
  %2785 = vmatpush1.bf16.msra.mxu0 0
  %2786 = vmatprep.subr.bf16.mxu0 0
  %2787 = vmatpush1.bf16.msra.mxu0 0
  %2788 = vmatprep.subr.bf16.mxu0 0
  %2789 = vmatpush1.bf16.msra.mxu0 0
  %2790 = vmatprep.subr.bf16.mxu0 0
  %2791 = vmatpush1.bf16.msra.mxu0 0
  %2792 = vmatprep.subr.bf16.mxu0 0
  %2793 = vmatpush1.bf16.msra.mxu0 0
  %2794 = vmatprep.subr.bf16.mxu0 0
  %2795 = vmatpush1.bf16.msra.mxu0 0
  %2796 = vmatprep.subr.bf16.mxu0 0
  %2797 = vmatpush1.bf16.msra.mxu0 0
  %2798 = vmatprep.subr.bf16.mxu0 0
  %2799 = vmatpush1.bf16.msra.mxu0 0
  %2800 = vmatprep.mubr.bf16.mxu0 0
  %2801 = vmatmul.mubr.bf16.gmra.mrb[0].mxu0 %v2763
  %v2802 = vpop.f32.mrb[0].mxu0
  %v2803 = vadd.f32 0.0, %v2802
  %v2804 = vpop.f32.mrb[0].mxu0
  %v2805 = vpop.f32.mrb[0].mxu0
  %v2806 = vpop.f32.mrb[0].mxu0
  %2807 = vdwg.mxu0
  %v2809 = vsel %vm460, %v367, 0
  %v2812 = vsel %vm464, %v439, 0
  %2814 = vmatprep.subr.bf16.mxu0 0
  %2815 = vmatpush1.bf16.msra.mxu0 %v2812
  %2816 = vmatprep.subr.bf16.mxu0 0
  %2817 = vmatpush1.bf16.msra.mxu0 0
  %2818 = vmatprep.subr.bf16.mxu0 0
  %2819 = vmatpush1.bf16.msra.mxu0 0
  %2820 = vmatprep.subr.bf16.mxu0 0
  %2821 = vmatpush1.bf16.msra.mxu0 0
  %2822 = vmatprep.subr.bf16.mxu0 0
  %2823 = vmatpush1.bf16.msra.mxu0 0
  %2824 = vmatprep.subr.bf16.mxu0 0
  %2825 = vmatpush1.bf16.msra.mxu0 0
  %2826 = vmatprep.subr.bf16.mxu0 0
  %2827 = vmatpush1.bf16.msra.mxu0 0
  %2828 = vmatprep.subr.bf16.mxu0 0
  %2829 = vmatpush1.bf16.msra.mxu0 0
  %2830 = vmatprep.subr.bf16.mxu0 0
  %2831 = vmatpush1.bf16.msra.mxu0 0
  %2832 = vmatprep.subr.bf16.mxu0 0
  %2833 = vmatpush1.bf16.msra.mxu0 0
  %2834 = vmatprep.subr.bf16.mxu0 0
  %2835 = vmatpush1.bf16.msra.mxu0 0
  %2836 = vmatprep.subr.bf16.mxu0 0
  %2837 = vmatpush1.bf16.msra.mxu0 0
  %2838 = vmatprep.subr.bf16.mxu0 0
  %2839 = vmatpush1.bf16.msra.mxu0 0
  %2840 = vmatprep.subr.bf16.mxu0 0
  %2841 = vmatpush1.bf16.msra.mxu0 0
  %2842 = vmatprep.subr.bf16.mxu0 0
  %2843 = vmatpush1.bf16.msra.mxu0 0
  %2844 = vmatprep.subr.bf16.mxu0 0
  %2845 = vmatpush1.bf16.msra.mxu0 0
  %2846 = vmatprep.mubr.bf16.mxu0 0
  %2847 = vmatmul.mubr.bf16.gmra.mrb[0].mxu0 %v2809
  %v2848 = vpop.f32.mrb[0].mxu0
  %v2849 = vadd.f32 0.0, %v2848
  %v2850 = vpop.f32.mrb[0].mxu0
  %v2851 = vpop.f32.mrb[0].mxu0
  %v2852 = vpop.f32.mrb[0].mxu0
  %2853 = vdwg.mxu0
  %v2855 = vsel %vm460, %v368, 0
  %v2858 = vsel %vm464, %v440, 0
  %2860 = vmatprep.subr.bf16.mxu0 0
  %2861 = vmatpush1.bf16.msra.mxu0 %v2858
  %2862 = vmatprep.subr.bf16.mxu0 0
  %2863 = vmatpush1.bf16.msra.mxu0 0
  %2864 = vmatprep.subr.bf16.mxu0 0
  %2865 = vmatpush1.bf16.msra.mxu0 0
  %2866 = vmatprep.subr.bf16.mxu0 0
  %2867 = vmatpush1.bf16.msra.mxu0 0
  %2868 = vmatprep.subr.bf16.mxu0 0
  %2869 = vmatpush1.bf16.msra.mxu0 0
  %2870 = vmatprep.subr.bf16.mxu0 0
  %2871 = vmatpush1.bf16.msra.mxu0 0
  %2872 = vmatprep.subr.bf16.mxu0 0
  %2873 = vmatpush1.bf16.msra.mxu0 0
  %2874 = vmatprep.subr.bf16.mxu0 0
  %2875 = vmatpush1.bf16.msra.mxu0 0
  %2876 = vmatprep.subr.bf16.mxu0 0
  %2877 = vmatpush1.bf16.msra.mxu0 0
  %2878 = vmatprep.subr.bf16.mxu0 0
  %2879 = vmatpush1.bf16.msra.mxu0 0
  %2880 = vmatprep.subr.bf16.mxu0 0
  %2881 = vmatpush1.bf16.msra.mxu0 0
  %2882 = vmatprep.subr.bf16.mxu0 0
  %2883 = vmatpush1.bf16.msra.mxu0 0
  %2884 = vmatprep.subr.bf16.mxu0 0
  %2885 = vmatpush1.bf16.msra.mxu0 0
  %2886 = vmatprep.subr.bf16.mxu0 0
  %2887 = vmatpush1.bf16.msra.mxu0 0
  %2888 = vmatprep.subr.bf16.mxu0 0
  %2889 = vmatpush1.bf16.msra.mxu0 0
  %2890 = vmatprep.subr.bf16.mxu0 0
  %2891 = vmatpush1.bf16.msra.mxu0 0
  %2892 = vmatprep.mubr.bf16.mxu0 0
  %2893 = vmatmul.mubr.bf16.gmra.mrb[0].mxu0 %v2855
  %v2894 = vpop.f32.mrb[0].mxu0
  %v2895 = vadd.f32 0.0, %v2894
  %v2896 = vpop.f32.mrb[0].mxu0
  %v2897 = vpop.f32.mrb[0].mxu0
  %v2898 = vpop.f32.mrb[0].mxu0
  %2899 = vdwg.mxu0
  %v2901 = vsel %vm460, %v369, 0
  %v2904 = vsel %vm464, %v441, 0
  %2906 = vmatprep.subr.bf16.mxu0 0
  %2907 = vmatpush1.bf16.msra.mxu0 %v2904
  %2908 = vmatprep.subr.bf16.mxu0 0
  %2909 = vmatpush1.bf16.msra.mxu0 0
  %2910 = vmatprep.subr.bf16.mxu0 0
  %2911 = vmatpush1.bf16.msra.mxu0 0
  %2912 = vmatprep.subr.bf16.mxu0 0
  %2913 = vmatpush1.bf16.msra.mxu0 0
  %2914 = vmatprep.subr.bf16.mxu0 0
  %2915 = vmatpush1.bf16.msra.mxu0 0
  %2916 = vmatprep.subr.bf16.mxu0 0
  %2917 = vmatpush1.bf16.msra.mxu0 0
  %2918 = vmatprep.subr.bf16.mxu0 0
  %2919 = vmatpush1.bf16.msra.mxu0 0
  %2920 = vmatprep.subr.bf16.mxu0 0
  %2921 = vmatpush1.bf16.msra.mxu0 0
  %2922 = vmatprep.subr.bf16.mxu0 0
  %2923 = vmatpush1.bf16.msra.mxu0 0
  %2924 = vmatprep.subr.bf16.mxu0 0
  %2925 = vmatpush1.bf16.msra.mxu0 0
  %2926 = vmatprep.subr.bf16.mxu0 0
  %2927 = vmatpush1.bf16.msra.mxu0 0
  %2928 = vmatprep.subr.bf16.mxu0 0
  %2929 = vmatpush1.bf16.msra.mxu0 0
  %2930 = vmatprep.subr.bf16.mxu0 0
  %2931 = vmatpush1.bf16.msra.mxu0 0
  %2932 = vmatprep.subr.bf16.mxu0 0
  %2933 = vmatpush1.bf16.msra.mxu0 0
  %2934 = vmatprep.subr.bf16.mxu0 0
  %2935 = vmatpush1.bf16.msra.mxu0 0
  %2936 = vmatprep.subr.bf16.mxu0 0
  %2937 = vmatpush1.bf16.msra.mxu0 0
  %2938 = vmatprep.mubr.bf16.mxu0 0
  %2939 = vmatmul.mubr.bf16.gmra.mrb[0].mxu0 %v2901
  %v2940 = vpop.f32.mrb[0].mxu0
  %v2941 = vadd.f32 0.0, %v2940
  %v2942 = vpop.f32.mrb[0].mxu0
  %v2943 = vpop.f32.mrb[0].mxu0
  %v2944 = vpop.f32.mrb[0].mxu0
  %2945 = vdwg.mxu0
  %v2947 = vsel %vm460, %v370, 0
  %v2950 = vsel %vm464, %v442, 0
  %2952 = vmatprep.subr.bf16.mxu0 0
  %2953 = vmatpush1.bf16.msra.mxu0 %v2950
  %2954 = vmatprep.subr.bf16.mxu0 0
  %2955 = vmatpush1.bf16.msra.mxu0 0
  %2956 = vmatprep.subr.bf16.mxu0 0
  %2957 = vmatpush1.bf16.msra.mxu0 0
  %2958 = vmatprep.subr.bf16.mxu0 0
  %2959 = vmatpush1.bf16.msra.mxu0 0
  %2960 = vmatprep.subr.bf16.mxu0 0
  %2961 = vmatpush1.bf16.msra.mxu0 0
  %2962 = vmatprep.subr.bf16.mxu0 0
  %2963 = vmatpush1.bf16.msra.mxu0 0
  %2964 = vmatprep.subr.bf16.mxu0 0
  %2965 = vmatpush1.bf16.msra.mxu0 0
  %2966 = vmatprep.subr.bf16.mxu0 0
  %2967 = vmatpush1.bf16.msra.mxu0 0
  %2968 = vmatprep.subr.bf16.mxu0 0
  %2969 = vmatpush1.bf16.msra.mxu0 0
  %2970 = vmatprep.subr.bf16.mxu0 0
  %2971 = vmatpush1.bf16.msra.mxu0 0
  %2972 = vmatprep.subr.bf16.mxu0 0
  %2973 = vmatpush1.bf16.msra.mxu0 0
  %2974 = vmatprep.subr.bf16.mxu0 0
  %2975 = vmatpush1.bf16.msra.mxu0 0
  %2976 = vmatprep.subr.bf16.mxu0 0
  %2977 = vmatpush1.bf16.msra.mxu0 0
  %2978 = vmatprep.subr.bf16.mxu0 0
  %2979 = vmatpush1.bf16.msra.mxu0 0
  %2980 = vmatprep.subr.bf16.mxu0 0
  %2981 = vmatpush1.bf16.msra.mxu0 0
  %2982 = vmatprep.subr.bf16.mxu0 0
  %2983 = vmatpush1.bf16.msra.mxu0 0
  %2984 = vmatprep.mubr.bf16.mxu0 0
  %2985 = vmatmul.mubr.bf16.gmra.mrb[0].mxu0 %v2947
  %v2986 = vpop.f32.mrb[0].mxu0
  %v2987 = vadd.f32 0.0, %v2986
  %v2988 = vpop.f32.mrb[0].mxu0
  %v2989 = vpop.f32.mrb[0].mxu0
  %v2990 = vpop.f32.mrb[0].mxu0
  %2991 = vdwg.mxu0
  %v2993 = vsel %vm460, %v371, 0
  %v2996 = vsel %vm464, %v443, 0
  %2998 = vmatprep.subr.bf16.mxu0 0
  %2999 = vmatpush1.bf16.msra.mxu0 %v2996
  %3000 = vmatprep.subr.bf16.mxu0 0
  %3001 = vmatpush1.bf16.msra.mxu0 0
  %3002 = vmatprep.subr.bf16.mxu0 0
  %3003 = vmatpush1.bf16.msra.mxu0 0
  %3004 = vmatprep.subr.bf16.mxu0 0
  %3005 = vmatpush1.bf16.msra.mxu0 0
  %3006 = vmatprep.subr.bf16.mxu0 0
  %3007 = vmatpush1.bf16.msra.mxu0 0
  %3008 = vmatprep.subr.bf16.mxu0 0
  %3009 = vmatpush1.bf16.msra.mxu0 0
  %3010 = vmatprep.subr.bf16.mxu0 0
  %3011 = vmatpush1.bf16.msra.mxu0 0
  %3012 = vmatprep.subr.bf16.mxu0 0
  %3013 = vmatpush1.bf16.msra.mxu0 0
  %3014 = vmatprep.subr.bf16.mxu0 0
  %3015 = vmatpush1.bf16.msra.mxu0 0
  %3016 = vmatprep.subr.bf16.mxu0 0
  %3017 = vmatpush1.bf16.msra.mxu0 0
  %3018 = vmatprep.subr.bf16.mxu0 0
  %3019 = vmatpush1.bf16.msra.mxu0 0
  %3020 = vmatprep.subr.bf16.mxu0 0
  %3021 = vmatpush1.bf16.msra.mxu0 0
  %3022 = vmatprep.subr.bf16.mxu0 0
  %3023 = vmatpush1.bf16.msra.mxu0 0
  %3024 = vmatprep.subr.bf16.mxu0 0
  %3025 = vmatpush1.bf16.msra.mxu0 0
  %3026 = vmatprep.subr.bf16.mxu0 0
  %3027 = vmatpush1.bf16.msra.mxu0 0
  %3028 = vmatprep.subr.bf16.mxu0 0
  %3029 = vmatpush1.bf16.msra.mxu0 0
  %3030 = vmatprep.mubr.bf16.mxu0 0
  %3031 = vmatmul.mubr.bf16.gmra.mrb[0].mxu0 %v2993
  %v3032 = vpop.f32.mrb[0].mxu0
  %v3033 = vadd.f32 0.0, %v3032
  %v3034 = vpop.f32.mrb[0].mxu0
  %v3035 = vpop.f32.mrb[0].mxu0
  %v3036 = vpop.f32.mrb[0].mxu0
  %3037 = vdwg.mxu0
  %v3039 = vsel %vm460, %v372, 0
  %v3042 = vsel %vm464, %v444, 0
  %3044 = vmatprep.subr.bf16.mxu0 0
  %3045 = vmatpush1.bf16.msra.mxu0 %v3042
  %3046 = vmatprep.subr.bf16.mxu0 0
  %3047 = vmatpush1.bf16.msra.mxu0 0
  %3048 = vmatprep.subr.bf16.mxu0 0
  %3049 = vmatpush1.bf16.msra.mxu0 0
  %3050 = vmatprep.subr.bf16.mxu0 0
  %3051 = vmatpush1.bf16.msra.mxu0 0
  %3052 = vmatprep.subr.bf16.mxu0 0
  %3053 = vmatpush1.bf16.msra.mxu0 0
  %3054 = vmatprep.subr.bf16.mxu0 0
  %3055 = vmatpush1.bf16.msra.mxu0 0
  %3056 = vmatprep.subr.bf16.mxu0 0
  %3057 = vmatpush1.bf16.msra.mxu0 0
  %3058 = vmatprep.subr.bf16.mxu0 0
  %3059 = vmatpush1.bf16.msra.mxu0 0
  %3060 = vmatprep.subr.bf16.mxu0 0
  %3061 = vmatpush1.bf16.msra.mxu0 0
  %3062 = vmatprep.subr.bf16.mxu0 0
  %3063 = vmatpush1.bf16.msra.mxu0 0
  %3064 = vmatprep.subr.bf16.mxu0 0
  %3065 = vmatpush1.bf16.msra.mxu0 0
  %3066 = vmatprep.subr.bf16.mxu0 0
  %3067 = vmatpush1.bf16.msra.mxu0 0
  %3068 = vmatprep.subr.bf16.mxu0 0
  %3069 = vmatpush1.bf16.msra.mxu0 0
  %3070 = vmatprep.subr.bf16.mxu0 0
  %3071 = vmatpush1.bf16.msra.mxu0 0
  %3072 = vmatprep.subr.bf16.mxu0 0
  %3073 = vmatpush1.bf16.msra.mxu0 0
  %3074 = vmatprep.subr.bf16.mxu0 0
  %3075 = vmatpush1.bf16.msra.mxu0 0
  %3076 = vmatprep.mubr.bf16.mxu0 0
  %3077 = vmatmul.mubr.bf16.gmra.mrb[0].mxu0 %v3039
  %v3078 = vpop.f32.mrb[0].mxu0
  %v3079 = vadd.f32 0.0, %v3078
  %v3080 = vpop.f32.mrb[0].mxu0
  %v3081 = vpop.f32.mrb[0].mxu0
  %v3082 = vpop.f32.mrb[0].mxu0
  %3083 = vdwg.mxu0
  %v3085 = vsel %vm460, %v373, 0
  %v3088 = vsel %vm464, %v445, 0
  %3090 = vmatprep.subr.bf16.mxu0 0
  %3091 = vmatpush1.bf16.msra.mxu0 %v3088
  %3092 = vmatprep.subr.bf16.mxu0 0
  %3093 = vmatpush1.bf16.msra.mxu0 0
  %3094 = vmatprep.subr.bf16.mxu0 0
  %3095 = vmatpush1.bf16.msra.mxu0 0
  %3096 = vmatprep.subr.bf16.mxu0 0
  %3097 = vmatpush1.bf16.msra.mxu0 0
  %3098 = vmatprep.subr.bf16.mxu0 0
  %3099 = vmatpush1.bf16.msra.mxu0 0
  %3100 = vmatprep.subr.bf16.mxu0 0
  %3101 = vmatpush1.bf16.msra.mxu0 0
  %3102 = vmatprep.subr.bf16.mxu0 0
  %3103 = vmatpush1.bf16.msra.mxu0 0
  %3104 = vmatprep.subr.bf16.mxu0 0
  %3105 = vmatpush1.bf16.msra.mxu0 0
  %3106 = vmatprep.subr.bf16.mxu0 0
  %3107 = vmatpush1.bf16.msra.mxu0 0
  %3108 = vmatprep.subr.bf16.mxu0 0
  %3109 = vmatpush1.bf16.msra.mxu0 0
  %3110 = vmatprep.subr.bf16.mxu0 0
  %3111 = vmatpush1.bf16.msra.mxu0 0
  %3112 = vmatprep.subr.bf16.mxu0 0
  %3113 = vmatpush1.bf16.msra.mxu0 0
  %3114 = vmatprep.subr.bf16.mxu0 0
  %3115 = vmatpush1.bf16.msra.mxu0 0
  %3116 = vmatprep.subr.bf16.mxu0 0
  %3117 = vmatpush1.bf16.msra.mxu0 0
  %3118 = vmatprep.subr.bf16.mxu0 0
  %3119 = vmatpush1.bf16.msra.mxu0 0
  %3120 = vmatprep.subr.bf16.mxu0 0
  %3121 = vmatpush1.bf16.msra.mxu0 0
  %3122 = vmatprep.mubr.bf16.mxu0 0
  %3123 = vmatmul.mubr.bf16.gmra.mrb[0].mxu0 %v3085
  %v3124 = vpop.f32.mrb[0].mxu0
  %v3125 = vadd.f32 0.0, %v3124
  %v3126 = vpop.f32.mrb[0].mxu0
  %v3127 = vpop.f32.mrb[0].mxu0
  %v3128 = vpop.f32.mrb[0].mxu0
  %3129 = vdwg.mxu0
  %v3131 = vsel %vm460, %v374, 0
  %v3134 = vsel %vm464, %v446, 0
  %3136 = vmatprep.subr.bf16.mxu0 0
  %3137 = vmatpush1.bf16.msra.mxu0 %v3134
  %3138 = vmatprep.subr.bf16.mxu0 0
  %3139 = vmatpush1.bf16.msra.mxu0 0
  %3140 = vmatprep.subr.bf16.mxu0 0
  %3141 = vmatpush1.bf16.msra.mxu0 0
  %3142 = vmatprep.subr.bf16.mxu0 0
  %3143 = vmatpush1.bf16.msra.mxu0 0
  %3144 = vmatprep.subr.bf16.mxu0 0
  %3145 = vmatpush1.bf16.msra.mxu0 0
  %3146 = vmatprep.subr.bf16.mxu0 0
  %3147 = vmatpush1.bf16.msra.mxu0 0
  %3148 = vmatprep.subr.bf16.mxu0 0
  %3149 = vmatpush1.bf16.msra.mxu0 0
  %3150 = vmatprep.subr.bf16.mxu0 0
  %3151 = vmatpush1.bf16.msra.mxu0 0
  %3152 = vmatprep.subr.bf16.mxu0 0
  %3153 = vmatpush1.bf16.msra.mxu0 0
  %3154 = vmatprep.subr.bf16.mxu0 0
  %3155 = vmatpush1.bf16.msra.mxu0 0
  %3156 = vmatprep.subr.bf16.mxu0 0
  %3157 = vmatpush1.bf16.msra.mxu0 0
  %3158 = vmatprep.subr.bf16.mxu0 0
  %3159 = vmatpush1.bf16.msra.mxu0 0
  %3160 = vmatprep.subr.bf16.mxu0 0
  %3161 = vmatpush1.bf16.msra.mxu0 0
  %3162 = vmatprep.subr.bf16.mxu0 0
  %3163 = vmatpush1.bf16.msra.mxu0 0
  %3164 = vmatprep.subr.bf16.mxu0 0
  %3165 = vmatpush1.bf16.msra.mxu0 0
  %3166 = vmatprep.subr.bf16.mxu0 0
  %3167 = vmatpush1.bf16.msra.mxu0 0
  %3168 = vmatprep.mubr.bf16.mxu0 0
  %3169 = vmatmul.mubr.bf16.gmra.mrb[0].mxu0 %v3131
  %v3170 = vpop.f32.mrb[0].mxu0
  %v3171 = vadd.f32 0.0, %v3170
  %v3172 = vpop.f32.mrb[0].mxu0
  %v3173 = vpop.f32.mrb[0].mxu0
  %v3174 = vpop.f32.mrb[0].mxu0
  %3175 = vdwg.mxu0
  %v3177 = vsel %vm460, %v375, 0
  %v3180 = vsel %vm464, %v447, 0
  %3182 = vmatprep.subr.bf16.mxu0 0
  %3183 = vmatpush1.bf16.msra.mxu0 %v3180
  %3184 = vmatprep.subr.bf16.mxu0 0
  %3185 = vmatpush1.bf16.msra.mxu0 0
  %3186 = vmatprep.subr.bf16.mxu0 0
  %3187 = vmatpush1.bf16.msra.mxu0 0
  %3188 = vmatprep.subr.bf16.mxu0 0
  %3189 = vmatpush1.bf16.msra.mxu0 0
  %3190 = vmatprep.subr.bf16.mxu0 0
  %3191 = vmatpush1.bf16.msra.mxu0 0
  %3192 = vmatprep.subr.bf16.mxu0 0
  %3193 = vmatpush1.bf16.msra.mxu0 0
  %3194 = vmatprep.subr.bf16.mxu0 0
  %3195 = vmatpush1.bf16.msra.mxu0 0
  %3196 = vmatprep.subr.bf16.mxu0 0
  %3197 = vmatpush1.bf16.msra.mxu0 0
  %3198 = vmatprep.subr.bf16.mxu0 0
  %3199 = vmatpush1.bf16.msra.mxu0 0
  %3200 = vmatprep.subr.bf16.mxu0 0
  %3201 = vmatpush1.bf16.msra.mxu0 0
  %3202 = vmatprep.subr.bf16.mxu0 0
  %3203 = vmatpush1.bf16.msra.mxu0 0
  %3204 = vmatprep.subr.bf16.mxu0 0
  %3205 = vmatpush1.bf16.msra.mxu0 0
  %3206 = vmatprep.subr.bf16.mxu0 0
  %3207 = vmatpush1.bf16.msra.mxu0 0
  %3208 = vmatprep.subr.bf16.mxu0 0
  %3209 = vmatpush1.bf16.msra.mxu0 0
  %3210 = vmatprep.subr.bf16.mxu0 0
  %3211 = vmatpush1.bf16.msra.mxu0 0
  %3212 = vmatprep.subr.bf16.mxu0 0
  %3213 = vmatpush1.bf16.msra.mxu0 0
  %3214 = vmatprep.mubr.bf16.mxu0 0
  %3215 = vmatmul.mubr.bf16.gmra.mrb[0].mxu0 %v3177
  %v3216 = vpop.f32.mrb[0].mxu0
  %v3217 = vadd.f32 0.0, %v3216
  %v3218 = vpop.f32.mrb[0].mxu0
  %v3219 = vpop.f32.mrb[0].mxu0
  %v3220 = vpop.f32.mrb[0].mxu0
  %3221 = vdwg.mxu0
  %v3223 = vsel %vm460, %v376, 0
  %v3226 = vsel %vm464, %v448, 0
  %3228 = vmatprep.subr.bf16.mxu0 0
  %3229 = vmatpush1.bf16.msra.mxu0 %v3226
  %3230 = vmatprep.subr.bf16.mxu0 0
  %3231 = vmatpush1.bf16.msra.mxu0 0
  %3232 = vmatprep.subr.bf16.mxu0 0
  %3233 = vmatpush1.bf16.msra.mxu0 0
  %3234 = vmatprep.subr.bf16.mxu0 0
  %3235 = vmatpush1.bf16.msra.mxu0 0
  %3236 = vmatprep.subr.bf16.mxu0 0
  %3237 = vmatpush1.bf16.msra.mxu0 0
  %3238 = vmatprep.subr.bf16.mxu0 0
  %3239 = vmatpush1.bf16.msra.mxu0 0
  %3240 = vmatprep.subr.bf16.mxu0 0
  %3241 = vmatpush1.bf16.msra.mxu0 0
  %3242 = vmatprep.subr.bf16.mxu0 0
  %3243 = vmatpush1.bf16.msra.mxu0 0
  %3244 = vmatprep.subr.bf16.mxu0 0
  %3245 = vmatpush1.bf16.msra.mxu0 0
  %3246 = vmatprep.subr.bf16.mxu0 0
  %3247 = vmatpush1.bf16.msra.mxu0 0
  %3248 = vmatprep.subr.bf16.mxu0 0
  %3249 = vmatpush1.bf16.msra.mxu0 0
  %3250 = vmatprep.subr.bf16.mxu0 0
  %3251 = vmatpush1.bf16.msra.mxu0 0
  %3252 = vmatprep.subr.bf16.mxu0 0
  %3253 = vmatpush1.bf16.msra.mxu0 0
  %3254 = vmatprep.subr.bf16.mxu0 0
  %3255 = vmatpush1.bf16.msra.mxu0 0
  %3256 = vmatprep.subr.bf16.mxu0 0
  %3257 = vmatpush1.bf16.msra.mxu0 0
  %3258 = vmatprep.subr.bf16.mxu0 0
  %3259 = vmatpush1.bf16.msra.mxu0 0
  %3260 = vmatprep.mubr.bf16.mxu0 0
  %3261 = vmatmul.mubr.bf16.gmra.mrb[0].mxu0 %v3223
  %v3262 = vpop.f32.mrb[0].mxu0
  %v3263 = vadd.f32 0.0, %v3262
  %v3264 = vpop.f32.mrb[0].mxu0
  %v3265 = vpop.f32.mrb[0].mxu0
  %v3266 = vpop.f32.mrb[0].mxu0
  %3267 = vdwg.mxu0
  %v3269 = vsel %vm460, %v377, 0
  %v3272 = vsel %vm464, %v449, 0
  %3274 = vmatprep.subr.bf16.mxu0 0
  %3275 = vmatpush1.bf16.msra.mxu0 %v3272
  %3276 = vmatprep.subr.bf16.mxu0 0
  %3277 = vmatpush1.bf16.msra.mxu0 0
  %3278 = vmatprep.subr.bf16.mxu0 0
  %3279 = vmatpush1.bf16.msra.mxu0 0
  %3280 = vmatprep.subr.bf16.mxu0 0
  %3281 = vmatpush1.bf16.msra.mxu0 0
  %3282 = vmatprep.subr.bf16.mxu0 0
  %3283 = vmatpush1.bf16.msra.mxu0 0
  %3284 = vmatprep.subr.bf16.mxu0 0
  %3285 = vmatpush1.bf16.msra.mxu0 0
  %3286 = vmatprep.subr.bf16.mxu0 0
  %3287 = vmatpush1.bf16.msra.mxu0 0
  %3288 = vmatprep.subr.bf16.mxu0 0
  %3289 = vmatpush1.bf16.msra.mxu0 0
  %3290 = vmatprep.subr.bf16.mxu0 0
  %3291 = vmatpush1.bf16.msra.mxu0 0
  %3292 = vmatprep.subr.bf16.mxu0 0
  %3293 = vmatpush1.bf16.msra.mxu0 0
  %3294 = vmatprep.subr.bf16.mxu0 0
  %3295 = vmatpush1.bf16.msra.mxu0 0
  %3296 = vmatprep.subr.bf16.mxu0 0
  %3297 = vmatpush1.bf16.msra.mxu0 0
  %3298 = vmatprep.subr.bf16.mxu0 0
  %3299 = vmatpush1.bf16.msra.mxu0 0
  %3300 = vmatprep.subr.bf16.mxu0 0
  %3301 = vmatpush1.bf16.msra.mxu0 0
  %3302 = vmatprep.subr.bf16.mxu0 0
  %3303 = vmatpush1.bf16.msra.mxu0 0
  %3304 = vmatprep.subr.bf16.mxu0 0
  %3305 = vmatpush1.bf16.msra.mxu0 0
  %3306 = vmatprep.mubr.bf16.mxu0 0
  %3307 = vmatmul.mubr.bf16.gmra.mrb[0].mxu0 %v3269
  %v3308 = vpop.f32.mrb[0].mxu0
  %v3309 = vadd.f32 0.0, %v3308
  %v3310 = vpop.f32.mrb[0].mxu0
  %v3311 = vpop.f32.mrb[0].mxu0
  %v3312 = vpop.f32.mrb[0].mxu0
  %3313 = vdwg.mxu0
  %v3315 = vsel %vm460, %v378, 0
  %v3318 = vsel %vm464, %v450, 0
  %3320 = vmatprep.subr.bf16.mxu0 0
  %3321 = vmatpush1.bf16.msra.mxu0 %v3318
  %3322 = vmatprep.subr.bf16.mxu0 0
  %3323 = vmatpush1.bf16.msra.mxu0 0
  %3324 = vmatprep.subr.bf16.mxu0 0
  %3325 = vmatpush1.bf16.msra.mxu0 0
  %3326 = vmatprep.subr.bf16.mxu0 0
  %3327 = vmatpush1.bf16.msra.mxu0 0
  %3328 = vmatprep.subr.bf16.mxu0 0
  %3329 = vmatpush1.bf16.msra.mxu0 0
  %3330 = vmatprep.subr.bf16.mxu0 0
  %3331 = vmatpush1.bf16.msra.mxu0 0
  %3332 = vmatprep.subr.bf16.mxu0 0
  %3333 = vmatpush1.bf16.msra.mxu0 0
  %3334 = vmatprep.subr.bf16.mxu0 0
  %3335 = vmatpush1.bf16.msra.mxu0 0
  %3336 = vmatprep.subr.bf16.mxu0 0
  %3337 = vmatpush1.bf16.msra.mxu0 0
  %3338 = vmatprep.subr.bf16.mxu0 0
  %3339 = vmatpush1.bf16.msra.mxu0 0
  %3340 = vmatprep.subr.bf16.mxu0 0
  %3341 = vmatpush1.bf16.msra.mxu0 0
  %3342 = vmatprep.subr.bf16.mxu0 0
  %3343 = vmatpush1.bf16.msra.mxu0 0
  %3344 = vmatprep.subr.bf16.mxu0 0
  %3345 = vmatpush1.bf16.msra.mxu0 0
  %3346 = vmatprep.subr.bf16.mxu0 0
  %3347 = vmatpush1.bf16.msra.mxu0 0
  %3348 = vmatprep.subr.bf16.mxu0 0
  %3349 = vmatpush1.bf16.msra.mxu0 0
  %3350 = vmatprep.subr.bf16.mxu0 0
  %3351 = vmatpush1.bf16.msra.mxu0 0
  %3352 = vmatprep.mubr.bf16.mxu0 0
  %3353 = vmatmul.mubr.bf16.gmra.mrb[0].mxu0 %v3315
  %v3354 = vpop.f32.mrb[0].mxu0
  %v3355 = vadd.f32 0.0, %v3354
  %v3356 = vpop.f32.mrb[0].mxu0
  %v3357 = vpop.f32.mrb[0].mxu0
  %v3358 = vpop.f32.mrb[0].mxu0
  %3359 = vdwg.mxu0
  %v3361 = vsel %vm460, %v379, 0
  %v3364 = vsel %vm464, %v451, 0
  %3366 = vmatprep.subr.bf16.mxu0 0
  %3367 = vmatpush1.bf16.msra.mxu0 %v3364
  %3368 = vmatprep.subr.bf16.mxu0 0
  %3369 = vmatpush1.bf16.msra.mxu0 0
  %3370 = vmatprep.subr.bf16.mxu0 0
  %3371 = vmatpush1.bf16.msra.mxu0 0
  %3372 = vmatprep.subr.bf16.mxu0 0
  %3373 = vmatpush1.bf16.msra.mxu0 0
  %3374 = vmatprep.subr.bf16.mxu0 0
  %3375 = vmatpush1.bf16.msra.mxu0 0
  %3376 = vmatprep.subr.bf16.mxu0 0
  %3377 = vmatpush1.bf16.msra.mxu0 0
  %3378 = vmatprep.subr.bf16.mxu0 0
  %3379 = vmatpush1.bf16.msra.mxu0 0
  %3380 = vmatprep.subr.bf16.mxu0 0
  %3381 = vmatpush1.bf16.msra.mxu0 0
  %3382 = vmatprep.subr.bf16.mxu0 0
  %3383 = vmatpush1.bf16.msra.mxu0 0
  %3384 = vmatprep.subr.bf16.mxu0 0
  %3385 = vmatpush1.bf16.msra.mxu0 0
  %3386 = vmatprep.subr.bf16.mxu0 0
  %3387 = vmatpush1.bf16.msra.mxu0 0
  %3388 = vmatprep.subr.bf16.mxu0 0
  %3389 = vmatpush1.bf16.msra.mxu0 0
  %3390 = vmatprep.subr.bf16.mxu0 0
  %3391 = vmatpush1.bf16.msra.mxu0 0
  %3392 = vmatprep.subr.bf16.mxu0 0
  %3393 = vmatpush1.bf16.msra.mxu0 0
  %3394 = vmatprep.subr.bf16.mxu0 0
  %3395 = vmatpush1.bf16.msra.mxu0 0
  %3396 = vmatprep.subr.bf16.mxu0 0
  %3397 = vmatpush1.bf16.msra.mxu0 0
  %3398 = vmatprep.mubr.bf16.mxu0 0
  %3399 = vmatmul.mubr.bf16.gmra.mrb[0].mxu0 %v3361
  %v3400 = vpop.f32.mrb[0].mxu0
  %v3401 = vadd.f32 0.0, %v3400
  %v3402 = vpop.f32.mrb[0].mxu0
  %v3403 = vpop.f32.mrb[0].mxu0
  %v3404 = vpop.f32.mrb[0].mxu0
  %3405 = vdwg.mxu0
  %v3407 = vsel %vm460, %v380, 0
  %v3410 = vsel %vm464, %v452, 0
  %3412 = vmatprep.subr.bf16.mxu0 0
  %3413 = vmatpush1.bf16.msra.mxu0 %v3410
  %3414 = vmatprep.subr.bf16.mxu0 0
  %3415 = vmatpush1.bf16.msra.mxu0 0
  %3416 = vmatprep.subr.bf16.mxu0 0
  %3417 = vmatpush1.bf16.msra.mxu0 0
  %3418 = vmatprep.subr.bf16.mxu0 0
  %3419 = vmatpush1.bf16.msra.mxu0 0
  %3420 = vmatprep.subr.bf16.mxu0 0
  %3421 = vmatpush1.bf16.msra.mxu0 0
  %3422 = vmatprep.subr.bf16.mxu0 0
  %3423 = vmatpush1.bf16.msra.mxu0 0
  %3424 = vmatprep.subr.bf16.mxu0 0
  %3425 = vmatpush1.bf16.msra.mxu0 0
  %3426 = vmatprep.subr.bf16.mxu0 0
  %3427 = vmatpush1.bf16.msra.mxu0 0
  %3428 = vmatprep.subr.bf16.mxu0 0
  %3429 = vmatpush1.bf16.msra.mxu0 0
  %3430 = vmatprep.subr.bf16.mxu0 0
  %3431 = vmatpush1.bf16.msra.mxu0 0
  %3432 = vmatprep.subr.bf16.mxu0 0
  %3433 = vmatpush1.bf16.msra.mxu0 0
  %3434 = vmatprep.subr.bf16.mxu0 0
  %3435 = vmatpush1.bf16.msra.mxu0 0
  %3436 = vmatprep.subr.bf16.mxu0 0
  %3437 = vmatpush1.bf16.msra.mxu0 0
  %3438 = vmatprep.subr.bf16.mxu0 0
  %3439 = vmatpush1.bf16.msra.mxu0 0
  %3440 = vmatprep.subr.bf16.mxu0 0
  %3441 = vmatpush1.bf16.msra.mxu0 0
  %3442 = vmatprep.subr.bf16.mxu0 0
  %3443 = vmatpush1.bf16.msra.mxu0 0
  %3444 = vmatprep.mubr.bf16.mxu0 0
  %3445 = vmatmul.mubr.bf16.gmra.mrb[0].mxu0 %v3407
  %v3446 = vpop.f32.mrb[0].mxu0
  %v3447 = vadd.f32 0.0, %v3446
  %v3448 = vpop.f32.mrb[0].mxu0
  %v3449 = vpop.f32.mrb[0].mxu0
  %v3450 = vpop.f32.mrb[0].mxu0
  %3451 = vdwg.mxu0
  %v3453 = vsel %vm460, %v381, 0
  %v3456 = vsel %vm464, %v453, 0
  %3458 = vmatprep.subr.bf16.mxu0 0
  %3459 = vmatpush1.bf16.msra.mxu0 %v3456
  %3460 = vmatprep.subr.bf16.mxu0 0
  %3461 = vmatpush1.bf16.msra.mxu0 0
  %3462 = vmatprep.subr.bf16.mxu0 0
  %3463 = vmatpush1.bf16.msra.mxu0 0
  %3464 = vmatprep.subr.bf16.mxu0 0
  %3465 = vmatpush1.bf16.msra.mxu0 0
  %3466 = vmatprep.subr.bf16.mxu0 0
  %3467 = vmatpush1.bf16.msra.mxu0 0
  %3468 = vmatprep.subr.bf16.mxu0 0
  %3469 = vmatpush1.bf16.msra.mxu0 0
  %3470 = vmatprep.subr.bf16.mxu0 0
  %3471 = vmatpush1.bf16.msra.mxu0 0
  %3472 = vmatprep.subr.bf16.mxu0 0
  %3473 = vmatpush1.bf16.msra.mxu0 0
  %3474 = vmatprep.subr.bf16.mxu0 0
  %3475 = vmatpush1.bf16.msra.mxu0 0
  %3476 = vmatprep.subr.bf16.mxu0 0
  %3477 = vmatpush1.bf16.msra.mxu0 0
  %3478 = vmatprep.subr.bf16.mxu0 0
  %3479 = vmatpush1.bf16.msra.mxu0 0
  %3480 = vmatprep.subr.bf16.mxu0 0
  %3481 = vmatpush1.bf16.msra.mxu0 0
  %3482 = vmatprep.subr.bf16.mxu0 0
  %3483 = vmatpush1.bf16.msra.mxu0 0
  %3484 = vmatprep.subr.bf16.mxu0 0
  %3485 = vmatpush1.bf16.msra.mxu0 0
  %3486 = vmatprep.subr.bf16.mxu0 0
  %3487 = vmatpush1.bf16.msra.mxu0 0
  %3488 = vmatprep.subr.bf16.mxu0 0
  %3489 = vmatpush1.bf16.msra.mxu0 0
  %3490 = vmatprep.mubr.bf16.mxu0 0
  %3491 = vmatmul.mubr.bf16.gmra.mrb[0].mxu0 %v3453
  %v3492 = vpop.f32.mrb[0].mxu0
  %v3493 = vadd.f32 0.0, %v3492
  %v3494 = vpop.f32.mrb[0].mxu0
  %v3495 = vpop.f32.mrb[0].mxu0
  %v3496 = vpop.f32.mrb[0].mxu0
  %3497 = vdwg.mxu0
  %v3499 = vsel %vm460, %v382, 0
  %v3502 = vsel %vm464, %v454, 0
  %3504 = vmatprep.subr.bf16.mxu0 0
  %3505 = vmatpush1.bf16.msra.mxu0 %v3502
  %3506 = vmatprep.subr.bf16.mxu0 0
  %3507 = vmatpush1.bf16.msra.mxu0 0
  %3508 = vmatprep.subr.bf16.mxu0 0
  %3509 = vmatpush1.bf16.msra.mxu0 0
  %3510 = vmatprep.subr.bf16.mxu0 0
  %3511 = vmatpush1.bf16.msra.mxu0 0
  %3512 = vmatprep.subr.bf16.mxu0 0
  %3513 = vmatpush1.bf16.msra.mxu0 0
  %3514 = vmatprep.subr.bf16.mxu0 0
  %3515 = vmatpush1.bf16.msra.mxu0 0
  %3516 = vmatprep.subr.bf16.mxu0 0
  %3517 = vmatpush1.bf16.msra.mxu0 0
  %3518 = vmatprep.subr.bf16.mxu0 0
  %3519 = vmatpush1.bf16.msra.mxu0 0
  %3520 = vmatprep.subr.bf16.mxu0 0
  %3521 = vmatpush1.bf16.msra.mxu0 0
  %3522 = vmatprep.subr.bf16.mxu0 0
  %3523 = vmatpush1.bf16.msra.mxu0 0
  %3524 = vmatprep.subr.bf16.mxu0 0
  %3525 = vmatpush1.bf16.msra.mxu0 0
  %3526 = vmatprep.subr.bf16.mxu0 0
  %3527 = vmatpush1.bf16.msra.mxu0 0
  %3528 = vmatprep.subr.bf16.mxu0 0
  %3529 = vmatpush1.bf16.msra.mxu0 0
  %3530 = vmatprep.subr.bf16.mxu0 0
  %3531 = vmatpush1.bf16.msra.mxu0 0
  %3532 = vmatprep.subr.bf16.mxu0 0
  %3533 = vmatpush1.bf16.msra.mxu0 0
  %3534 = vmatprep.subr.bf16.mxu0 0
  %3535 = vmatpush1.bf16.msra.mxu0 0
  %3536 = vmatprep.mubr.bf16.mxu0 0
  %3537 = vmatmul.mubr.bf16.gmra.mrb[0].mxu0 %v3499
  %v3538 = vpop.f32.mrb[0].mxu0
  %v3539 = vadd.f32 0.0, %v3538
  %v3540 = vpop.f32.mrb[0].mxu0
  %v3541 = vpop.f32.mrb[0].mxu0
  %v3542 = vpop.f32.mrb[0].mxu0
  %3543 = vdwg.mxu0
  %v3545 = vsel %vm460, %v383, 0
  %v3548 = vsel %vm464, %v455, 0
  %3550 = vmatprep.subr.bf16.mxu0 0
  %3551 = vmatpush1.bf16.msra.mxu0 %v3548
  %3552 = vmatprep.subr.bf16.mxu0 0
  %3553 = vmatpush1.bf16.msra.mxu0 0
  %3554 = vmatprep.subr.bf16.mxu0 0
  %3555 = vmatpush1.bf16.msra.mxu0 0
  %3556 = vmatprep.subr.bf16.mxu0 0
  %3557 = vmatpush1.bf16.msra.mxu0 0
  %3558 = vmatprep.subr.bf16.mxu0 0
  %3559 = vmatpush1.bf16.msra.mxu0 0
  %3560 = vmatprep.subr.bf16.mxu0 0
  %3561 = vmatpush1.bf16.msra.mxu0 0
  %3562 = vmatprep.subr.bf16.mxu0 0
  %3563 = vmatpush1.bf16.msra.mxu0 0
  %3564 = vmatprep.subr.bf16.mxu0 0
  %3565 = vmatpush1.bf16.msra.mxu0 0
  %3566 = vmatprep.subr.bf16.mxu0 0
  %3567 = vmatpush1.bf16.msra.mxu0 0
  %3568 = vmatprep.subr.bf16.mxu0 0
  %3569 = vmatpush1.bf16.msra.mxu0 0
  %3570 = vmatprep.subr.bf16.mxu0 0
  %3571 = vmatpush1.bf16.msra.mxu0 0
  %3572 = vmatprep.subr.bf16.mxu0 0
  %3573 = vmatpush1.bf16.msra.mxu0 0
  %3574 = vmatprep.subr.bf16.mxu0 0
  %3575 = vmatpush1.bf16.msra.mxu0 0
  %3576 = vmatprep.subr.bf16.mxu0 0
  %3577 = vmatpush1.bf16.msra.mxu0 0
  %3578 = vmatprep.subr.bf16.mxu0 0
  %3579 = vmatpush1.bf16.msra.mxu0 0
  %3580 = vmatprep.subr.bf16.mxu0 0
  %3581 = vmatpush1.bf16.msra.mxu0 0
  %3582 = vmatprep.mubr.bf16.mxu0 0
  %3583 = vmatmul.mubr.bf16.gmra.mrb[0].mxu0 %v3545
  %v3584 = vpop.f32.mrb[0].mxu0
  %v3585 = vadd.f32 0.0, %v3584
  %v3586 = vpop.f32.mrb[0].mxu0
  %v3587 = vpop.f32.mrb[0].mxu0
  %v3588 = vpop.f32.mrb[0].mxu0
  %3589 = vdwg.mxu0
  %v3591 = vsel %vm460, %v384, 0
  %v3594 = vsel %vm464, %v456, 0
  %3596 = vmatprep.subr.bf16.mxu0 0
  %3597 = vmatpush1.bf16.msra.mxu0 %v3594
  %3598 = vmatprep.subr.bf16.mxu0 0
  %3599 = vmatpush1.bf16.msra.mxu0 0
  %3600 = vmatprep.subr.bf16.mxu0 0
  %3601 = vmatpush1.bf16.msra.mxu0 0
  %3602 = vmatprep.subr.bf16.mxu0 0
  %3603 = vmatpush1.bf16.msra.mxu0 0
  %3604 = vmatprep.subr.bf16.mxu0 0
  %3605 = vmatpush1.bf16.msra.mxu0 0
  %3606 = vmatprep.subr.bf16.mxu0 0
  %3607 = vmatpush1.bf16.msra.mxu0 0
  %3608 = vmatprep.subr.bf16.mxu0 0
  %3609 = vmatpush1.bf16.msra.mxu0 0
  %3610 = vmatprep.subr.bf16.mxu0 0
  %3611 = vmatpush1.bf16.msra.mxu0 0
  %3612 = vmatprep.subr.bf16.mxu0 0
  %3613 = vmatpush1.bf16.msra.mxu0 0
  %3614 = vmatprep.subr.bf16.mxu0 0
  %3615 = vmatpush1.bf16.msra.mxu0 0
  %3616 = vmatprep.subr.bf16.mxu0 0
  %3617 = vmatpush1.bf16.msra.mxu0 0
  %3618 = vmatprep.subr.bf16.mxu0 0
  %3619 = vmatpush1.bf16.msra.mxu0 0
  %3620 = vmatprep.subr.bf16.mxu0 0
  %3621 = vmatpush1.bf16.msra.mxu0 0
  %3622 = vmatprep.subr.bf16.mxu0 0
  %3623 = vmatpush1.bf16.msra.mxu0 0
  %3624 = vmatprep.subr.bf16.mxu0 0
  %3625 = vmatpush1.bf16.msra.mxu0 0
  %3626 = vmatprep.subr.bf16.mxu0 0
  %3627 = vmatpush1.bf16.msra.mxu0 0
  %3628 = vmatprep.mubr.bf16.mxu0 0
  %3629 = vmatmul.mubr.bf16.gmra.mrb[0].mxu0 %v3591
  %v3630 = vpop.f32.mrb[0].mxu0
  %v3631 = vadd.f32 0.0, %v3630
  %v3632 = vpop.f32.mrb[0].mxu0
  %v3633 = vpop.f32.mrb[0].mxu0
  %v3634 = vpop.f32.mrb[0].mxu0
  %3635 = vdwg.mxu0
  %v3637 = vsel %vm460, %v385, 0
  %v3640 = vsel %vm464, %v457, 0
  %3642 = vmatprep.subr.bf16.mxu0 0
  %3643 = vmatpush1.bf16.msra.mxu0 %v3640
  %3644 = vmatprep.subr.bf16.mxu0 0
  %3645 = vmatpush1.bf16.msra.mxu0 0
  %3646 = vmatprep.subr.bf16.mxu0 0
  %3647 = vmatpush1.bf16.msra.mxu0 0
  %3648 = vmatprep.subr.bf16.mxu0 0
  %3649 = vmatpush1.bf16.msra.mxu0 0
  %3650 = vmatprep.subr.bf16.mxu0 0
  %3651 = vmatpush1.bf16.msra.mxu0 0
  %3652 = vmatprep.subr.bf16.mxu0 0
  %3653 = vmatpush1.bf16.msra.mxu0 0
  %3654 = vmatprep.subr.bf16.mxu0 0
  %3655 = vmatpush1.bf16.msra.mxu0 0
  %3656 = vmatprep.subr.bf16.mxu0 0
  %3657 = vmatpush1.bf16.msra.mxu0 0
  %3658 = vmatprep.subr.bf16.mxu0 0
  %3659 = vmatpush1.bf16.msra.mxu0 0
  %3660 = vmatprep.subr.bf16.mxu0 0
  %3661 = vmatpush1.bf16.msra.mxu0 0
  %3662 = vmatprep.subr.bf16.mxu0 0
  %3663 = vmatpush1.bf16.msra.mxu0 0
  %3664 = vmatprep.subr.bf16.mxu0 0
  %3665 = vmatpush1.bf16.msra.mxu0 0
  %3666 = vmatprep.subr.bf16.mxu0 0
  %3667 = vmatpush1.bf16.msra.mxu0 0
  %3668 = vmatprep.subr.bf16.mxu0 0
  %3669 = vmatpush1.bf16.msra.mxu0 0
  %3670 = vmatprep.subr.bf16.mxu0 0
  %3671 = vmatpush1.bf16.msra.mxu0 0
  %3672 = vmatprep.subr.bf16.mxu0 0
  %3673 = vmatpush1.bf16.msra.mxu0 0
  %3674 = vmatprep.mubr.bf16.mxu0 0
  %3675 = vmatmul.mubr.bf16.gmra.mrb[0].mxu0 %v3637
  %v3676 = vpop.f32.mrb[0].mxu0
  %v3677 = vadd.f32 0.0, %v3676
  %v3678 = vpop.f32.mrb[0].mxu0
  %v3679 = vpop.f32.mrb[0].mxu0
  %v3680 = vpop.f32.mrb[0].mxu0
  %3681 = vdwg.mxu0
  %v3683 = vsel %vm460, %v386, 0
  %v3686 = vsel %vm464, %v458, 0
  %3688 = vmatprep.subr.bf16.mxu0 0
  %3689 = vmatpush1.bf16.msra.mxu0 %v3686
  %3690 = vmatprep.subr.bf16.mxu0 0
  %3691 = vmatpush1.bf16.msra.mxu0 0
  %3692 = vmatprep.subr.bf16.mxu0 0
  %3693 = vmatpush1.bf16.msra.mxu0 0
  %3694 = vmatprep.subr.bf16.mxu0 0
  %3695 = vmatpush1.bf16.msra.mxu0 0
  %3696 = vmatprep.subr.bf16.mxu0 0
  %3697 = vmatpush1.bf16.msra.mxu0 0
  %3698 = vmatprep.subr.bf16.mxu0 0
  %3699 = vmatpush1.bf16.msra.mxu0 0
  %3700 = vmatprep.subr.bf16.mxu0 0
  %3701 = vmatpush1.bf16.msra.mxu0 0
  %3702 = vmatprep.subr.bf16.mxu0 0
  %3703 = vmatpush1.bf16.msra.mxu0 0
  %3704 = vmatprep.subr.bf16.mxu0 0
  %3705 = vmatpush1.bf16.msra.mxu0 0
  %3706 = vmatprep.subr.bf16.mxu0 0
  %3707 = vmatpush1.bf16.msra.mxu0 0
  %3708 = vmatprep.subr.bf16.mxu0 0
  %3709 = vmatpush1.bf16.msra.mxu0 0
  %3710 = vmatprep.subr.bf16.mxu0 0
  %3711 = vmatpush1.bf16.msra.mxu0 0
  %3712 = vmatprep.subr.bf16.mxu0 0
  %3713 = vmatpush1.bf16.msra.mxu0 0
  %3714 = vmatprep.subr.bf16.mxu0 0
  %3715 = vmatpush1.bf16.msra.mxu0 0
  %3716 = vmatprep.subr.bf16.mxu0 0
  %3717 = vmatpush1.bf16.msra.mxu0 0
  %3718 = vmatprep.subr.bf16.mxu0 0
  %3719 = vmatpush1.bf16.msra.mxu0 0
  %3720 = vmatprep.mubr.bf16.mxu0 0
  %3721 = vmatmul.mubr.bf16.gmra.mrb[0].mxu0 %v3683
  %v3722 = vpop.f32.mrb[0].mxu0
  %v3723 = vadd.f32 0.0, %v3722
  %v3724 = vpop.f32.mrb[0].mxu0
  %v3725 = vpop.f32.mrb[0].mxu0
  %v3726 = vpop.f32.mrb[0].mxu0
  %3727 = vdwg.mxu0
  %v3729 = vsel %vm460, %v387, 0
  %v3732 = vsel %vm464, %v459, 0
  %3734 = vmatprep.subr.bf16.mxu0 0
  %3735 = vmatpush1.bf16.msra.mxu0 %v3732
  %3736 = vmatprep.subr.bf16.mxu0 0
  %3737 = vmatpush1.bf16.msra.mxu0 0
  %3738 = vmatprep.subr.bf16.mxu0 0
  %3739 = vmatpush1.bf16.msra.mxu0 0
  %3740 = vmatprep.subr.bf16.mxu0 0
  %3741 = vmatpush1.bf16.msra.mxu0 0
  %3742 = vmatprep.subr.bf16.mxu0 0
  %3743 = vmatpush1.bf16.msra.mxu0 0
  %3744 = vmatprep.subr.bf16.mxu0 0
  %3745 = vmatpush1.bf16.msra.mxu0 0
  %3746 = vmatprep.subr.bf16.mxu0 0
  %3747 = vmatpush1.bf16.msra.mxu0 0
  %3748 = vmatprep.subr.bf16.mxu0 0
  %3749 = vmatpush1.bf16.msra.mxu0 0
  %3750 = vmatprep.subr.bf16.mxu0 0
  %3751 = vmatpush1.bf16.msra.mxu0 0
  %3752 = vmatprep.subr.bf16.mxu0 0
  %3753 = vmatpush1.bf16.msra.mxu0 0
  %3754 = vmatprep.subr.bf16.mxu0 0
  %3755 = vmatpush1.bf16.msra.mxu0 0
  %3756 = vmatprep.subr.bf16.mxu0 0
  %3757 = vmatpush1.bf16.msra.mxu0 0
  %3758 = vmatprep.subr.bf16.mxu0 0
  %3759 = vmatpush1.bf16.msra.mxu0 0
  %3760 = vmatprep.subr.bf16.mxu0 0
  %3761 = vmatpush1.bf16.msra.mxu0 0
  %3762 = vmatprep.subr.bf16.mxu0 0
  %3763 = vmatpush1.bf16.msra.mxu0 0
  %3764 = vmatprep.subr.bf16.mxu0 0
  %3765 = vmatpush1.bf16.msra.mxu0 0
  %3766 = vmatprep.mubr.bf16.mxu0 0
  %3767 = vmatmul.mubr.bf16.gmra.mrb[0].mxu0 %v3729
  %v3768 = vpop.f32.mrb[0].mxu0
  %v3769 = vadd.f32 0.0, %v3768
  %v3770 = vpop.f32.mrb[0].mxu0
  %v3771 = vpop.f32.mrb[0].mxu0
  %v3772 = vpop.f32.mrb[0].mxu0
  %3773 = vdwg.mxu0
  %v3774 = vld [vmem:[%s3] sm:$0xf]
  %v3775 = vld [vmem:[%s3 + $0x4] sm:$0xf]
  %v3776 = vld [vmem:[%s3 + $0x8] sm:$0xf]
  %v3777 = vld [vmem:[%s3 + $0xc] sm:$0xf]
  %v3778 = vld [vmem:[%s3 + $0x10] sm:$0xf]
  %v3779 = vld [vmem:[%s3 + $0x14] sm:$0xf]
  %v3780 = vld [vmem:[%s3 + $0x18] sm:$0xf]
  %v3781 = vld [vmem:[%s3 + $0x1c] sm:$0xf]
  %v3782 = vld [vmem:[%s3 + $0x20] sm:$0xf]
  %v3783 = vld [vmem:[%s3 + $0x24] sm:$0xf]
  %v3784 = vld [vmem:[%s3 + $0x28] sm:$0xf]
  %v3785 = vld [vmem:[%s3 + $0x2c] sm:$0xf]
  %v3786 = vld [vmem:[%s3 + $0x30] sm:$0xf]
  %v3787 = vld [vmem:[%s3 + $0x34] sm:$0xf]
  %v3788 = vld [vmem:[%s3 + $0x38] sm:$0xf]
  %v3789 = vld [vmem:[%s3 + $0x3c] sm:$0xf]
  %v3790 = vld [vmem:[%s3 + $0x40] sm:$0xf]
  %v3791 = vld [vmem:[%s3 + $0x44] sm:$0xf]
  %v3792 = vld [vmem:[%s3 + $0x48] sm:$0xf]
  %v3793 = vld [vmem:[%s3 + $0x4c] sm:$0xf]
  %v3794 = vld [vmem:[%s3 + $0x50] sm:$0xf]
  %v3795 = vld [vmem:[%s3 + $0x54] sm:$0xf]
  %v3796 = vld [vmem:[%s3 + $0x58] sm:$0xf]
  %v3797 = vld [vmem:[%s3 + $0x5c] sm:$0xf]
  %v3798 = vld [vmem:[%s3 + $0x60] sm:$0xf]
  %v3799 = vld [vmem:[%s3 + $0x64] sm:$0xf]
  %v3800 = vld [vmem:[%s3 + $0x68] sm:$0xf]
  %v3801 = vld [vmem:[%s3 + $0x6c] sm:$0xf]
  %v3802 = vld [vmem:[%s3 + $0x70] sm:$0xf]
  %v3803 = vld [vmem:[%s3 + $0x74] sm:$0xf]
  %v3804 = vld [vmem:[%s3 + $0x78] sm:$0xf]
  %v3805 = vld [vmem:[%s3 + $0x7c] sm:$0xf]
  %v3806 = vld [vmem:[%s3 + $0x80] sm:$0xf]
  %v3807 = vld [vmem:[%s3 + $0x84] sm:$0xf]
  %v3808 = vld [vmem:[%s3 + $0x88] sm:$0xf]
  %v3809 = vld [vmem:[%s3 + $0x8c] sm:$0xf]
  %v3810 = vld [vmem:[%s3 + $0x90] sm:$0xf]
  %v3811 = vld [vmem:[%s3 + $0x94] sm:$0xf]
  %v3812 = vld [vmem:[%s3 + $0x98] sm:$0xf]
  %v3813 = vld [vmem:[%s3 + $0x9c] sm:$0xf]
  %v3814 = vld [vmem:[%s3 + $0xa0] sm:$0xf]
  %v3815 = vld [vmem:[%s3 + $0xa4] sm:$0xf]
  %v3816 = vld [vmem:[%s3 + $0xa8] sm:$0xf]
  %v3817 = vld [vmem:[%s3 + $0xac] sm:$0xf]
  %v3818 = vld [vmem:[%s3 + $0xb0] sm:$0xf]
  %v3819 = vld [vmem:[%s3 + $0xb4] sm:$0xf]
  %v3820 = vld [vmem:[%s3 + $0xb8] sm:$0xf]
  %v3821 = vld [vmem:[%s3 + $0xbc] sm:$0xf]
  %v3822 = vld [vmem:[%s3 + $0xc0] sm:$0xf]
  %v3823 = vld [vmem:[%s3 + $0xc4] sm:$0xf]
  %v3824 = vld [vmem:[%s3 + $0xc8] sm:$0xf]
  %v3825 = vld [vmem:[%s3 + $0xcc] sm:$0xf]
  %v3826 = vld [vmem:[%s3 + $0xd0] sm:$0xf]
  %v3827 = vld [vmem:[%s3 + $0xd4] sm:$0xf]
  %v3828 = vld [vmem:[%s3 + $0xd8] sm:$0xf]
  %v3829 = vld [vmem:[%s3 + $0xdc] sm:$0xf]
  %v3830 = vld [vmem:[%s3 + $0xe0] sm:$0xf]
  %v3831 = vld [vmem:[%s3 + $0xe4] sm:$0xf]
  %v3832 = vld [vmem:[%s3 + $0xe8] sm:$0xf]
  %v3833 = vld [vmem:[%s3 + $0xec] sm:$0xf]
  %v3834 = vld [vmem:[%s3 + $0xf0] sm:$0xf]
  %v3835 = vld [vmem:[%s3 + $0xf4] sm:$0xf]
  %v3836 = vld [vmem:[%s3 + $0xf8] sm:$0xf]
  %v3837 = vld [vmem:[%s3 + $0xfc] sm:$0xf]
  %v3838 = vld [vmem:[%s3 + $0x100] sm:$0xf]
  %v3839 = vld [vmem:[%s3 + $0x104] sm:$0xf]
  %v3840 = vld [vmem:[%s3 + $0x108] sm:$0xf]
  %v3841 = vld [vmem:[%s3 + $0x10c] sm:$0xf]
  %v3842 = vld [vmem:[%s3 + $0x110] sm:$0xf]
  %v3843 = vld [vmem:[%s3 + $0x114] sm:$0xf]
  %v3844 = vld [vmem:[%s3 + $0x118] sm:$0xf]
  %v3845 = vld [vmem:[%s3 + $0x11c] sm:$0xf]
  %v3847 = vsel %vm460, %v172, 0
  %v3850 = vsel %vm464, %v3774, 0
  %3852 = vmatprep.subr.bf16.mxu0 0
  %3853 = vmatpush1.bf16.msra.mxu0 %v3850
  %3854 = vmatprep.subr.bf16.mxu0 0
  %3855 = vmatpush1.bf16.msra.mxu0 0
  %3856 = vmatprep.subr.bf16.mxu0 0
  %3857 = vmatpush1.bf16.msra.mxu0 0
  %3858 = vmatprep.subr.bf16.mxu0 0
  %3859 = vmatpush1.bf16.msra.mxu0 0
  %3860 = vmatprep.subr.bf16.mxu0 0
  %3861 = vmatpush1.bf16.msra.mxu0 0
  %3862 = vmatprep.subr.bf16.mxu0 0
  %3863 = vmatpush1.bf16.msra.mxu0 0
  %3864 = vmatprep.subr.bf16.mxu0 0
  %3865 = vmatpush1.bf16.msra.mxu0 0
  %3866 = vmatprep.subr.bf16.mxu0 0
  %3867 = vmatpush1.bf16.msra.mxu0 0
  %3868 = vmatprep.subr.bf16.mxu0 0
  %3869 = vmatpush1.bf16.msra.mxu0 0
  %3870 = vmatprep.subr.bf16.mxu0 0
  %3871 = vmatpush1.bf16.msra.mxu0 0
  %3872 = vmatprep.subr.bf16.mxu0 0
  %3873 = vmatpush1.bf16.msra.mxu0 0
  %3874 = vmatprep.subr.bf16.mxu0 0
  %3875 = vmatpush1.bf16.msra.mxu0 0
  %3876 = vmatprep.subr.bf16.mxu0 0
  %3877 = vmatpush1.bf16.msra.mxu0 0
  %3878 = vmatprep.subr.bf16.mxu0 0
  %3879 = vmatpush1.bf16.msra.mxu0 0
  %3880 = vmatprep.subr.bf16.mxu0 0
  %3881 = vmatpush1.bf16.msra.mxu0 0
  %3882 = vmatprep.subr.bf16.mxu0 0
  %3883 = vmatpush1.bf16.msra.mxu0 0
  %3884 = vmatprep.mubr.bf16.mxu0 0
  %3885 = vmatmul.mubr.bf16.gmra.mrb[0].mxu0 %v3847
  %v3886 = vpop.f32.mrb[0].mxu0
  %v3887 = vadd.f32 0.0, %v3886
  %v3888 = vpop.f32.mrb[0].mxu0
  %v3889 = vpop.f32.mrb[0].mxu0
  %v3890 = vpop.f32.mrb[0].mxu0
  %3891 = vdwg.mxu0
  %v3893 = vsel %vm460, %v173, 0
  %v3896 = vsel %vm464, %v3775, 0
  %3898 = vmatprep.subr.bf16.mxu0 0
  %3899 = vmatpush1.bf16.msra.mxu0 %v3896
  %3900 = vmatprep.subr.bf16.mxu0 0
  %3901 = vmatpush1.bf16.msra.mxu0 0
  %3902 = vmatprep.subr.bf16.mxu0 0
  %3903 = vmatpush1.bf16.msra.mxu0 0
  %3904 = vmatprep.subr.bf16.mxu0 0
  %3905 = vmatpush1.bf16.msra.mxu0 0
  %3906 = vmatprep.subr.bf16.mxu0 0
  %3907 = vmatpush1.bf16.msra.mxu0 0
  %3908 = vmatprep.subr.bf16.mxu0 0
  %3909 = vmatpush1.bf16.msra.mxu0 0
  %3910 = vmatprep.subr.bf16.mxu0 0
  %3911 = vmatpush1.bf16.msra.mxu0 0
  %3912 = vmatprep.subr.bf16.mxu0 0
  %3913 = vmatpush1.bf16.msra.mxu0 0
  %3914 = vmatprep.subr.bf16.mxu0 0
  %3915 = vmatpush1.bf16.msra.mxu0 0
  %3916 = vmatprep.subr.bf16.mxu0 0
  %3917 = vmatpush1.bf16.msra.mxu0 0
  %3918 = vmatprep.subr.bf16.mxu0 0
  %3919 = vmatpush1.bf16.msra.mxu0 0
  %3920 = vmatprep.subr.bf16.mxu0 0
  %3921 = vmatpush1.bf16.msra.mxu0 0
  %3922 = vmatprep.subr.bf16.mxu0 0
  %3923 = vmatpush1.bf16.msra.mxu0 0
  %3924 = vmatprep.subr.bf16.mxu0 0
  %3925 = vmatpush1.bf16.msra.mxu0 0
  %3926 = vmatprep.subr.bf16.mxu0 0
  %3927 = vmatpush1.bf16.msra.mxu0 0
  %3928 = vmatprep.subr.bf16.mxu0 0
  %3929 = vmatpush1.bf16.msra.mxu0 0
  %3930 = vmatprep.mubr.bf16.mxu0 0
  %3931 = vmatmul.mubr.bf16.gmra.mrb[0].mxu0 %v3893
  %v3932 = vpop.f32.mrb[0].mxu0
  %v3933 = vadd.f32 0.0, %v3932
  %v3934 = vpop.f32.mrb[0].mxu0
  %v3935 = vpop.f32.mrb[0].mxu0
  %v3936 = vpop.f32.mrb[0].mxu0
  %3937 = vdwg.mxu0
  %v3939 = vsel %vm460, %v174, 0
  %v3942 = vsel %vm464, %v3776, 0
  %3944 = vmatprep.subr.bf16.mxu0 0
  %3945 = vmatpush1.bf16.msra.mxu0 %v3942
  %3946 = vmatprep.subr.bf16.mxu0 0
  %3947 = vmatpush1.bf16.msra.mxu0 0
  %3948 = vmatprep.subr.bf16.mxu0 0
  %3949 = vmatpush1.bf16.msra.mxu0 0
  %3950 = vmatprep.subr.bf16.mxu0 0
  %3951 = vmatpush1.bf16.msra.mxu0 0
  %3952 = vmatprep.subr.bf16.mxu0 0
  %3953 = vmatpush1.bf16.msra.mxu0 0
  %3954 = vmatprep.subr.bf16.mxu0 0
  %3955 = vmatpush1.bf16.msra.mxu0 0
  %3956 = vmatprep.subr.bf16.mxu0 0
  %3957 = vmatpush1.bf16.msra.mxu0 0
  %3958 = vmatprep.subr.bf16.mxu0 0
  %3959 = vmatpush1.bf16.msra.mxu0 0
  %3960 = vmatprep.subr.bf16.mxu0 0
  %3961 = vmatpush1.bf16.msra.mxu0 0
  %3962 = vmatprep.subr.bf16.mxu0 0
  %3963 = vmatpush1.bf16.msra.mxu0 0
  %3964 = vmatprep.subr.bf16.mxu0 0
  %3965 = vmatpush1.bf16.msra.mxu0 0
  %3966 = vmatprep.subr.bf16.mxu0 0
  %3967 = vmatpush1.bf16.msra.mxu0 0
  %3968 = vmatprep.subr.bf16.mxu0 0
  %3969 = vmatpush1.bf16.msra.mxu0 0
  %3970 = vmatprep.subr.bf16.mxu0 0
  %3971 = vmatpush1.bf16.msra.mxu0 0
  %3972 = vmatprep.subr.bf16.mxu0 0
  %3973 = vmatpush1.bf16.msra.mxu0 0
  %3974 = vmatprep.subr.bf16.mxu0 0
  %3975 = vmatpush1.bf16.msra.mxu0 0
  %3976 = vmatprep.mubr.bf16.mxu0 0
  %3977 = vmatmul.mubr.bf16.gmra.mrb[0].mxu0 %v3939
  %v3978 = vpop.f32.mrb[0].mxu0
  %v3979 = vadd.f32 0.0, %v3978
  %v3980 = vpop.f32.mrb[0].mxu0
  %v3981 = vpop.f32.mrb[0].mxu0
  %v3982 = vpop.f32.mrb[0].mxu0
  %3983 = vdwg.mxu0
  %v3985 = vsel %vm460, %v175, 0
  %v3988 = vsel %vm464, %v3777, 0
  %3990 = vmatprep.subr.bf16.mxu0 0
  %3991 = vmatpush1.bf16.msra.mxu0 %v3988
  %3992 = vmatprep.subr.bf16.mxu0 0
  %3993 = vmatpush1.bf16.msra.mxu0 0
  %3994 = vmatprep.subr.bf16.mxu0 0
  %3995 = vmatpush1.bf16.msra.mxu0 0
  %3996 = vmatprep.subr.bf16.mxu0 0
  %3997 = vmatpush1.bf16.msra.mxu0 0
  %3998 = vmatprep.subr.bf16.mxu0 0
  %3999 = vmatpush1.bf16.msra.mxu0 0
  %4000 = vmatprep.subr.bf16.mxu0 0
  %4001 = vmatpush1.bf16.msra.mxu0 0
  %4002 = vmatprep.subr.bf16.mxu0 0
  %4003 = vmatpush1.bf16.msra.mxu0 0
  %4004 = vmatprep.subr.bf16.mxu0 0
  %4005 = vmatpush1.bf16.msra.mxu0 0
  %4006 = vmatprep.subr.bf16.mxu0 0
  %4007 = vmatpush1.bf16.msra.mxu0 0
  %4008 = vmatprep.subr.bf16.mxu0 0
  %4009 = vmatpush1.bf16.msra.mxu0 0
  %4010 = vmatprep.subr.bf16.mxu0 0
  %4011 = vmatpush1.bf16.msra.mxu0 0
  %4012 = vmatprep.subr.bf16.mxu0 0
  %4013 = vmatpush1.bf16.msra.mxu0 0
  %4014 = vmatprep.subr.bf16.mxu0 0
  %4015 = vmatpush1.bf16.msra.mxu0 0
  %4016 = vmatprep.subr.bf16.mxu0 0
  %4017 = vmatpush1.bf16.msra.mxu0 0
  %4018 = vmatprep.subr.bf16.mxu0 0
  %4019 = vmatpush1.bf16.msra.mxu0 0
  %4020 = vmatprep.subr.bf16.mxu0 0
  %4021 = vmatpush1.bf16.msra.mxu0 0
  %4022 = vmatprep.mubr.bf16.mxu0 0
  %4023 = vmatmul.mubr.bf16.gmra.mrb[0].mxu0 %v3985
  %v4024 = vpop.f32.mrb[0].mxu0
  %v4025 = vadd.f32 0.0, %v4024
  %v4026 = vpop.f32.mrb[0].mxu0
  %v4027 = vpop.f32.mrb[0].mxu0
  %v4028 = vpop.f32.mrb[0].mxu0
  %4029 = vdwg.mxu0
  %v4031 = vsel %vm460, %v176, 0
  %v4034 = vsel %vm464, %v3778, 0
  %4036 = vmatprep.subr.bf16.mxu0 0
  %4037 = vmatpush1.bf16.msra.mxu0 %v4034
  %4038 = vmatprep.subr.bf16.mxu0 0
  %4039 = vmatpush1.bf16.msra.mxu0 0
  %4040 = vmatprep.subr.bf16.mxu0 0
  %4041 = vmatpush1.bf16.msra.mxu0 0
  %4042 = vmatprep.subr.bf16.mxu0 0
  %4043 = vmatpush1.bf16.msra.mxu0 0
  %4044 = vmatprep.subr.bf16.mxu0 0
  %4045 = vmatpush1.bf16.msra.mxu0 0
  %4046 = vmatprep.subr.bf16.mxu0 0
  %4047 = vmatpush1.bf16.msra.mxu0 0
  %4048 = vmatprep.subr.bf16.mxu0 0
  %4049 = vmatpush1.bf16.msra.mxu0 0
  %4050 = vmatprep.subr.bf16.mxu0 0
  %4051 = vmatpush1.bf16.msra.mxu0 0
  %4052 = vmatprep.subr.bf16.mxu0 0
  %4053 = vmatpush1.bf16.msra.mxu0 0
  %4054 = vmatprep.subr.bf16.mxu0 0
  %4055 = vmatpush1.bf16.msra.mxu0 0
  %4056 = vmatprep.subr.bf16.mxu0 0
  %4057 = vmatpush1.bf16.msra.mxu0 0
  %4058 = vmatprep.subr.bf16.mxu0 0
  %4059 = vmatpush1.bf16.msra.mxu0 0
  %4060 = vmatprep.subr.bf16.mxu0 0
  %4061 = vmatpush1.bf16.msra.mxu0 0
  %4062 = vmatprep.subr.bf16.mxu0 0
  %4063 = vmatpush1.bf16.msra.mxu0 0
  %4064 = vmatprep.subr.bf16.mxu0 0
  %4065 = vmatpush1.bf16.msra.mxu0 0
  %4066 = vmatprep.subr.bf16.mxu0 0
  %4067 = vmatpush1.bf16.msra.mxu0 0
  %4068 = vmatprep.mubr.bf16.mxu0 0
  %4069 = vmatmul.mubr.bf16.gmra.mrb[0].mxu0 %v4031
  %v4070 = vpop.f32.mrb[0].mxu0
  %v4071 = vadd.f32 0.0, %v4070
  %v4072 = vpop.f32.mrb[0].mxu0
  %v4073 = vpop.f32.mrb[0].mxu0
  %v4074 = vpop.f32.mrb[0].mxu0
  %4075 = vdwg.mxu0
  %v4077 = vsel %vm460, %v177, 0
  %v4080 = vsel %vm464, %v3779, 0
  %4082 = vmatprep.subr.bf16.mxu0 0
  %4083 = vmatpush1.bf16.msra.mxu0 %v4080
  %4084 = vmatprep.subr.bf16.mxu0 0
  %4085 = vmatpush1.bf16.msra.mxu0 0
  %4086 = vmatprep.subr.bf16.mxu0 0
  %4087 = vmatpush1.bf16.msra.mxu0 0
  %4088 = vmatprep.subr.bf16.mxu0 0
  %4089 = vmatpush1.bf16.msra.mxu0 0
  %4090 = vmatprep.subr.bf16.mxu0 0
  %4091 = vmatpush1.bf16.msra.mxu0 0
  %4092 = vmatprep.subr.bf16.mxu0 0
  %4093 = vmatpush1.bf16.msra.mxu0 0
  %4094 = vmatprep.subr.bf16.mxu0 0
  %4095 = vmatpush1.bf16.msra.mxu0 0
  %4096 = vmatprep.subr.bf16.mxu0 0
  %4097 = vmatpush1.bf16.msra.mxu0 0
  %4098 = vmatprep.subr.bf16.mxu0 0
  %4099 = vmatpush1.bf16.msra.mxu0 0
  %4100 = vmatprep.subr.bf16.mxu0 0
  %4101 = vmatpush1.bf16.msra.mxu0 0
  %4102 = vmatprep.subr.bf16.mxu0 0
  %4103 = vmatpush1.bf16.msra.mxu0 0
  %4104 = vmatprep.subr.bf16.mxu0 0
  %4105 = vmatpush1.bf16.msra.mxu0 0
  %4106 = vmatprep.subr.bf16.mxu0 0
  %4107 = vmatpush1.bf16.msra.mxu0 0
  %4108 = vmatprep.subr.bf16.mxu0 0
  %4109 = vmatpush1.bf16.msra.mxu0 0
  %4110 = vmatprep.subr.bf16.mxu0 0
  %4111 = vmatpush1.bf16.msra.mxu0 0
  %4112 = vmatprep.subr.bf16.mxu0 0
  %4113 = vmatpush1.bf16.msra.mxu0 0
  %4114 = vmatprep.mubr.bf16.mxu0 0
  %4115 = vmatmul.mubr.bf16.gmra.mrb[0].mxu0 %v4077
  %v4116 = vpop.f32.mrb[0].mxu0
  %v4117 = vadd.f32 0.0, %v4116
  %v4118 = vpop.f32.mrb[0].mxu0
  %v4119 = vpop.f32.mrb[0].mxu0
  %v4120 = vpop.f32.mrb[0].mxu0
  %4121 = vdwg.mxu0
  %v4123 = vsel %vm460, %v178, 0
  %v4126 = vsel %vm464, %v3780, 0
  %4128 = vmatprep.subr.bf16.mxu0 0
  %4129 = vmatpush1.bf16.msra.mxu0 %v4126
  %4130 = vmatprep.subr.bf16.mxu0 0
  %4131 = vmatpush1.bf16.msra.mxu0 0
  %4132 = vmatprep.subr.bf16.mxu0 0
  %4133 = vmatpush1.bf16.msra.mxu0 0
  %4134 = vmatprep.subr.bf16.mxu0 0
  %4135 = vmatpush1.bf16.msra.mxu0 0
  %4136 = vmatprep.subr.bf16.mxu0 0
  %4137 = vmatpush1.bf16.msra.mxu0 0
  %4138 = vmatprep.subr.bf16.mxu0 0
  %4139 = vmatpush1.bf16.msra.mxu0 0
  %4140 = vmatprep.subr.bf16.mxu0 0
  %4141 = vmatpush1.bf16.msra.mxu0 0
  %4142 = vmatprep.subr.bf16.mxu0 0
  %4143 = vmatpush1.bf16.msra.mxu0 0
  %4144 = vmatprep.subr.bf16.mxu0 0
  %4145 = vmatpush1.bf16.msra.mxu0 0
  %4146 = vmatprep.subr.bf16.mxu0 0
  %4147 = vmatpush1.bf16.msra.mxu0 0
  %4148 = vmatprep.subr.bf16.mxu0 0
  %4149 = vmatpush1.bf16.msra.mxu0 0
  %4150 = vmatprep.subr.bf16.mxu0 0
  %4151 = vmatpush1.bf16.msra.mxu0 0
  %4152 = vmatprep.subr.bf16.mxu0 0
  %4153 = vmatpush1.bf16.msra.mxu0 0
  %4154 = vmatprep.subr.bf16.mxu0 0
  %4155 = vmatpush1.bf16.msra.mxu0 0
  %4156 = vmatprep.subr.bf16.mxu0 0
  %4157 = vmatpush1.bf16.msra.mxu0 0
  %4158 = vmatprep.subr.bf16.mxu0 0
  %4159 = vmatpush1.bf16.msra.mxu0 0
  %4160 = vmatprep.mubr.bf16.mxu0 0
  %4161 = vmatmul.mubr.bf16.gmra.mrb[0].mxu0 %v4123
  %v4162 = vpop.f32.mrb[0].mxu0
  %v4163 = vadd.f32 0.0, %v4162
  %v4164 = vpop.f32.mrb[0].mxu0
  %v4165 = vpop.f32.mrb[0].mxu0
  %v4166 = vpop.f32.mrb[0].mxu0
  %4167 = vdwg.mxu0
  %v4169 = vsel %vm460, %v179, 0
  %v4172 = vsel %vm464, %v3781, 0
  %4174 = vmatprep.subr.bf16.mxu0 0
  %4175 = vmatpush1.bf16.msra.mxu0 %v4172
  %4176 = vmatprep.subr.bf16.mxu0 0
  %4177 = vmatpush1.bf16.msra.mxu0 0
  %4178 = vmatprep.subr.bf16.mxu0 0
  %4179 = vmatpush1.bf16.msra.mxu0 0
  %4180 = vmatprep.subr.bf16.mxu0 0
  %4181 = vmatpush1.bf16.msra.mxu0 0
  %4182 = vmatprep.subr.bf16.mxu0 0
  %4183 = vmatpush1.bf16.msra.mxu0 0
  %4184 = vmatprep.subr.bf16.mxu0 0
  %4185 = vmatpush1.bf16.msra.mxu0 0
  %4186 = vmatprep.subr.bf16.mxu0 0
  %4187 = vmatpush1.bf16.msra.mxu0 0
  %4188 = vmatprep.subr.bf16.mxu0 0
  %4189 = vmatpush1.bf16.msra.mxu0 0
  %4190 = vmatprep.subr.bf16.mxu0 0
  %4191 = vmatpush1.bf16.msra.mxu0 0
  %4192 = vmatprep.subr.bf16.mxu0 0
  %4193 = vmatpush1.bf16.msra.mxu0 0
  %4194 = vmatprep.subr.bf16.mxu0 0
  %4195 = vmatpush1.bf16.msra.mxu0 0
  %4196 = vmatprep.subr.bf16.mxu0 0
  %4197 = vmatpush1.bf16.msra.mxu0 0
  %4198 = vmatprep.subr.bf16.mxu0 0
  %4199 = vmatpush1.bf16.msra.mxu0 0
  %4200 = vmatprep.subr.bf16.mxu0 0
  %4201 = vmatpush1.bf16.msra.mxu0 0
  %4202 = vmatprep.subr.bf16.mxu0 0
  %4203 = vmatpush1.bf16.msra.mxu0 0
  %4204 = vmatprep.subr.bf16.mxu0 0
  %4205 = vmatpush1.bf16.msra.mxu0 0
  %4206 = vmatprep.mubr.bf16.mxu0 0
  %4207 = vmatmul.mubr.bf16.gmra.mrb[0].mxu0 %v4169
  %v4208 = vpop.f32.mrb[0].mxu0
  %v4209 = vadd.f32 0.0, %v4208
  %v4210 = vpop.f32.mrb[0].mxu0
  %v4211 = vpop.f32.mrb[0].mxu0
  %v4212 = vpop.f32.mrb[0].mxu0
  %4213 = vdwg.mxu0
  %v4215 = vsel %vm460, %v180, 0
  %v4218 = vsel %vm464, %v3782, 0
  %4220 = vmatprep.subr.bf16.mxu0 0
  %4221 = vmatpush1.bf16.msra.mxu0 %v4218
  %4222 = vmatprep.subr.bf16.mxu0 0
  %4223 = vmatpush1.bf16.msra.mxu0 0
  %4224 = vmatprep.subr.bf16.mxu0 0
  %4225 = vmatpush1.bf16.msra.mxu0 0
  %4226 = vmatprep.subr.bf16.mxu0 0
  %4227 = vmatpush1.bf16.msra.mxu0 0
  %4228 = vmatprep.subr.bf16.mxu0 0
  %4229 = vmatpush1.bf16.msra.mxu0 0
  %4230 = vmatprep.subr.bf16.mxu0 0
  %4231 = vmatpush1.bf16.msra.mxu0 0
  %4232 = vmatprep.subr.bf16.mxu0 0
  %4233 = vmatpush1.bf16.msra.mxu0 0
  %4234 = vmatprep.subr.bf16.mxu0 0
  %4235 = vmatpush1.bf16.msra.mxu0 0
  %4236 = vmatprep.subr.bf16.mxu0 0
  %4237 = vmatpush1.bf16.msra.mxu0 0
  %4238 = vmatprep.subr.bf16.mxu0 0
  %4239 = vmatpush1.bf16.msra.mxu0 0
  %4240 = vmatprep.subr.bf16.mxu0 0
  %4241 = vmatpush1.bf16.msra.mxu0 0
  %4242 = vmatprep.subr.bf16.mxu0 0
  %4243 = vmatpush1.bf16.msra.mxu0 0
  %4244 = vmatprep.subr.bf16.mxu0 0
  %4245 = vmatpush1.bf16.msra.mxu0 0
  %4246 = vmatprep.subr.bf16.mxu0 0
  %4247 = vmatpush1.bf16.msra.mxu0 0
  %4248 = vmatprep.subr.bf16.mxu0 0
  %4249 = vmatpush1.bf16.msra.mxu0 0
  %4250 = vmatprep.subr.bf16.mxu0 0
  %4251 = vmatpush1.bf16.msra.mxu0 0
  %4252 = vmatprep.mubr.bf16.mxu0 0
  %4253 = vmatmul.mubr.bf16.gmra.mrb[0].mxu0 %v4215
  %v4254 = vpop.f32.mrb[0].mxu0
  %v4255 = vadd.f32 0.0, %v4254
  %v4256 = vpop.f32.mrb[0].mxu0
  %v4257 = vpop.f32.mrb[0].mxu0
  %v4258 = vpop.f32.mrb[0].mxu0
  %4259 = vdwg.mxu0
  %v4261 = vsel %vm460, %v181, 0
  %v4264 = vsel %vm464, %v3783, 0
  %4266 = vmatprep.subr.bf16.mxu0 0
  %4267 = vmatpush1.bf16.msra.mxu0 %v4264
  %4268 = vmatprep.subr.bf16.mxu0 0
  %4269 = vmatpush1.bf16.msra.mxu0 0
  %4270 = vmatprep.subr.bf16.mxu0 0
  %4271 = vmatpush1.bf16.msra.mxu0 0
  %4272 = vmatprep.subr.bf16.mxu0 0
  %4273 = vmatpush1.bf16.msra.mxu0 0
  %4274 = vmatprep.subr.bf16.mxu0 0
  %4275 = vmatpush1.bf16.msra.mxu0 0
  %4276 = vmatprep.subr.bf16.mxu0 0
  %4277 = vmatpush1.bf16.msra.mxu0 0
  %4278 = vmatprep.subr.bf16.mxu0 0
  %4279 = vmatpush1.bf16.msra.mxu0 0
  %4280 = vmatprep.subr.bf16.mxu0 0
  %4281 = vmatpush1.bf16.msra.mxu0 0
  %4282 = vmatprep.subr.bf16.mxu0 0
  %4283 = vmatpush1.bf16.msra.mxu0 0
  %4284 = vmatprep.subr.bf16.mxu0 0
  %4285 = vmatpush1.bf16.msra.mxu0 0
  %4286 = vmatprep.subr.bf16.mxu0 0
  %4287 = vmatpush1.bf16.msra.mxu0 0
  %4288 = vmatprep.subr.bf16.mxu0 0
  %4289 = vmatpush1.bf16.msra.mxu0 0
  %4290 = vmatprep.subr.bf16.mxu0 0
  %4291 = vmatpush1.bf16.msra.mxu0 0
  %4292 = vmatprep.subr.bf16.mxu0 0
  %4293 = vmatpush1.bf16.msra.mxu0 0
  %4294 = vmatprep.subr.bf16.mxu0 0
  %4295 = vmatpush1.bf16.msra.mxu0 0
  %4296 = vmatprep.subr.bf16.mxu0 0
  %4297 = vmatpush1.bf16.msra.mxu0 0
  %4298 = vmatprep.mubr.bf16.mxu0 0
  %4299 = vmatmul.mubr.bf16.gmra.mrb[0].mxu0 %v4261
  %v4300 = vpop.f32.mrb[0].mxu0
  %v4301 = vadd.f32 0.0, %v4300
  %v4302 = vpop.f32.mrb[0].mxu0
  %v4303 = vpop.f32.mrb[0].mxu0
  %v4304 = vpop.f32.mrb[0].mxu0
  %4305 = vdwg.mxu0
  %v4307 = vsel %vm460, %v182, 0
  %v4310 = vsel %vm464, %v3784, 0
  %4312 = vmatprep.subr.bf16.mxu0 0
  %4313 = vmatpush1.bf16.msra.mxu0 %v4310
  %4314 = vmatprep.subr.bf16.mxu0 0
  %4315 = vmatpush1.bf16.msra.mxu0 0
  %4316 = vmatprep.subr.bf16.mxu0 0
  %4317 = vmatpush1.bf16.msra.mxu0 0
  %4318 = vmatprep.subr.bf16.mxu0 0
  %4319 = vmatpush1.bf16.msra.mxu0 0
  %4320 = vmatprep.subr.bf16.mxu0 0
  %4321 = vmatpush1.bf16.msra.mxu0 0
  %4322 = vmatprep.subr.bf16.mxu0 0
  %4323 = vmatpush1.bf16.msra.mxu0 0
  %4324 = vmatprep.subr.bf16.mxu0 0
  %4325 = vmatpush1.bf16.msra.mxu0 0
  %4326 = vmatprep.subr.bf16.mxu0 0
  %4327 = vmatpush1.bf16.msra.mxu0 0
  %4328 = vmatprep.subr.bf16.mxu0 0
  %4329 = vmatpush1.bf16.msra.mxu0 0
  %4330 = vmatprep.subr.bf16.mxu0 0
  %4331 = vmatpush1.bf16.msra.mxu0 0
  %4332 = vmatprep.subr.bf16.mxu0 0
  %4333 = vmatpush1.bf16.msra.mxu0 0
  %4334 = vmatprep.subr.bf16.mxu0 0
  %4335 = vmatpush1.bf16.msra.mxu0 0
  %4336 = vmatprep.subr.bf16.mxu0 0
  %4337 = vmatpush1.bf16.msra.mxu0 0
  %4338 = vmatprep.subr.bf16.mxu0 0
  %4339 = vmatpush1.bf16.msra.mxu0 0
  %4340 = vmatprep.subr.bf16.mxu0 0
  %4341 = vmatpush1.bf16.msra.mxu0 0
  %4342 = vmatprep.subr.bf16.mxu0 0
  %4343 = vmatpush1.bf16.msra.mxu0 0
  %4344 = vmatprep.mubr.bf16.mxu0 0
  %4345 = vmatmul.mubr.bf16.gmra.mrb[0].mxu0 %v4307
  %v4346 = vpop.f32.mrb[0].mxu0
  %v4347 = vadd.f32 0.0, %v4346
  %v4348 = vpop.f32.mrb[0].mxu0
  %v4349 = vpop.f32.mrb[0].mxu0
  %v4350 = vpop.f32.mrb[0].mxu0
  %4351 = vdwg.mxu0
  %v4353 = vsel %vm460, %v183, 0
  %v4356 = vsel %vm464, %v3785, 0
  %4358 = vmatprep.subr.bf16.mxu0 0
  %4359 = vmatpush1.bf16.msra.mxu0 %v4356
  %4360 = vmatprep.subr.bf16.mxu0 0
  %4361 = vmatpush1.bf16.msra.mxu0 0
  %4362 = vmatprep.subr.bf16.mxu0 0
  %4363 = vmatpush1.bf16.msra.mxu0 0
  %4364 = vmatprep.subr.bf16.mxu0 0
  %4365 = vmatpush1.bf16.msra.mxu0 0
  %4366 = vmatprep.subr.bf16.mxu0 0
  %4367 = vmatpush1.bf16.msra.mxu0 0
  %4368 = vmatprep.subr.bf16.mxu0 0
  %4369 = vmatpush1.bf16.msra.mxu0 0
  %4370 = vmatprep.subr.bf16.mxu0 0
  %4371 = vmatpush1.bf16.msra.mxu0 0
  %4372 = vmatprep.subr.bf16.mxu0 0
  %4373 = vmatpush1.bf16.msra.mxu0 0
  %4374 = vmatprep.subr.bf16.mxu0 0
  %4375 = vmatpush1.bf16.msra.mxu0 0
  %4376 = vmatprep.subr.bf16.mxu0 0
  %4377 = vmatpush1.bf16.msra.mxu0 0
  %4378 = vmatprep.subr.bf16.mxu0 0
  %4379 = vmatpush1.bf16.msra.mxu0 0
  %4380 = vmatprep.subr.bf16.mxu0 0
  %4381 = vmatpush1.bf16.msra.mxu0 0
  %4382 = vmatprep.subr.bf16.mxu0 0
  %4383 = vmatpush1.bf16.msra.mxu0 0
  %4384 = vmatprep.subr.bf16.mxu0 0
  %4385 = vmatpush1.bf16.msra.mxu0 0
  %4386 = vmatprep.subr.bf16.mxu0 0
  %4387 = vmatpush1.bf16.msra.mxu0 0
  %4388 = vmatprep.subr.bf16.mxu0 0
  %4389 = vmatpush1.bf16.msra.mxu0 0
  %4390 = vmatprep.mubr.bf16.mxu0 0
  %4391 = vmatmul.mubr.bf16.gmra.mrb[0].mxu0 %v4353
  %v4392 = vpop.f32.mrb[0].mxu0
  %v4393 = vadd.f32 0.0, %v4392
  %v4394 = vpop.f32.mrb[0].mxu0
  %v4395 = vpop.f32.mrb[0].mxu0
  %v4396 = vpop.f32.mrb[0].mxu0
  %4397 = vdwg.mxu0
  %v4399 = vsel %vm460, %v184, 0
  %v4402 = vsel %vm464, %v3786, 0
  %4404 = vmatprep.subr.bf16.mxu0 0
  %4405 = vmatpush1.bf16.msra.mxu0 %v4402
  %4406 = vmatprep.subr.bf16.mxu0 0
  %4407 = vmatpush1.bf16.msra.mxu0 0
  %4408 = vmatprep.subr.bf16.mxu0 0
  %4409 = vmatpush1.bf16.msra.mxu0 0
  %4410 = vmatprep.subr.bf16.mxu0 0
  %4411 = vmatpush1.bf16.msra.mxu0 0
  %4412 = vmatprep.subr.bf16.mxu0 0
  %4413 = vmatpush1.bf16.msra.mxu0 0
  %4414 = vmatprep.subr.bf16.mxu0 0
  %4415 = vmatpush1.bf16.msra.mxu0 0
  %4416 = vmatprep.subr.bf16.mxu0 0
  %4417 = vmatpush1.bf16.msra.mxu0 0
  %4418 = vmatprep.subr.bf16.mxu0 0
  %4419 = vmatpush1.bf16.msra.mxu0 0
  %4420 = vmatprep.subr.bf16.mxu0 0
  %4421 = vmatpush1.bf16.msra.mxu0 0
  %4422 = vmatprep.subr.bf16.mxu0 0
  %4423 = vmatpush1.bf16.msra.mxu0 0
  %4424 = vmatprep.subr.bf16.mxu0 0
  %4425 = vmatpush1.bf16.msra.mxu0 0
  %4426 = vmatprep.subr.bf16.mxu0 0
  %4427 = vmatpush1.bf16.msra.mxu0 0
  %4428 = vmatprep.subr.bf16.mxu0 0
  %4429 = vmatpush1.bf16.msra.mxu0 0
  %4430 = vmatprep.subr.bf16.mxu0 0
  %4431 = vmatpush1.bf16.msra.mxu0 0
  %4432 = vmatprep.subr.bf16.mxu0 0
  %4433 = vmatpush1.bf16.msra.mxu0 0
  %4434 = vmatprep.subr.bf16.mxu0 0
  %4435 = vmatpush1.bf16.msra.mxu0 0
  %4436 = vmatprep.mubr.bf16.mxu0 0
  %4437 = vmatmul.mubr.bf16.gmra.mrb[0].mxu0 %v4399
  %v4438 = vpop.f32.mrb[0].mxu0
  %v4439 = vadd.f32 0.0, %v4438
  %v4440 = vpop.f32.mrb[0].mxu0
  %v4441 = vpop.f32.mrb[0].mxu0
  %v4442 = vpop.f32.mrb[0].mxu0
  %4443 = vdwg.mxu0
  %v4445 = vsel %vm460, %v185, 0
  %v4448 = vsel %vm464, %v3787, 0
  %4450 = vmatprep.subr.bf16.mxu0 0
  %4451 = vmatpush1.bf16.msra.mxu0 %v4448
  %4452 = vmatprep.subr.bf16.mxu0 0
  %4453 = vmatpush1.bf16.msra.mxu0 0
  %4454 = vmatprep.subr.bf16.mxu0 0
  %4455 = vmatpush1.bf16.msra.mxu0 0
  %4456 = vmatprep.subr.bf16.mxu0 0
  %4457 = vmatpush1.bf16.msra.mxu0 0
  %4458 = vmatprep.subr.bf16.mxu0 0
  %4459 = vmatpush1.bf16.msra.mxu0 0
  %4460 = vmatprep.subr.bf16.mxu0 0
  %4461 = vmatpush1.bf16.msra.mxu0 0
  %4462 = vmatprep.subr.bf16.mxu0 0
  %4463 = vmatpush1.bf16.msra.mxu0 0
  %4464 = vmatprep.subr.bf16.mxu0 0
  %4465 = vmatpush1.bf16.msra.mxu0 0
  %4466 = vmatprep.subr.bf16.mxu0 0
  %4467 = vmatpush1.bf16.msra.mxu0 0
  %4468 = vmatprep.subr.bf16.mxu0 0
  %4469 = vmatpush1.bf16.msra.mxu0 0
  %4470 = vmatprep.subr.bf16.mxu0 0
  %4471 = vmatpush1.bf16.msra.mxu0 0
  %4472 = vmatprep.subr.bf16.mxu0 0
  %4473 = vmatpush1.bf16.msra.mxu0 0
  %4474 = vmatprep.subr.bf16.mxu0 0
  %4475 = vmatpush1.bf16.msra.mxu0 0
  %4476 = vmatprep.subr.bf16.mxu0 0
  %4477 = vmatpush1.bf16.msra.mxu0 0
  %4478 = vmatprep.subr.bf16.mxu0 0
  %4479 = vmatpush1.bf16.msra.mxu0 0
  %4480 = vmatprep.subr.bf16.mxu0 0
  %4481 = vmatpush1.bf16.msra.mxu0 0
  %4482 = vmatprep.mubr.bf16.mxu0 0
  %4483 = vmatmul.mubr.bf16.gmra.mrb[0].mxu0 %v4445
  %v4484 = vpop.f32.mrb[0].mxu0
  %v4485 = vadd.f32 0.0, %v4484
  %v4486 = vpop.f32.mrb[0].mxu0
  %v4487 = vpop.f32.mrb[0].mxu0
  %v4488 = vpop.f32.mrb[0].mxu0
  %4489 = vdwg.mxu0
  %v4491 = vsel %vm460, %v186, 0
  %v4494 = vsel %vm464, %v3788, 0
  %4496 = vmatprep.subr.bf16.mxu0 0
  %4497 = vmatpush1.bf16.msra.mxu0 %v4494
  %4498 = vmatprep.subr.bf16.mxu0 0
  %4499 = vmatpush1.bf16.msra.mxu0 0
  %4500 = vmatprep.subr.bf16.mxu0 0
  %4501 = vmatpush1.bf16.msra.mxu0 0
  %4502 = vmatprep.subr.bf16.mxu0 0
  %4503 = vmatpush1.bf16.msra.mxu0 0
  %4504 = vmatprep.subr.bf16.mxu0 0
  %4505 = vmatpush1.bf16.msra.mxu0 0
  %4506 = vmatprep.subr.bf16.mxu0 0
  %4507 = vmatpush1.bf16.msra.mxu0 0
  %4508 = vmatprep.subr.bf16.mxu0 0
  %4509 = vmatpush1.bf16.msra.mxu0 0
  %4510 = vmatprep.subr.bf16.mxu0 0
  %4511 = vmatpush1.bf16.msra.mxu0 0
  %4512 = vmatprep.subr.bf16.mxu0 0
  %4513 = vmatpush1.bf16.msra.mxu0 0
  %4514 = vmatprep.subr.bf16.mxu0 0
  %4515 = vmatpush1.bf16.msra.mxu0 0
  %4516 = vmatprep.subr.bf16.mxu0 0
  %4517 = vmatpush1.bf16.msra.mxu0 0
  %4518 = vmatprep.subr.bf16.mxu0 0
  %4519 = vmatpush1.bf16.msra.mxu0 0
  %4520 = vmatprep.subr.bf16.mxu0 0
  %4521 = vmatpush1.bf16.msra.mxu0 0
  %4522 = vmatprep.subr.bf16.mxu0 0
  %4523 = vmatpush1.bf16.msra.mxu0 0
  %4524 = vmatprep.subr.bf16.mxu0 0
  %4525 = vmatpush1.bf16.msra.mxu0 0
  %4526 = vmatprep.subr.bf16.mxu0 0
  %4527 = vmatpush1.bf16.msra.mxu0 0
  %4528 = vmatprep.mubr.bf16.mxu0 0
  %4529 = vmatmul.mubr.bf16.gmra.mrb[0].mxu0 %v4491
  %v4530 = vpop.f32.mrb[0].mxu0
  %v4531 = vadd.f32 0.0, %v4530
  %v4532 = vpop.f32.mrb[0].mxu0
  %v4533 = vpop.f32.mrb[0].mxu0
  %v4534 = vpop.f32.mrb[0].mxu0
  %4535 = vdwg.mxu0
  %v4537 = vsel %vm460, %v187, 0
  %v4540 = vsel %vm464, %v3789, 0
  %4542 = vmatprep.subr.bf16.mxu0 0
  %4543 = vmatpush1.bf16.msra.mxu0 %v4540
  %4544 = vmatprep.subr.bf16.mxu0 0
  %4545 = vmatpush1.bf16.msra.mxu0 0
  %4546 = vmatprep.subr.bf16.mxu0 0
  %4547 = vmatpush1.bf16.msra.mxu0 0
  %4548 = vmatprep.subr.bf16.mxu0 0
  %4549 = vmatpush1.bf16.msra.mxu0 0
  %4550 = vmatprep.subr.bf16.mxu0 0
  %4551 = vmatpush1.bf16.msra.mxu0 0
  %4552 = vmatprep.subr.bf16.mxu0 0
  %4553 = vmatpush1.bf16.msra.mxu0 0
  %4554 = vmatprep.subr.bf16.mxu0 0
  %4555 = vmatpush1.bf16.msra.mxu0 0
  %4556 = vmatprep.subr.bf16.mxu0 0
  %4557 = vmatpush1.bf16.msra.mxu0 0
  %4558 = vmatprep.subr.bf16.mxu0 0
  %4559 = vmatpush1.bf16.msra.mxu0 0
  %4560 = vmatprep.subr.bf16.mxu0 0
  %4561 = vmatpush1.bf16.msra.mxu0 0
  %4562 = vmatprep.subr.bf16.mxu0 0
  %4563 = vmatpush1.bf16.msra.mxu0 0
  %4564 = vmatprep.subr.bf16.mxu0 0
  %4565 = vmatpush1.bf16.msra.mxu0 0
  %4566 = vmatprep.subr.bf16.mxu0 0
  %4567 = vmatpush1.bf16.msra.mxu0 0
  %4568 = vmatprep.subr.bf16.mxu0 0
  %4569 = vmatpush1.bf16.msra.mxu0 0
  %4570 = vmatprep.subr.bf16.mxu0 0
  %4571 = vmatpush1.bf16.msra.mxu0 0
  %4572 = vmatprep.subr.bf16.mxu0 0
  %4573 = vmatpush1.bf16.msra.mxu0 0
  %4574 = vmatprep.mubr.bf16.mxu0 0
  %4575 = vmatmul.mubr.bf16.gmra.mrb[0].mxu0 %v4537
  %v4576 = vpop.f32.mrb[0].mxu0
  %v4577 = vadd.f32 0.0, %v4576
  %v4578 = vpop.f32.mrb[0].mxu0
  %v4579 = vpop.f32.mrb[0].mxu0
  %v4580 = vpop.f32.mrb[0].mxu0
  %4581 = vdwg.mxu0
  %v4583 = vsel %vm460, %v188, 0
  %v4586 = vsel %vm464, %v3790, 0
  %4588 = vmatprep.subr.bf16.mxu0 0
  %4589 = vmatpush1.bf16.msra.mxu0 %v4586
  %4590 = vmatprep.subr.bf16.mxu0 0
  %4591 = vmatpush1.bf16.msra.mxu0 0
  %4592 = vmatprep.subr.bf16.mxu0 0
  %4593 = vmatpush1.bf16.msra.mxu0 0
  %4594 = vmatprep.subr.bf16.mxu0 0
  %4595 = vmatpush1.bf16.msra.mxu0 0
  %4596 = vmatprep.subr.bf16.mxu0 0
  %4597 = vmatpush1.bf16.msra.mxu0 0
  %4598 = vmatprep.subr.bf16.mxu0 0
  %4599 = vmatpush1.bf16.msra.mxu0 0
  %4600 = vmatprep.subr.bf16.mxu0 0
  %4601 = vmatpush1.bf16.msra.mxu0 0
  %4602 = vmatprep.subr.bf16.mxu0 0
  %4603 = vmatpush1.bf16.msra.mxu0 0
  %4604 = vmatprep.subr.bf16.mxu0 0
  %4605 = vmatpush1.bf16.msra.mxu0 0
  %4606 = vmatprep.subr.bf16.mxu0 0
  %4607 = vmatpush1.bf16.msra.mxu0 0
  %4608 = vmatprep.subr.bf16.mxu0 0
  %4609 = vmatpush1.bf16.msra.mxu0 0
  %4610 = vmatprep.subr.bf16.mxu0 0
  %4611 = vmatpush1.bf16.msra.mxu0 0
  %4612 = vmatprep.subr.bf16.mxu0 0
  %4613 = vmatpush1.bf16.msra.mxu0 0
  %4614 = vmatprep.subr.bf16.mxu0 0
  %4615 = vmatpush1.bf16.msra.mxu0 0
  %4616 = vmatprep.subr.bf16.mxu0 0
  %4617 = vmatpush1.bf16.msra.mxu0 0
  %4618 = vmatprep.subr.bf16.mxu0 0
  %4619 = vmatpush1.bf16.msra.mxu0 0
  %4620 = vmatprep.mubr.bf16.mxu0 0
  %4621 = vmatmul.mubr.bf16.gmra.mrb[0].mxu0 %v4583
  %v4622 = vpop.f32.mrb[0].mxu0
  %v4623 = vadd.f32 0.0, %v4622
  %v4624 = vpop.f32.mrb[0].mxu0
  %v4625 = vpop.f32.mrb[0].mxu0
  %v4626 = vpop.f32.mrb[0].mxu0
  %4627 = vdwg.mxu0
  %v4629 = vsel %vm460, %v189, 0
  %v4632 = vsel %vm464, %v3791, 0
  %4634 = vmatprep.subr.bf16.mxu0 0
  %4635 = vmatpush1.bf16.msra.mxu0 %v4632
  %4636 = vmatprep.subr.bf16.mxu0 0
  %4637 = vmatpush1.bf16.msra.mxu0 0
  %4638 = vmatprep.subr.bf16.mxu0 0
  %4639 = vmatpush1.bf16.msra.mxu0 0
  %4640 = vmatprep.subr.bf16.mxu0 0
  %4641 = vmatpush1.bf16.msra.mxu0 0
  %4642 = vmatprep.subr.bf16.mxu0 0
  %4643 = vmatpush1.bf16.msra.mxu0 0
  %4644 = vmatprep.subr.bf16.mxu0 0
  %4645 = vmatpush1.bf16.msra.mxu0 0
  %4646 = vmatprep.subr.bf16.mxu0 0
  %4647 = vmatpush1.bf16.msra.mxu0 0
  %4648 = vmatprep.subr.bf16.mxu0 0
  %4649 = vmatpush1.bf16.msra.mxu0 0
  %4650 = vmatprep.subr.bf16.mxu0 0
  %4651 = vmatpush1.bf16.msra.mxu0 0
  %4652 = vmatprep.subr.bf16.mxu0 0
  %4653 = vmatpush1.bf16.msra.mxu0 0
  %4654 = vmatprep.subr.bf16.mxu0 0
  %4655 = vmatpush1.bf16.msra.mxu0 0
  %4656 = vmatprep.subr.bf16.mxu0 0
  %4657 = vmatpush1.bf16.msra.mxu0 0
  %4658 = vmatprep.subr.bf16.mxu0 0
  %4659 = vmatpush1.bf16.msra.mxu0 0
  %4660 = vmatprep.subr.bf16.mxu0 0
  %4661 = vmatpush1.bf16.msra.mxu0 0
  %4662 = vmatprep.subr.bf16.mxu0 0
  %4663 = vmatpush1.bf16.msra.mxu0 0
  %4664 = vmatprep.subr.bf16.mxu0 0
  %4665 = vmatpush1.bf16.msra.mxu0 0
  %4666 = vmatprep.mubr.bf16.mxu0 0
  %4667 = vmatmul.mubr.bf16.gmra.mrb[0].mxu0 %v4629
  %v4668 = vpop.f32.mrb[0].mxu0
  %v4669 = vadd.f32 0.0, %v4668
  %v4670 = vpop.f32.mrb[0].mxu0
  %v4671 = vpop.f32.mrb[0].mxu0
  %v4672 = vpop.f32.mrb[0].mxu0
  %4673 = vdwg.mxu0
  %v4675 = vsel %vm460, %v190, 0
  %v4678 = vsel %vm464, %v3792, 0
  %4680 = vmatprep.subr.bf16.mxu0 0
  %4681 = vmatpush1.bf16.msra.mxu0 %v4678
  %4682 = vmatprep.subr.bf16.mxu0 0
  %4683 = vmatpush1.bf16.msra.mxu0 0
  %4684 = vmatprep.subr.bf16.mxu0 0
  %4685 = vmatpush1.bf16.msra.mxu0 0
  %4686 = vmatprep.subr.bf16.mxu0 0
  %4687 = vmatpush1.bf16.msra.mxu0 0
  %4688 = vmatprep.subr.bf16.mxu0 0
  %4689 = vmatpush1.bf16.msra.mxu0 0
  %4690 = vmatprep.subr.bf16.mxu0 0
  %4691 = vmatpush1.bf16.msra.mxu0 0
  %4692 = vmatprep.subr.bf16.mxu0 0
  %4693 = vmatpush1.bf16.msra.mxu0 0
  %4694 = vmatprep.subr.bf16.mxu0 0
  %4695 = vmatpush1.bf16.msra.mxu0 0
  %4696 = vmatprep.subr.bf16.mxu0 0
  %4697 = vmatpush1.bf16.msra.mxu0 0
  %4698 = vmatprep.subr.bf16.mxu0 0
  %4699 = vmatpush1.bf16.msra.mxu0 0
  %4700 = vmatprep.subr.bf16.mxu0 0
  %4701 = vmatpush1.bf16.msra.mxu0 0
  %4702 = vmatprep.subr.bf16.mxu0 0
  %4703 = vmatpush1.bf16.msra.mxu0 0
  %4704 = vmatprep.subr.bf16.mxu0 0
  %4705 = vmatpush1.bf16.msra.mxu0 0
  %4706 = vmatprep.subr.bf16.mxu0 0
  %4707 = vmatpush1.bf16.msra.mxu0 0
  %4708 = vmatprep.subr.bf16.mxu0 0
  %4709 = vmatpush1.bf16.msra.mxu0 0
  %4710 = vmatprep.subr.bf16.mxu0 0
  %4711 = vmatpush1.bf16.msra.mxu0 0
  %4712 = vmatprep.mubr.bf16.mxu0 0
  %4713 = vmatmul.mubr.bf16.gmra.mrb[0].mxu0 %v4675
  %v4714 = vpop.f32.mrb[0].mxu0
  %v4715 = vadd.f32 0.0, %v4714
  %v4716 = vpop.f32.mrb[0].mxu0
  %v4717 = vpop.f32.mrb[0].mxu0
  %v4718 = vpop.f32.mrb[0].mxu0
  %4719 = vdwg.mxu0
  %v4721 = vsel %vm460, %v191, 0
  %v4724 = vsel %vm464, %v3793, 0
  %4726 = vmatprep.subr.bf16.mxu0 0
  %4727 = vmatpush1.bf16.msra.mxu0 %v4724
  %4728 = vmatprep.subr.bf16.mxu0 0
  %4729 = vmatpush1.bf16.msra.mxu0 0
  %4730 = vmatprep.subr.bf16.mxu0 0
  %4731 = vmatpush1.bf16.msra.mxu0 0
  %4732 = vmatprep.subr.bf16.mxu0 0
  %4733 = vmatpush1.bf16.msra.mxu0 0
  %4734 = vmatprep.subr.bf16.mxu0 0
  %4735 = vmatpush1.bf16.msra.mxu0 0
  %4736 = vmatprep.subr.bf16.mxu0 0
  %4737 = vmatpush1.bf16.msra.mxu0 0
  %4738 = vmatprep.subr.bf16.mxu0 0
  %4739 = vmatpush1.bf16.msra.mxu0 0
  %4740 = vmatprep.subr.bf16.mxu0 0
  %4741 = vmatpush1.bf16.msra.mxu0 0
  %4742 = vmatprep.subr.bf16.mxu0 0
  %4743 = vmatpush1.bf16.msra.mxu0 0
  %4744 = vmatprep.subr.bf16.mxu0 0
  %4745 = vmatpush1.bf16.msra.mxu0 0
  %4746 = vmatprep.subr.bf16.mxu0 0
  %4747 = vmatpush1.bf16.msra.mxu0 0
  %4748 = vmatprep.subr.bf16.mxu0 0
  %4749 = vmatpush1.bf16.msra.mxu0 0
  %4750 = vmatprep.subr.bf16.mxu0 0
  %4751 = vmatpush1.bf16.msra.mxu0 0
  %4752 = vmatprep.subr.bf16.mxu0 0
  %4753 = vmatpush1.bf16.msra.mxu0 0
  %4754 = vmatprep.subr.bf16.mxu0 0
  %4755 = vmatpush1.bf16.msra.mxu0 0
  %4756 = vmatprep.subr.bf16.mxu0 0
  %4757 = vmatpush1.bf16.msra.mxu0 0
  %4758 = vmatprep.mubr.bf16.mxu0 0
  %4759 = vmatmul.mubr.bf16.gmra.mrb[0].mxu0 %v4721
  %v4760 = vpop.f32.mrb[0].mxu0
  %v4761 = vadd.f32 0.0, %v4760
  %v4762 = vpop.f32.mrb[0].mxu0
  %v4763 = vpop.f32.mrb[0].mxu0
  %v4764 = vpop.f32.mrb[0].mxu0
  %4765 = vdwg.mxu0
  %v4767 = vsel %vm460, %v192, 0
  %v4770 = vsel %vm464, %v3794, 0
  %4772 = vmatprep.subr.bf16.mxu0 0
  %4773 = vmatpush1.bf16.msra.mxu0 %v4770
  %4774 = vmatprep.subr.bf16.mxu0 0
  %4775 = vmatpush1.bf16.msra.mxu0 0
  %4776 = vmatprep.subr.bf16.mxu0 0
  %4777 = vmatpush1.bf16.msra.mxu0 0
  %4778 = vmatprep.subr.bf16.mxu0 0
  %4779 = vmatpush1.bf16.msra.mxu0 0
  %4780 = vmatprep.subr.bf16.mxu0 0
  %4781 = vmatpush1.bf16.msra.mxu0 0
  %4782 = vmatprep.subr.bf16.mxu0 0
  %4783 = vmatpush1.bf16.msra.mxu0 0
  %4784 = vmatprep.subr.bf16.mxu0 0
  %4785 = vmatpush1.bf16.msra.mxu0 0
  %4786 = vmatprep.subr.bf16.mxu0 0
  %4787 = vmatpush1.bf16.msra.mxu0 0
  %4788 = vmatprep.subr.bf16.mxu0 0
  %4789 = vmatpush1.bf16.msra.mxu0 0
  %4790 = vmatprep.subr.bf16.mxu0 0
  %4791 = vmatpush1.bf16.msra.mxu0 0
  %4792 = vmatprep.subr.bf16.mxu0 0
  %4793 = vmatpush1.bf16.msra.mxu0 0
  %4794 = vmatprep.subr.bf16.mxu0 0
  %4795 = vmatpush1.bf16.msra.mxu0 0
  %4796 = vmatprep.subr.bf16.mxu0 0
  %4797 = vmatpush1.bf16.msra.mxu0 0
  %4798 = vmatprep.subr.bf16.mxu0 0
  %4799 = vmatpush1.bf16.msra.mxu0 0
  %4800 = vmatprep.subr.bf16.mxu0 0
  %4801 = vmatpush1.bf16.msra.mxu0 0
  %4802 = vmatprep.subr.bf16.mxu0 0
  %4803 = vmatpush1.bf16.msra.mxu0 0
  %4804 = vmatprep.mubr.bf16.mxu0 0
  %4805 = vmatmul.mubr.bf16.gmra.mrb[0].mxu0 %v4767
  %v4806 = vpop.f32.mrb[0].mxu0
  %v4807 = vadd.f32 0.0, %v4806
  %v4808 = vpop.f32.mrb[0].mxu0
  %v4809 = vpop.f32.mrb[0].mxu0
  %v4810 = vpop.f32.mrb[0].mxu0
  %4811 = vdwg.mxu0
  %v4813 = vsel %vm460, %v193, 0
  %v4816 = vsel %vm464, %v3795, 0
  %4818 = vmatprep.subr.bf16.mxu0 0
  %4819 = vmatpush1.bf16.msra.mxu0 %v4816
  %4820 = vmatprep.subr.bf16.mxu0 0
  %4821 = vmatpush1.bf16.msra.mxu0 0
  %4822 = vmatprep.subr.bf16.mxu0 0
  %4823 = vmatpush1.bf16.msra.mxu0 0
  %4824 = vmatprep.subr.bf16.mxu0 0
  %4825 = vmatpush1.bf16.msra.mxu0 0
  %4826 = vmatprep.subr.bf16.mxu0 0
  %4827 = vmatpush1.bf16.msra.mxu0 0
  %4828 = vmatprep.subr.bf16.mxu0 0
  %4829 = vmatpush1.bf16.msra.mxu0 0
  %4830 = vmatprep.subr.bf16.mxu0 0
  %4831 = vmatpush1.bf16.msra.mxu0 0
  %4832 = vmatprep.subr.bf16.mxu0 0
  %4833 = vmatpush1.bf16.msra.mxu0 0
  %4834 = vmatprep.subr.bf16.mxu0 0
  %4835 = vmatpush1.bf16.msra.mxu0 0
  %4836 = vmatprep.subr.bf16.mxu0 0
  %4837 = vmatpush1.bf16.msra.mxu0 0
  %4838 = vmatprep.subr.bf16.mxu0 0
  %4839 = vmatpush1.bf16.msra.mxu0 0
  %4840 = vmatprep.subr.bf16.mxu0 0
  %4841 = vmatpush1.bf16.msra.mxu0 0
  %4842 = vmatprep.subr.bf16.mxu0 0
  %4843 = vmatpush1.bf16.msra.mxu0 0
  %4844 = vmatprep.subr.bf16.mxu0 0
  %4845 = vmatpush1.bf16.msra.mxu0 0
  %4846 = vmatprep.subr.bf16.mxu0 0
  %4847 = vmatpush1.bf16.msra.mxu0 0
  %4848 = vmatprep.subr.bf16.mxu0 0
  %4849 = vmatpush1.bf16.msra.mxu0 0
  %4850 = vmatprep.mubr.bf16.mxu0 0
  %4851 = vmatmul.mubr.bf16.gmra.mrb[0].mxu0 %v4813
  %v4852 = vpop.f32.mrb[0].mxu0
  %v4853 = vadd.f32 0.0, %v4852
  %v4854 = vpop.f32.mrb[0].mxu0
  %v4855 = vpop.f32.mrb[0].mxu0
  %v4856 = vpop.f32.mrb[0].mxu0
  %4857 = vdwg.mxu0
  %v4859 = vsel %vm460, %v194, 0
  %v4862 = vsel %vm464, %v3796, 0
  %4864 = vmatprep.subr.bf16.mxu0 0
  %4865 = vmatpush1.bf16.msra.mxu0 %v4862
  %4866 = vmatprep.subr.bf16.mxu0 0
  %4867 = vmatpush1.bf16.msra.mxu0 0
  %4868 = vmatprep.subr.bf16.mxu0 0
  %4869 = vmatpush1.bf16.msra.mxu0 0
  %4870 = vmatprep.subr.bf16.mxu0 0
  %4871 = vmatpush1.bf16.msra.mxu0 0
  %4872 = vmatprep.subr.bf16.mxu0 0
  %4873 = vmatpush1.bf16.msra.mxu0 0
  %4874 = vmatprep.subr.bf16.mxu0 0
  %4875 = vmatpush1.bf16.msra.mxu0 0
  %4876 = vmatprep.subr.bf16.mxu0 0
  %4877 = vmatpush1.bf16.msra.mxu0 0
  %4878 = vmatprep.subr.bf16.mxu0 0
  %4879 = vmatpush1.bf16.msra.mxu0 0
  %4880 = vmatprep.subr.bf16.mxu0 0
  %4881 = vmatpush1.bf16.msra.mxu0 0
  %4882 = vmatprep.subr.bf16.mxu0 0
  %4883 = vmatpush1.bf16.msra.mxu0 0
  %4884 = vmatprep.subr.bf16.mxu0 0
  %4885 = vmatpush1.bf16.msra.mxu0 0
  %4886 = vmatprep.subr.bf16.mxu0 0
  %4887 = vmatpush1.bf16.msra.mxu0 0
  %4888 = vmatprep.subr.bf16.mxu0 0
  %4889 = vmatpush1.bf16.msra.mxu0 0
  %4890 = vmatprep.subr.bf16.mxu0 0
  %4891 = vmatpush1.bf16.msra.mxu0 0
  %4892 = vmatprep.subr.bf16.mxu0 0
  %4893 = vmatpush1.bf16.msra.mxu0 0
  %4894 = vmatprep.subr.bf16.mxu0 0
  %4895 = vmatpush1.bf16.msra.mxu0 0
  %4896 = vmatprep.mubr.bf16.mxu0 0
  %4897 = vmatmul.mubr.bf16.gmra.mrb[0].mxu0 %v4859
  %v4898 = vpop.f32.mrb[0].mxu0
  %v4899 = vadd.f32 0.0, %v4898
  %v4900 = vpop.f32.mrb[0].mxu0
  %v4901 = vpop.f32.mrb[0].mxu0
  %v4902 = vpop.f32.mrb[0].mxu0
  %4903 = vdwg.mxu0
  %v4905 = vsel %vm460, %v195, 0
  %v4908 = vsel %vm464, %v3797, 0
  %4910 = vmatprep.subr.bf16.mxu0 0
  %4911 = vmatpush1.bf16.msra.mxu0 %v4908
  %4912 = vmatprep.subr.bf16.mxu0 0
  %4913 = vmatpush1.bf16.msra.mxu0 0
  %4914 = vmatprep.subr.bf16.mxu0 0
  %4915 = vmatpush1.bf16.msra.mxu0 0
  %4916 = vmatprep.subr.bf16.mxu0 0
  %4917 = vmatpush1.bf16.msra.mxu0 0
  %4918 = vmatprep.subr.bf16.mxu0 0
  %4919 = vmatpush1.bf16.msra.mxu0 0
  %4920 = vmatprep.subr.bf16.mxu0 0
  %4921 = vmatpush1.bf16.msra.mxu0 0
  %4922 = vmatprep.subr.bf16.mxu0 0
  %4923 = vmatpush1.bf16.msra.mxu0 0
  %4924 = vmatprep.subr.bf16.mxu0 0
  %4925 = vmatpush1.bf16.msra.mxu0 0
  %4926 = vmatprep.subr.bf16.mxu0 0
  %4927 = vmatpush1.bf16.msra.mxu0 0
  %4928 = vmatprep.subr.bf16.mxu0 0
  %4929 = vmatpush1.bf16.msra.mxu0 0
  %4930 = vmatprep.subr.bf16.mxu0 0
  %4931 = vmatpush1.bf16.msra.mxu0 0
  %4932 = vmatprep.subr.bf16.mxu0 0
  %4933 = vmatpush1.bf16.msra.mxu0 0
  %4934 = vmatprep.subr.bf16.mxu0 0
  %4935 = vmatpush1.bf16.msra.mxu0 0
  %4936 = vmatprep.subr.bf16.mxu0 0
  %4937 = vmatpush1.bf16.msra.mxu0 0
  %4938 = vmatprep.subr.bf16.mxu0 0
  %4939 = vmatpush1.bf16.msra.mxu0 0
  %4940 = vmatprep.subr.bf16.mxu0 0
  %4941 = vmatpush1.bf16.msra.mxu0 0
  %4942 = vmatprep.mubr.bf16.mxu0 0
  %4943 = vmatmul.mubr.bf16.gmra.mrb[0].mxu0 %v4905
  %v4944 = vpop.f32.mrb[0].mxu0
  %v4945 = vadd.f32 0.0, %v4944
  %v4946 = vpop.f32.mrb[0].mxu0
  %v4947 = vpop.f32.mrb[0].mxu0
  %v4948 = vpop.f32.mrb[0].mxu0
  %4949 = vdwg.mxu0
  %v4951 = vsel %vm460, %v196, 0
  %v4954 = vsel %vm464, %v3798, 0
  %4956 = vmatprep.subr.bf16.mxu0 0
  %4957 = vmatpush1.bf16.msra.mxu0 %v4954
  %4958 = vmatprep.subr.bf16.mxu0 0
  %4959 = vmatpush1.bf16.msra.mxu0 0
  %4960 = vmatprep.subr.bf16.mxu0 0
  %4961 = vmatpush1.bf16.msra.mxu0 0
  %4962 = vmatprep.subr.bf16.mxu0 0
  %4963 = vmatpush1.bf16.msra.mxu0 0
  %4964 = vmatprep.subr.bf16.mxu0 0
  %4965 = vmatpush1.bf16.msra.mxu0 0
  %4966 = vmatprep.subr.bf16.mxu0 0
  %4967 = vmatpush1.bf16.msra.mxu0 0
  %4968 = vmatprep.subr.bf16.mxu0 0
  %4969 = vmatpush1.bf16.msra.mxu0 0
  %4970 = vmatprep.subr.bf16.mxu0 0
  %4971 = vmatpush1.bf16.msra.mxu0 0
  %4972 = vmatprep.subr.bf16.mxu0 0
  %4973 = vmatpush1.bf16.msra.mxu0 0
  %4974 = vmatprep.subr.bf16.mxu0 0
  %4975 = vmatpush1.bf16.msra.mxu0 0
  %4976 = vmatprep.subr.bf16.mxu0 0
  %4977 = vmatpush1.bf16.msra.mxu0 0
  %4978 = vmatprep.subr.bf16.mxu0 0
  %4979 = vmatpush1.bf16.msra.mxu0 0
  %4980 = vmatprep.subr.bf16.mxu0 0
  %4981 = vmatpush1.bf16.msra.mxu0 0
  %4982 = vmatprep.subr.bf16.mxu0 0
  %4983 = vmatpush1.bf16.msra.mxu0 0
  %4984 = vmatprep.subr.bf16.mxu0 0
  %4985 = vmatpush1.bf16.msra.mxu0 0
  %4986 = vmatprep.subr.bf16.mxu0 0
  %4987 = vmatpush1.bf16.msra.mxu0 0
  %4988 = vmatprep.mubr.bf16.mxu0 0
  %4989 = vmatmul.mubr.bf16.gmra.mrb[0].mxu0 %v4951
  %v4990 = vpop.f32.mrb[0].mxu0
  %v4991 = vadd.f32 0.0, %v4990
  %v4992 = vpop.f32.mrb[0].mxu0
  %v4993 = vpop.f32.mrb[0].mxu0
  %v4994 = vpop.f32.mrb[0].mxu0
  %4995 = vdwg.mxu0
  %v4997 = vsel %vm460, %v197, 0
  %v5000 = vsel %vm464, %v3799, 0
  %5002 = vmatprep.subr.bf16.mxu0 0
  %5003 = vmatpush1.bf16.msra.mxu0 %v5000
  %5004 = vmatprep.subr.bf16.mxu0 0
  %5005 = vmatpush1.bf16.msra.mxu0 0
  %5006 = vmatprep.subr.bf16.mxu0 0
  %5007 = vmatpush1.bf16.msra.mxu0 0
  %5008 = vmatprep.subr.bf16.mxu0 0
  %5009 = vmatpush1.bf16.msra.mxu0 0
  %5010 = vmatprep.subr.bf16.mxu0 0
  %5011 = vmatpush1.bf16.msra.mxu0 0
  %5012 = vmatprep.subr.bf16.mxu0 0
  %5013 = vmatpush1.bf16.msra.mxu0 0
  %5014 = vmatprep.subr.bf16.mxu0 0
  %5015 = vmatpush1.bf16.msra.mxu0 0
  %5016 = vmatprep.subr.bf16.mxu0 0
  %5017 = vmatpush1.bf16.msra.mxu0 0
  %5018 = vmatprep.subr.bf16.mxu0 0
  %5019 = vmatpush1.bf16.msra.mxu0 0
  %5020 = vmatprep.subr.bf16.mxu0 0
  %5021 = vmatpush1.bf16.msra.mxu0 0
  %5022 = vmatprep.subr.bf16.mxu0 0
  %5023 = vmatpush1.bf16.msra.mxu0 0
  %5024 = vmatprep.subr.bf16.mxu0 0
  %5025 = vmatpush1.bf16.msra.mxu0 0
  %5026 = vmatprep.subr.bf16.mxu0 0
  %5027 = vmatpush1.bf16.msra.mxu0 0
  %5028 = vmatprep.subr.bf16.mxu0 0
  %5029 = vmatpush1.bf16.msra.mxu0 0
  %5030 = vmatprep.subr.bf16.mxu0 0
  %5031 = vmatpush1.bf16.msra.mxu0 0
  %5032 = vmatprep.subr.bf16.mxu0 0
  %5033 = vmatpush1.bf16.msra.mxu0 0
  %5034 = vmatprep.mubr.bf16.mxu0 0
  %5035 = vmatmul.mubr.bf16.gmra.mrb[0].mxu0 %v4997
  %v5036 = vpop.f32.mrb[0].mxu0
  %v5037 = vadd.f32 0.0, %v5036
  %v5038 = vpop.f32.mrb[0].mxu0
  %v5039 = vpop.f32.mrb[0].mxu0
  %v5040 = vpop.f32.mrb[0].mxu0
  %5041 = vdwg.mxu0
  %v5043 = vsel %vm460, %v198, 0
  %v5046 = vsel %vm464, %v3800, 0
  %5048 = vmatprep.subr.bf16.mxu0 0
  %5049 = vmatpush1.bf16.msra.mxu0 %v5046
  %5050 = vmatprep.subr.bf16.mxu0 0
  %5051 = vmatpush1.bf16.msra.mxu0 0
  %5052 = vmatprep.subr.bf16.mxu0 0
  %5053 = vmatpush1.bf16.msra.mxu0 0
  %5054 = vmatprep.subr.bf16.mxu0 0
  %5055 = vmatpush1.bf16.msra.mxu0 0
  %5056 = vmatprep.subr.bf16.mxu0 0
  %5057 = vmatpush1.bf16.msra.mxu0 0
  %5058 = vmatprep.subr.bf16.mxu0 0
  %5059 = vmatpush1.bf16.msra.mxu0 0
  %5060 = vmatprep.subr.bf16.mxu0 0
  %5061 = vmatpush1.bf16.msra.mxu0 0
  %5062 = vmatprep.subr.bf16.mxu0 0
  %5063 = vmatpush1.bf16.msra.mxu0 0
  %5064 = vmatprep.subr.bf16.mxu0 0
  %5065 = vmatpush1.bf16.msra.mxu0 0
  %5066 = vmatprep.subr.bf16.mxu0 0
  %5067 = vmatpush1.bf16.msra.mxu0 0
  %5068 = vmatprep.subr.bf16.mxu0 0
  %5069 = vmatpush1.bf16.msra.mxu0 0
  %5070 = vmatprep.subr.bf16.mxu0 0
  %5071 = vmatpush1.bf16.msra.mxu0 0
  %5072 = vmatprep.subr.bf16.mxu0 0
  %5073 = vmatpush1.bf16.msra.mxu0 0
  %5074 = vmatprep.subr.bf16.mxu0 0
  %5075 = vmatpush1.bf16.msra.mxu0 0
  %5076 = vmatprep.subr.bf16.mxu0 0
  %5077 = vmatpush1.bf16.msra.mxu0 0
  %5078 = vmatprep.subr.bf16.mxu0 0
  %5079 = vmatpush1.bf16.msra.mxu0 0
  %5080 = vmatprep.mubr.bf16.mxu0 0
  %5081 = vmatmul.mubr.bf16.gmra.mrb[0].mxu0 %v5043
  %v5082 = vpop.f32.mrb[0].mxu0
  %v5083 = vadd.f32 0.0, %v5082
  %v5084 = vpop.f32.mrb[0].mxu0
  %v5085 = vpop.f32.mrb[0].mxu0
  %v5086 = vpop.f32.mrb[0].mxu0
  %5087 = vdwg.mxu0
  %v5089 = vsel %vm460, %v199, 0
  %v5092 = vsel %vm464, %v3801, 0
  %5094 = vmatprep.subr.bf16.mxu0 0
  %5095 = vmatpush1.bf16.msra.mxu0 %v5092
  %5096 = vmatprep.subr.bf16.mxu0 0
  %5097 = vmatpush1.bf16.msra.mxu0 0
  %5098 = vmatprep.subr.bf16.mxu0 0
  %5099 = vmatpush1.bf16.msra.mxu0 0
  %5100 = vmatprep.subr.bf16.mxu0 0
  %5101 = vmatpush1.bf16.msra.mxu0 0
  %5102 = vmatprep.subr.bf16.mxu0 0
  %5103 = vmatpush1.bf16.msra.mxu0 0
  %5104 = vmatprep.subr.bf16.mxu0 0
  %5105 = vmatpush1.bf16.msra.mxu0 0
  %5106 = vmatprep.subr.bf16.mxu0 0
  %5107 = vmatpush1.bf16.msra.mxu0 0
  %5108 = vmatprep.subr.bf16.mxu0 0
  %5109 = vmatpush1.bf16.msra.mxu0 0
  %5110 = vmatprep.subr.bf16.mxu0 0
  %5111 = vmatpush1.bf16.msra.mxu0 0
  %5112 = vmatprep.subr.bf16.mxu0 0
  %5113 = vmatpush1.bf16.msra.mxu0 0
  %5114 = vmatprep.subr.bf16.mxu0 0
  %5115 = vmatpush1.bf16.msra.mxu0 0
  %5116 = vmatprep.subr.bf16.mxu0 0
  %5117 = vmatpush1.bf16.msra.mxu0 0
  %5118 = vmatprep.subr.bf16.mxu0 0
  %5119 = vmatpush1.bf16.msra.mxu0 0
  %5120 = vmatprep.subr.bf16.mxu0 0
  %5121 = vmatpush1.bf16.msra.mxu0 0
  %5122 = vmatprep.subr.bf16.mxu0 0
  %5123 = vmatpush1.bf16.msra.mxu0 0
  %5124 = vmatprep.subr.bf16.mxu0 0
  %5125 = vmatpush1.bf16.msra.mxu0 0
  %5126 = vmatprep.mubr.bf16.mxu0 0
  %5127 = vmatmul.mubr.bf16.gmra.mrb[0].mxu0 %v5089
  %v5128 = vpop.f32.mrb[0].mxu0
  %v5129 = vadd.f32 0.0, %v5128
  %v5130 = vpop.f32.mrb[0].mxu0
  %v5131 = vpop.f32.mrb[0].mxu0
  %v5132 = vpop.f32.mrb[0].mxu0
  %5133 = vdwg.mxu0
  %v5135 = vsel %vm460, %v200, 0
  %v5138 = vsel %vm464, %v3802, 0
  %5140 = vmatprep.subr.bf16.mxu0 0
  %5141 = vmatpush1.bf16.msra.mxu0 %v5138
  %5142 = vmatprep.subr.bf16.mxu0 0
  %5143 = vmatpush1.bf16.msra.mxu0 0
  %5144 = vmatprep.subr.bf16.mxu0 0
  %5145 = vmatpush1.bf16.msra.mxu0 0
  %5146 = vmatprep.subr.bf16.mxu0 0
  %5147 = vmatpush1.bf16.msra.mxu0 0
  %5148 = vmatprep.subr.bf16.mxu0 0
  %5149 = vmatpush1.bf16.msra.mxu0 0
  %5150 = vmatprep.subr.bf16.mxu0 0
  %5151 = vmatpush1.bf16.msra.mxu0 0
  %5152 = vmatprep.subr.bf16.mxu0 0
  %5153 = vmatpush1.bf16.msra.mxu0 0
  %5154 = vmatprep.subr.bf16.mxu0 0
  %5155 = vmatpush1.bf16.msra.mxu0 0
  %5156 = vmatprep.subr.bf16.mxu0 0
  %5157 = vmatpush1.bf16.msra.mxu0 0
  %5158 = vmatprep.subr.bf16.mxu0 0
  %5159 = vmatpush1.bf16.msra.mxu0 0
  %5160 = vmatprep.subr.bf16.mxu0 0
  %5161 = vmatpush1.bf16.msra.mxu0 0
  %5162 = vmatprep.subr.bf16.mxu0 0
  %5163 = vmatpush1.bf16.msra.mxu0 0
  %5164 = vmatprep.subr.bf16.mxu0 0
  %5165 = vmatpush1.bf16.msra.mxu0 0
  %5166 = vmatprep.subr.bf16.mxu0 0
  %5167 = vmatpush1.bf16.msra.mxu0 0
  %5168 = vmatprep.subr.bf16.mxu0 0
  %5169 = vmatpush1.bf16.msra.mxu0 0
  %5170 = vmatprep.subr.bf16.mxu0 0
  %5171 = vmatpush1.bf16.msra.mxu0 0
  %5172 = vmatprep.mubr.bf16.mxu0 0
  %5173 = vmatmul.mubr.bf16.gmra.mrb[0].mxu0 %v5135
  %v5174 = vpop.f32.mrb[0].mxu0
  %v5175 = vadd.f32 0.0, %v5174
  %v5176 = vpop.f32.mrb[0].mxu0
  %v5177 = vpop.f32.mrb[0].mxu0
  %v5178 = vpop.f32.mrb[0].mxu0
  %5179 = vdwg.mxu0
  %v5181 = vsel %vm460, %v201, 0
  %v5184 = vsel %vm464, %v3803, 0
  %5186 = vmatprep.subr.bf16.mxu0 0
  %5187 = vmatpush1.bf16.msra.mxu0 %v5184
  %5188 = vmatprep.subr.bf16.mxu0 0
  %5189 = vmatpush1.bf16.msra.mxu0 0
  %5190 = vmatprep.subr.bf16.mxu0 0
  %5191 = vmatpush1.bf16.msra.mxu0 0
  %5192 = vmatprep.subr.bf16.mxu0 0
  %5193 = vmatpush1.bf16.msra.mxu0 0
  %5194 = vmatprep.subr.bf16.mxu0 0
  %5195 = vmatpush1.bf16.msra.mxu0 0
  %5196 = vmatprep.subr.bf16.mxu0 0
  %5197 = vmatpush1.bf16.msra.mxu0 0
  %5198 = vmatprep.subr.bf16.mxu0 0
  %5199 = vmatpush1.bf16.msra.mxu0 0
  %5200 = vmatprep.subr.bf16.mxu0 0
  %5201 = vmatpush1.bf16.msra.mxu0 0
  %5202 = vmatprep.subr.bf16.mxu0 0
  %5203 = vmatpush1.bf16.msra.mxu0 0
  %5204 = vmatprep.subr.bf16.mxu0 0
  %5205 = vmatpush1.bf16.msra.mxu0 0
  %5206 = vmatprep.subr.bf16.mxu0 0
  %5207 = vmatpush1.bf16.msra.mxu0 0
  %5208 = vmatprep.subr.bf16.mxu0 0
  %5209 = vmatpush1.bf16.msra.mxu0 0
  %5210 = vmatprep.subr.bf16.mxu0 0
  %5211 = vmatpush1.bf16.msra.mxu0 0
  %5212 = vmatprep.subr.bf16.mxu0 0
  %5213 = vmatpush1.bf16.msra.mxu0 0
  %5214 = vmatprep.subr.bf16.mxu0 0
  %5215 = vmatpush1.bf16.msra.mxu0 0
  %5216 = vmatprep.subr.bf16.mxu0 0
  %5217 = vmatpush1.bf16.msra.mxu0 0
  %5218 = vmatprep.mubr.bf16.mxu0 0
  %5219 = vmatmul.mubr.bf16.gmra.mrb[0].mxu0 %v5181
  %v5220 = vpop.f32.mrb[0].mxu0
  %v5221 = vadd.f32 0.0, %v5220
  %v5222 = vpop.f32.mrb[0].mxu0
  %v5223 = vpop.f32.mrb[0].mxu0
  %v5224 = vpop.f32.mrb[0].mxu0
  %5225 = vdwg.mxu0
  %v5227 = vsel %vm460, %v202, 0
  %v5230 = vsel %vm464, %v3804, 0
  %5232 = vmatprep.subr.bf16.mxu0 0
  %5233 = vmatpush1.bf16.msra.mxu0 %v5230
  %5234 = vmatprep.subr.bf16.mxu0 0
  %5235 = vmatpush1.bf16.msra.mxu0 0
  %5236 = vmatprep.subr.bf16.mxu0 0
  %5237 = vmatpush1.bf16.msra.mxu0 0
  %5238 = vmatprep.subr.bf16.mxu0 0
  %5239 = vmatpush1.bf16.msra.mxu0 0
  %5240 = vmatprep.subr.bf16.mxu0 0
  %5241 = vmatpush1.bf16.msra.mxu0 0
  %5242 = vmatprep.subr.bf16.mxu0 0
  %5243 = vmatpush1.bf16.msra.mxu0 0
  %5244 = vmatprep.subr.bf16.mxu0 0
  %5245 = vmatpush1.bf16.msra.mxu0 0
  %5246 = vmatprep.subr.bf16.mxu0 0
  %5247 = vmatpush1.bf16.msra.mxu0 0
  %5248 = vmatprep.subr.bf16.mxu0 0
  %5249 = vmatpush1.bf16.msra.mxu0 0
  %5250 = vmatprep.subr.bf16.mxu0 0
  %5251 = vmatpush1.bf16.msra.mxu0 0
  %5252 = vmatprep.subr.bf16.mxu0 0
  %5253 = vmatpush1.bf16.msra.mxu0 0
  %5254 = vmatprep.subr.bf16.mxu0 0
  %5255 = vmatpush1.bf16.msra.mxu0 0
  %5256 = vmatprep.subr.bf16.mxu0 0
  %5257 = vmatpush1.bf16.msra.mxu0 0
  %5258 = vmatprep.subr.bf16.mxu0 0
  %5259 = vmatpush1.bf16.msra.mxu0 0
  %5260 = vmatprep.subr.bf16.mxu0 0
  %5261 = vmatpush1.bf16.msra.mxu0 0
  %5262 = vmatprep.subr.bf16.mxu0 0
  %5263 = vmatpush1.bf16.msra.mxu0 0
  %5264 = vmatprep.mubr.bf16.mxu0 0
  %5265 = vmatmul.mubr.bf16.gmra.mrb[0].mxu0 %v5227
  %v5266 = vpop.f32.mrb[0].mxu0
  %v5267 = vadd.f32 0.0, %v5266
  %v5268 = vpop.f32.mrb[0].mxu0
  %v5269 = vpop.f32.mrb[0].mxu0
  %v5270 = vpop.f32.mrb[0].mxu0
  %5271 = vdwg.mxu0
  %v5273 = vsel %vm460, %v203, 0
  %v5276 = vsel %vm464, %v3805, 0
  %5278 = vmatprep.subr.bf16.mxu0 0
  %5279 = vmatpush1.bf16.msra.mxu0 %v5276
  %5280 = vmatprep.subr.bf16.mxu0 0
  %5281 = vmatpush1.bf16.msra.mxu0 0
  %5282 = vmatprep.subr.bf16.mxu0 0
  %5283 = vmatpush1.bf16.msra.mxu0 0
  %5284 = vmatprep.subr.bf16.mxu0 0
  %5285 = vmatpush1.bf16.msra.mxu0 0
  %5286 = vmatprep.subr.bf16.mxu0 0
  %5287 = vmatpush1.bf16.msra.mxu0 0
  %5288 = vmatprep.subr.bf16.mxu0 0
  %5289 = vmatpush1.bf16.msra.mxu0 0
  %5290 = vmatprep.subr.bf16.mxu0 0
  %5291 = vmatpush1.bf16.msra.mxu0 0
  %5292 = vmatprep.subr.bf16.mxu0 0
  %5293 = vmatpush1.bf16.msra.mxu0 0
  %5294 = vmatprep.subr.bf16.mxu0 0
  %5295 = vmatpush1.bf16.msra.mxu0 0
  %5296 = vmatprep.subr.bf16.mxu0 0
  %5297 = vmatpush1.bf16.msra.mxu0 0
  %5298 = vmatprep.subr.bf16.mxu0 0
  %5299 = vmatpush1.bf16.msra.mxu0 0
  %5300 = vmatprep.subr.bf16.mxu0 0
  %5301 = vmatpush1.bf16.msra.mxu0 0
  %5302 = vmatprep.subr.bf16.mxu0 0
  %5303 = vmatpush1.bf16.msra.mxu0 0
  %5304 = vmatprep.subr.bf16.mxu0 0
  %5305 = vmatpush1.bf16.msra.mxu0 0
  %5306 = vmatprep.subr.bf16.mxu0 0
  %5307 = vmatpush1.bf16.msra.mxu0 0
  %5308 = vmatprep.subr.bf16.mxu0 0
  %5309 = vmatpush1.bf16.msra.mxu0 0
  %5310 = vmatprep.mubr.bf16.mxu0 0
  %5311 = vmatmul.mubr.bf16.gmra.mrb[0].mxu0 %v5273
  %v5312 = vpop.f32.mrb[0].mxu0
  %v5313 = vadd.f32 0.0, %v5312
  %v5314 = vpop.f32.mrb[0].mxu0
  %v5315 = vpop.f32.mrb[0].mxu0
  %v5316 = vpop.f32.mrb[0].mxu0
  %5317 = vdwg.mxu0
  %v5319 = vsel %vm460, %v204, 0
  %v5322 = vsel %vm464, %v3806, 0
  %5324 = vmatprep.subr.bf16.mxu0 0
  %5325 = vmatpush1.bf16.msra.mxu0 %v5322
  %5326 = vmatprep.subr.bf16.mxu0 0
  %5327 = vmatpush1.bf16.msra.mxu0 0
  %5328 = vmatprep.subr.bf16.mxu0 0
  %5329 = vmatpush1.bf16.msra.mxu0 0
  %5330 = vmatprep.subr.bf16.mxu0 0
  %5331 = vmatpush1.bf16.msra.mxu0 0
  %5332 = vmatprep.subr.bf16.mxu0 0
  %5333 = vmatpush1.bf16.msra.mxu0 0
  %5334 = vmatprep.subr.bf16.mxu0 0
  %5335 = vmatpush1.bf16.msra.mxu0 0
  %5336 = vmatprep.subr.bf16.mxu0 0
  %5337 = vmatpush1.bf16.msra.mxu0 0
  %5338 = vmatprep.subr.bf16.mxu0 0
  %5339 = vmatpush1.bf16.msra.mxu0 0
  %5340 = vmatprep.subr.bf16.mxu0 0
  %5341 = vmatpush1.bf16.msra.mxu0 0
  %5342 = vmatprep.subr.bf16.mxu0 0
  %5343 = vmatpush1.bf16.msra.mxu0 0
  %5344 = vmatprep.subr.bf16.mxu0 0
  %5345 = vmatpush1.bf16.msra.mxu0 0
  %5346 = vmatprep.subr.bf16.mxu0 0
  %5347 = vmatpush1.bf16.msra.mxu0 0
  %5348 = vmatprep.subr.bf16.mxu0 0
  %5349 = vmatpush1.bf16.msra.mxu0 0
  %5350 = vmatprep.subr.bf16.mxu0 0
  %5351 = vmatpush1.bf16.msra.mxu0 0
  %5352 = vmatprep.subr.bf16.mxu0 0
  %5353 = vmatpush1.bf16.msra.mxu0 0
  %5354 = vmatprep.subr.bf16.mxu0 0
  %5355 = vmatpush1.bf16.msra.mxu0 0
  %5356 = vmatprep.mubr.bf16.mxu0 0
  %5357 = vmatmul.mubr.bf16.gmra.mrb[0].mxu0 %v5319
  %v5358 = vpop.f32.mrb[0].mxu0
  %v5359 = vadd.f32 0.0, %v5358
  %v5360 = vpop.f32.mrb[0].mxu0
  %v5361 = vpop.f32.mrb[0].mxu0
  %v5362 = vpop.f32.mrb[0].mxu0
  %5363 = vdwg.mxu0
  %v5365 = vsel %vm460, %v205, 0
  %v5368 = vsel %vm464, %v3807, 0
  %5370 = vmatprep.subr.bf16.mxu0 0
  %5371 = vmatpush1.bf16.msra.mxu0 %v5368
  %5372 = vmatprep.subr.bf16.mxu0 0
  %5373 = vmatpush1.bf16.msra.mxu0 0
  %5374 = vmatprep.subr.bf16.mxu0 0
  %5375 = vmatpush1.bf16.msra.mxu0 0
  %5376 = vmatprep.subr.bf16.mxu0 0
  %5377 = vmatpush1.bf16.msra.mxu0 0
  %5378 = vmatprep.subr.bf16.mxu0 0
  %5379 = vmatpush1.bf16.msra.mxu0 0
  %5380 = vmatprep.subr.bf16.mxu0 0
  %5381 = vmatpush1.bf16.msra.mxu0 0
  %5382 = vmatprep.subr.bf16.mxu0 0
  %5383 = vmatpush1.bf16.msra.mxu0 0
  %5384 = vmatprep.subr.bf16.mxu0 0
  %5385 = vmatpush1.bf16.msra.mxu0 0
  %5386 = vmatprep.subr.bf16.mxu0 0
  %5387 = vmatpush1.bf16.msra.mxu0 0
  %5388 = vmatprep.subr.bf16.mxu0 0
  %5389 = vmatpush1.bf16.msra.mxu0 0
  %5390 = vmatprep.subr.bf16.mxu0 0
  %5391 = vmatpush1.bf16.msra.mxu0 0
  %5392 = vmatprep.subr.bf16.mxu0 0
  %5393 = vmatpush1.bf16.msra.mxu0 0
  %5394 = vmatprep.subr.bf16.mxu0 0
  %5395 = vmatpush1.bf16.msra.mxu0 0
  %5396 = vmatprep.subr.bf16.mxu0 0
  %5397 = vmatpush1.bf16.msra.mxu0 0
  %5398 = vmatprep.subr.bf16.mxu0 0
  %5399 = vmatpush1.bf16.msra.mxu0 0
  %5400 = vmatprep.subr.bf16.mxu0 0
  %5401 = vmatpush1.bf16.msra.mxu0 0
  %5402 = vmatprep.mubr.bf16.mxu0 0
  %5403 = vmatmul.mubr.bf16.gmra.mrb[0].mxu0 %v5365
  %v5404 = vpop.f32.mrb[0].mxu0
  %v5405 = vadd.f32 0.0, %v5404
  %v5406 = vpop.f32.mrb[0].mxu0
  %v5407 = vpop.f32.mrb[0].mxu0
  %v5408 = vpop.f32.mrb[0].mxu0
  %5409 = vdwg.mxu0
  %v5411 = vsel %vm460, %v206, 0
  %v5414 = vsel %vm464, %v3808, 0
  %5416 = vmatprep.subr.bf16.mxu0 0
  %5417 = vmatpush1.bf16.msra.mxu0 %v5414
  %5418 = vmatprep.subr.bf16.mxu0 0
  %5419 = vmatpush1.bf16.msra.mxu0 0
  %5420 = vmatprep.subr.bf16.mxu0 0
  %5421 = vmatpush1.bf16.msra.mxu0 0
  %5422 = vmatprep.subr.bf16.mxu0 0
  %5423 = vmatpush1.bf16.msra.mxu0 0
  %5424 = vmatprep.subr.bf16.mxu0 0
  %5425 = vmatpush1.bf16.msra.mxu0 0
  %5426 = vmatprep.subr.bf16.mxu0 0
  %5427 = vmatpush1.bf16.msra.mxu0 0
  %5428 = vmatprep.subr.bf16.mxu0 0
  %5429 = vmatpush1.bf16.msra.mxu0 0
  %5430 = vmatprep.subr.bf16.mxu0 0
  %5431 = vmatpush1.bf16.msra.mxu0 0
  %5432 = vmatprep.subr.bf16.mxu0 0
  %5433 = vmatpush1.bf16.msra.mxu0 0
  %5434 = vmatprep.subr.bf16.mxu0 0
  %5435 = vmatpush1.bf16.msra.mxu0 0
  %5436 = vmatprep.subr.bf16.mxu0 0
  %5437 = vmatpush1.bf16.msra.mxu0 0
  %5438 = vmatprep.subr.bf16.mxu0 0
  %5439 = vmatpush1.bf16.msra.mxu0 0
  %5440 = vmatprep.subr.bf16.mxu0 0
  %5441 = vmatpush1.bf16.msra.mxu0 0
  %5442 = vmatprep.subr.bf16.mxu0 0
  %5443 = vmatpush1.bf16.msra.mxu0 0
  %5444 = vmatprep.subr.bf16.mxu0 0
  %5445 = vmatpush1.bf16.msra.mxu0 0
  %5446 = vmatprep.subr.bf16.mxu0 0
  %5447 = vmatpush1.bf16.msra.mxu0 0
  %5448 = vmatprep.mubr.bf16.mxu0 0
  %5449 = vmatmul.mubr.bf16.gmra.mrb[0].mxu0 %v5411
  %v5450 = vpop.f32.mrb[0].mxu0
  %v5451 = vadd.f32 0.0, %v5450
  %v5452 = vpop.f32.mrb[0].mxu0
  %v5453 = vpop.f32.mrb[0].mxu0
  %v5454 = vpop.f32.mrb[0].mxu0
  %5455 = vdwg.mxu0
  %v5457 = vsel %vm460, %v207, 0
  %v5460 = vsel %vm464, %v3809, 0
  %5462 = vmatprep.subr.bf16.mxu0 0
  %5463 = vmatpush1.bf16.msra.mxu0 %v5460
  %5464 = vmatprep.subr.bf16.mxu0 0
  %5465 = vmatpush1.bf16.msra.mxu0 0
  %5466 = vmatprep.subr.bf16.mxu0 0
  %5467 = vmatpush1.bf16.msra.mxu0 0
  %5468 = vmatprep.subr.bf16.mxu0 0
  %5469 = vmatpush1.bf16.msra.mxu0 0
  %5470 = vmatprep.subr.bf16.mxu0 0
  %5471 = vmatpush1.bf16.msra.mxu0 0
  %5472 = vmatprep.subr.bf16.mxu0 0
  %5473 = vmatpush1.bf16.msra.mxu0 0
  %5474 = vmatprep.subr.bf16.mxu0 0
  %5475 = vmatpush1.bf16.msra.mxu0 0
  %5476 = vmatprep.subr.bf16.mxu0 0
  %5477 = vmatpush1.bf16.msra.mxu0 0
  %5478 = vmatprep.subr.bf16.mxu0 0
  %5479 = vmatpush1.bf16.msra.mxu0 0
  %5480 = vmatprep.subr.bf16.mxu0 0
  %5481 = vmatpush1.bf16.msra.mxu0 0
  %5482 = vmatprep.subr.bf16.mxu0 0
  %5483 = vmatpush1.bf16.msra.mxu0 0
  %5484 = vmatprep.subr.bf16.mxu0 0
  %5485 = vmatpush1.bf16.msra.mxu0 0
  %5486 = vmatprep.subr.bf16.mxu0 0
  %5487 = vmatpush1.bf16.msra.mxu0 0
  %5488 = vmatprep.subr.bf16.mxu0 0
  %5489 = vmatpush1.bf16.msra.mxu0 0
  %5490 = vmatprep.subr.bf16.mxu0 0
  %5491 = vmatpush1.bf16.msra.mxu0 0
  %5492 = vmatprep.subr.bf16.mxu0 0
  %5493 = vmatpush1.bf16.msra.mxu0 0
  %5494 = vmatprep.mubr.bf16.mxu0 0
  %5495 = vmatmul.mubr.bf16.gmra.mrb[0].mxu0 %v5457
  %v5496 = vpop.f32.mrb[0].mxu0
  %v5497 = vadd.f32 0.0, %v5496
  %v5498 = vpop.f32.mrb[0].mxu0
  %v5499 = vpop.f32.mrb[0].mxu0
  %v5500 = vpop.f32.mrb[0].mxu0
  %5501 = vdwg.mxu0
  %v5503 = vsel %vm460, %v208, 0
  %v5506 = vsel %vm464, %v3810, 0
  %5508 = vmatprep.subr.bf16.mxu0 0
  %5509 = vmatpush1.bf16.msra.mxu0 %v5506
  %5510 = vmatprep.subr.bf16.mxu0 0
  %5511 = vmatpush1.bf16.msra.mxu0 0
  %5512 = vmatprep.subr.bf16.mxu0 0
  %5513 = vmatpush1.bf16.msra.mxu0 0
  %5514 = vmatprep.subr.bf16.mxu0 0
  %5515 = vmatpush1.bf16.msra.mxu0 0
  %5516 = vmatprep.subr.bf16.mxu0 0
  %5517 = vmatpush1.bf16.msra.mxu0 0
  %5518 = vmatprep.subr.bf16.mxu0 0
  %5519 = vmatpush1.bf16.msra.mxu0 0
  %5520 = vmatprep.subr.bf16.mxu0 0
  %5521 = vmatpush1.bf16.msra.mxu0 0
  %5522 = vmatprep.subr.bf16.mxu0 0
  %5523 = vmatpush1.bf16.msra.mxu0 0
  %5524 = vmatprep.subr.bf16.mxu0 0
  %5525 = vmatpush1.bf16.msra.mxu0 0
  %5526 = vmatprep.subr.bf16.mxu0 0
  %5527 = vmatpush1.bf16.msra.mxu0 0
  %5528 = vmatprep.subr.bf16.mxu0 0
  %5529 = vmatpush1.bf16.msra.mxu0 0
  %5530 = vmatprep.subr.bf16.mxu0 0
  %5531 = vmatpush1.bf16.msra.mxu0 0
  %5532 = vmatprep.subr.bf16.mxu0 0
  %5533 = vmatpush1.bf16.msra.mxu0 0
  %5534 = vmatprep.subr.bf16.mxu0 0
  %5535 = vmatpush1.bf16.msra.mxu0 0
  %5536 = vmatprep.subr.bf16.mxu0 0
  %5537 = vmatpush1.bf16.msra.mxu0 0
  %5538 = vmatprep.subr.bf16.mxu0 0
  %5539 = vmatpush1.bf16.msra.mxu0 0
  %5540 = vmatprep.mubr.bf16.mxu0 0
  %5541 = vmatmul.mubr.bf16.gmra.mrb[0].mxu0 %v5503
  %v5542 = vpop.f32.mrb[0].mxu0
  %v5543 = vadd.f32 0.0, %v5542
  %v5544 = vpop.f32.mrb[0].mxu0
  %v5545 = vpop.f32.mrb[0].mxu0
  %v5546 = vpop.f32.mrb[0].mxu0
  %5547 = vdwg.mxu0
  %v5549 = vsel %vm460, %v209, 0
  %v5552 = vsel %vm464, %v3811, 0
  %5554 = vmatprep.subr.bf16.mxu0 0
  %5555 = vmatpush1.bf16.msra.mxu0 %v5552
  %5556 = vmatprep.subr.bf16.mxu0 0
  %5557 = vmatpush1.bf16.msra.mxu0 0
  %5558 = vmatprep.subr.bf16.mxu0 0
  %5559 = vmatpush1.bf16.msra.mxu0 0
  %5560 = vmatprep.subr.bf16.mxu0 0
  %5561 = vmatpush1.bf16.msra.mxu0 0
  %5562 = vmatprep.subr.bf16.mxu0 0
  %5563 = vmatpush1.bf16.msra.mxu0 0
  %5564 = vmatprep.subr.bf16.mxu0 0
  %5565 = vmatpush1.bf16.msra.mxu0 0
  %5566 = vmatprep.subr.bf16.mxu0 0
  %5567 = vmatpush1.bf16.msra.mxu0 0
  %5568 = vmatprep.subr.bf16.mxu0 0
  %5569 = vmatpush1.bf16.msra.mxu0 0
  %5570 = vmatprep.subr.bf16.mxu0 0
  %5571 = vmatpush1.bf16.msra.mxu0 0
  %5572 = vmatprep.subr.bf16.mxu0 0
  %5573 = vmatpush1.bf16.msra.mxu0 0
  %5574 = vmatprep.subr.bf16.mxu0 0
  %5575 = vmatpush1.bf16.msra.mxu0 0
  %5576 = vmatprep.subr.bf16.mxu0 0
  %5577 = vmatpush1.bf16.msra.mxu0 0
  %5578 = vmatprep.subr.bf16.mxu0 0
  %5579 = vmatpush1.bf16.msra.mxu0 0
  %5580 = vmatprep.subr.bf16.mxu0 0
  %5581 = vmatpush1.bf16.msra.mxu0 0
  %5582 = vmatprep.subr.bf16.mxu0 0
  %5583 = vmatpush1.bf16.msra.mxu0 0
  %5584 = vmatprep.subr.bf16.mxu0 0
  %5585 = vmatpush1.bf16.msra.mxu0 0
  %5586 = vmatprep.mubr.bf16.mxu0 0
  %5587 = vmatmul.mubr.bf16.gmra.mrb[0].mxu0 %v5549
  %v5588 = vpop.f32.mrb[0].mxu0
  %v5589 = vadd.f32 0.0, %v5588
  %v5590 = vpop.f32.mrb[0].mxu0
  %v5591 = vpop.f32.mrb[0].mxu0
  %v5592 = vpop.f32.mrb[0].mxu0
  %5593 = vdwg.mxu0
  %v5595 = vsel %vm460, %v210, 0
  %v5598 = vsel %vm464, %v3812, 0
  %5600 = vmatprep.subr.bf16.mxu0 0
  %5601 = vmatpush1.bf16.msra.mxu0 %v5598
  %5602 = vmatprep.subr.bf16.mxu0 0
  %5603 = vmatpush1.bf16.msra.mxu0 0
  %5604 = vmatprep.subr.bf16.mxu0 0
  %5605 = vmatpush1.bf16.msra.mxu0 0
  %5606 = vmatprep.subr.bf16.mxu0 0
  %5607 = vmatpush1.bf16.msra.mxu0 0
  %5608 = vmatprep.subr.bf16.mxu0 0
  %5609 = vmatpush1.bf16.msra.mxu0 0
  %5610 = vmatprep.subr.bf16.mxu0 0
  %5611 = vmatpush1.bf16.msra.mxu0 0
  %5612 = vmatprep.subr.bf16.mxu0 0
  %5613 = vmatpush1.bf16.msra.mxu0 0
  %5614 = vmatprep.subr.bf16.mxu0 0
  %5615 = vmatpush1.bf16.msra.mxu0 0
  %5616 = vmatprep.subr.bf16.mxu0 0
  %5617 = vmatpush1.bf16.msra.mxu0 0
  %5618 = vmatprep.subr.bf16.mxu0 0
  %5619 = vmatpush1.bf16.msra.mxu0 0
  %5620 = vmatprep.subr.bf16.mxu0 0
  %5621 = vmatpush1.bf16.msra.mxu0 0
  %5622 = vmatprep.subr.bf16.mxu0 0
  %5623 = vmatpush1.bf16.msra.mxu0 0
  %5624 = vmatprep.subr.bf16.mxu0 0
  %5625 = vmatpush1.bf16.msra.mxu0 0
  %5626 = vmatprep.subr.bf16.mxu0 0
  %5627 = vmatpush1.bf16.msra.mxu0 0
  %5628 = vmatprep.subr.bf16.mxu0 0
  %5629 = vmatpush1.bf16.msra.mxu0 0
  %5630 = vmatprep.subr.bf16.mxu0 0
  %5631 = vmatpush1.bf16.msra.mxu0 0
  %5632 = vmatprep.mubr.bf16.mxu0 0
  %5633 = vmatmul.mubr.bf16.gmra.mrb[0].mxu0 %v5595
  %v5634 = vpop.f32.mrb[0].mxu0
  %v5635 = vadd.f32 0.0, %v5634
  %v5636 = vpop.f32.mrb[0].mxu0
  %v5637 = vpop.f32.mrb[0].mxu0
  %v5638 = vpop.f32.mrb[0].mxu0
  %5639 = vdwg.mxu0
  %v5641 = vsel %vm460, %v211, 0
  %v5644 = vsel %vm464, %v3813, 0
  %5646 = vmatprep.subr.bf16.mxu0 0
  %5647 = vmatpush1.bf16.msra.mxu0 %v5644
  %5648 = vmatprep.subr.bf16.mxu0 0
  %5649 = vmatpush1.bf16.msra.mxu0 0
  %5650 = vmatprep.subr.bf16.mxu0 0
  %5651 = vmatpush1.bf16.msra.mxu0 0
  %5652 = vmatprep.subr.bf16.mxu0 0
  %5653 = vmatpush1.bf16.msra.mxu0 0
  %5654 = vmatprep.subr.bf16.mxu0 0
  %5655 = vmatpush1.bf16.msra.mxu0 0
  %5656 = vmatprep.subr.bf16.mxu0 0
  %5657 = vmatpush1.bf16.msra.mxu0 0
  %5658 = vmatprep.subr.bf16.mxu0 0
  %5659 = vmatpush1.bf16.msra.mxu0 0
  %5660 = vmatprep.subr.bf16.mxu0 0
  %5661 = vmatpush1.bf16.msra.mxu0 0
  %5662 = vmatprep.subr.bf16.mxu0 0
  %5663 = vmatpush1.bf16.msra.mxu0 0
  %5664 = vmatprep.subr.bf16.mxu0 0
  %5665 = vmatpush1.bf16.msra.mxu0 0
  %5666 = vmatprep.subr.bf16.mxu0 0
  %5667 = vmatpush1.bf16.msra.mxu0 0
  %5668 = vmatprep.subr.bf16.mxu0 0
  %5669 = vmatpush1.bf16.msra.mxu0 0
  %5670 = vmatprep.subr.bf16.mxu0 0
  %5671 = vmatpush1.bf16.msra.mxu0 0
  %5672 = vmatprep.subr.bf16.mxu0 0
  %5673 = vmatpush1.bf16.msra.mxu0 0
  %5674 = vmatprep.subr.bf16.mxu0 0
  %5675 = vmatpush1.bf16.msra.mxu0 0
  %5676 = vmatprep.subr.bf16.mxu0 0
  %5677 = vmatpush1.bf16.msra.mxu0 0
  %5678 = vmatprep.mubr.bf16.mxu0 0
  %5679 = vmatmul.mubr.bf16.gmra.mrb[0].mxu0 %v5641
  %v5680 = vpop.f32.mrb[0].mxu0
  %v5681 = vadd.f32 0.0, %v5680
  %v5682 = vpop.f32.mrb[0].mxu0
  %v5683 = vpop.f32.mrb[0].mxu0
  %v5684 = vpop.f32.mrb[0].mxu0
  %5685 = vdwg.mxu0
  %v5687 = vsel %vm460, %v212, 0
  %v5690 = vsel %vm464, %v3814, 0
  %5692 = vmatprep.subr.bf16.mxu0 0
  %5693 = vmatpush1.bf16.msra.mxu0 %v5690
  %5694 = vmatprep.subr.bf16.mxu0 0
  %5695 = vmatpush1.bf16.msra.mxu0 0
  %5696 = vmatprep.subr.bf16.mxu0 0
  %5697 = vmatpush1.bf16.msra.mxu0 0
  %5698 = vmatprep.subr.bf16.mxu0 0
  %5699 = vmatpush1.bf16.msra.mxu0 0
  %5700 = vmatprep.subr.bf16.mxu0 0
  %5701 = vmatpush1.bf16.msra.mxu0 0
  %5702 = vmatprep.subr.bf16.mxu0 0
  %5703 = vmatpush1.bf16.msra.mxu0 0
  %5704 = vmatprep.subr.bf16.mxu0 0
  %5705 = vmatpush1.bf16.msra.mxu0 0
  %5706 = vmatprep.subr.bf16.mxu0 0
  %5707 = vmatpush1.bf16.msra.mxu0 0
  %5708 = vmatprep.subr.bf16.mxu0 0
  %5709 = vmatpush1.bf16.msra.mxu0 0
  %5710 = vmatprep.subr.bf16.mxu0 0
  %5711 = vmatpush1.bf16.msra.mxu0 0
  %5712 = vmatprep.subr.bf16.mxu0 0
  %5713 = vmatpush1.bf16.msra.mxu0 0
  %5714 = vmatprep.subr.bf16.mxu0 0
  %5715 = vmatpush1.bf16.msra.mxu0 0
  %5716 = vmatprep.subr.bf16.mxu0 0
  %5717 = vmatpush1.bf16.msra.mxu0 0
  %5718 = vmatprep.subr.bf16.mxu0 0
  %5719 = vmatpush1.bf16.msra.mxu0 0
  %5720 = vmatprep.subr.bf16.mxu0 0
  %5721 = vmatpush1.bf16.msra.mxu0 0
  %5722 = vmatprep.subr.bf16.mxu0 0
  %5723 = vmatpush1.bf16.msra.mxu0 0
  %5724 = vmatprep.mubr.bf16.mxu0 0
  %5725 = vmatmul.mubr.bf16.gmra.mrb[0].mxu0 %v5687
  %v5726 = vpop.f32.mrb[0].mxu0
  %v5727 = vadd.f32 0.0, %v5726
  %v5728 = vpop.f32.mrb[0].mxu0
  %v5729 = vpop.f32.mrb[0].mxu0
  %v5730 = vpop.f32.mrb[0].mxu0
  %5731 = vdwg.mxu0
  %v5733 = vsel %vm460, %v213, 0
  %v5736 = vsel %vm464, %v3815, 0
  %5738 = vmatprep.subr.bf16.mxu0 0
  %5739 = vmatpush1.bf16.msra.mxu0 %v5736
  %5740 = vmatprep.subr.bf16.mxu0 0
  %5741 = vmatpush1.bf16.msra.mxu0 0
  %5742 = vmatprep.subr.bf16.mxu0 0
  %5743 = vmatpush1.bf16.msra.mxu0 0
  %5744 = vmatprep.subr.bf16.mxu0 0
  %5745 = vmatpush1.bf16.msra.mxu0 0
  %5746 = vmatprep.subr.bf16.mxu0 0
  %5747 = vmatpush1.bf16.msra.mxu0 0
  %5748 = vmatprep.subr.bf16.mxu0 0
  %5749 = vmatpush1.bf16.msra.mxu0 0
  %5750 = vmatprep.subr.bf16.mxu0 0
  %5751 = vmatpush1.bf16.msra.mxu0 0
  %5752 = vmatprep.subr.bf16.mxu0 0
  %5753 = vmatpush1.bf16.msra.mxu0 0
  %5754 = vmatprep.subr.bf16.mxu0 0
  %5755 = vmatpush1.bf16.msra.mxu0 0
  %5756 = vmatprep.subr.bf16.mxu0 0
  %5757 = vmatpush1.bf16.msra.mxu0 0
  %5758 = vmatprep.subr.bf16.mxu0 0
  %5759 = vmatpush1.bf16.msra.mxu0 0
  %5760 = vmatprep.subr.bf16.mxu0 0
  %5761 = vmatpush1.bf16.msra.mxu0 0
  %5762 = vmatprep.subr.bf16.mxu0 0
  %5763 = vmatpush1.bf16.msra.mxu0 0
  %5764 = vmatprep.subr.bf16.mxu0 0
  %5765 = vmatpush1.bf16.msra.mxu0 0
  %5766 = vmatprep.subr.bf16.mxu0 0
  %5767 = vmatpush1.bf16.msra.mxu0 0
  %5768 = vmatprep.subr.bf16.mxu0 0
  %5769 = vmatpush1.bf16.msra.mxu0 0
  %5770 = vmatprep.mubr.bf16.mxu0 0
  %5771 = vmatmul.mubr.bf16.gmra.mrb[0].mxu0 %v5733
  %v5772 = vpop.f32.mrb[0].mxu0
  %v5773 = vadd.f32 0.0, %v5772
  %v5774 = vpop.f32.mrb[0].mxu0
  %v5775 = vpop.f32.mrb[0].mxu0
  %v5776 = vpop.f32.mrb[0].mxu0
  %5777 = vdwg.mxu0
  %v5779 = vsel %vm460, %v214, 0
  %v5782 = vsel %vm464, %v3816, 0
  %5784 = vmatprep.subr.bf16.mxu0 0
  %5785 = vmatpush1.bf16.msra.mxu0 %v5782
  %5786 = vmatprep.subr.bf16.mxu0 0
  %5787 = vmatpush1.bf16.msra.mxu0 0
  %5788 = vmatprep.subr.bf16.mxu0 0
  %5789 = vmatpush1.bf16.msra.mxu0 0
  %5790 = vmatprep.subr.bf16.mxu0 0
  %5791 = vmatpush1.bf16.msra.mxu0 0
  %5792 = vmatprep.subr.bf16.mxu0 0
  %5793 = vmatpush1.bf16.msra.mxu0 0
  %5794 = vmatprep.subr.bf16.mxu0 0
  %5795 = vmatpush1.bf16.msra.mxu0 0
  %5796 = vmatprep.subr.bf16.mxu0 0
  %5797 = vmatpush1.bf16.msra.mxu0 0
  %5798 = vmatprep.subr.bf16.mxu0 0
  %5799 = vmatpush1.bf16.msra.mxu0 0
  %5800 = vmatprep.subr.bf16.mxu0 0
  %5801 = vmatpush1.bf16.msra.mxu0 0
  %5802 = vmatprep.subr.bf16.mxu0 0
  %5803 = vmatpush1.bf16.msra.mxu0 0
  %5804 = vmatprep.subr.bf16.mxu0 0
  %5805 = vmatpush1.bf16.msra.mxu0 0
  %5806 = vmatprep.subr.bf16.mxu0 0
  %5807 = vmatpush1.bf16.msra.mxu0 0
  %5808 = vmatprep.subr.bf16.mxu0 0
  %5809 = vmatpush1.bf16.msra.mxu0 0
  %5810 = vmatprep.subr.bf16.mxu0 0
  %5811 = vmatpush1.bf16.msra.mxu0 0
  %5812 = vmatprep.subr.bf16.mxu0 0
  %5813 = vmatpush1.bf16.msra.mxu0 0
  %5814 = vmatprep.subr.bf16.mxu0 0
  %5815 = vmatpush1.bf16.msra.mxu0 0
  %5816 = vmatprep.mubr.bf16.mxu0 0
  %5817 = vmatmul.mubr.bf16.gmra.mrb[0].mxu0 %v5779
  %v5818 = vpop.f32.mrb[0].mxu0
  %v5819 = vadd.f32 0.0, %v5818
  %v5820 = vpop.f32.mrb[0].mxu0
  %v5821 = vpop.f32.mrb[0].mxu0
  %v5822 = vpop.f32.mrb[0].mxu0
  %5823 = vdwg.mxu0
  %v5825 = vsel %vm460, %v215, 0
  %v5828 = vsel %vm464, %v3817, 0
  %5830 = vmatprep.subr.bf16.mxu0 0
  %5831 = vmatpush1.bf16.msra.mxu0 %v5828
  %5832 = vmatprep.subr.bf16.mxu0 0
  %5833 = vmatpush1.bf16.msra.mxu0 0
  %5834 = vmatprep.subr.bf16.mxu0 0
  %5835 = vmatpush1.bf16.msra.mxu0 0
  %5836 = vmatprep.subr.bf16.mxu0 0
  %5837 = vmatpush1.bf16.msra.mxu0 0
  %5838 = vmatprep.subr.bf16.mxu0 0
  %5839 = vmatpush1.bf16.msra.mxu0 0
  %5840 = vmatprep.subr.bf16.mxu0 0
  %5841 = vmatpush1.bf16.msra.mxu0 0
  %5842 = vmatprep.subr.bf16.mxu0 0
  %5843 = vmatpush1.bf16.msra.mxu0 0
  %5844 = vmatprep.subr.bf16.mxu0 0
  %5845 = vmatpush1.bf16.msra.mxu0 0
  %5846 = vmatprep.subr.bf16.mxu0 0
  %5847 = vmatpush1.bf16.msra.mxu0 0
  %5848 = vmatprep.subr.bf16.mxu0 0
  %5849 = vmatpush1.bf16.msra.mxu0 0
  %5850 = vmatprep.subr.bf16.mxu0 0
  %5851 = vmatpush1.bf16.msra.mxu0 0
  %5852 = vmatprep.subr.bf16.mxu0 0
  %5853 = vmatpush1.bf16.msra.mxu0 0
  %5854 = vmatprep.subr.bf16.mxu0 0
  %5855 = vmatpush1.bf16.msra.mxu0 0
  %5856 = vmatprep.subr.bf16.mxu0 0
  %5857 = vmatpush1.bf16.msra.mxu0 0
  %5858 = vmatprep.subr.bf16.mxu0 0
  %5859 = vmatpush1.bf16.msra.mxu0 0
  %5860 = vmatprep.subr.bf16.mxu0 0
  %5861 = vmatpush1.bf16.msra.mxu0 0
  %5862 = vmatprep.mubr.bf16.mxu0 0
  %5863 = vmatmul.mubr.bf16.gmra.mrb[0].mxu0 %v5825
  %v5864 = vpop.f32.mrb[0].mxu0
  %v5865 = vadd.f32 0.0, %v5864
  %v5866 = vpop.f32.mrb[0].mxu0
  %v5867 = vpop.f32.mrb[0].mxu0
  %v5868 = vpop.f32.mrb[0].mxu0
  %5869 = vdwg.mxu0
  %v5871 = vsel %vm460, %v216, 0
  %v5874 = vsel %vm464, %v3818, 0
  %5876 = vmatprep.subr.bf16.mxu0 0
  %5877 = vmatpush1.bf16.msra.mxu0 %v5874
  %5878 = vmatprep.subr.bf16.mxu0 0
  %5879 = vmatpush1.bf16.msra.mxu0 0
  %5880 = vmatprep.subr.bf16.mxu0 0
  %5881 = vmatpush1.bf16.msra.mxu0 0
  %5882 = vmatprep.subr.bf16.mxu0 0
  %5883 = vmatpush1.bf16.msra.mxu0 0
  %5884 = vmatprep.subr.bf16.mxu0 0
  %5885 = vmatpush1.bf16.msra.mxu0 0
  %5886 = vmatprep.subr.bf16.mxu0 0
  %5887 = vmatpush1.bf16.msra.mxu0 0
  %5888 = vmatprep.subr.bf16.mxu0 0
  %5889 = vmatpush1.bf16.msra.mxu0 0
  %5890 = vmatprep.subr.bf16.mxu0 0
  %5891 = vmatpush1.bf16.msra.mxu0 0
  %5892 = vmatprep.subr.bf16.mxu0 0
  %5893 = vmatpush1.bf16.msra.mxu0 0
  %5894 = vmatprep.subr.bf16.mxu0 0
  %5895 = vmatpush1.bf16.msra.mxu0 0
  %5896 = vmatprep.subr.bf16.mxu0 0
  %5897 = vmatpush1.bf16.msra.mxu0 0
  %5898 = vmatprep.subr.bf16.mxu0 0
  %5899 = vmatpush1.bf16.msra.mxu0 0
  %5900 = vmatprep.subr.bf16.mxu0 0
  %5901 = vmatpush1.bf16.msra.mxu0 0
  %5902 = vmatprep.subr.bf16.mxu0 0
  %5903 = vmatpush1.bf16.msra.mxu0 0
  %5904 = vmatprep.subr.bf16.mxu0 0
  %5905 = vmatpush1.bf16.msra.mxu0 0
  %5906 = vmatprep.subr.bf16.mxu0 0
  %5907 = vmatpush1.bf16.msra.mxu0 0
  %5908 = vmatprep.mubr.bf16.mxu0 0
  %5909 = vmatmul.mubr.bf16.gmra.mrb[0].mxu0 %v5871
  %v5910 = vpop.f32.mrb[0].mxu0
  %v5911 = vadd.f32 0.0, %v5910
  %v5912 = vpop.f32.mrb[0].mxu0
  %v5913 = vpop.f32.mrb[0].mxu0
  %v5914 = vpop.f32.mrb[0].mxu0
  %5915 = vdwg.mxu0
  %v5917 = vsel %vm460, %v217, 0
  %v5920 = vsel %vm464, %v3819, 0
  %5922 = vmatprep.subr.bf16.mxu0 0
  %5923 = vmatpush1.bf16.msra.mxu0 %v5920
  %5924 = vmatprep.subr.bf16.mxu0 0
  %5925 = vmatpush1.bf16.msra.mxu0 0
  %5926 = vmatprep.subr.bf16.mxu0 0
  %5927 = vmatpush1.bf16.msra.mxu0 0
  %5928 = vmatprep.subr.bf16.mxu0 0
  %5929 = vmatpush1.bf16.msra.mxu0 0
  %5930 = vmatprep.subr.bf16.mxu0 0
  %5931 = vmatpush1.bf16.msra.mxu0 0
  %5932 = vmatprep.subr.bf16.mxu0 0
  %5933 = vmatpush1.bf16.msra.mxu0 0
  %5934 = vmatprep.subr.bf16.mxu0 0
  %5935 = vmatpush1.bf16.msra.mxu0 0
  %5936 = vmatprep.subr.bf16.mxu0 0
  %5937 = vmatpush1.bf16.msra.mxu0 0
  %5938 = vmatprep.subr.bf16.mxu0 0
  %5939 = vmatpush1.bf16.msra.mxu0 0
  %5940 = vmatprep.subr.bf16.mxu0 0
  %5941 = vmatpush1.bf16.msra.mxu0 0
  %5942 = vmatprep.subr.bf16.mxu0 0
  %5943 = vmatpush1.bf16.msra.mxu0 0
  %5944 = vmatprep.subr.bf16.mxu0 0
  %5945 = vmatpush1.bf16.msra.mxu0 0
  %5946 = vmatprep.subr.bf16.mxu0 0
  %5947 = vmatpush1.bf16.msra.mxu0 0
  %5948 = vmatprep.subr.bf16.mxu0 0
  %5949 = vmatpush1.bf16.msra.mxu0 0
  %5950 = vmatprep.subr.bf16.mxu0 0
  %5951 = vmatpush1.bf16.msra.mxu0 0
  %5952 = vmatprep.subr.bf16.mxu0 0
  %5953 = vmatpush1.bf16.msra.mxu0 0
  %5954 = vmatprep.mubr.bf16.mxu0 0
  %5955 = vmatmul.mubr.bf16.gmra.mrb[0].mxu0 %v5917
  %v5956 = vpop.f32.mrb[0].mxu0
  %v5957 = vadd.f32 0.0, %v5956
  %v5958 = vpop.f32.mrb[0].mxu0
  %v5959 = vpop.f32.mrb[0].mxu0
  %v5960 = vpop.f32.mrb[0].mxu0
  %5961 = vdwg.mxu0
  %v5963 = vsel %vm460, %v218, 0
  %v5966 = vsel %vm464, %v3820, 0
  %5968 = vmatprep.subr.bf16.mxu0 0
  %5969 = vmatpush1.bf16.msra.mxu0 %v5966
  %5970 = vmatprep.subr.bf16.mxu0 0
  %5971 = vmatpush1.bf16.msra.mxu0 0
  %5972 = vmatprep.subr.bf16.mxu0 0
  %5973 = vmatpush1.bf16.msra.mxu0 0
  %5974 = vmatprep.subr.bf16.mxu0 0
  %5975 = vmatpush1.bf16.msra.mxu0 0
  %5976 = vmatprep.subr.bf16.mxu0 0
  %5977 = vmatpush1.bf16.msra.mxu0 0
  %5978 = vmatprep.subr.bf16.mxu0 0
  %5979 = vmatpush1.bf16.msra.mxu0 0
  %5980 = vmatprep.subr.bf16.mxu0 0
  %5981 = vmatpush1.bf16.msra.mxu0 0
  %5982 = vmatprep.subr.bf16.mxu0 0
  %5983 = vmatpush1.bf16.msra.mxu0 0
  %5984 = vmatprep.subr.bf16.mxu0 0
  %5985 = vmatpush1.bf16.msra.mxu0 0
  %5986 = vmatprep.subr.bf16.mxu0 0
  %5987 = vmatpush1.bf16.msra.mxu0 0
  %5988 = vmatprep.subr.bf16.mxu0 0
  %5989 = vmatpush1.bf16.msra.mxu0 0
  %5990 = vmatprep.subr.bf16.mxu0 0
  %5991 = vmatpush1.bf16.msra.mxu0 0
  %5992 = vmatprep.subr.bf16.mxu0 0
  %5993 = vmatpush1.bf16.msra.mxu0 0
  %5994 = vmatprep.subr.bf16.mxu0 0
  %5995 = vmatpush1.bf16.msra.mxu0 0
  %5996 = vmatprep.subr.bf16.mxu0 0
  %5997 = vmatpush1.bf16.msra.mxu0 0
  %5998 = vmatprep.subr.bf16.mxu0 0
  %5999 = vmatpush1.bf16.msra.mxu0 0
  %6000 = vmatprep.mubr.bf16.mxu0 0
  %6001 = vmatmul.mubr.bf16.gmra.mrb[0].mxu0 %v5963
  %v6002 = vpop.f32.mrb[0].mxu0
  %v6003 = vadd.f32 0.0, %v6002
  %v6004 = vpop.f32.mrb[0].mxu0
  %v6005 = vpop.f32.mrb[0].mxu0
  %v6006 = vpop.f32.mrb[0].mxu0
  %6007 = vdwg.mxu0
  %v6009 = vsel %vm460, %v219, 0
  %v6012 = vsel %vm464, %v3821, 0
  %6014 = vmatprep.subr.bf16.mxu0 0
  %6015 = vmatpush1.bf16.msra.mxu0 %v6012
  %6016 = vmatprep.subr.bf16.mxu0 0
  %6017 = vmatpush1.bf16.msra.mxu0 0
  %6018 = vmatprep.subr.bf16.mxu0 0
  %6019 = vmatpush1.bf16.msra.mxu0 0
  %6020 = vmatprep.subr.bf16.mxu0 0
  %6021 = vmatpush1.bf16.msra.mxu0 0
  %6022 = vmatprep.subr.bf16.mxu0 0
  %6023 = vmatpush1.bf16.msra.mxu0 0
  %6024 = vmatprep.subr.bf16.mxu0 0
  %6025 = vmatpush1.bf16.msra.mxu0 0
  %6026 = vmatprep.subr.bf16.mxu0 0
  %6027 = vmatpush1.bf16.msra.mxu0 0
  %6028 = vmatprep.subr.bf16.mxu0 0
  %6029 = vmatpush1.bf16.msra.mxu0 0
  %6030 = vmatprep.subr.bf16.mxu0 0
  %6031 = vmatpush1.bf16.msra.mxu0 0
  %6032 = vmatprep.subr.bf16.mxu0 0
  %6033 = vmatpush1.bf16.msra.mxu0 0
  %6034 = vmatprep.subr.bf16.mxu0 0
  %6035 = vmatpush1.bf16.msra.mxu0 0
  %6036 = vmatprep.subr.bf16.mxu0 0
  %6037 = vmatpush1.bf16.msra.mxu0 0
  %6038 = vmatprep.subr.bf16.mxu0 0
  %6039 = vmatpush1.bf16.msra.mxu0 0
  %6040 = vmatprep.subr.bf16.mxu0 0
  %6041 = vmatpush1.bf16.msra.mxu0 0
  %6042 = vmatprep.subr.bf16.mxu0 0
  %6043 = vmatpush1.bf16.msra.mxu0 0
  %6044 = vmatprep.subr.bf16.mxu0 0
  %6045 = vmatpush1.bf16.msra.mxu0 0
  %6046 = vmatprep.mubr.bf16.mxu0 0
  %6047 = vmatmul.mubr.bf16.gmra.mrb[0].mxu0 %v6009
  %v6048 = vpop.f32.mrb[0].mxu0
  %v6049 = vadd.f32 0.0, %v6048
  %v6050 = vpop.f32.mrb[0].mxu0
  %v6051 = vpop.f32.mrb[0].mxu0
  %v6052 = vpop.f32.mrb[0].mxu0
  %6053 = vdwg.mxu0
  %v6055 = vsel %vm460, %v220, 0
  %v6058 = vsel %vm464, %v3822, 0
  %6060 = vmatprep.subr.bf16.mxu0 0
  %6061 = vmatpush1.bf16.msra.mxu0 %v6058
  %6062 = vmatprep.subr.bf16.mxu0 0
  %6063 = vmatpush1.bf16.msra.mxu0 0
  %6064 = vmatprep.subr.bf16.mxu0 0
  %6065 = vmatpush1.bf16.msra.mxu0 0
  %6066 = vmatprep.subr.bf16.mxu0 0
  %6067 = vmatpush1.bf16.msra.mxu0 0
  %6068 = vmatprep.subr.bf16.mxu0 0
  %6069 = vmatpush1.bf16.msra.mxu0 0
  %6070 = vmatprep.subr.bf16.mxu0 0
  %6071 = vmatpush1.bf16.msra.mxu0 0
  %6072 = vmatprep.subr.bf16.mxu0 0
  %6073 = vmatpush1.bf16.msra.mxu0 0
  %6074 = vmatprep.subr.bf16.mxu0 0
  %6075 = vmatpush1.bf16.msra.mxu0 0
  %6076 = vmatprep.subr.bf16.mxu0 0
  %6077 = vmatpush1.bf16.msra.mxu0 0
  %6078 = vmatprep.subr.bf16.mxu0 0
  %6079 = vmatpush1.bf16.msra.mxu0 0
  %6080 = vmatprep.subr.bf16.mxu0 0
  %6081 = vmatpush1.bf16.msra.mxu0 0
  %6082 = vmatprep.subr.bf16.mxu0 0
  %6083 = vmatpush1.bf16.msra.mxu0 0
  %6084 = vmatprep.subr.bf16.mxu0 0
  %6085 = vmatpush1.bf16.msra.mxu0 0
  %6086 = vmatprep.subr.bf16.mxu0 0
  %6087 = vmatpush1.bf16.msra.mxu0 0
  %6088 = vmatprep.subr.bf16.mxu0 0
  %6089 = vmatpush1.bf16.msra.mxu0 0
  %6090 = vmatprep.subr.bf16.mxu0 0
  %6091 = vmatpush1.bf16.msra.mxu0 0
  %6092 = vmatprep.mubr.bf16.mxu0 0
  %6093 = vmatmul.mubr.bf16.gmra.mrb[0].mxu0 %v6055
  %v6094 = vpop.f32.mrb[0].mxu0
  %v6095 = vadd.f32 0.0, %v6094
  %v6096 = vpop.f32.mrb[0].mxu0
  %v6097 = vpop.f32.mrb[0].mxu0
  %v6098 = vpop.f32.mrb[0].mxu0
  %6099 = vdwg.mxu0
  %v6101 = vsel %vm460, %v221, 0
  %v6104 = vsel %vm464, %v3823, 0
  %6106 = vmatprep.subr.bf16.mxu0 0
  %6107 = vmatpush1.bf16.msra.mxu0 %v6104
  %6108 = vmatprep.subr.bf16.mxu0 0
  %6109 = vmatpush1.bf16.msra.mxu0 0
  %6110 = vmatprep.subr.bf16.mxu0 0
  %6111 = vmatpush1.bf16.msra.mxu0 0
  %6112 = vmatprep.subr.bf16.mxu0 0
  %6113 = vmatpush1.bf16.msra.mxu0 0
  %6114 = vmatprep.subr.bf16.mxu0 0
  %6115 = vmatpush1.bf16.msra.mxu0 0
  %6116 = vmatprep.subr.bf16.mxu0 0
  %6117 = vmatpush1.bf16.msra.mxu0 0
  %6118 = vmatprep.subr.bf16.mxu0 0
  %6119 = vmatpush1.bf16.msra.mxu0 0
  %6120 = vmatprep.subr.bf16.mxu0 0
  %6121 = vmatpush1.bf16.msra.mxu0 0
  %6122 = vmatprep.subr.bf16.mxu0 0
  %6123 = vmatpush1.bf16.msra.mxu0 0
  %6124 = vmatprep.subr.bf16.mxu0 0
  %6125 = vmatpush1.bf16.msra.mxu0 0
  %6126 = vmatprep.subr.bf16.mxu0 0
  %6127 = vmatpush1.bf16.msra.mxu0 0
  %6128 = vmatprep.subr.bf16.mxu0 0
  %6129 = vmatpush1.bf16.msra.mxu0 0
  %6130 = vmatprep.subr.bf16.mxu0 0
  %6131 = vmatpush1.bf16.msra.mxu0 0
  %6132 = vmatprep.subr.bf16.mxu0 0
  %6133 = vmatpush1.bf16.msra.mxu0 0
  %6134 = vmatprep.subr.bf16.mxu0 0
  %6135 = vmatpush1.bf16.msra.mxu0 0
  %6136 = vmatprep.subr.bf16.mxu0 0
  %6137 = vmatpush1.bf16.msra.mxu0 0
  %6138 = vmatprep.mubr.bf16.mxu0 0
  %6139 = vmatmul.mubr.bf16.gmra.mrb[0].mxu0 %v6101
  %v6140 = vpop.f32.mrb[0].mxu0
  %v6141 = vadd.f32 0.0, %v6140
  %v6142 = vpop.f32.mrb[0].mxu0
  %v6143 = vpop.f32.mrb[0].mxu0
  %v6144 = vpop.f32.mrb[0].mxu0
  %6145 = vdwg.mxu0
  %v6147 = vsel %vm460, %v222, 0
  %v6150 = vsel %vm464, %v3824, 0
  %6152 = vmatprep.subr.bf16.mxu0 0
  %6153 = vmatpush1.bf16.msra.mxu0 %v6150
  %6154 = vmatprep.subr.bf16.mxu0 0
  %6155 = vmatpush1.bf16.msra.mxu0 0
  %6156 = vmatprep.subr.bf16.mxu0 0
  %6157 = vmatpush1.bf16.msra.mxu0 0
  %6158 = vmatprep.subr.bf16.mxu0 0
  %6159 = vmatpush1.bf16.msra.mxu0 0
  %6160 = vmatprep.subr.bf16.mxu0 0
  %6161 = vmatpush1.bf16.msra.mxu0 0
  %6162 = vmatprep.subr.bf16.mxu0 0
  %6163 = vmatpush1.bf16.msra.mxu0 0
  %6164 = vmatprep.subr.bf16.mxu0 0
  %6165 = vmatpush1.bf16.msra.mxu0 0
  %6166 = vmatprep.subr.bf16.mxu0 0
  %6167 = vmatpush1.bf16.msra.mxu0 0
  %6168 = vmatprep.subr.bf16.mxu0 0
  %6169 = vmatpush1.bf16.msra.mxu0 0
  %6170 = vmatprep.subr.bf16.mxu0 0
  %6171 = vmatpush1.bf16.msra.mxu0 0
  %6172 = vmatprep.subr.bf16.mxu0 0
  %6173 = vmatpush1.bf16.msra.mxu0 0
  %6174 = vmatprep.subr.bf16.mxu0 0
  %6175 = vmatpush1.bf16.msra.mxu0 0
  %6176 = vmatprep.subr.bf16.mxu0 0
  %6177 = vmatpush1.bf16.msra.mxu0 0
  %6178 = vmatprep.subr.bf16.mxu0 0
  %6179 = vmatpush1.bf16.msra.mxu0 0
  %6180 = vmatprep.subr.bf16.mxu0 0
  %6181 = vmatpush1.bf16.msra.mxu0 0
  %6182 = vmatprep.subr.bf16.mxu0 0
  %6183 = vmatpush1.bf16.msra.mxu0 0
  %6184 = vmatprep.mubr.bf16.mxu0 0
  %6185 = vmatmul.mubr.bf16.gmra.mrb[0].mxu0 %v6147
  %v6186 = vpop.f32.mrb[0].mxu0
  %v6187 = vadd.f32 0.0, %v6186
  %v6188 = vpop.f32.mrb[0].mxu0
  %v6189 = vpop.f32.mrb[0].mxu0
  %v6190 = vpop.f32.mrb[0].mxu0
  %6191 = vdwg.mxu0
  %v6193 = vsel %vm460, %v223, 0
  %v6196 = vsel %vm464, %v3825, 0
  %6198 = vmatprep.subr.bf16.mxu0 0
  %6199 = vmatpush1.bf16.msra.mxu0 %v6196
  %6200 = vmatprep.subr.bf16.mxu0 0
  %6201 = vmatpush1.bf16.msra.mxu0 0
  %6202 = vmatprep.subr.bf16.mxu0 0
  %6203 = vmatpush1.bf16.msra.mxu0 0
  %6204 = vmatprep.subr.bf16.mxu0 0
  %6205 = vmatpush1.bf16.msra.mxu0 0
  %6206 = vmatprep.subr.bf16.mxu0 0
  %6207 = vmatpush1.bf16.msra.mxu0 0
  %6208 = vmatprep.subr.bf16.mxu0 0
  %6209 = vmatpush1.bf16.msra.mxu0 0
  %6210 = vmatprep.subr.bf16.mxu0 0
  %6211 = vmatpush1.bf16.msra.mxu0 0
  %6212 = vmatprep.subr.bf16.mxu0 0
  %6213 = vmatpush1.bf16.msra.mxu0 0
  %6214 = vmatprep.subr.bf16.mxu0 0
  %6215 = vmatpush1.bf16.msra.mxu0 0
  %6216 = vmatprep.subr.bf16.mxu0 0
  %6217 = vmatpush1.bf16.msra.mxu0 0
  %6218 = vmatprep.subr.bf16.mxu0 0
  %6219 = vmatpush1.bf16.msra.mxu0 0
  %6220 = vmatprep.subr.bf16.mxu0 0
  %6221 = vmatpush1.bf16.msra.mxu0 0
  %6222 = vmatprep.subr.bf16.mxu0 0
  %6223 = vmatpush1.bf16.msra.mxu0 0
  %6224 = vmatprep.subr.bf16.mxu0 0
  %6225 = vmatpush1.bf16.msra.mxu0 0
  %6226 = vmatprep.subr.bf16.mxu0 0
  %6227 = vmatpush1.bf16.msra.mxu0 0
  %6228 = vmatprep.subr.bf16.mxu0 0
  %6229 = vmatpush1.bf16.msra.mxu0 0
  %6230 = vmatprep.mubr.bf16.mxu0 0
  %6231 = vmatmul.mubr.bf16.gmra.mrb[0].mxu0 %v6193
  %v6232 = vpop.f32.mrb[0].mxu0
  %v6233 = vadd.f32 0.0, %v6232
  %v6234 = vpop.f32.mrb[0].mxu0
  %v6235 = vpop.f32.mrb[0].mxu0
  %v6236 = vpop.f32.mrb[0].mxu0
  %6237 = vdwg.mxu0
  %v6239 = vsel %vm460, %v224, 0
  %v6242 = vsel %vm464, %v3826, 0
  %6244 = vmatprep.subr.bf16.mxu0 0
  %6245 = vmatpush1.bf16.msra.mxu0 %v6242
  %6246 = vmatprep.subr.bf16.mxu0 0
  %6247 = vmatpush1.bf16.msra.mxu0 0
  %6248 = vmatprep.subr.bf16.mxu0 0
  %6249 = vmatpush1.bf16.msra.mxu0 0
  %6250 = vmatprep.subr.bf16.mxu0 0
  %6251 = vmatpush1.bf16.msra.mxu0 0
  %6252 = vmatprep.subr.bf16.mxu0 0
  %6253 = vmatpush1.bf16.msra.mxu0 0
  %6254 = vmatprep.subr.bf16.mxu0 0
  %6255 = vmatpush1.bf16.msra.mxu0 0
  %6256 = vmatprep.subr.bf16.mxu0 0
  %6257 = vmatpush1.bf16.msra.mxu0 0
  %6258 = vmatprep.subr.bf16.mxu0 0
  %6259 = vmatpush1.bf16.msra.mxu0 0
  %6260 = vmatprep.subr.bf16.mxu0 0
  %6261 = vmatpush1.bf16.msra.mxu0 0
  %6262 = vmatprep.subr.bf16.mxu0 0
  %6263 = vmatpush1.bf16.msra.mxu0 0
  %6264 = vmatprep.subr.bf16.mxu0 0
  %6265 = vmatpush1.bf16.msra.mxu0 0
  %6266 = vmatprep.subr.bf16.mxu0 0
  %6267 = vmatpush1.bf16.msra.mxu0 0
  %6268 = vmatprep.subr.bf16.mxu0 0
  %6269 = vmatpush1.bf16.msra.mxu0 0
  %6270 = vmatprep.subr.bf16.mxu0 0
  %6271 = vmatpush1.bf16.msra.mxu0 0
  %6272 = vmatprep.subr.bf16.mxu0 0
  %6273 = vmatpush1.bf16.msra.mxu0 0
  %6274 = vmatprep.subr.bf16.mxu0 0
  %6275 = vmatpush1.bf16.msra.mxu0 0
  %6276 = vmatprep.mubr.bf16.mxu0 0
  %6277 = vmatmul.mubr.bf16.gmra.mrb[0].mxu0 %v6239
  %v6278 = vpop.f32.mrb[0].mxu0
  %v6279 = vadd.f32 0.0, %v6278
  %v6280 = vpop.f32.mrb[0].mxu0
  %v6281 = vpop.f32.mrb[0].mxu0
  %v6282 = vpop.f32.mrb[0].mxu0
  %6283 = vdwg.mxu0
  %v6285 = vsel %vm460, %v225, 0
  %v6288 = vsel %vm464, %v3827, 0
  %6290 = vmatprep.subr.bf16.mxu0 0
  %6291 = vmatpush1.bf16.msra.mxu0 %v6288
  %6292 = vmatprep.subr.bf16.mxu0 0
  %6293 = vmatpush1.bf16.msra.mxu0 0
  %6294 = vmatprep.subr.bf16.mxu0 0
  %6295 = vmatpush1.bf16.msra.mxu0 0
  %6296 = vmatprep.subr.bf16.mxu0 0
  %6297 = vmatpush1.bf16.msra.mxu0 0
  %6298 = vmatprep.subr.bf16.mxu0 0
  %6299 = vmatpush1.bf16.msra.mxu0 0
  %6300 = vmatprep.subr.bf16.mxu0 0
  %6301 = vmatpush1.bf16.msra.mxu0 0
  %6302 = vmatprep.subr.bf16.mxu0 0
  %6303 = vmatpush1.bf16.msra.mxu0 0
  %6304 = vmatprep.subr.bf16.mxu0 0
  %6305 = vmatpush1.bf16.msra.mxu0 0
  %6306 = vmatprep.subr.bf16.mxu0 0
  %6307 = vmatpush1.bf16.msra.mxu0 0
  %6308 = vmatprep.subr.bf16.mxu0 0
  %6309 = vmatpush1.bf16.msra.mxu0 0
  %6310 = vmatprep.subr.bf16.mxu0 0
  %6311 = vmatpush1.bf16.msra.mxu0 0
  %6312 = vmatprep.subr.bf16.mxu0 0
  %6313 = vmatpush1.bf16.msra.mxu0 0
  %6314 = vmatprep.subr.bf16.mxu0 0
  %6315 = vmatpush1.bf16.msra.mxu0 0
  %6316 = vmatprep.subr.bf16.mxu0 0
  %6317 = vmatpush1.bf16.msra.mxu0 0
  %6318 = vmatprep.subr.bf16.mxu0 0
  %6319 = vmatpush1.bf16.msra.mxu0 0
  %6320 = vmatprep.subr.bf16.mxu0 0
  %6321 = vmatpush1.bf16.msra.mxu0 0
  %6322 = vmatprep.mubr.bf16.mxu0 0
  %6323 = vmatmul.mubr.bf16.gmra.mrb[0].mxu0 %v6285
  %v6324 = vpop.f32.mrb[0].mxu0
  %v6325 = vadd.f32 0.0, %v6324
  %v6326 = vpop.f32.mrb[0].mxu0
  %v6327 = vpop.f32.mrb[0].mxu0
  %v6328 = vpop.f32.mrb[0].mxu0
  %6329 = vdwg.mxu0
  %v6331 = vsel %vm460, %v226, 0
  %v6334 = vsel %vm464, %v3828, 0
  %6336 = vmatprep.subr.bf16.mxu0 0
  %6337 = vmatpush1.bf16.msra.mxu0 %v6334
  %6338 = vmatprep.subr.bf16.mxu0 0
  %6339 = vmatpush1.bf16.msra.mxu0 0
  %6340 = vmatprep.subr.bf16.mxu0 0
  %6341 = vmatpush1.bf16.msra.mxu0 0
  %6342 = vmatprep.subr.bf16.mxu0 0
  %6343 = vmatpush1.bf16.msra.mxu0 0
  %6344 = vmatprep.subr.bf16.mxu0 0
  %6345 = vmatpush1.bf16.msra.mxu0 0
  %6346 = vmatprep.subr.bf16.mxu0 0
  %6347 = vmatpush1.bf16.msra.mxu0 0
  %6348 = vmatprep.subr.bf16.mxu0 0
  %6349 = vmatpush1.bf16.msra.mxu0 0
  %6350 = vmatprep.subr.bf16.mxu0 0
  %6351 = vmatpush1.bf16.msra.mxu0 0
  %6352 = vmatprep.subr.bf16.mxu0 0
  %6353 = vmatpush1.bf16.msra.mxu0 0
  %6354 = vmatprep.subr.bf16.mxu0 0
  %6355 = vmatpush1.bf16.msra.mxu0 0
  %6356 = vmatprep.subr.bf16.mxu0 0
  %6357 = vmatpush1.bf16.msra.mxu0 0
  %6358 = vmatprep.subr.bf16.mxu0 0
  %6359 = vmatpush1.bf16.msra.mxu0 0
  %6360 = vmatprep.subr.bf16.mxu0 0
  %6361 = vmatpush1.bf16.msra.mxu0 0
  %6362 = vmatprep.subr.bf16.mxu0 0
  %6363 = vmatpush1.bf16.msra.mxu0 0
  %6364 = vmatprep.subr.bf16.mxu0 0
  %6365 = vmatpush1.bf16.msra.mxu0 0
  %6366 = vmatprep.subr.bf16.mxu0 0
  %6367 = vmatpush1.bf16.msra.mxu0 0
  %6368 = vmatprep.mubr.bf16.mxu0 0
  %6369 = vmatmul.mubr.bf16.gmra.mrb[0].mxu0 %v6331
  %v6370 = vpop.f32.mrb[0].mxu0
  %v6371 = vadd.f32 0.0, %v6370
  %v6372 = vpop.f32.mrb[0].mxu0
  %v6373 = vpop.f32.mrb[0].mxu0
  %v6374 = vpop.f32.mrb[0].mxu0
  %6375 = vdwg.mxu0
  %v6377 = vsel %vm460, %v227, 0
  %v6380 = vsel %vm464, %v3829, 0
  %6382 = vmatprep.subr.bf16.mxu0 0
  %6383 = vmatpush1.bf16.msra.mxu0 %v6380
  %6384 = vmatprep.subr.bf16.mxu0 0
  %6385 = vmatpush1.bf16.msra.mxu0 0
  %6386 = vmatprep.subr.bf16.mxu0 0
  %6387 = vmatpush1.bf16.msra.mxu0 0
  %6388 = vmatprep.subr.bf16.mxu0 0
  %6389 = vmatpush1.bf16.msra.mxu0 0
  %6390 = vmatprep.subr.bf16.mxu0 0
  %6391 = vmatpush1.bf16.msra.mxu0 0
  %6392 = vmatprep.subr.bf16.mxu0 0
  %6393 = vmatpush1.bf16.msra.mxu0 0
  %6394 = vmatprep.subr.bf16.mxu0 0
  %6395 = vmatpush1.bf16.msra.mxu0 0
  %6396 = vmatprep.subr.bf16.mxu0 0
  %6397 = vmatpush1.bf16.msra.mxu0 0
  %6398 = vmatprep.subr.bf16.mxu0 0
  %6399 = vmatpush1.bf16.msra.mxu0 0
  %6400 = vmatprep.subr.bf16.mxu0 0
  %6401 = vmatpush1.bf16.msra.mxu0 0
  %6402 = vmatprep.subr.bf16.mxu0 0
  %6403 = vmatpush1.bf16.msra.mxu0 0
  %6404 = vmatprep.subr.bf16.mxu0 0
  %6405 = vmatpush1.bf16.msra.mxu0 0
  %6406 = vmatprep.subr.bf16.mxu0 0
  %6407 = vmatpush1.bf16.msra.mxu0 0
  %6408 = vmatprep.subr.bf16.mxu0 0
  %6409 = vmatpush1.bf16.msra.mxu0 0
  %6410 = vmatprep.subr.bf16.mxu0 0
  %6411 = vmatpush1.bf16.msra.mxu0 0
  %6412 = vmatprep.subr.bf16.mxu0 0
  %6413 = vmatpush1.bf16.msra.mxu0 0
  %6414 = vmatprep.mubr.bf16.mxu0 0
  %6415 = vmatmul.mubr.bf16.gmra.mrb[0].mxu0 %v6377
  %v6416 = vpop.f32.mrb[0].mxu0
  %v6417 = vadd.f32 0.0, %v6416
  %v6418 = vpop.f32.mrb[0].mxu0
  %v6419 = vpop.f32.mrb[0].mxu0
  %v6420 = vpop.f32.mrb[0].mxu0
  %6421 = vdwg.mxu0
  %v6423 = vsel %vm460, %v228, 0
  %v6426 = vsel %vm464, %v3830, 0
  %6428 = vmatprep.subr.bf16.mxu0 0
  %6429 = vmatpush1.bf16.msra.mxu0 %v6426
  %6430 = vmatprep.subr.bf16.mxu0 0
  %6431 = vmatpush1.bf16.msra.mxu0 0
  %6432 = vmatprep.subr.bf16.mxu0 0
  %6433 = vmatpush1.bf16.msra.mxu0 0
  %6434 = vmatprep.subr.bf16.mxu0 0
  %6435 = vmatpush1.bf16.msra.mxu0 0
  %6436 = vmatprep.subr.bf16.mxu0 0
  %6437 = vmatpush1.bf16.msra.mxu0 0
  %6438 = vmatprep.subr.bf16.mxu0 0
  %6439 = vmatpush1.bf16.msra.mxu0 0
  %6440 = vmatprep.subr.bf16.mxu0 0
  %6441 = vmatpush1.bf16.msra.mxu0 0
  %6442 = vmatprep.subr.bf16.mxu0 0
  %6443 = vmatpush1.bf16.msra.mxu0 0
  %6444 = vmatprep.subr.bf16.mxu0 0
  %6445 = vmatpush1.bf16.msra.mxu0 0
  %6446 = vmatprep.subr.bf16.mxu0 0
  %6447 = vmatpush1.bf16.msra.mxu0 0
  %6448 = vmatprep.subr.bf16.mxu0 0
  %6449 = vmatpush1.bf16.msra.mxu0 0
  %6450 = vmatprep.subr.bf16.mxu0 0
  %6451 = vmatpush1.bf16.msra.mxu0 0
  %6452 = vmatprep.subr.bf16.mxu0 0
  %6453 = vmatpush1.bf16.msra.mxu0 0
  %6454 = vmatprep.subr.bf16.mxu0 0
  %6455 = vmatpush1.bf16.msra.mxu0 0
  %6456 = vmatprep.subr.bf16.mxu0 0
  %6457 = vmatpush1.bf16.msra.mxu0 0
  %6458 = vmatprep.subr.bf16.mxu0 0
  %6459 = vmatpush1.bf16.msra.mxu0 0
  %6460 = vmatprep.mubr.bf16.mxu0 0
  %6461 = vmatmul.mubr.bf16.gmra.mrb[0].mxu0 %v6423
  %v6462 = vpop.f32.mrb[0].mxu0
  %v6463 = vadd.f32 0.0, %v6462
  %v6464 = vpop.f32.mrb[0].mxu0
  %v6465 = vpop.f32.mrb[0].mxu0
  %v6466 = vpop.f32.mrb[0].mxu0
  %6467 = vdwg.mxu0
  %v6469 = vsel %vm460, %v229, 0
  %v6472 = vsel %vm464, %v3831, 0
  %6474 = vmatprep.subr.bf16.mxu0 0
  %6475 = vmatpush1.bf16.msra.mxu0 %v6472
  %6476 = vmatprep.subr.bf16.mxu0 0
  %6477 = vmatpush1.bf16.msra.mxu0 0
  %6478 = vmatprep.subr.bf16.mxu0 0
  %6479 = vmatpush1.bf16.msra.mxu0 0
  %6480 = vmatprep.subr.bf16.mxu0 0
  %6481 = vmatpush1.bf16.msra.mxu0 0
  %6482 = vmatprep.subr.bf16.mxu0 0
  %6483 = vmatpush1.bf16.msra.mxu0 0
  %6484 = vmatprep.subr.bf16.mxu0 0
  %6485 = vmatpush1.bf16.msra.mxu0 0
  %6486 = vmatprep.subr.bf16.mxu0 0
  %6487 = vmatpush1.bf16.msra.mxu0 0
  %6488 = vmatprep.subr.bf16.mxu0 0
  %6489 = vmatpush1.bf16.msra.mxu0 0
  %6490 = vmatprep.subr.bf16.mxu0 0
  %6491 = vmatpush1.bf16.msra.mxu0 0
  %6492 = vmatprep.subr.bf16.mxu0 0
  %6493 = vmatpush1.bf16.msra.mxu0 0
  %6494 = vmatprep.subr.bf16.mxu0 0
  %6495 = vmatpush1.bf16.msra.mxu0 0
  %6496 = vmatprep.subr.bf16.mxu0 0
  %6497 = vmatpush1.bf16.msra.mxu0 0
  %6498 = vmatprep.subr.bf16.mxu0 0
  %6499 = vmatpush1.bf16.msra.mxu0 0
  %6500 = vmatprep.subr.bf16.mxu0 0
  %6501 = vmatpush1.bf16.msra.mxu0 0
  %6502 = vmatprep.subr.bf16.mxu0 0
  %6503 = vmatpush1.bf16.msra.mxu0 0
  %6504 = vmatprep.subr.bf16.mxu0 0
  %6505 = vmatpush1.bf16.msra.mxu0 0
  %6506 = vmatprep.mubr.bf16.mxu0 0
  %6507 = vmatmul.mubr.bf16.gmra.mrb[0].mxu0 %v6469
  %v6508 = vpop.f32.mrb[0].mxu0
  %v6509 = vadd.f32 0.0, %v6508
  %v6510 = vpop.f32.mrb[0].mxu0
  %v6511 = vpop.f32.mrb[0].mxu0
  %v6512 = vpop.f32.mrb[0].mxu0
  %6513 = vdwg.mxu0
  %v6515 = vsel %vm460, %v230, 0
  %v6518 = vsel %vm464, %v3832, 0
  %6520 = vmatprep.subr.bf16.mxu0 0
  %6521 = vmatpush1.bf16.msra.mxu0 %v6518
  %6522 = vmatprep.subr.bf16.mxu0 0
  %6523 = vmatpush1.bf16.msra.mxu0 0
  %6524 = vmatprep.subr.bf16.mxu0 0
  %6525 = vmatpush1.bf16.msra.mxu0 0
  %6526 = vmatprep.subr.bf16.mxu0 0
  %6527 = vmatpush1.bf16.msra.mxu0 0
  %6528 = vmatprep.subr.bf16.mxu0 0
  %6529 = vmatpush1.bf16.msra.mxu0 0
  %6530 = vmatprep.subr.bf16.mxu0 0
  %6531 = vmatpush1.bf16.msra.mxu0 0
  %6532 = vmatprep.subr.bf16.mxu0 0
  %6533 = vmatpush1.bf16.msra.mxu0 0
  %6534 = vmatprep.subr.bf16.mxu0 0
  %6535 = vmatpush1.bf16.msra.mxu0 0
  %6536 = vmatprep.subr.bf16.mxu0 0
  %6537 = vmatpush1.bf16.msra.mxu0 0
  %6538 = vmatprep.subr.bf16.mxu0 0
  %6539 = vmatpush1.bf16.msra.mxu0 0
  %6540 = vmatprep.subr.bf16.mxu0 0
  %6541 = vmatpush1.bf16.msra.mxu0 0
  %6542 = vmatprep.subr.bf16.mxu0 0
  %6543 = vmatpush1.bf16.msra.mxu0 0
  %6544 = vmatprep.subr.bf16.mxu0 0
  %6545 = vmatpush1.bf16.msra.mxu0 0
  %6546 = vmatprep.subr.bf16.mxu0 0
  %6547 = vmatpush1.bf16.msra.mxu0 0
  %6548 = vmatprep.subr.bf16.mxu0 0
  %6549 = vmatpush1.bf16.msra.mxu0 0
  %6550 = vmatprep.subr.bf16.mxu0 0
  %6551 = vmatpush1.bf16.msra.mxu0 0
  %6552 = vmatprep.mubr.bf16.mxu0 0
  %6553 = vmatmul.mubr.bf16.gmra.mrb[0].mxu0 %v6515
  %v6554 = vpop.f32.mrb[0].mxu0
  %v6555 = vadd.f32 0.0, %v6554
  %v6556 = vpop.f32.mrb[0].mxu0
  %v6557 = vpop.f32.mrb[0].mxu0
  %v6558 = vpop.f32.mrb[0].mxu0
  %6559 = vdwg.mxu0
  %v6561 = vsel %vm460, %v231, 0
  %v6564 = vsel %vm464, %v3833, 0
  %6566 = vmatprep.subr.bf16.mxu0 0
  %6567 = vmatpush1.bf16.msra.mxu0 %v6564
  %6568 = vmatprep.subr.bf16.mxu0 0
  %6569 = vmatpush1.bf16.msra.mxu0 0
  %6570 = vmatprep.subr.bf16.mxu0 0
  %6571 = vmatpush1.bf16.msra.mxu0 0
  %6572 = vmatprep.subr.bf16.mxu0 0
  %6573 = vmatpush1.bf16.msra.mxu0 0
  %6574 = vmatprep.subr.bf16.mxu0 0
  %6575 = vmatpush1.bf16.msra.mxu0 0
  %6576 = vmatprep.subr.bf16.mxu0 0
  %6577 = vmatpush1.bf16.msra.mxu0 0
  %6578 = vmatprep.subr.bf16.mxu0 0
  %6579 = vmatpush1.bf16.msra.mxu0 0
  %6580 = vmatprep.subr.bf16.mxu0 0
  %6581 = vmatpush1.bf16.msra.mxu0 0
  %6582 = vmatprep.subr.bf16.mxu0 0
  %6583 = vmatpush1.bf16.msra.mxu0 0
  %6584 = vmatprep.subr.bf16.mxu0 0
  %6585 = vmatpush1.bf16.msra.mxu0 0
  %6586 = vmatprep.subr.bf16.mxu0 0
  %6587 = vmatpush1.bf16.msra.mxu0 0
  %6588 = vmatprep.subr.bf16.mxu0 0
  %6589 = vmatpush1.bf16.msra.mxu0 0
  %6590 = vmatprep.subr.bf16.mxu0 0
  %6591 = vmatpush1.bf16.msra.mxu0 0
  %6592 = vmatprep.subr.bf16.mxu0 0
  %6593 = vmatpush1.bf16.msra.mxu0 0
  %6594 = vmatprep.subr.bf16.mxu0 0
  %6595 = vmatpush1.bf16.msra.mxu0 0
  %6596 = vmatprep.subr.bf16.mxu0 0
  %6597 = vmatpush1.bf16.msra.mxu0 0
  %6598 = vmatprep.mubr.bf16.mxu0 0
  %6599 = vmatmul.mubr.bf16.gmra.mrb[0].mxu0 %v6561
  %v6600 = vpop.f32.mrb[0].mxu0
  %v6601 = vadd.f32 0.0, %v6600
  %v6602 = vpop.f32.mrb[0].mxu0
  %v6603 = vpop.f32.mrb[0].mxu0
  %v6604 = vpop.f32.mrb[0].mxu0
  %6605 = vdwg.mxu0
  %v6607 = vsel %vm460, %v232, 0
  %v6610 = vsel %vm464, %v3834, 0
  %6612 = vmatprep.subr.bf16.mxu0 0
  %6613 = vmatpush1.bf16.msra.mxu0 %v6610
  %6614 = vmatprep.subr.bf16.mxu0 0
  %6615 = vmatpush1.bf16.msra.mxu0 0
  %6616 = vmatprep.subr.bf16.mxu0 0
  %6617 = vmatpush1.bf16.msra.mxu0 0
  %6618 = vmatprep.subr.bf16.mxu0 0
  %6619 = vmatpush1.bf16.msra.mxu0 0
  %6620 = vmatprep.subr.bf16.mxu0 0
  %6621 = vmatpush1.bf16.msra.mxu0 0
  %6622 = vmatprep.subr.bf16.mxu0 0
  %6623 = vmatpush1.bf16.msra.mxu0 0
  %6624 = vmatprep.subr.bf16.mxu0 0
  %6625 = vmatpush1.bf16.msra.mxu0 0
  %6626 = vmatprep.subr.bf16.mxu0 0
  %6627 = vmatpush1.bf16.msra.mxu0 0
  %6628 = vmatprep.subr.bf16.mxu0 0
  %6629 = vmatpush1.bf16.msra.mxu0 0
  %6630 = vmatprep.subr.bf16.mxu0 0
  %6631 = vmatpush1.bf16.msra.mxu0 0
  %6632 = vmatprep.subr.bf16.mxu0 0
  %6633 = vmatpush1.bf16.msra.mxu0 0
  %6634 = vmatprep.subr.bf16.mxu0 0
  %6635 = vmatpush1.bf16.msra.mxu0 0
  %6636 = vmatprep.subr.bf16.mxu0 0
  %6637 = vmatpush1.bf16.msra.mxu0 0
  %6638 = vmatprep.subr.bf16.mxu0 0
  %6639 = vmatpush1.bf16.msra.mxu0 0
  %6640 = vmatprep.subr.bf16.mxu0 0
  %6641 = vmatpush1.bf16.msra.mxu0 0
  %6642 = vmatprep.subr.bf16.mxu0 0
  %6643 = vmatpush1.bf16.msra.mxu0 0
  %6644 = vmatprep.mubr.bf16.mxu0 0
  %6645 = vmatmul.mubr.bf16.gmra.mrb[0].mxu0 %v6607
  %v6646 = vpop.f32.mrb[0].mxu0
  %v6647 = vadd.f32 0.0, %v6646
  %v6648 = vpop.f32.mrb[0].mxu0
  %v6649 = vpop.f32.mrb[0].mxu0
  %v6650 = vpop.f32.mrb[0].mxu0
  %6651 = vdwg.mxu0
  %v6653 = vsel %vm460, %v233, 0
  %v6656 = vsel %vm464, %v3835, 0
  %6658 = vmatprep.subr.bf16.mxu0 0
  %6659 = vmatpush1.bf16.msra.mxu0 %v6656
  %6660 = vmatprep.subr.bf16.mxu0 0
  %6661 = vmatpush1.bf16.msra.mxu0 0
  %6662 = vmatprep.subr.bf16.mxu0 0
  %6663 = vmatpush1.bf16.msra.mxu0 0
  %6664 = vmatprep.subr.bf16.mxu0 0
  %6665 = vmatpush1.bf16.msra.mxu0 0
  %6666 = vmatprep.subr.bf16.mxu0 0
  %6667 = vmatpush1.bf16.msra.mxu0 0
  %6668 = vmatprep.subr.bf16.mxu0 0
  %6669 = vmatpush1.bf16.msra.mxu0 0
  %6670 = vmatprep.subr.bf16.mxu0 0
  %6671 = vmatpush1.bf16.msra.mxu0 0
  %6672 = vmatprep.subr.bf16.mxu0 0
  %6673 = vmatpush1.bf16.msra.mxu0 0
  %6674 = vmatprep.subr.bf16.mxu0 0
  %6675 = vmatpush1.bf16.msra.mxu0 0
  %6676 = vmatprep.subr.bf16.mxu0 0
  %6677 = vmatpush1.bf16.msra.mxu0 0
  %6678 = vmatprep.subr.bf16.mxu0 0
  %6679 = vmatpush1.bf16.msra.mxu0 0
  %6680 = vmatprep.subr.bf16.mxu0 0
  %6681 = vmatpush1.bf16.msra.mxu0 0
  %6682 = vmatprep.subr.bf16.mxu0 0
  %6683 = vmatpush1.bf16.msra.mxu0 0
  %6684 = vmatprep.subr.bf16.mxu0 0
  %6685 = vmatpush1.bf16.msra.mxu0 0
  %6686 = vmatprep.subr.bf16.mxu0 0
  %6687 = vmatpush1.bf16.msra.mxu0 0
  %6688 = vmatprep.subr.bf16.mxu0 0
  %6689 = vmatpush1.bf16.msra.mxu0 0
  %6690 = vmatprep.mubr.bf16.mxu0 0
  %6691 = vmatmul.mubr.bf16.gmra.mrb[0].mxu0 %v6653
  %v6692 = vpop.f32.mrb[0].mxu0
  %v6693 = vadd.f32 0.0, %v6692
  %v6694 = vpop.f32.mrb[0].mxu0
  %v6695 = vpop.f32.mrb[0].mxu0
  %v6696 = vpop.f32.mrb[0].mxu0
  %6697 = vdwg.mxu0
  %v6699 = vsel %vm460, %v234, 0
  %v6702 = vsel %vm464, %v3836, 0
  %6704 = vmatprep.subr.bf16.mxu0 0
  %6705 = vmatpush1.bf16.msra.mxu0 %v6702
  %6706 = vmatprep.subr.bf16.mxu0 0
  %6707 = vmatpush1.bf16.msra.mxu0 0
  %6708 = vmatprep.subr.bf16.mxu0 0
  %6709 = vmatpush1.bf16.msra.mxu0 0
  %6710 = vmatprep.subr.bf16.mxu0 0
  %6711 = vmatpush1.bf16.msra.mxu0 0
  %6712 = vmatprep.subr.bf16.mxu0 0
  %6713 = vmatpush1.bf16.msra.mxu0 0
  %6714 = vmatprep.subr.bf16.mxu0 0
  %6715 = vmatpush1.bf16.msra.mxu0 0
  %6716 = vmatprep.subr.bf16.mxu0 0
  %6717 = vmatpush1.bf16.msra.mxu0 0
  %6718 = vmatprep.subr.bf16.mxu0 0
  %6719 = vmatpush1.bf16.msra.mxu0 0
  %6720 = vmatprep.subr.bf16.mxu0 0
  %6721 = vmatpush1.bf16.msra.mxu0 0
  %6722 = vmatprep.subr.bf16.mxu0 0
  %6723 = vmatpush1.bf16.msra.mxu0 0
  %6724 = vmatprep.subr.bf16.mxu0 0
  %6725 = vmatpush1.bf16.msra.mxu0 0
  %6726 = vmatprep.subr.bf16.mxu0 0
  %6727 = vmatpush1.bf16.msra.mxu0 0
  %6728 = vmatprep.subr.bf16.mxu0 0
  %6729 = vmatpush1.bf16.msra.mxu0 0
  %6730 = vmatprep.subr.bf16.mxu0 0
  %6731 = vmatpush1.bf16.msra.mxu0 0
  %6732 = vmatprep.subr.bf16.mxu0 0
  %6733 = vmatpush1.bf16.msra.mxu0 0
  %6734 = vmatprep.subr.bf16.mxu0 0
  %6735 = vmatpush1.bf16.msra.mxu0 0
  %6736 = vmatprep.mubr.bf16.mxu0 0
  %6737 = vmatmul.mubr.bf16.gmra.mrb[0].mxu0 %v6699
  %v6738 = vpop.f32.mrb[0].mxu0
  %v6739 = vadd.f32 0.0, %v6738
  %v6740 = vpop.f32.mrb[0].mxu0
  %v6741 = vpop.f32.mrb[0].mxu0
  %v6742 = vpop.f32.mrb[0].mxu0
  %6743 = vdwg.mxu0
  %v6745 = vsel %vm460, %v235, 0
  %v6748 = vsel %vm464, %v3837, 0
  %6750 = vmatprep.subr.bf16.mxu0 0
  %6751 = vmatpush1.bf16.msra.mxu0 %v6748
  %6752 = vmatprep.subr.bf16.mxu0 0
  %6753 = vmatpush1.bf16.msra.mxu0 0
  %6754 = vmatprep.subr.bf16.mxu0 0
  %6755 = vmatpush1.bf16.msra.mxu0 0
  %6756 = vmatprep.subr.bf16.mxu0 0
  %6757 = vmatpush1.bf16.msra.mxu0 0
  %6758 = vmatprep.subr.bf16.mxu0 0
  %6759 = vmatpush1.bf16.msra.mxu0 0
  %6760 = vmatprep.subr.bf16.mxu0 0
  %6761 = vmatpush1.bf16.msra.mxu0 0
  %6762 = vmatprep.subr.bf16.mxu0 0
  %6763 = vmatpush1.bf16.msra.mxu0 0
  %6764 = vmatprep.subr.bf16.mxu0 0
  %6765 = vmatpush1.bf16.msra.mxu0 0
  %6766 = vmatprep.subr.bf16.mxu0 0
  %6767 = vmatpush1.bf16.msra.mxu0 0
  %6768 = vmatprep.subr.bf16.mxu0 0
  %6769 = vmatpush1.bf16.msra.mxu0 0
  %6770 = vmatprep.subr.bf16.mxu0 0
  %6771 = vmatpush1.bf16.msra.mxu0 0
  %6772 = vmatprep.subr.bf16.mxu0 0
  %6773 = vmatpush1.bf16.msra.mxu0 0
  %6774 = vmatprep.subr.bf16.mxu0 0
  %6775 = vmatpush1.bf16.msra.mxu0 0
  %6776 = vmatprep.subr.bf16.mxu0 0
  %6777 = vmatpush1.bf16.msra.mxu0 0
  %6778 = vmatprep.subr.bf16.mxu0 0
  %6779 = vmatpush1.bf16.msra.mxu0 0
  %6780 = vmatprep.subr.bf16.mxu0 0
  %6781 = vmatpush1.bf16.msra.mxu0 0
  %6782 = vmatprep.mubr.bf16.mxu0 0
  %6783 = vmatmul.mubr.bf16.gmra.mrb[0].mxu0 %v6745
  %v6784 = vpop.f32.mrb[0].mxu0
  %v6785 = vadd.f32 0.0, %v6784
  %v6786 = vpop.f32.mrb[0].mxu0
  %v6787 = vpop.f32.mrb[0].mxu0
  %v6788 = vpop.f32.mrb[0].mxu0
  %6789 = vdwg.mxu0
  %v6791 = vsel %vm460, %v236, 0
  %v6794 = vsel %vm464, %v3838, 0
  %6796 = vmatprep.subr.bf16.mxu0 0
  %6797 = vmatpush1.bf16.msra.mxu0 %v6794
  %6798 = vmatprep.subr.bf16.mxu0 0
  %6799 = vmatpush1.bf16.msra.mxu0 0
  %6800 = vmatprep.subr.bf16.mxu0 0
  %6801 = vmatpush1.bf16.msra.mxu0 0
  %6802 = vmatprep.subr.bf16.mxu0 0
  %6803 = vmatpush1.bf16.msra.mxu0 0
  %6804 = vmatprep.subr.bf16.mxu0 0
  %6805 = vmatpush1.bf16.msra.mxu0 0
  %6806 = vmatprep.subr.bf16.mxu0 0
  %6807 = vmatpush1.bf16.msra.mxu0 0
  %6808 = vmatprep.subr.bf16.mxu0 0
  %6809 = vmatpush1.bf16.msra.mxu0 0
  %6810 = vmatprep.subr.bf16.mxu0 0
  %6811 = vmatpush1.bf16.msra.mxu0 0
  %6812 = vmatprep.subr.bf16.mxu0 0
  %6813 = vmatpush1.bf16.msra.mxu0 0
  %6814 = vmatprep.subr.bf16.mxu0 0
  %6815 = vmatpush1.bf16.msra.mxu0 0
  %6816 = vmatprep.subr.bf16.mxu0 0
  %6817 = vmatpush1.bf16.msra.mxu0 0
  %6818 = vmatprep.subr.bf16.mxu0 0
  %6819 = vmatpush1.bf16.msra.mxu0 0
  %6820 = vmatprep.subr.bf16.mxu0 0
  %6821 = vmatpush1.bf16.msra.mxu0 0
  %6822 = vmatprep.subr.bf16.mxu0 0
  %6823 = vmatpush1.bf16.msra.mxu0 0
  %6824 = vmatprep.subr.bf16.mxu0 0
  %6825 = vmatpush1.bf16.msra.mxu0 0
  %6826 = vmatprep.subr.bf16.mxu0 0
  %6827 = vmatpush1.bf16.msra.mxu0 0
  %6828 = vmatprep.mubr.bf16.mxu0 0
  %6829 = vmatmul.mubr.bf16.gmra.mrb[0].mxu0 %v6791
  %v6830 = vpop.f32.mrb[0].mxu0
  %v6831 = vadd.f32 0.0, %v6830
  %v6832 = vpop.f32.mrb[0].mxu0
  %v6833 = vpop.f32.mrb[0].mxu0
  %v6834 = vpop.f32.mrb[0].mxu0
  %6835 = vdwg.mxu0
  %v6837 = vsel %vm460, %v237, 0
  %v6840 = vsel %vm464, %v3839, 0
  %6842 = vmatprep.subr.bf16.mxu0 0
  %6843 = vmatpush1.bf16.msra.mxu0 %v6840
  %6844 = vmatprep.subr.bf16.mxu0 0
  %6845 = vmatpush1.bf16.msra.mxu0 0
  %6846 = vmatprep.subr.bf16.mxu0 0
  %6847 = vmatpush1.bf16.msra.mxu0 0
  %6848 = vmatprep.subr.bf16.mxu0 0
  %6849 = vmatpush1.bf16.msra.mxu0 0
  %6850 = vmatprep.subr.bf16.mxu0 0
  %6851 = vmatpush1.bf16.msra.mxu0 0
  %6852 = vmatprep.subr.bf16.mxu0 0
  %6853 = vmatpush1.bf16.msra.mxu0 0
  %6854 = vmatprep.subr.bf16.mxu0 0
  %6855 = vmatpush1.bf16.msra.mxu0 0
  %6856 = vmatprep.subr.bf16.mxu0 0
  %6857 = vmatpush1.bf16.msra.mxu0 0
  %6858 = vmatprep.subr.bf16.mxu0 0
  %6859 = vmatpush1.bf16.msra.mxu0 0
  %6860 = vmatprep.subr.bf16.mxu0 0
  %6861 = vmatpush1.bf16.msra.mxu0 0
  %6862 = vmatprep.subr.bf16.mxu0 0
  %6863 = vmatpush1.bf16.msra.mxu0 0
  %6864 = vmatprep.subr.bf16.mxu0 0
  %6865 = vmatpush1.bf16.msra.mxu0 0
  %6866 = vmatprep.subr.bf16.mxu0 0
  %6867 = vmatpush1.bf16.msra.mxu0 0
  %6868 = vmatprep.subr.bf16.mxu0 0
  %6869 = vmatpush1.bf16.msra.mxu0 0
  %6870 = vmatprep.subr.bf16.mxu0 0
  %6871 = vmatpush1.bf16.msra.mxu0 0
  %6872 = vmatprep.subr.bf16.mxu0 0
  %6873 = vmatpush1.bf16.msra.mxu0 0
  %6874 = vmatprep.mubr.bf16.mxu0 0
  %6875 = vmatmul.mubr.bf16.gmra.mrb[0].mxu0 %v6837
  %v6876 = vpop.f32.mrb[0].mxu0
  %v6877 = vadd.f32 0.0, %v6876
  %v6878 = vpop.f32.mrb[0].mxu0
  %v6879 = vpop.f32.mrb[0].mxu0
  %v6880 = vpop.f32.mrb[0].mxu0
  %6881 = vdwg.mxu0
  %v6883 = vsel %vm460, %v238, 0
  %v6886 = vsel %vm464, %v3840, 0
  %6888 = vmatprep.subr.bf16.mxu0 0
  %6889 = vmatpush1.bf16.msra.mxu0 %v6886
  %6890 = vmatprep.subr.bf16.mxu0 0
  %6891 = vmatpush1.bf16.msra.mxu0 0
  %6892 = vmatprep.subr.bf16.mxu0 0
  %6893 = vmatpush1.bf16.msra.mxu0 0
  %6894 = vmatprep.subr.bf16.mxu0 0
  %6895 = vmatpush1.bf16.msra.mxu0 0
  %6896 = vmatprep.subr.bf16.mxu0 0
  %6897 = vmatpush1.bf16.msra.mxu0 0
  %6898 = vmatprep.subr.bf16.mxu0 0
  %6899 = vmatpush1.bf16.msra.mxu0 0
  %6900 = vmatprep.subr.bf16.mxu0 0
  %6901 = vmatpush1.bf16.msra.mxu0 0
  %6902 = vmatprep.subr.bf16.mxu0 0
  %6903 = vmatpush1.bf16.msra.mxu0 0
  %6904 = vmatprep.subr.bf16.mxu0 0
  %6905 = vmatpush1.bf16.msra.mxu0 0
  %6906 = vmatprep.subr.bf16.mxu0 0
  %6907 = vmatpush1.bf16.msra.mxu0 0
  %6908 = vmatprep.subr.bf16.mxu0 0
  %6909 = vmatpush1.bf16.msra.mxu0 0
  %6910 = vmatprep.subr.bf16.mxu0 0
  %6911 = vmatpush1.bf16.msra.mxu0 0
  %6912 = vmatprep.subr.bf16.mxu0 0
  %6913 = vmatpush1.bf16.msra.mxu0 0
  %6914 = vmatprep.subr.bf16.mxu0 0
  %6915 = vmatpush1.bf16.msra.mxu0 0
  %6916 = vmatprep.subr.bf16.mxu0 0
  %6917 = vmatpush1.bf16.msra.mxu0 0
  %6918 = vmatprep.subr.bf16.mxu0 0
  %6919 = vmatpush1.bf16.msra.mxu0 0
  %6920 = vmatprep.mubr.bf16.mxu0 0
  %6921 = vmatmul.mubr.bf16.gmra.mrb[0].mxu0 %v6883
  %v6922 = vpop.f32.mrb[0].mxu0
  %v6923 = vadd.f32 0.0, %v6922
  %v6924 = vpop.f32.mrb[0].mxu0
  %v6925 = vpop.f32.mrb[0].mxu0
  %v6926 = vpop.f32.mrb[0].mxu0
  %6927 = vdwg.mxu0
  %v6929 = vsel %vm460, %v239, 0
  %v6932 = vsel %vm464, %v3841, 0
  %6934 = vmatprep.subr.bf16.mxu0 0
  %6935 = vmatpush1.bf16.msra.mxu0 %v6932
  %6936 = vmatprep.subr.bf16.mxu0 0
  %6937 = vmatpush1.bf16.msra.mxu0 0
  %6938 = vmatprep.subr.bf16.mxu0 0
  %6939 = vmatpush1.bf16.msra.mxu0 0
  %6940 = vmatprep.subr.bf16.mxu0 0
  %6941 = vmatpush1.bf16.msra.mxu0 0
  %6942 = vmatprep.subr.bf16.mxu0 0
  %6943 = vmatpush1.bf16.msra.mxu0 0
  %6944 = vmatprep.subr.bf16.mxu0 0
  %6945 = vmatpush1.bf16.msra.mxu0 0
  %6946 = vmatprep.subr.bf16.mxu0 0
  %6947 = vmatpush1.bf16.msra.mxu0 0
  %6948 = vmatprep.subr.bf16.mxu0 0
  %6949 = vmatpush1.bf16.msra.mxu0 0
  %6950 = vmatprep.subr.bf16.mxu0 0
  %6951 = vmatpush1.bf16.msra.mxu0 0
  %6952 = vmatprep.subr.bf16.mxu0 0
  %6953 = vmatpush1.bf16.msra.mxu0 0
  %6954 = vmatprep.subr.bf16.mxu0 0
  %6955 = vmatpush1.bf16.msra.mxu0 0
  %6956 = vmatprep.subr.bf16.mxu0 0
  %6957 = vmatpush1.bf16.msra.mxu0 0
  %6958 = vmatprep.subr.bf16.mxu0 0
  %6959 = vmatpush1.bf16.msra.mxu0 0
  %6960 = vmatprep.subr.bf16.mxu0 0
  %6961 = vmatpush1.bf16.msra.mxu0 0
  %6962 = vmatprep.subr.bf16.mxu0 0
  %6963 = vmatpush1.bf16.msra.mxu0 0
  %6964 = vmatprep.subr.bf16.mxu0 0
  %6965 = vmatpush1.bf16.msra.mxu0 0
  %6966 = vmatprep.mubr.bf16.mxu0 0
  %6967 = vmatmul.mubr.bf16.gmra.mrb[0].mxu0 %v6929
  %v6968 = vpop.f32.mrb[0].mxu0
  %v6969 = vadd.f32 0.0, %v6968
  %v6970 = vpop.f32.mrb[0].mxu0
  %v6971 = vpop.f32.mrb[0].mxu0
  %v6972 = vpop.f32.mrb[0].mxu0
  %6973 = vdwg.mxu0
  %v6975 = vsel %vm460, %v240, 0
  %v6978 = vsel %vm464, %v3842, 0
  %6980 = vmatprep.subr.bf16.mxu0 0
  %6981 = vmatpush1.bf16.msra.mxu0 %v6978
  %6982 = vmatprep.subr.bf16.mxu0 0
  %6983 = vmatpush1.bf16.msra.mxu0 0
  %6984 = vmatprep.subr.bf16.mxu0 0
  %6985 = vmatpush1.bf16.msra.mxu0 0
  %6986 = vmatprep.subr.bf16.mxu0 0
  %6987 = vmatpush1.bf16.msra.mxu0 0
  %6988 = vmatprep.subr.bf16.mxu0 0
  %6989 = vmatpush1.bf16.msra.mxu0 0
  %6990 = vmatprep.subr.bf16.mxu0 0
  %6991 = vmatpush1.bf16.msra.mxu0 0
  %6992 = vmatprep.subr.bf16.mxu0 0
  %6993 = vmatpush1.bf16.msra.mxu0 0
  %6994 = vmatprep.subr.bf16.mxu0 0
  %6995 = vmatpush1.bf16.msra.mxu0 0
  %6996 = vmatprep.subr.bf16.mxu0 0
  %6997 = vmatpush1.bf16.msra.mxu0 0
  %6998 = vmatprep.subr.bf16.mxu0 0
  %6999 = vmatpush1.bf16.msra.mxu0 0
  %7000 = vmatprep.subr.bf16.mxu0 0
  %7001 = vmatpush1.bf16.msra.mxu0 0
  %7002 = vmatprep.subr.bf16.mxu0 0
  %7003 = vmatpush1.bf16.msra.mxu0 0
  %7004 = vmatprep.subr.bf16.mxu0 0
  %7005 = vmatpush1.bf16.msra.mxu0 0
  %7006 = vmatprep.subr.bf16.mxu0 0
  %7007 = vmatpush1.bf16.msra.mxu0 0
  %7008 = vmatprep.subr.bf16.mxu0 0
  %7009 = vmatpush1.bf16.msra.mxu0 0
  %7010 = vmatprep.subr.bf16.mxu0 0
  %7011 = vmatpush1.bf16.msra.mxu0 0
  %7012 = vmatprep.mubr.bf16.mxu0 0
  %7013 = vmatmul.mubr.bf16.gmra.mrb[0].mxu0 %v6975
  %v7014 = vpop.f32.mrb[0].mxu0
  %v7015 = vadd.f32 0.0, %v7014
  %v7016 = vpop.f32.mrb[0].mxu0
  %v7017 = vpop.f32.mrb[0].mxu0
  %v7018 = vpop.f32.mrb[0].mxu0
  %7019 = vdwg.mxu0
  %v7021 = vsel %vm460, %v241, 0
  %v7024 = vsel %vm464, %v3843, 0
  %7026 = vmatprep.subr.bf16.mxu0 0
  %7027 = vmatpush1.bf16.msra.mxu0 %v7024
  %7028 = vmatprep.subr.bf16.mxu0 0
  %7029 = vmatpush1.bf16.msra.mxu0 0
  %7030 = vmatprep.subr.bf16.mxu0 0
  %7031 = vmatpush1.bf16.msra.mxu0 0
  %7032 = vmatprep.subr.bf16.mxu0 0
  %7033 = vmatpush1.bf16.msra.mxu0 0
  %7034 = vmatprep.subr.bf16.mxu0 0
  %7035 = vmatpush1.bf16.msra.mxu0 0
  %7036 = vmatprep.subr.bf16.mxu0 0
  %7037 = vmatpush1.bf16.msra.mxu0 0
  %7038 = vmatprep.subr.bf16.mxu0 0
  %7039 = vmatpush1.bf16.msra.mxu0 0
  %7040 = vmatprep.subr.bf16.mxu0 0
  %7041 = vmatpush1.bf16.msra.mxu0 0
  %7042 = vmatprep.subr.bf16.mxu0 0
  %7043 = vmatpush1.bf16.msra.mxu0 0
  %7044 = vmatprep.subr.bf16.mxu0 0
  %7045 = vmatpush1.bf16.msra.mxu0 0
  %7046 = vmatprep.subr.bf16.mxu0 0
  %7047 = vmatpush1.bf16.msra.mxu0 0
  %7048 = vmatprep.subr.bf16.mxu0 0
  %7049 = vmatpush1.bf16.msra.mxu0 0
  %7050 = vmatprep.subr.bf16.mxu0 0
  %7051 = vmatpush1.bf16.msra.mxu0 0
  %7052 = vmatprep.subr.bf16.mxu0 0
  %7053 = vmatpush1.bf16.msra.mxu0 0
  %7054 = vmatprep.subr.bf16.mxu0 0
  %7055 = vmatpush1.bf16.msra.mxu0 0
  %7056 = vmatprep.subr.bf16.mxu0 0
  %7057 = vmatpush1.bf16.msra.mxu0 0
  %7058 = vmatprep.mubr.bf16.mxu0 0
  %7059 = vmatmul.mubr.bf16.gmra.mrb[0].mxu0 %v7021
  %v7060 = vpop.f32.mrb[0].mxu0
  %v7061 = vadd.f32 0.0, %v7060
  %v7062 = vpop.f32.mrb[0].mxu0
  %v7063 = vpop.f32.mrb[0].mxu0
  %v7064 = vpop.f32.mrb[0].mxu0
  %7065 = vdwg.mxu0
  %v7067 = vsel %vm460, %v242, 0
  %v7070 = vsel %vm464, %v3844, 0
  %7072 = vmatprep.subr.bf16.mxu0 0
  %7073 = vmatpush1.bf16.msra.mxu0 %v7070
  %7074 = vmatprep.subr.bf16.mxu0 0
  %7075 = vmatpush1.bf16.msra.mxu0 0
  %7076 = vmatprep.subr.bf16.mxu0 0
  %7077 = vmatpush1.bf16.msra.mxu0 0
  %7078 = vmatprep.subr.bf16.mxu0 0
  %7079 = vmatpush1.bf16.msra.mxu0 0
  %7080 = vmatprep.subr.bf16.mxu0 0
  %7081 = vmatpush1.bf16.msra.mxu0 0
  %7082 = vmatprep.subr.bf16.mxu0 0
  %7083 = vmatpush1.bf16.msra.mxu0 0
  %7084 = vmatprep.subr.bf16.mxu0 0
  %7085 = vmatpush1.bf16.msra.mxu0 0
  %7086 = vmatprep.subr.bf16.mxu0 0
  %7087 = vmatpush1.bf16.msra.mxu0 0
  %7088 = vmatprep.subr.bf16.mxu0 0
  %7089 = vmatpush1.bf16.msra.mxu0 0
  %7090 = vmatprep.subr.bf16.mxu0 0
  %7091 = vmatpush1.bf16.msra.mxu0 0
  %7092 = vmatprep.subr.bf16.mxu0 0
  %7093 = vmatpush1.bf16.msra.mxu0 0
  %7094 = vmatprep.subr.bf16.mxu0 0
  %7095 = vmatpush1.bf16.msra.mxu0 0
  %7096 = vmatprep.subr.bf16.mxu0 0
  %7097 = vmatpush1.bf16.msra.mxu0 0
  %7098 = vmatprep.subr.bf16.mxu0 0
  %7099 = vmatpush1.bf16.msra.mxu0 0
  %7100 = vmatprep.subr.bf16.mxu0 0
  %7101 = vmatpush1.bf16.msra.mxu0 0
  %7102 = vmatprep.subr.bf16.mxu0 0
  %7103 = vmatpush1.bf16.msra.mxu0 0
  %7104 = vmatprep.mubr.bf16.mxu0 0
  %7105 = vmatmul.mubr.bf16.gmra.mrb[0].mxu0 %v7067
  %v7106 = vpop.f32.mrb[0].mxu0
  %v7107 = vadd.f32 0.0, %v7106
  %v7108 = vpop.f32.mrb[0].mxu0
  %v7109 = vpop.f32.mrb[0].mxu0
  %v7110 = vpop.f32.mrb[0].mxu0
  %7111 = vdwg.mxu0
  %v7113 = vsel %vm460, %v243, 0
  %v7116 = vsel %vm464, %v3845, 0
  %7118 = vmatprep.subr.bf16.mxu0 0
  %7119 = vmatpush1.bf16.msra.mxu0 %v7116
  %7120 = vmatprep.subr.bf16.mxu0 0
  %7121 = vmatpush1.bf16.msra.mxu0 0
  %7122 = vmatprep.subr.bf16.mxu0 0
  %7123 = vmatpush1.bf16.msra.mxu0 0
  %7124 = vmatprep.subr.bf16.mxu0 0
  %7125 = vmatpush1.bf16.msra.mxu0 0
  %7126 = vmatprep.subr.bf16.mxu0 0
  %7127 = vmatpush1.bf16.msra.mxu0 0
  %7128 = vmatprep.subr.bf16.mxu0 0
  %7129 = vmatpush1.bf16.msra.mxu0 0
  %7130 = vmatprep.subr.bf16.mxu0 0
  %7131 = vmatpush1.bf16.msra.mxu0 0
  %7132 = vmatprep.subr.bf16.mxu0 0
  %7133 = vmatpush1.bf16.msra.mxu0 0
  %7134 = vmatprep.subr.bf16.mxu0 0
  %7135 = vmatpush1.bf16.msra.mxu0 0
  %7136 = vmatprep.subr.bf16.mxu0 0
  %7137 = vmatpush1.bf16.msra.mxu0 0
  %7138 = vmatprep.subr.bf16.mxu0 0
  %7139 = vmatpush1.bf16.msra.mxu0 0
  %7140 = vmatprep.subr.bf16.mxu0 0
  %7141 = vmatpush1.bf16.msra.mxu0 0
  %7142 = vmatprep.subr.bf16.mxu0 0
  %7143 = vmatpush1.bf16.msra.mxu0 0
  %7144 = vmatprep.subr.bf16.mxu0 0
  %7145 = vmatpush1.bf16.msra.mxu0 0
  %7146 = vmatprep.subr.bf16.mxu0 0
  %7147 = vmatpush1.bf16.msra.mxu0 0
  %7148 = vmatprep.subr.bf16.mxu0 0
  %7149 = vmatpush1.bf16.msra.mxu0 0
  %7150 = vmatprep.mubr.bf16.mxu0 0
  %7151 = vmatmul.mubr.bf16.gmra.mrb[0].mxu0 %v7113
  %v7152 = vpop.f32.mrb[0].mxu0
  %v7153 = vadd.f32 0.0, %v7152
  %v7154 = vpop.f32.mrb[0].mxu0
  %v7155 = vpop.f32.mrb[0].mxu0
  %v7156 = vpop.f32.mrb[0].mxu0
  %7157 = vdwg.mxu0
  %v7158 = vld [vmem:[%s4] sm:$0xf]
  %v7159 = vld [vmem:[%s4 + $0x4] sm:$0xf]
  %v7160 = vld [vmem:[%s4 + $0x8] sm:$0xf]
  %v7161 = vld [vmem:[%s4 + $0xc] sm:$0xf]
  %v7162 = vld [vmem:[%s4 + $0x10] sm:$0xf]
  %v7163 = vld [vmem:[%s4 + $0x14] sm:$0xf]
  %v7164 = vld [vmem:[%s4 + $0x18] sm:$0xf]
  %v7165 = vld [vmem:[%s4 + $0x1c] sm:$0xf]
  %v7166 = vld [vmem:[%s4 + $0x20] sm:$0xf]
  %v7167 = vld [vmem:[%s4 + $0x24] sm:$0xf]
  %v7168 = vld [vmem:[%s4 + $0x28] sm:$0xf]
  %v7169 = vld [vmem:[%s4 + $0x2c] sm:$0xf]
  %v7170 = vld [vmem:[%s4 + $0x30] sm:$0xf]
  %v7171 = vld [vmem:[%s4 + $0x34] sm:$0xf]
  %v7172 = vld [vmem:[%s4 + $0x38] sm:$0xf]
  %v7173 = vld [vmem:[%s4 + $0x3c] sm:$0xf]
  %v7174 = vld [vmem:[%s4 + $0x40] sm:$0xf]
  %v7175 = vld [vmem:[%s4 + $0x44] sm:$0xf]
  %v7176 = vld [vmem:[%s4 + $0x48] sm:$0xf]
  %v7177 = vld [vmem:[%s4 + $0x4c] sm:$0xf]
  %v7178 = vld [vmem:[%s4 + $0x50] sm:$0xf]
  %v7179 = vld [vmem:[%s4 + $0x54] sm:$0xf]
  %v7180 = vld [vmem:[%s4 + $0x58] sm:$0xf]
  %v7181 = vld [vmem:[%s4 + $0x5c] sm:$0xf]
  %v7182 = vld [vmem:[%s4 + $0x60] sm:$0xf]
  %v7183 = vld [vmem:[%s4 + $0x64] sm:$0xf]
  %v7184 = vld [vmem:[%s4 + $0x68] sm:$0xf]
  %v7185 = vld [vmem:[%s4 + $0x6c] sm:$0xf]
  %v7186 = vld [vmem:[%s4 + $0x70] sm:$0xf]
  %v7187 = vld [vmem:[%s4 + $0x74] sm:$0xf]
  %v7188 = vld [vmem:[%s4 + $0x78] sm:$0xf]
  %v7189 = vld [vmem:[%s4 + $0x7c] sm:$0xf]
  %v7190 = vld [vmem:[%s4 + $0x80] sm:$0xf]
  %v7191 = vld [vmem:[%s4 + $0x84] sm:$0xf]
  %v7192 = vld [vmem:[%s4 + $0x88] sm:$0xf]
  %v7193 = vld [vmem:[%s4 + $0x8c] sm:$0xf]
  %v7194 = vld [vmem:[%s4 + $0x90] sm:$0xf]
  %v7195 = vld [vmem:[%s4 + $0x94] sm:$0xf]
  %v7196 = vld [vmem:[%s4 + $0x98] sm:$0xf]
  %v7197 = vld [vmem:[%s4 + $0x9c] sm:$0xf]
  %v7198 = vld [vmem:[%s4 + $0xa0] sm:$0xf]
  %v7199 = vld [vmem:[%s4 + $0xa4] sm:$0xf]
  %v7200 = vld [vmem:[%s4 + $0xa8] sm:$0xf]
  %v7201 = vld [vmem:[%s4 + $0xac] sm:$0xf]
  %v7202 = vld [vmem:[%s4 + $0xb0] sm:$0xf]
  %v7203 = vld [vmem:[%s4 + $0xb4] sm:$0xf]
  %v7204 = vld [vmem:[%s4 + $0xb8] sm:$0xf]
  %v7205 = vld [vmem:[%s4 + $0xbc] sm:$0xf]
  %v7206 = vld [vmem:[%s4 + $0xc0] sm:$0xf]
  %v7207 = vld [vmem:[%s4 + $0xc4] sm:$0xf]
  %v7208 = vld [vmem:[%s4 + $0xc8] sm:$0xf]
  %v7209 = vld [vmem:[%s4 + $0xcc] sm:$0xf]
  %v7210 = vld [vmem:[%s4 + $0xd0] sm:$0xf]
  %v7211 = vld [vmem:[%s4 + $0xd4] sm:$0xf]
  %v7212 = vld [vmem:[%s4 + $0xd8] sm:$0xf]
  %v7213 = vld [vmem:[%s4 + $0xdc] sm:$0xf]
  %v7214 = vld [vmem:[%s4 + $0xe0] sm:$0xf]
  %v7215 = vld [vmem:[%s4 + $0xe4] sm:$0xf]
  %v7216 = vld [vmem:[%s4 + $0xe8] sm:$0xf]
  %v7217 = vld [vmem:[%s4 + $0xec] sm:$0xf]
  %v7218 = vld [vmem:[%s4 + $0xf0] sm:$0xf]
  %v7219 = vld [vmem:[%s4 + $0xf4] sm:$0xf]
  %v7220 = vld [vmem:[%s4 + $0xf8] sm:$0xf]
  %v7221 = vld [vmem:[%s4 + $0xfc] sm:$0xf]
  %v7222 = vld [vmem:[%s4 + $0x100] sm:$0xf]
  %v7223 = vld [vmem:[%s4 + $0x104] sm:$0xf]
  %v7224 = vld [vmem:[%s4 + $0x108] sm:$0xf]
  %v7225 = vld [vmem:[%s4 + $0x10c] sm:$0xf]
  %v7226 = vld [vmem:[%s4 + $0x110] sm:$0xf]
  %v7227 = vld [vmem:[%s4 + $0x114] sm:$0xf]
  %v7228 = vld [vmem:[%s4 + $0x118] sm:$0xf]
  %v7229 = vld [vmem:[%s4 + $0x11c] sm:$0xf]
  %v7231 = vsel %vm460, %v244, 0
  %v7234 = vsel %vm464, %v7158, 0
  %7236 = vmatprep.subr.bf16.mxu0 0
  %7237 = vmatpush1.bf16.msra.mxu0 %v7234
  %7238 = vmatprep.subr.bf16.mxu0 0
  %7239 = vmatpush1.bf16.msra.mxu0 0
  %7240 = vmatprep.subr.bf16.mxu0 0
  %7241 = vmatpush1.bf16.msra.mxu0 0
  %7242 = vmatprep.subr.bf16.mxu0 0
  %7243 = vmatpush1.bf16.msra.mxu0 0
  %7244 = vmatprep.subr.bf16.mxu0 0
  %7245 = vmatpush1.bf16.msra.mxu0 0
  %7246 = vmatprep.subr.bf16.mxu0 0
  %7247 = vmatpush1.bf16.msra.mxu0 0
  %7248 = vmatprep.subr.bf16.mxu0 0
  %7249 = vmatpush1.bf16.msra.mxu0 0
  %7250 = vmatprep.subr.bf16.mxu0 0
  %7251 = vmatpush1.bf16.msra.mxu0 0
  %7252 = vmatprep.subr.bf16.mxu0 0
  %7253 = vmatpush1.bf16.msra.mxu0 0
  %7254 = vmatprep.subr.bf16.mxu0 0
  %7255 = vmatpush1.bf16.msra.mxu0 0
  %7256 = vmatprep.subr.bf16.mxu0 0
  %7257 = vmatpush1.bf16.msra.mxu0 0
  %7258 = vmatprep.subr.bf16.mxu0 0
  %7259 = vmatpush1.bf16.msra.mxu0 0
  %7260 = vmatprep.subr.bf16.mxu0 0
  %7261 = vmatpush1.bf16.msra.mxu0 0
  %7262 = vmatprep.subr.bf16.mxu0 0
  %7263 = vmatpush1.bf16.msra.mxu0 0
  %7264 = vmatprep.subr.bf16.mxu0 0
  %7265 = vmatpush1.bf16.msra.mxu0 0
  %7266 = vmatprep.subr.bf16.mxu0 0
  %7267 = vmatpush1.bf16.msra.mxu0 0
  %7268 = vmatprep.mubr.bf16.mxu0 0
  %7269 = vmatmul.mubr.bf16.gmra.mrb[0].mxu0 %v7231
  %v7270 = vpop.f32.mrb[0].mxu0
  %v7271 = vadd.f32 0.0, %v7270
  %v7272 = vpop.f32.mrb[0].mxu0
  %v7273 = vpop.f32.mrb[0].mxu0
  %v7274 = vpop.f32.mrb[0].mxu0
  %7275 = vdwg.mxu0
  %v7277 = vsel %vm460, %v245, 0
  %v7280 = vsel %vm464, %v7159, 0
  %7282 = vmatprep.subr.bf16.mxu0 0
  %7283 = vmatpush1.bf16.msra.mxu0 %v7280
  %7284 = vmatprep.subr.bf16.mxu0 0
  %7285 = vmatpush1.bf16.msra.mxu0 0
  %7286 = vmatprep.subr.bf16.mxu0 0
  %7287 = vmatpush1.bf16.msra.mxu0 0
  %7288 = vmatprep.subr.bf16.mxu0 0
  %7289 = vmatpush1.bf16.msra.mxu0 0
  %7290 = vmatprep.subr.bf16.mxu0 0
  %7291 = vmatpush1.bf16.msra.mxu0 0
  %7292 = vmatprep.subr.bf16.mxu0 0
  %7293 = vmatpush1.bf16.msra.mxu0 0
  %7294 = vmatprep.subr.bf16.mxu0 0
  %7295 = vmatpush1.bf16.msra.mxu0 0
  %7296 = vmatprep.subr.bf16.mxu0 0
  %7297 = vmatpush1.bf16.msra.mxu0 0
  %7298 = vmatprep.subr.bf16.mxu0 0
  %7299 = vmatpush1.bf16.msra.mxu0 0
  %7300 = vmatprep.subr.bf16.mxu0 0
  %7301 = vmatpush1.bf16.msra.mxu0 0
  %7302 = vmatprep.subr.bf16.mxu0 0
  %7303 = vmatpush1.bf16.msra.mxu0 0
  %7304 = vmatprep.subr.bf16.mxu0 0
  %7305 = vmatpush1.bf16.msra.mxu0 0
  %7306 = vmatprep.subr.bf16.mxu0 0
  %7307 = vmatpush1.bf16.msra.mxu0 0
  %7308 = vmatprep.subr.bf16.mxu0 0
  %7309 = vmatpush1.bf16.msra.mxu0 0
  %7310 = vmatprep.subr.bf16.mxu0 0
  %7311 = vmatpush1.bf16.msra.mxu0 0
  %7312 = vmatprep.subr.bf16.mxu0 0
  %7313 = vmatpush1.bf16.msra.mxu0 0
  %7314 = vmatprep.mubr.bf16.mxu0 0
  %7315 = vmatmul.mubr.bf16.gmra.mrb[0].mxu0 %v7277
  %v7316 = vpop.f32.mrb[0].mxu0
  %v7317 = vadd.f32 0.0, %v7316
  %v7318 = vpop.f32.mrb[0].mxu0
  %v7319 = vpop.f32.mrb[0].mxu0
  %v7320 = vpop.f32.mrb[0].mxu0
  %7321 = vdwg.mxu0
  %v7323 = vsel %vm460, %v246, 0
  %v7326 = vsel %vm464, %v7160, 0
  %7328 = vmatprep.subr.bf16.mxu0 0
  %7329 = vmatpush1.bf16.msra.mxu0 %v7326
  %7330 = vmatprep.subr.bf16.mxu0 0
  %7331 = vmatpush1.bf16.msra.mxu0 0
  %7332 = vmatprep.subr.bf16.mxu0 0
  %7333 = vmatpush1.bf16.msra.mxu0 0
  %7334 = vmatprep.subr.bf16.mxu0 0
  %7335 = vmatpush1.bf16.msra.mxu0 0
  %7336 = vmatprep.subr.bf16.mxu0 0
  %7337 = vmatpush1.bf16.msra.mxu0 0
  %7338 = vmatprep.subr.bf16.mxu0 0
  %7339 = vmatpush1.bf16.msra.mxu0 0
  %7340 = vmatprep.subr.bf16.mxu0 0
  %7341 = vmatpush1.bf16.msra.mxu0 0
  %7342 = vmatprep.subr.bf16.mxu0 0
  %7343 = vmatpush1.bf16.msra.mxu0 0
  %7344 = vmatprep.subr.bf16.mxu0 0
  %7345 = vmatpush1.bf16.msra.mxu0 0
  %7346 = vmatprep.subr.bf16.mxu0 0
  %7347 = vmatpush1.bf16.msra.mxu0 0
  %7348 = vmatprep.subr.bf16.mxu0 0
  %7349 = vmatpush1.bf16.msra.mxu0 0
  %7350 = vmatprep.subr.bf16.mxu0 0
  %7351 = vmatpush1.bf16.msra.mxu0 0
  %7352 = vmatprep.subr.bf16.mxu0 0
  %7353 = vmatpush1.bf16.msra.mxu0 0
  %7354 = vmatprep.subr.bf16.mxu0 0
  %7355 = vmatpush1.bf16.msra.mxu0 0
  %7356 = vmatprep.subr.bf16.mxu0 0
  %7357 = vmatpush1.bf16.msra.mxu0 0
  %7358 = vmatprep.subr.bf16.mxu0 0
  %7359 = vmatpush1.bf16.msra.mxu0 0
  %7360 = vmatprep.mubr.bf16.mxu0 0
  %7361 = vmatmul.mubr.bf16.gmra.mrb[0].mxu0 %v7323
  %v7362 = vpop.f32.mrb[0].mxu0
  %v7363 = vadd.f32 0.0, %v7362
  %v7364 = vpop.f32.mrb[0].mxu0
  %v7365 = vpop.f32.mrb[0].mxu0
  %v7366 = vpop.f32.mrb[0].mxu0
  %7367 = vdwg.mxu0
  %v7369 = vsel %vm460, %v247, 0
  %v7372 = vsel %vm464, %v7161, 0
  %7374 = vmatprep.subr.bf16.mxu0 0
  %7375 = vmatpush1.bf16.msra.mxu0 %v7372
  %7376 = vmatprep.subr.bf16.mxu0 0
  %7377 = vmatpush1.bf16.msra.mxu0 0
  %7378 = vmatprep.subr.bf16.mxu0 0
  %7379 = vmatpush1.bf16.msra.mxu0 0
  %7380 = vmatprep.subr.bf16.mxu0 0
  %7381 = vmatpush1.bf16.msra.mxu0 0
  %7382 = vmatprep.subr.bf16.mxu0 0
  %7383 = vmatpush1.bf16.msra.mxu0 0
  %7384 = vmatprep.subr.bf16.mxu0 0
  %7385 = vmatpush1.bf16.msra.mxu0 0
  %7386 = vmatprep.subr.bf16.mxu0 0
  %7387 = vmatpush1.bf16.msra.mxu0 0
  %7388 = vmatprep.subr.bf16.mxu0 0
  %7389 = vmatpush1.bf16.msra.mxu0 0
  %7390 = vmatprep.subr.bf16.mxu0 0
  %7391 = vmatpush1.bf16.msra.mxu0 0
  %7392 = vmatprep.subr.bf16.mxu0 0
  %7393 = vmatpush1.bf16.msra.mxu0 0
  %7394 = vmatprep.subr.bf16.mxu0 0
  %7395 = vmatpush1.bf16.msra.mxu0 0
  %7396 = vmatprep.subr.bf16.mxu0 0
  %7397 = vmatpush1.bf16.msra.mxu0 0
  %7398 = vmatprep.subr.bf16.mxu0 0
  %7399 = vmatpush1.bf16.msra.mxu0 0
  %7400 = vmatprep.subr.bf16.mxu0 0
  %7401 = vmatpush1.bf16.msra.mxu0 0
  %7402 = vmatprep.subr.bf16.mxu0 0
  %7403 = vmatpush1.bf16.msra.mxu0 0
  %7404 = vmatprep.subr.bf16.mxu0 0
  %7405 = vmatpush1.bf16.msra.mxu0 0
  %7406 = vmatprep.mubr.bf16.mxu0 0
  %7407 = vmatmul.mubr.bf16.gmra.mrb[0].mxu0 %v7369
  %v7408 = vpop.f32.mrb[0].mxu0
  %v7409 = vadd.f32 0.0, %v7408
  %v7410 = vpop.f32.mrb[0].mxu0
  %v7411 = vpop.f32.mrb[0].mxu0
  %v7412 = vpop.f32.mrb[0].mxu0
  %7413 = vdwg.mxu0
  %v7415 = vsel %vm460, %v248, 0
  %v7418 = vsel %vm464, %v7162, 0
  %7420 = vmatprep.subr.bf16.mxu0 0
  %7421 = vmatpush1.bf16.msra.mxu0 %v7418
  %7422 = vmatprep.subr.bf16.mxu0 0
  %7423 = vmatpush1.bf16.msra.mxu0 0
  %7424 = vmatprep.subr.bf16.mxu0 0
  %7425 = vmatpush1.bf16.msra.mxu0 0
  %7426 = vmatprep.subr.bf16.mxu0 0
  %7427 = vmatpush1.bf16.msra.mxu0 0
  %7428 = vmatprep.subr.bf16.mxu0 0
  %7429 = vmatpush1.bf16.msra.mxu0 0
  %7430 = vmatprep.subr.bf16.mxu0 0
  %7431 = vmatpush1.bf16.msra.mxu0 0
  %7432 = vmatprep.subr.bf16.mxu0 0
  %7433 = vmatpush1.bf16.msra.mxu0 0
  %7434 = vmatprep.subr.bf16.mxu0 0
  %7435 = vmatpush1.bf16.msra.mxu0 0
  %7436 = vmatprep.subr.bf16.mxu0 0
  %7437 = vmatpush1.bf16.msra.mxu0 0
  %7438 = vmatprep.subr.bf16.mxu0 0
  %7439 = vmatpush1.bf16.msra.mxu0 0
  %7440 = vmatprep.subr.bf16.mxu0 0
  %7441 = vmatpush1.bf16.msra.mxu0 0
  %7442 = vmatprep.subr.bf16.mxu0 0
  %7443 = vmatpush1.bf16.msra.mxu0 0
  %7444 = vmatprep.subr.bf16.mxu0 0
  %7445 = vmatpush1.bf16.msra.mxu0 0
  %7446 = vmatprep.subr.bf16.mxu0 0
  %7447 = vmatpush1.bf16.msra.mxu0 0
  %7448 = vmatprep.subr.bf16.mxu0 0
  %7449 = vmatpush1.bf16.msra.mxu0 0
  %7450 = vmatprep.subr.bf16.mxu0 0
  %7451 = vmatpush1.bf16.msra.mxu0 0
  %7452 = vmatprep.mubr.bf16.mxu0 0
  %7453 = vmatmul.mubr.bf16.gmra.mrb[0].mxu0 %v7415
  %v7454 = vpop.f32.mrb[0].mxu0
  %v7455 = vadd.f32 0.0, %v7454
  %v7456 = vpop.f32.mrb[0].mxu0
  %v7457 = vpop.f32.mrb[0].mxu0
  %v7458 = vpop.f32.mrb[0].mxu0
  %7459 = vdwg.mxu0
  %v7461 = vsel %vm460, %v249, 0
  %v7464 = vsel %vm464, %v7163, 0
  %7466 = vmatprep.subr.bf16.mxu0 0
  %7467 = vmatpush1.bf16.msra.mxu0 %v7464
  %7468 = vmatprep.subr.bf16.mxu0 0
  %7469 = vmatpush1.bf16.msra.mxu0 0
  %7470 = vmatprep.subr.bf16.mxu0 0
  %7471 = vmatpush1.bf16.msra.mxu0 0
  %7472 = vmatprep.subr.bf16.mxu0 0
  %7473 = vmatpush1.bf16.msra.mxu0 0
  %7474 = vmatprep.subr.bf16.mxu0 0
  %7475 = vmatpush1.bf16.msra.mxu0 0
  %7476 = vmatprep.subr.bf16.mxu0 0
  %7477 = vmatpush1.bf16.msra.mxu0 0
  %7478 = vmatprep.subr.bf16.mxu0 0
  %7479 = vmatpush1.bf16.msra.mxu0 0
  %7480 = vmatprep.subr.bf16.mxu0 0
  %7481 = vmatpush1.bf16.msra.mxu0 0
  %7482 = vmatprep.subr.bf16.mxu0 0
  %7483 = vmatpush1.bf16.msra.mxu0 0
  %7484 = vmatprep.subr.bf16.mxu0 0
  %7485 = vmatpush1.bf16.msra.mxu0 0
  %7486 = vmatprep.subr.bf16.mxu0 0
  %7487 = vmatpush1.bf16.msra.mxu0 0
  %7488 = vmatprep.subr.bf16.mxu0 0
  %7489 = vmatpush1.bf16.msra.mxu0 0
  %7490 = vmatprep.subr.bf16.mxu0 0
  %7491 = vmatpush1.bf16.msra.mxu0 0
  %7492 = vmatprep.subr.bf16.mxu0 0
  %7493 = vmatpush1.bf16.msra.mxu0 0
  %7494 = vmatprep.subr.bf16.mxu0 0
  %7495 = vmatpush1.bf16.msra.mxu0 0
  %7496 = vmatprep.subr.bf16.mxu0 0
  %7497 = vmatpush1.bf16.msra.mxu0 0
  %7498 = vmatprep.mubr.bf16.mxu0 0
  %7499 = vmatmul.mubr.bf16.gmra.mrb[0].mxu0 %v7461
  %v7500 = vpop.f32.mrb[0].mxu0
  %v7501 = vadd.f32 0.0, %v7500
  %v7502 = vpop.f32.mrb[0].mxu0
  %v7503 = vpop.f32.mrb[0].mxu0
  %v7504 = vpop.f32.mrb[0].mxu0
  %7505 = vdwg.mxu0
  %v7507 = vsel %vm460, %v250, 0
  %v7510 = vsel %vm464, %v7164, 0
  %7512 = vmatprep.subr.bf16.mxu0 0
  %7513 = vmatpush1.bf16.msra.mxu0 %v7510
  %7514 = vmatprep.subr.bf16.mxu0 0
  %7515 = vmatpush1.bf16.msra.mxu0 0
  %7516 = vmatprep.subr.bf16.mxu0 0
  %7517 = vmatpush1.bf16.msra.mxu0 0
  %7518 = vmatprep.subr.bf16.mxu0 0
  %7519 = vmatpush1.bf16.msra.mxu0 0
  %7520 = vmatprep.subr.bf16.mxu0 0
  %7521 = vmatpush1.bf16.msra.mxu0 0
  %7522 = vmatprep.subr.bf16.mxu0 0
  %7523 = vmatpush1.bf16.msra.mxu0 0
  %7524 = vmatprep.subr.bf16.mxu0 0
  %7525 = vmatpush1.bf16.msra.mxu0 0
  %7526 = vmatprep.subr.bf16.mxu0 0
  %7527 = vmatpush1.bf16.msra.mxu0 0
  %7528 = vmatprep.subr.bf16.mxu0 0
  %7529 = vmatpush1.bf16.msra.mxu0 0
  %7530 = vmatprep.subr.bf16.mxu0 0
  %7531 = vmatpush1.bf16.msra.mxu0 0
  %7532 = vmatprep.subr.bf16.mxu0 0
  %7533 = vmatpush1.bf16.msra.mxu0 0
  %7534 = vmatprep.subr.bf16.mxu0 0
  %7535 = vmatpush1.bf16.msra.mxu0 0
  %7536 = vmatprep.subr.bf16.mxu0 0
  %7537 = vmatpush1.bf16.msra.mxu0 0
  %7538 = vmatprep.subr.bf16.mxu0 0
  %7539 = vmatpush1.bf16.msra.mxu0 0
  %7540 = vmatprep.subr.bf16.mxu0 0
  %7541 = vmatpush1.bf16.msra.mxu0 0
  %7542 = vmatprep.subr.bf16.mxu0 0
  %7543 = vmatpush1.bf16.msra.mxu0 0
  %7544 = vmatprep.mubr.bf16.mxu0 0
  %7545 = vmatmul.mubr.bf16.gmra.mrb[0].mxu0 %v7507
  %v7546 = vpop.f32.mrb[0].mxu0
  %v7547 = vadd.f32 0.0, %v7546
  %v7548 = vpop.f32.mrb[0].mxu0
  %v7549 = vpop.f32.mrb[0].mxu0
  %v7550 = vpop.f32.mrb[0].mxu0
  %7551 = vdwg.mxu0
  %v7553 = vsel %vm460, %v251, 0
  %v7556 = vsel %vm464, %v7165, 0
  %7558 = vmatprep.subr.bf16.mxu0 0
  %7559 = vmatpush1.bf16.msra.mxu0 %v7556
  %7560 = vmatprep.subr.bf16.mxu0 0
  %7561 = vmatpush1.bf16.msra.mxu0 0
  %7562 = vmatprep.subr.bf16.mxu0 0
  %7563 = vmatpush1.bf16.msra.mxu0 0
  %7564 = vmatprep.subr.bf16.mxu0 0
  %7565 = vmatpush1.bf16.msra.mxu0 0
  %7566 = vmatprep.subr.bf16.mxu0 0
  %7567 = vmatpush1.bf16.msra.mxu0 0
  %7568 = vmatprep.subr.bf16.mxu0 0
  %7569 = vmatpush1.bf16.msra.mxu0 0
  %7570 = vmatprep.subr.bf16.mxu0 0
  %7571 = vmatpush1.bf16.msra.mxu0 0
  %7572 = vmatprep.subr.bf16.mxu0 0
  %7573 = vmatpush1.bf16.msra.mxu0 0
  %7574 = vmatprep.subr.bf16.mxu0 0
  %7575 = vmatpush1.bf16.msra.mxu0 0
  %7576 = vmatprep.subr.bf16.mxu0 0
  %7577 = vmatpush1.bf16.msra.mxu0 0
  %7578 = vmatprep.subr.bf16.mxu0 0
  %7579 = vmatpush1.bf16.msra.mxu0 0
  %7580 = vmatprep.subr.bf16.mxu0 0
  %7581 = vmatpush1.bf16.msra.mxu0 0
  %7582 = vmatprep.subr.bf16.mxu0 0
  %7583 = vmatpush1.bf16.msra.mxu0 0
  %7584 = vmatprep.subr.bf16.mxu0 0
  %7585 = vmatpush1.bf16.msra.mxu0 0
  %7586 = vmatprep.subr.bf16.mxu0 0
  %7587 = vmatpush1.bf16.msra.mxu0 0
  %7588 = vmatprep.subr.bf16.mxu0 0
  %7589 = vmatpush1.bf16.msra.mxu0 0
  %7590 = vmatprep.mubr.bf16.mxu0 0
  %7591 = vmatmul.mubr.bf16.gmra.mrb[0].mxu0 %v7553
  %v7592 = vpop.f32.mrb[0].mxu0
  %v7593 = vadd.f32 0.0, %v7592
  %v7594 = vpop.f32.mrb[0].mxu0
  %v7595 = vpop.f32.mrb[0].mxu0
  %v7596 = vpop.f32.mrb[0].mxu0
  %7597 = vdwg.mxu0
  %v7599 = vsel %vm460, %v252, 0
  %v7602 = vsel %vm464, %v7166, 0
  %7604 = vmatprep.subr.bf16.mxu0 0
  %7605 = vmatpush1.bf16.msra.mxu0 %v7602
  %7606 = vmatprep.subr.bf16.mxu0 0
  %7607 = vmatpush1.bf16.msra.mxu0 0
  %7608 = vmatprep.subr.bf16.mxu0 0
  %7609 = vmatpush1.bf16.msra.mxu0 0
  %7610 = vmatprep.subr.bf16.mxu0 0
  %7611 = vmatpush1.bf16.msra.mxu0 0
  %7612 = vmatprep.subr.bf16.mxu0 0
  %7613 = vmatpush1.bf16.msra.mxu0 0
  %7614 = vmatprep.subr.bf16.mxu0 0
  %7615 = vmatpush1.bf16.msra.mxu0 0
  %7616 = vmatprep.subr.bf16.mxu0 0
  %7617 = vmatpush1.bf16.msra.mxu0 0
  %7618 = vmatprep.subr.bf16.mxu0 0
  %7619 = vmatpush1.bf16.msra.mxu0 0
  %7620 = vmatprep.subr.bf16.mxu0 0
  %7621 = vmatpush1.bf16.msra.mxu0 0
  %7622 = vmatprep.subr.bf16.mxu0 0
  %7623 = vmatpush1.bf16.msra.mxu0 0
  %7624 = vmatprep.subr.bf16.mxu0 0
  %7625 = vmatpush1.bf16.msra.mxu0 0
  %7626 = vmatprep.subr.bf16.mxu0 0
  %7627 = vmatpush1.bf16.msra.mxu0 0
  %7628 = vmatprep.subr.bf16.mxu0 0
  %7629 = vmatpush1.bf16.msra.mxu0 0
  %7630 = vmatprep.subr.bf16.mxu0 0
  %7631 = vmatpush1.bf16.msra.mxu0 0
  %7632 = vmatprep.subr.bf16.mxu0 0
  %7633 = vmatpush1.bf16.msra.mxu0 0
  %7634 = vmatprep.subr.bf16.mxu0 0
  %7635 = vmatpush1.bf16.msra.mxu0 0
  %7636 = vmatprep.mubr.bf16.mxu0 0
  %7637 = vmatmul.mubr.bf16.gmra.mrb[0].mxu0 %v7599
  %v7638 = vpop.f32.mrb[0].mxu0
  %v7639 = vadd.f32 0.0, %v7638
  %v7640 = vpop.f32.mrb[0].mxu0
  %v7641 = vpop.f32.mrb[0].mxu0
  %v7642 = vpop.f32.mrb[0].mxu0
  %7643 = vdwg.mxu0
  %v7645 = vsel %vm460, %v253, 0
  %v7648 = vsel %vm464, %v7167, 0
  %7650 = vmatprep.subr.bf16.mxu0 0
  %7651 = vmatpush1.bf16.msra.mxu0 %v7648
  %7652 = vmatprep.subr.bf16.mxu0 0
  %7653 = vmatpush1.bf16.msra.mxu0 0
  %7654 = vmatprep.subr.bf16.mxu0 0
  %7655 = vmatpush1.bf16.msra.mxu0 0
  %7656 = vmatprep.subr.bf16.mxu0 0
  %7657 = vmatpush1.bf16.msra.mxu0 0
  %7658 = vmatprep.subr.bf16.mxu0 0
  %7659 = vmatpush1.bf16.msra.mxu0 0
  %7660 = vmatprep.subr.bf16.mxu0 0
  %7661 = vmatpush1.bf16.msra.mxu0 0
  %7662 = vmatprep.subr.bf16.mxu0 0
  %7663 = vmatpush1.bf16.msra.mxu0 0
  %7664 = vmatprep.subr.bf16.mxu0 0
  %7665 = vmatpush1.bf16.msra.mxu0 0
  %7666 = vmatprep.subr.bf16.mxu0 0
  %7667 = vmatpush1.bf16.msra.mxu0 0
  %7668 = vmatprep.subr.bf16.mxu0 0
  %7669 = vmatpush1.bf16.msra.mxu0 0
  %7670 = vmatprep.subr.bf16.mxu0 0
  %7671 = vmatpush1.bf16.msra.mxu0 0
  %7672 = vmatprep.subr.bf16.mxu0 0
  %7673 = vmatpush1.bf16.msra.mxu0 0
  %7674 = vmatprep.subr.bf16.mxu0 0
  %7675 = vmatpush1.bf16.msra.mxu0 0
  %7676 = vmatprep.subr.bf16.mxu0 0
  %7677 = vmatpush1.bf16.msra.mxu0 0
  %7678 = vmatprep.subr.bf16.mxu0 0
  %7679 = vmatpush1.bf16.msra.mxu0 0
  %7680 = vmatprep.subr.bf16.mxu0 0
  %7681 = vmatpush1.bf16.msra.mxu0 0
  %7682 = vmatprep.mubr.bf16.mxu0 0
  %7683 = vmatmul.mubr.bf16.gmra.mrb[0].mxu0 %v7645
  %v7684 = vpop.f32.mrb[0].mxu0
  %v7685 = vadd.f32 0.0, %v7684
  %v7686 = vpop.f32.mrb[0].mxu0
  %v7687 = vpop.f32.mrb[0].mxu0
  %v7688 = vpop.f32.mrb[0].mxu0
  %7689 = vdwg.mxu0
  %v7691 = vsel %vm460, %v254, 0
  %v7694 = vsel %vm464, %v7168, 0
  %7696 = vmatprep.subr.bf16.mxu0 0
  %7697 = vmatpush1.bf16.msra.mxu0 %v7694
  %7698 = vmatprep.subr.bf16.mxu0 0
  %7699 = vmatpush1.bf16.msra.mxu0 0
  %7700 = vmatprep.subr.bf16.mxu0 0
  %7701 = vmatpush1.bf16.msra.mxu0 0
  %7702 = vmatprep.subr.bf16.mxu0 0
  %7703 = vmatpush1.bf16.msra.mxu0 0
  %7704 = vmatprep.subr.bf16.mxu0 0
  %7705 = vmatpush1.bf16.msra.mxu0 0
  %7706 = vmatprep.subr.bf16.mxu0 0
  %7707 = vmatpush1.bf16.msra.mxu0 0
  %7708 = vmatprep.subr.bf16.mxu0 0
  %7709 = vmatpush1.bf16.msra.mxu0 0
  %7710 = vmatprep.subr.bf16.mxu0 0
  %7711 = vmatpush1.bf16.msra.mxu0 0
  %7712 = vmatprep.subr.bf16.mxu0 0
  %7713 = vmatpush1.bf16.msra.mxu0 0
  %7714 = vmatprep.subr.bf16.mxu0 0
  %7715 = vmatpush1.bf16.msra.mxu0 0
  %7716 = vmatprep.subr.bf16.mxu0 0
  %7717 = vmatpush1.bf16.msra.mxu0 0
  %7718 = vmatprep.subr.bf16.mxu0 0
  %7719 = vmatpush1.bf16.msra.mxu0 0
  %7720 = vmatprep.subr.bf16.mxu0 0
  %7721 = vmatpush1.bf16.msra.mxu0 0
  %7722 = vmatprep.subr.bf16.mxu0 0
  %7723 = vmatpush1.bf16.msra.mxu0 0
  %7724 = vmatprep.subr.bf16.mxu0 0
  %7725 = vmatpush1.bf16.msra.mxu0 0
  %7726 = vmatprep.subr.bf16.mxu0 0
  %7727 = vmatpush1.bf16.msra.mxu0 0
  %7728 = vmatprep.mubr.bf16.mxu0 0
  %7729 = vmatmul.mubr.bf16.gmra.mrb[0].mxu0 %v7691
  %v7730 = vpop.f32.mrb[0].mxu0
  %v7731 = vadd.f32 0.0, %v7730
  %v7732 = vpop.f32.mrb[0].mxu0
  %v7733 = vpop.f32.mrb[0].mxu0
  %v7734 = vpop.f32.mrb[0].mxu0
  %7735 = vdwg.mxu0
  %v7737 = vsel %vm460, %v255, 0
  %v7740 = vsel %vm464, %v7169, 0
  %7742 = vmatprep.subr.bf16.mxu0 0
  %7743 = vmatpush1.bf16.msra.mxu0 %v7740
  %7744 = vmatprep.subr.bf16.mxu0 0
  %7745 = vmatpush1.bf16.msra.mxu0 0
  %7746 = vmatprep.subr.bf16.mxu0 0
  %7747 = vmatpush1.bf16.msra.mxu0 0
  %7748 = vmatprep.subr.bf16.mxu0 0
  %7749 = vmatpush1.bf16.msra.mxu0 0
  %7750 = vmatprep.subr.bf16.mxu0 0
  %7751 = vmatpush1.bf16.msra.mxu0 0
  %7752 = vmatprep.subr.bf16.mxu0 0
  %7753 = vmatpush1.bf16.msra.mxu0 0
  %7754 = vmatprep.subr.bf16.mxu0 0
  %7755 = vmatpush1.bf16.msra.mxu0 0
  %7756 = vmatprep.subr.bf16.mxu0 0
  %7757 = vmatpush1.bf16.msra.mxu0 0
  %7758 = vmatprep.subr.bf16.mxu0 0
  %7759 = vmatpush1.bf16.msra.mxu0 0
  %7760 = vmatprep.subr.bf16.mxu0 0
  %7761 = vmatpush1.bf16.msra.mxu0 0
  %7762 = vmatprep.subr.bf16.mxu0 0
  %7763 = vmatpush1.bf16.msra.mxu0 0
  %7764 = vmatprep.subr.bf16.mxu0 0
  %7765 = vmatpush1.bf16.msra.mxu0 0
  %7766 = vmatprep.subr.bf16.mxu0 0
  %7767 = vmatpush1.bf16.msra.mxu0 0
  %7768 = vmatprep.subr.bf16.mxu0 0
  %7769 = vmatpush1.bf16.msra.mxu0 0
  %7770 = vmatprep.subr.bf16.mxu0 0
  %7771 = vmatpush1.bf16.msra.mxu0 0
  %7772 = vmatprep.subr.bf16.mxu0 0
  %7773 = vmatpush1.bf16.msra.mxu0 0
  %7774 = vmatprep.mubr.bf16.mxu0 0
  %7775 = vmatmul.mubr.bf16.gmra.mrb[0].mxu0 %v7737
  %v7776 = vpop.f32.mrb[0].mxu0
  %v7777 = vadd.f32 0.0, %v7776
  %v7778 = vpop.f32.mrb[0].mxu0
  %v7779 = vpop.f32.mrb[0].mxu0
  %v7780 = vpop.f32.mrb[0].mxu0
  %7781 = vdwg.mxu0
  %v7783 = vsel %vm460, %v256, 0
  %v7786 = vsel %vm464, %v7170, 0
  %7788 = vmatprep.subr.bf16.mxu0 0
  %7789 = vmatpush1.bf16.msra.mxu0 %v7786
  %7790 = vmatprep.subr.bf16.mxu0 0
  %7791 = vmatpush1.bf16.msra.mxu0 0
  %7792 = vmatprep.subr.bf16.mxu0 0
  %7793 = vmatpush1.bf16.msra.mxu0 0
  %7794 = vmatprep.subr.bf16.mxu0 0
  %7795 = vmatpush1.bf16.msra.mxu0 0
  %7796 = vmatprep.subr.bf16.mxu0 0
  %7797 = vmatpush1.bf16.msra.mxu0 0
  %7798 = vmatprep.subr.bf16.mxu0 0
  %7799 = vmatpush1.bf16.msra.mxu0 0
  %7800 = vmatprep.subr.bf16.mxu0 0
  %7801 = vmatpush1.bf16.msra.mxu0 0
  %7802 = vmatprep.subr.bf16.mxu0 0
  %7803 = vmatpush1.bf16.msra.mxu0 0
  %7804 = vmatprep.subr.bf16.mxu0 0
  %7805 = vmatpush1.bf16.msra.mxu0 0
  %7806 = vmatprep.subr.bf16.mxu0 0
  %7807 = vmatpush1.bf16.msra.mxu0 0
  %7808 = vmatprep.subr.bf16.mxu0 0
  %7809 = vmatpush1.bf16.msra.mxu0 0
  %7810 = vmatprep.subr.bf16.mxu0 0
  %7811 = vmatpush1.bf16.msra.mxu0 0
  %7812 = vmatprep.subr.bf16.mxu0 0
  %7813 = vmatpush1.bf16.msra.mxu0 0
  %7814 = vmatprep.subr.bf16.mxu0 0
  %7815 = vmatpush1.bf16.msra.mxu0 0
  %7816 = vmatprep.subr.bf16.mxu0 0
  %7817 = vmatpush1.bf16.msra.mxu0 0
  %7818 = vmatprep.subr.bf16.mxu0 0
  %7819 = vmatpush1.bf16.msra.mxu0 0
  %7820 = vmatprep.mubr.bf16.mxu0 0
  %7821 = vmatmul.mubr.bf16.gmra.mrb[0].mxu0 %v7783
  %v7822 = vpop.f32.mrb[0].mxu0
  %v7823 = vadd.f32 0.0, %v7822
  %v7824 = vpop.f32.mrb[0].mxu0
  %v7825 = vpop.f32.mrb[0].mxu0
  %v7826 = vpop.f32.mrb[0].mxu0
  %7827 = vdwg.mxu0
  %v7829 = vsel %vm460, %v257, 0
  %v7832 = vsel %vm464, %v7171, 0
  %7834 = vmatprep.subr.bf16.mxu0 0
  %7835 = vmatpush1.bf16.msra.mxu0 %v7832
  %7836 = vmatprep.subr.bf16.mxu0 0
  %7837 = vmatpush1.bf16.msra.mxu0 0
  %7838 = vmatprep.subr.bf16.mxu0 0
  %7839 = vmatpush1.bf16.msra.mxu0 0
  %7840 = vmatprep.subr.bf16.mxu0 0
  %7841 = vmatpush1.bf16.msra.mxu0 0
  %7842 = vmatprep.subr.bf16.mxu0 0
  %7843 = vmatpush1.bf16.msra.mxu0 0
  %7844 = vmatprep.subr.bf16.mxu0 0
  %7845 = vmatpush1.bf16.msra.mxu0 0
  %7846 = vmatprep.subr.bf16.mxu0 0
  %7847 = vmatpush1.bf16.msra.mxu0 0
  %7848 = vmatprep.subr.bf16.mxu0 0
  %7849 = vmatpush1.bf16.msra.mxu0 0
  %7850 = vmatprep.subr.bf16.mxu0 0
  %7851 = vmatpush1.bf16.msra.mxu0 0
  %7852 = vmatprep.subr.bf16.mxu0 0
  %7853 = vmatpush1.bf16.msra.mxu0 0
  %7854 = vmatprep.subr.bf16.mxu0 0
  %7855 = vmatpush1.bf16.msra.mxu0 0
  %7856 = vmatprep.subr.bf16.mxu0 0
  %7857 = vmatpush1.bf16.msra.mxu0 0
  %7858 = vmatprep.subr.bf16.mxu0 0
  %7859 = vmatpush1.bf16.msra.mxu0 0
  %7860 = vmatprep.subr.bf16.mxu0 0
  %7861 = vmatpush1.bf16.msra.mxu0 0
  %7862 = vmatprep.subr.bf16.mxu0 0
  %7863 = vmatpush1.bf16.msra.mxu0 0
  %7864 = vmatprep.subr.bf16.mxu0 0
  %7865 = vmatpush1.bf16.msra.mxu0 0
  %7866 = vmatprep.mubr.bf16.mxu0 0
  %7867 = vmatmul.mubr.bf16.gmra.mrb[0].mxu0 %v7829
  %v7868 = vpop.f32.mrb[0].mxu0
  %v7869 = vadd.f32 0.0, %v7868
  %v7870 = vpop.f32.mrb[0].mxu0
  %v7871 = vpop.f32.mrb[0].mxu0
  %v7872 = vpop.f32.mrb[0].mxu0
  %7873 = vdwg.mxu0
  %v7875 = vsel %vm460, %v258, 0
  %v7878 = vsel %vm464, %v7172, 0
  %7880 = vmatprep.subr.bf16.mxu0 0
  %7881 = vmatpush1.bf16.msra.mxu0 %v7878
  %7882 = vmatprep.subr.bf16.mxu0 0
  %7883 = vmatpush1.bf16.msra.mxu0 0
  %7884 = vmatprep.subr.bf16.mxu0 0
  %7885 = vmatpush1.bf16.msra.mxu0 0
  %7886 = vmatprep.subr.bf16.mxu0 0
  %7887 = vmatpush1.bf16.msra.mxu0 0
  %7888 = vmatprep.subr.bf16.mxu0 0
  %7889 = vmatpush1.bf16.msra.mxu0 0
  %7890 = vmatprep.subr.bf16.mxu0 0
  %7891 = vmatpush1.bf16.msra.mxu0 0
  %7892 = vmatprep.subr.bf16.mxu0 0
  %7893 = vmatpush1.bf16.msra.mxu0 0
  %7894 = vmatprep.subr.bf16.mxu0 0
  %7895 = vmatpush1.bf16.msra.mxu0 0
  %7896 = vmatprep.subr.bf16.mxu0 0
  %7897 = vmatpush1.bf16.msra.mxu0 0
  %7898 = vmatprep.subr.bf16.mxu0 0
  %7899 = vmatpush1.bf16.msra.mxu0 0
  %7900 = vmatprep.subr.bf16.mxu0 0
  %7901 = vmatpush1.bf16.msra.mxu0 0
  %7902 = vmatprep.subr.bf16.mxu0 0
  %7903 = vmatpush1.bf16.msra.mxu0 0
  %7904 = vmatprep.subr.bf16.mxu0 0
  %7905 = vmatpush1.bf16.msra.mxu0 0
  %7906 = vmatprep.subr.bf16.mxu0 0
  %7907 = vmatpush1.bf16.msra.mxu0 0
  %7908 = vmatprep.subr.bf16.mxu0 0
  %7909 = vmatpush1.bf16.msra.mxu0 0
  %7910 = vmatprep.subr.bf16.mxu0 0
  %7911 = vmatpush1.bf16.msra.mxu0 0
  %7912 = vmatprep.mubr.bf16.mxu0 0
  %7913 = vmatmul.mubr.bf16.gmra.mrb[0].mxu0 %v7875
  %v7914 = vpop.f32.mrb[0].mxu0
  %v7915 = vadd.f32 0.0, %v7914
  %v7916 = vpop.f32.mrb[0].mxu0
  %v7917 = vpop.f32.mrb[0].mxu0
  %v7918 = vpop.f32.mrb[0].mxu0
  %7919 = vdwg.mxu0
  %v7921 = vsel %vm460, %v259, 0
  %v7924 = vsel %vm464, %v7173, 0
  %7926 = vmatprep.subr.bf16.mxu0 0
  %7927 = vmatpush1.bf16.msra.mxu0 %v7924
  %7928 = vmatprep.subr.bf16.mxu0 0
  %7929 = vmatpush1.bf16.msra.mxu0 0
  %7930 = vmatprep.subr.bf16.mxu0 0
  %7931 = vmatpush1.bf16.msra.mxu0 0
  %7932 = vmatprep.subr.bf16.mxu0 0
  %7933 = vmatpush1.bf16.msra.mxu0 0
  %7934 = vmatprep.subr.bf16.mxu0 0
  %7935 = vmatpush1.bf16.msra.mxu0 0
  %7936 = vmatprep.subr.bf16.mxu0 0
  %7937 = vmatpush1.bf16.msra.mxu0 0
  %7938 = vmatprep.subr.bf16.mxu0 0
  %7939 = vmatpush1.bf16.msra.mxu0 0
  %7940 = vmatprep.subr.bf16.mxu0 0
  %7941 = vmatpush1.bf16.msra.mxu0 0
  %7942 = vmatprep.subr.bf16.mxu0 0
  %7943 = vmatpush1.bf16.msra.mxu0 0
  %7944 = vmatprep.subr.bf16.mxu0 0
  %7945 = vmatpush1.bf16.msra.mxu0 0
  %7946 = vmatprep.subr.bf16.mxu0 0
  %7947 = vmatpush1.bf16.msra.mxu0 0
  %7948 = vmatprep.subr.bf16.mxu0 0
  %7949 = vmatpush1.bf16.msra.mxu0 0
  %7950 = vmatprep.subr.bf16.mxu0 0
  %7951 = vmatpush1.bf16.msra.mxu0 0
  %7952 = vmatprep.subr.bf16.mxu0 0
  %7953 = vmatpush1.bf16.msra.mxu0 0
  %7954 = vmatprep.subr.bf16.mxu0 0
  %7955 = vmatpush1.bf16.msra.mxu0 0
  %7956 = vmatprep.subr.bf16.mxu0 0
  %7957 = vmatpush1.bf16.msra.mxu0 0
  %7958 = vmatprep.mubr.bf16.mxu0 0
  %7959 = vmatmul.mubr.bf16.gmra.mrb[0].mxu0 %v7921
  %v7960 = vpop.f32.mrb[0].mxu0
  %v7961 = vadd.f32 0.0, %v7960
  %v7962 = vpop.f32.mrb[0].mxu0
  %v7963 = vpop.f32.mrb[0].mxu0
  %v7964 = vpop.f32.mrb[0].mxu0
  %7965 = vdwg.mxu0
  %v7967 = vsel %vm460, %v260, 0
  %v7970 = vsel %vm464, %v7174, 0
  %7972 = vmatprep.subr.bf16.mxu0 0
  %7973 = vmatpush1.bf16.msra.mxu0 %v7970
  %7974 = vmatprep.subr.bf16.mxu0 0
  %7975 = vmatpush1.bf16.msra.mxu0 0
  %7976 = vmatprep.subr.bf16.mxu0 0
  %7977 = vmatpush1.bf16.msra.mxu0 0
  %7978 = vmatprep.subr.bf16.mxu0 0
  %7979 = vmatpush1.bf16.msra.mxu0 0
  %7980 = vmatprep.subr.bf16.mxu0 0
  %7981 = vmatpush1.bf16.msra.mxu0 0
  %7982 = vmatprep.subr.bf16.mxu0 0
  %7983 = vmatpush1.bf16.msra.mxu0 0
  %7984 = vmatprep.subr.bf16.mxu0 0
  %7985 = vmatpush1.bf16.msra.mxu0 0
  %7986 = vmatprep.subr.bf16.mxu0 0
  %7987 = vmatpush1.bf16.msra.mxu0 0
  %7988 = vmatprep.subr.bf16.mxu0 0
  %7989 = vmatpush1.bf16.msra.mxu0 0
  %7990 = vmatprep.subr.bf16.mxu0 0
  %7991 = vmatpush1.bf16.msra.mxu0 0
  %7992 = vmatprep.subr.bf16.mxu0 0
  %7993 = vmatpush1.bf16.msra.mxu0 0
  %7994 = vmatprep.subr.bf16.mxu0 0
  %7995 = vmatpush1.bf16.msra.mxu0 0
  %7996 = vmatprep.subr.bf16.mxu0 0
  %7997 = vmatpush1.bf16.msra.mxu0 0
  %7998 = vmatprep.subr.bf16.mxu0 0
  %7999 = vmatpush1.bf16.msra.mxu0 0
  %8000 = vmatprep.subr.bf16.mxu0 0
  %8001 = vmatpush1.bf16.msra.mxu0 0
  %8002 = vmatprep.subr.bf16.mxu0 0
  %8003 = vmatpush1.bf16.msra.mxu0 0
  %8004 = vmatprep.mubr.bf16.mxu0 0
  %8005 = vmatmul.mubr.bf16.gmra.mrb[0].mxu0 %v7967
  %v8006 = vpop.f32.mrb[0].mxu0
  %v8007 = vadd.f32 0.0, %v8006
  %v8008 = vpop.f32.mrb[0].mxu0
  %v8009 = vpop.f32.mrb[0].mxu0
  %v8010 = vpop.f32.mrb[0].mxu0
  %8011 = vdwg.mxu0
  %v8013 = vsel %vm460, %v261, 0
  %v8016 = vsel %vm464, %v7175, 0
  %8018 = vmatprep.subr.bf16.mxu0 0
  %8019 = vmatpush1.bf16.msra.mxu0 %v8016
  %8020 = vmatprep.subr.bf16.mxu0 0
  %8021 = vmatpush1.bf16.msra.mxu0 0
  %8022 = vmatprep.subr.bf16.mxu0 0
  %8023 = vmatpush1.bf16.msra.mxu0 0
  %8024 = vmatprep.subr.bf16.mxu0 0
  %8025 = vmatpush1.bf16.msra.mxu0 0
  %8026 = vmatprep.subr.bf16.mxu0 0
  %8027 = vmatpush1.bf16.msra.mxu0 0
  %8028 = vmatprep.subr.bf16.mxu0 0
  %8029 = vmatpush1.bf16.msra.mxu0 0
  %8030 = vmatprep.subr.bf16.mxu0 0
  %8031 = vmatpush1.bf16.msra.mxu0 0
  %8032 = vmatprep.subr.bf16.mxu0 0
  %8033 = vmatpush1.bf16.msra.mxu0 0
  %8034 = vmatprep.subr.bf16.mxu0 0
  %8035 = vmatpush1.bf16.msra.mxu0 0
  %8036 = vmatprep.subr.bf16.mxu0 0
  %8037 = vmatpush1.bf16.msra.mxu0 0
  %8038 = vmatprep.subr.bf16.mxu0 0
  %8039 = vmatpush1.bf16.msra.mxu0 0
  %8040 = vmatprep.subr.bf16.mxu0 0
  %8041 = vmatpush1.bf16.msra.mxu0 0
  %8042 = vmatprep.subr.bf16.mxu0 0
  %8043 = vmatpush1.bf16.msra.mxu0 0
  %8044 = vmatprep.subr.bf16.mxu0 0
  %8045 = vmatpush1.bf16.msra.mxu0 0
  %8046 = vmatprep.subr.bf16.mxu0 0
  %8047 = vmatpush1.bf16.msra.mxu0 0
  %8048 = vmatprep.subr.bf16.mxu0 0
  %8049 = vmatpush1.bf16.msra.mxu0 0
  %8050 = vmatprep.mubr.bf16.mxu0 0
  %8051 = vmatmul.mubr.bf16.gmra.mrb[0].mxu0 %v8013
  %v8052 = vpop.f32.mrb[0].mxu0
  %v8053 = vadd.f32 0.0, %v8052
  %v8054 = vpop.f32.mrb[0].mxu0
  %v8055 = vpop.f32.mrb[0].mxu0
  %v8056 = vpop.f32.mrb[0].mxu0
  %8057 = vdwg.mxu0
  %v8059 = vsel %vm460, %v262, 0
  %v8062 = vsel %vm464, %v7176, 0
  %8064 = vmatprep.subr.bf16.mxu0 0
  %8065 = vmatpush1.bf16.msra.mxu0 %v8062
  %8066 = vmatprep.subr.bf16.mxu0 0
  %8067 = vmatpush1.bf16.msra.mxu0 0
  %8068 = vmatprep.subr.bf16.mxu0 0
  %8069 = vmatpush1.bf16.msra.mxu0 0
  %8070 = vmatprep.subr.bf16.mxu0 0
  %8071 = vmatpush1.bf16.msra.mxu0 0
  %8072 = vmatprep.subr.bf16.mxu0 0
  %8073 = vmatpush1.bf16.msra.mxu0 0
  %8074 = vmatprep.subr.bf16.mxu0 0
  %8075 = vmatpush1.bf16.msra.mxu0 0
  %8076 = vmatprep.subr.bf16.mxu0 0
  %8077 = vmatpush1.bf16.msra.mxu0 0
  %8078 = vmatprep.subr.bf16.mxu0 0
  %8079 = vmatpush1.bf16.msra.mxu0 0
  %8080 = vmatprep.subr.bf16.mxu0 0
  %8081 = vmatpush1.bf16.msra.mxu0 0
  %8082 = vmatprep.subr.bf16.mxu0 0
  %8083 = vmatpush1.bf16.msra.mxu0 0
  %8084 = vmatprep.subr.bf16.mxu0 0
  %8085 = vmatpush1.bf16.msra.mxu0 0
  %8086 = vmatprep.subr.bf16.mxu0 0
  %8087 = vmatpush1.bf16.msra.mxu0 0
  %8088 = vmatprep.subr.bf16.mxu0 0
  %8089 = vmatpush1.bf16.msra.mxu0 0
  %8090 = vmatprep.subr.bf16.mxu0 0
  %8091 = vmatpush1.bf16.msra.mxu0 0
  %8092 = vmatprep.subr.bf16.mxu0 0
  %8093 = vmatpush1.bf16.msra.mxu0 0
  %8094 = vmatprep.subr.bf16.mxu0 0
  %8095 = vmatpush1.bf16.msra.mxu0 0
  %8096 = vmatprep.mubr.bf16.mxu0 0
  %8097 = vmatmul.mubr.bf16.gmra.mrb[0].mxu0 %v8059
  %v8098 = vpop.f32.mrb[0].mxu0
  %v8099 = vadd.f32 0.0, %v8098
  %v8100 = vpop.f32.mrb[0].mxu0
  %v8101 = vpop.f32.mrb[0].mxu0
  %v8102 = vpop.f32.mrb[0].mxu0
  %8103 = vdwg.mxu0
  %v8105 = vsel %vm460, %v263, 0
  %v8108 = vsel %vm464, %v7177, 0
  %8110 = vmatprep.subr.bf16.mxu0 0
  %8111 = vmatpush1.bf16.msra.mxu0 %v8108
  %8112 = vmatprep.subr.bf16.mxu0 0
  %8113 = vmatpush1.bf16.msra.mxu0 0
  %8114 = vmatprep.subr.bf16.mxu0 0
  %8115 = vmatpush1.bf16.msra.mxu0 0
  %8116 = vmatprep.subr.bf16.mxu0 0
  %8117 = vmatpush1.bf16.msra.mxu0 0
  %8118 = vmatprep.subr.bf16.mxu0 0
  %8119 = vmatpush1.bf16.msra.mxu0 0
  %8120 = vmatprep.subr.bf16.mxu0 0
  %8121 = vmatpush1.bf16.msra.mxu0 0
  %8122 = vmatprep.subr.bf16.mxu0 0
  %8123 = vmatpush1.bf16.msra.mxu0 0
  %8124 = vmatprep.subr.bf16.mxu0 0
  %8125 = vmatpush1.bf16.msra.mxu0 0
  %8126 = vmatprep.subr.bf16.mxu0 0
  %8127 = vmatpush1.bf16.msra.mxu0 0
  %8128 = vmatprep.subr.bf16.mxu0 0
  %8129 = vmatpush1.bf16.msra.mxu0 0
  %8130 = vmatprep.subr.bf16.mxu0 0
  %8131 = vmatpush1.bf16.msra.mxu0 0
  %8132 = vmatprep.subr.bf16.mxu0 0
  %8133 = vmatpush1.bf16.msra.mxu0 0
  %8134 = vmatprep.subr.bf16.mxu0 0
  %8135 = vmatpush1.bf16.msra.mxu0 0
  %8136 = vmatprep.subr.bf16.mxu0 0
  %8137 = vmatpush1.bf16.msra.mxu0 0
  %8138 = vmatprep.subr.bf16.mxu0 0
  %8139 = vmatpush1.bf16.msra.mxu0 0
  %8140 = vmatprep.subr.bf16.mxu0 0
  %8141 = vmatpush1.bf16.msra.mxu0 0
  %8142 = vmatprep.mubr.bf16.mxu0 0
  %8143 = vmatmul.mubr.bf16.gmra.mrb[0].mxu0 %v8105
  %v8144 = vpop.f32.mrb[0].mxu0
  %v8145 = vadd.f32 0.0, %v8144
  %v8146 = vpop.f32.mrb[0].mxu0
  %v8147 = vpop.f32.mrb[0].mxu0
  %v8148 = vpop.f32.mrb[0].mxu0
  %8149 = vdwg.mxu0
  %v8151 = vsel %vm460, %v264, 0
  %v8154 = vsel %vm464, %v7178, 0
  %8156 = vmatprep.subr.bf16.mxu0 0
  %8157 = vmatpush1.bf16.msra.mxu0 %v8154
  %8158 = vmatprep.subr.bf16.mxu0 0
  %8159 = vmatpush1.bf16.msra.mxu0 0
  %8160 = vmatprep.subr.bf16.mxu0 0
  %8161 = vmatpush1.bf16.msra.mxu0 0
  %8162 = vmatprep.subr.bf16.mxu0 0
  %8163 = vmatpush1.bf16.msra.mxu0 0
  %8164 = vmatprep.subr.bf16.mxu0 0
  %8165 = vmatpush1.bf16.msra.mxu0 0
  %8166 = vmatprep.subr.bf16.mxu0 0
  %8167 = vmatpush1.bf16.msra.mxu0 0
  %8168 = vmatprep.subr.bf16.mxu0 0
  %8169 = vmatpush1.bf16.msra.mxu0 0
  %8170 = vmatprep.subr.bf16.mxu0 0
  %8171 = vmatpush1.bf16.msra.mxu0 0
  %8172 = vmatprep.subr.bf16.mxu0 0
  %8173 = vmatpush1.bf16.msra.mxu0 0
  %8174 = vmatprep.subr.bf16.mxu0 0
  %8175 = vmatpush1.bf16.msra.mxu0 0
  %8176 = vmatprep.subr.bf16.mxu0 0
  %8177 = vmatpush1.bf16.msra.mxu0 0
  %8178 = vmatprep.subr.bf16.mxu0 0
  %8179 = vmatpush1.bf16.msra.mxu0 0
  %8180 = vmatprep.subr.bf16.mxu0 0
  %8181 = vmatpush1.bf16.msra.mxu0 0
  %8182 = vmatprep.subr.bf16.mxu0 0
  %8183 = vmatpush1.bf16.msra.mxu0 0
  %8184 = vmatprep.subr.bf16.mxu0 0
  %8185 = vmatpush1.bf16.msra.mxu0 0
  %8186 = vmatprep.subr.bf16.mxu0 0
  %8187 = vmatpush1.bf16.msra.mxu0 0
  %8188 = vmatprep.mubr.bf16.mxu0 0
  %8189 = vmatmul.mubr.bf16.gmra.mrb[0].mxu0 %v8151
  %v8190 = vpop.f32.mrb[0].mxu0
  %v8191 = vadd.f32 0.0, %v8190
  %v8192 = vpop.f32.mrb[0].mxu0
  %v8193 = vpop.f32.mrb[0].mxu0
  %v8194 = vpop.f32.mrb[0].mxu0
  %8195 = vdwg.mxu0
  %v8197 = vsel %vm460, %v265, 0
  %v8200 = vsel %vm464, %v7179, 0
  %8202 = vmatprep.subr.bf16.mxu0 0
  %8203 = vmatpush1.bf16.msra.mxu0 %v8200
  %8204 = vmatprep.subr.bf16.mxu0 0
  %8205 = vmatpush1.bf16.msra.mxu0 0
  %8206 = vmatprep.subr.bf16.mxu0 0
  %8207 = vmatpush1.bf16.msra.mxu0 0
  %8208 = vmatprep.subr.bf16.mxu0 0
  %8209 = vmatpush1.bf16.msra.mxu0 0
  %8210 = vmatprep.subr.bf16.mxu0 0
  %8211 = vmatpush1.bf16.msra.mxu0 0
  %8212 = vmatprep.subr.bf16.mxu0 0
  %8213 = vmatpush1.bf16.msra.mxu0 0
  %8214 = vmatprep.subr.bf16.mxu0 0
  %8215 = vmatpush1.bf16.msra.mxu0 0
  %8216 = vmatprep.subr.bf16.mxu0 0
  %8217 = vmatpush1.bf16.msra.mxu0 0
  %8218 = vmatprep.subr.bf16.mxu0 0
  %8219 = vmatpush1.bf16.msra.mxu0 0
  %8220 = vmatprep.subr.bf16.mxu0 0
  %8221 = vmatpush1.bf16.msra.mxu0 0
  %8222 = vmatprep.subr.bf16.mxu0 0
  %8223 = vmatpush1.bf16.msra.mxu0 0
  %8224 = vmatprep.subr.bf16.mxu0 0
  %8225 = vmatpush1.bf16.msra.mxu0 0
  %8226 = vmatprep.subr.bf16.mxu0 0
  %8227 = vmatpush1.bf16.msra.mxu0 0
  %8228 = vmatprep.subr.bf16.mxu0 0
  %8229 = vmatpush1.bf16.msra.mxu0 0
  %8230 = vmatprep.subr.bf16.mxu0 0
  %8231 = vmatpush1.bf16.msra.mxu0 0
  %8232 = vmatprep.subr.bf16.mxu0 0
  %8233 = vmatpush1.bf16.msra.mxu0 0
  %8234 = vmatprep.mubr.bf16.mxu0 0
  %8235 = vmatmul.mubr.bf16.gmra.mrb[0].mxu0 %v8197
  %v8236 = vpop.f32.mrb[0].mxu0
  %v8237 = vadd.f32 0.0, %v8236
  %v8238 = vpop.f32.mrb[0].mxu0
  %v8239 = vpop.f32.mrb[0].mxu0
  %v8240 = vpop.f32.mrb[0].mxu0
  %8241 = vdwg.mxu0
  %v8243 = vsel %vm460, %v266, 0
  %v8246 = vsel %vm464, %v7180, 0
  %8248 = vmatprep.subr.bf16.mxu0 0
  %8249 = vmatpush1.bf16.msra.mxu0 %v8246
  %8250 = vmatprep.subr.bf16.mxu0 0
  %8251 = vmatpush1.bf16.msra.mxu0 0
  %8252 = vmatprep.subr.bf16.mxu0 0
  %8253 = vmatpush1.bf16.msra.mxu0 0
  %8254 = vmatprep.subr.bf16.mxu0 0
  %8255 = vmatpush1.bf16.msra.mxu0 0
  %8256 = vmatprep.subr.bf16.mxu0 0
  %8257 = vmatpush1.bf16.msra.mxu0 0
  %8258 = vmatprep.subr.bf16.mxu0 0
  %8259 = vmatpush1.bf16.msra.mxu0 0
  %8260 = vmatprep.subr.bf16.mxu0 0
  %8261 = vmatpush1.bf16.msra.mxu0 0
  %8262 = vmatprep.subr.bf16.mxu0 0
  %8263 = vmatpush1.bf16.msra.mxu0 0
  %8264 = vmatprep.subr.bf16.mxu0 0
  %8265 = vmatpush1.bf16.msra.mxu0 0
  %8266 = vmatprep.subr.bf16.mxu0 0
  %8267 = vmatpush1.bf16.msra.mxu0 0
  %8268 = vmatprep.subr.bf16.mxu0 0
  %8269 = vmatpush1.bf16.msra.mxu0 0
  %8270 = vmatprep.subr.bf16.mxu0 0
  %8271 = vmatpush1.bf16.msra.mxu0 0
  %8272 = vmatprep.subr.bf16.mxu0 0
  %8273 = vmatpush1.bf16.msra.mxu0 0
  %8274 = vmatprep.subr.bf16.mxu0 0
  %8275 = vmatpush1.bf16.msra.mxu0 0
  %8276 = vmatprep.subr.bf16.mxu0 0
  %8277 = vmatpush1.bf16.msra.mxu0 0
  %8278 = vmatprep.subr.bf16.mxu0 0
  %8279 = vmatpush1.bf16.msra.mxu0 0
  %8280 = vmatprep.mubr.bf16.mxu0 0
  %8281 = vmatmul.mubr.bf16.gmra.mrb[0].mxu0 %v8243
  %v8282 = vpop.f32.mrb[0].mxu0
  %v8283 = vadd.f32 0.0, %v8282
  %v8284 = vpop.f32.mrb[0].mxu0
  %v8285 = vpop.f32.mrb[0].mxu0
  %v8286 = vpop.f32.mrb[0].mxu0
  %8287 = vdwg.mxu0
  %v8289 = vsel %vm460, %v267, 0
  %v8292 = vsel %vm464, %v7181, 0
  %8294 = vmatprep.subr.bf16.mxu0 0
  %8295 = vmatpush1.bf16.msra.mxu0 %v8292
  %8296 = vmatprep.subr.bf16.mxu0 0
  %8297 = vmatpush1.bf16.msra.mxu0 0
  %8298 = vmatprep.subr.bf16.mxu0 0
  %8299 = vmatpush1.bf16.msra.mxu0 0
  %8300 = vmatprep.subr.bf16.mxu0 0
  %8301 = vmatpush1.bf16.msra.mxu0 0
  %8302 = vmatprep.subr.bf16.mxu0 0
  %8303 = vmatpush1.bf16.msra.mxu0 0
  %8304 = vmatprep.subr.bf16.mxu0 0
  %8305 = vmatpush1.bf16.msra.mxu0 0
  %8306 = vmatprep.subr.bf16.mxu0 0
  %8307 = vmatpush1.bf16.msra.mxu0 0
  %8308 = vmatprep.subr.bf16.mxu0 0
  %8309 = vmatpush1.bf16.msra.mxu0 0
  %8310 = vmatprep.subr.bf16.mxu0 0
  %8311 = vmatpush1.bf16.msra.mxu0 0
  %8312 = vmatprep.subr.bf16.mxu0 0
  %8313 = vmatpush1.bf16.msra.mxu0 0
  %8314 = vmatprep.subr.bf16.mxu0 0
  %8315 = vmatpush1.bf16.msra.mxu0 0
  %8316 = vmatprep.subr.bf16.mxu0 0
  %8317 = vmatpush1.bf16.msra.mxu0 0
  %8318 = vmatprep.subr.bf16.mxu0 0
  %8319 = vmatpush1.bf16.msra.mxu0 0
  %8320 = vmatprep.subr.bf16.mxu0 0
  %8321 = vmatpush1.bf16.msra.mxu0 0
  %8322 = vmatprep.subr.bf16.mxu0 0
  %8323 = vmatpush1.bf16.msra.mxu0 0
  %8324 = vmatprep.subr.bf16.mxu0 0
  %8325 = vmatpush1.bf16.msra.mxu0 0
  %8326 = vmatprep.mubr.bf16.mxu0 0
  %8327 = vmatmul.mubr.bf16.gmra.mrb[0].mxu0 %v8289
  %v8328 = vpop.f32.mrb[0].mxu0
  %v8329 = vadd.f32 0.0, %v8328
  %v8330 = vpop.f32.mrb[0].mxu0
  %v8331 = vpop.f32.mrb[0].mxu0
  %v8332 = vpop.f32.mrb[0].mxu0
  %8333 = vdwg.mxu0
  %v8335 = vsel %vm460, %v268, 0
  %v8338 = vsel %vm464, %v7182, 0
  %8340 = vmatprep.subr.bf16.mxu0 0
  %8341 = vmatpush1.bf16.msra.mxu0 %v8338
  %8342 = vmatprep.subr.bf16.mxu0 0
  %8343 = vmatpush1.bf16.msra.mxu0 0
  %8344 = vmatprep.subr.bf16.mxu0 0
  %8345 = vmatpush1.bf16.msra.mxu0 0
  %8346 = vmatprep.subr.bf16.mxu0 0
  %8347 = vmatpush1.bf16.msra.mxu0 0
  %8348 = vmatprep.subr.bf16.mxu0 0
  %8349 = vmatpush1.bf16.msra.mxu0 0
  %8350 = vmatprep.subr.bf16.mxu0 0
  %8351 = vmatpush1.bf16.msra.mxu0 0
  %8352 = vmatprep.subr.bf16.mxu0 0
  %8353 = vmatpush1.bf16.msra.mxu0 0
  %8354 = vmatprep.subr.bf16.mxu0 0
  %8355 = vmatpush1.bf16.msra.mxu0 0
  %8356 = vmatprep.subr.bf16.mxu0 0
  %8357 = vmatpush1.bf16.msra.mxu0 0
  %8358 = vmatprep.subr.bf16.mxu0 0
  %8359 = vmatpush1.bf16.msra.mxu0 0
  %8360 = vmatprep.subr.bf16.mxu0 0
  %8361 = vmatpush1.bf16.msra.mxu0 0
  %8362 = vmatprep.subr.bf16.mxu0 0
  %8363 = vmatpush1.bf16.msra.mxu0 0
  %8364 = vmatprep.subr.bf16.mxu0 0
  %8365 = vmatpush1.bf16.msra.mxu0 0
  %8366 = vmatprep.subr.bf16.mxu0 0
  %8367 = vmatpush1.bf16.msra.mxu0 0
  %8368 = vmatprep.subr.bf16.mxu0 0
  %8369 = vmatpush1.bf16.msra.mxu0 0
  %8370 = vmatprep.subr.bf16.mxu0 0
  %8371 = vmatpush1.bf16.msra.mxu0 0
  %8372 = vmatprep.mubr.bf16.mxu0 0
  %8373 = vmatmul.mubr.bf16.gmra.mrb[0].mxu0 %v8335
  %v8374 = vpop.f32.mrb[0].mxu0
  %v8375 = vadd.f32 0.0, %v8374
  %v8376 = vpop.f32.mrb[0].mxu0
  %v8377 = vpop.f32.mrb[0].mxu0
  %v8378 = vpop.f32.mrb[0].mxu0
  %8379 = vdwg.mxu0
  %v8381 = vsel %vm460, %v269, 0
  %v8384 = vsel %vm464, %v7183, 0
  %8386 = vmatprep.subr.bf16.mxu0 0
  %8387 = vmatpush1.bf16.msra.mxu0 %v8384
  %8388 = vmatprep.subr.bf16.mxu0 0
  %8389 = vmatpush1.bf16.msra.mxu0 0
  %8390 = vmatprep.subr.bf16.mxu0 0
  %8391 = vmatpush1.bf16.msra.mxu0 0
  %8392 = vmatprep.subr.bf16.mxu0 0
  %8393 = vmatpush1.bf16.msra.mxu0 0
  %8394 = vmatprep.subr.bf16.mxu0 0
  %8395 = vmatpush1.bf16.msra.mxu0 0
  %8396 = vmatprep.subr.bf16.mxu0 0
  %8397 = vmatpush1.bf16.msra.mxu0 0
  %8398 = vmatprep.subr.bf16.mxu0 0
  %8399 = vmatpush1.bf16.msra.mxu0 0
  %8400 = vmatprep.subr.bf16.mxu0 0
  %8401 = vmatpush1.bf16.msra.mxu0 0
  %8402 = vmatprep.subr.bf16.mxu0 0
  %8403 = vmatpush1.bf16.msra.mxu0 0
  %8404 = vmatprep.subr.bf16.mxu0 0
  %8405 = vmatpush1.bf16.msra.mxu0 0
  %8406 = vmatprep.subr.bf16.mxu0 0
  %8407 = vmatpush1.bf16.msra.mxu0 0
  %8408 = vmatprep.subr.bf16.mxu0 0
  %8409 = vmatpush1.bf16.msra.mxu0 0
  %8410 = vmatprep.subr.bf16.mxu0 0
  %8411 = vmatpush1.bf16.msra.mxu0 0
  %8412 = vmatprep.subr.bf16.mxu0 0
  %8413 = vmatpush1.bf16.msra.mxu0 0
  %8414 = vmatprep.subr.bf16.mxu0 0
  %8415 = vmatpush1.bf16.msra.mxu0 0
  %8416 = vmatprep.subr.bf16.mxu0 0
  %8417 = vmatpush1.bf16.msra.mxu0 0
  %8418 = vmatprep.mubr.bf16.mxu0 0
  %8419 = vmatmul.mubr.bf16.gmra.mrb[0].mxu0 %v8381
  %v8420 = vpop.f32.mrb[0].mxu0
  %v8421 = vadd.f32 0.0, %v8420
  %v8422 = vpop.f32.mrb[0].mxu0
  %v8423 = vpop.f32.mrb[0].mxu0
  %v8424 = vpop.f32.mrb[0].mxu0
  %8425 = vdwg.mxu0
  %v8427 = vsel %vm460, %v270, 0
  %v8430 = vsel %vm464, %v7184, 0
  %8432 = vmatprep.subr.bf16.mxu0 0
  %8433 = vmatpush1.bf16.msra.mxu0 %v8430
  %8434 = vmatprep.subr.bf16.mxu0 0
  %8435 = vmatpush1.bf16.msra.mxu0 0
  %8436 = vmatprep.subr.bf16.mxu0 0
  %8437 = vmatpush1.bf16.msra.mxu0 0
  %8438 = vmatprep.subr.bf16.mxu0 0
  %8439 = vmatpush1.bf16.msra.mxu0 0
  %8440 = vmatprep.subr.bf16.mxu0 0
  %8441 = vmatpush1.bf16.msra.mxu0 0
  %8442 = vmatprep.subr.bf16.mxu0 0
  %8443 = vmatpush1.bf16.msra.mxu0 0
  %8444 = vmatprep.subr.bf16.mxu0 0
  %8445 = vmatpush1.bf16.msra.mxu0 0
  %8446 = vmatprep.subr.bf16.mxu0 0
  %8447 = vmatpush1.bf16.msra.mxu0 0
  %8448 = vmatprep.subr.bf16.mxu0 0
  %8449 = vmatpush1.bf16.msra.mxu0 0
  %8450 = vmatprep.subr.bf16.mxu0 0
  %8451 = vmatpush1.bf16.msra.mxu0 0
  %8452 = vmatprep.subr.bf16.mxu0 0
  %8453 = vmatpush1.bf16.msra.mxu0 0
  %8454 = vmatprep.subr.bf16.mxu0 0
  %8455 = vmatpush1.bf16.msra.mxu0 0
  %8456 = vmatprep.subr.bf16.mxu0 0
  %8457 = vmatpush1.bf16.msra.mxu0 0
  %8458 = vmatprep.subr.bf16.mxu0 0
  %8459 = vmatpush1.bf16.msra.mxu0 0
  %8460 = vmatprep.subr.bf16.mxu0 0
  %8461 = vmatpush1.bf16.msra.mxu0 0
  %8462 = vmatprep.subr.bf16.mxu0 0
  %8463 = vmatpush1.bf16.msra.mxu0 0
  %8464 = vmatprep.mubr.bf16.mxu0 0
  %8465 = vmatmul.mubr.bf16.gmra.mrb[0].mxu0 %v8427
  %v8466 = vpop.f32.mrb[0].mxu0
  %v8467 = vadd.f32 0.0, %v8466
  %v8468 = vpop.f32.mrb[0].mxu0
  %v8469 = vpop.f32.mrb[0].mxu0
  %v8470 = vpop.f32.mrb[0].mxu0
  %8471 = vdwg.mxu0
  %v8473 = vsel %vm460, %v271, 0
  %v8476 = vsel %vm464, %v7185, 0
  %8478 = vmatprep.subr.bf16.mxu0 0
  %8479 = vmatpush1.bf16.msra.mxu0 %v8476
  %8480 = vmatprep.subr.bf16.mxu0 0
  %8481 = vmatpush1.bf16.msra.mxu0 0
  %8482 = vmatprep.subr.bf16.mxu0 0
  %8483 = vmatpush1.bf16.msra.mxu0 0
  %8484 = vmatprep.subr.bf16.mxu0 0
  %8485 = vmatpush1.bf16.msra.mxu0 0
  %8486 = vmatprep.subr.bf16.mxu0 0
  %8487 = vmatpush1.bf16.msra.mxu0 0
  %8488 = vmatprep.subr.bf16.mxu0 0
  %8489 = vmatpush1.bf16.msra.mxu0 0
  %8490 = vmatprep.subr.bf16.mxu0 0
  %8491 = vmatpush1.bf16.msra.mxu0 0
  %8492 = vmatprep.subr.bf16.mxu0 0
  %8493 = vmatpush1.bf16.msra.mxu0 0
  %8494 = vmatprep.subr.bf16.mxu0 0
  %8495 = vmatpush1.bf16.msra.mxu0 0
  %8496 = vmatprep.subr.bf16.mxu0 0
  %8497 = vmatpush1.bf16.msra.mxu0 0
  %8498 = vmatprep.subr.bf16.mxu0 0
  %8499 = vmatpush1.bf16.msra.mxu0 0
  %8500 = vmatprep.subr.bf16.mxu0 0
  %8501 = vmatpush1.bf16.msra.mxu0 0
  %8502 = vmatprep.subr.bf16.mxu0 0
  %8503 = vmatpush1.bf16.msra.mxu0 0
  %8504 = vmatprep.subr.bf16.mxu0 0
  %8505 = vmatpush1.bf16.msra.mxu0 0
  %8506 = vmatprep.subr.bf16.mxu0 0
  %8507 = vmatpush1.bf16.msra.mxu0 0
  %8508 = vmatprep.subr.bf16.mxu0 0
  %8509 = vmatpush1.bf16.msra.mxu0 0
  %8510 = vmatprep.mubr.bf16.mxu0 0
  %8511 = vmatmul.mubr.bf16.gmra.mrb[0].mxu0 %v8473
  %v8512 = vpop.f32.mrb[0].mxu0
  %v8513 = vadd.f32 0.0, %v8512
  %v8514 = vpop.f32.mrb[0].mxu0
  %v8515 = vpop.f32.mrb[0].mxu0
  %v8516 = vpop.f32.mrb[0].mxu0
  %8517 = vdwg.mxu0
  %v8519 = vsel %vm460, %v272, 0
  %v8522 = vsel %vm464, %v7186, 0
  %8524 = vmatprep.subr.bf16.mxu0 0
  %8525 = vmatpush1.bf16.msra.mxu0 %v8522
  %8526 = vmatprep.subr.bf16.mxu0 0
  %8527 = vmatpush1.bf16.msra.mxu0 0
  %8528 = vmatprep.subr.bf16.mxu0 0
  %8529 = vmatpush1.bf16.msra.mxu0 0
  %8530 = vmatprep.subr.bf16.mxu0 0
  %8531 = vmatpush1.bf16.msra.mxu0 0
  %8532 = vmatprep.subr.bf16.mxu0 0
  %8533 = vmatpush1.bf16.msra.mxu0 0
  %8534 = vmatprep.subr.bf16.mxu0 0
  %8535 = vmatpush1.bf16.msra.mxu0 0
  %8536 = vmatprep.subr.bf16.mxu0 0
  %8537 = vmatpush1.bf16.msra.mxu0 0
  %8538 = vmatprep.subr.bf16.mxu0 0
  %8539 = vmatpush1.bf16.msra.mxu0 0
  %8540 = vmatprep.subr.bf16.mxu0 0
  %8541 = vmatpush1.bf16.msra.mxu0 0
  %8542 = vmatprep.subr.bf16.mxu0 0
  %8543 = vmatpush1.bf16.msra.mxu0 0
  %8544 = vmatprep.subr.bf16.mxu0 0
  %8545 = vmatpush1.bf16.msra.mxu0 0
  %8546 = vmatprep.subr.bf16.mxu0 0
  %8547 = vmatpush1.bf16.msra.mxu0 0
  %8548 = vmatprep.subr.bf16.mxu0 0
  %8549 = vmatpush1.bf16.msra.mxu0 0
  %8550 = vmatprep.subr.bf16.mxu0 0
  %8551 = vmatpush1.bf16.msra.mxu0 0
  %8552 = vmatprep.subr.bf16.mxu0 0
  %8553 = vmatpush1.bf16.msra.mxu0 0
  %8554 = vmatprep.subr.bf16.mxu0 0
  %8555 = vmatpush1.bf16.msra.mxu0 0
  %8556 = vmatprep.mubr.bf16.mxu0 0
  %8557 = vmatmul.mubr.bf16.gmra.mrb[0].mxu0 %v8519
  %v8558 = vpop.f32.mrb[0].mxu0
  %v8559 = vadd.f32 0.0, %v8558
  %v8560 = vpop.f32.mrb[0].mxu0
  %v8561 = vpop.f32.mrb[0].mxu0
  %v8562 = vpop.f32.mrb[0].mxu0
  %8563 = vdwg.mxu0
  %v8565 = vsel %vm460, %v273, 0
  %v8568 = vsel %vm464, %v7187, 0
  %8570 = vmatprep.subr.bf16.mxu0 0
  %8571 = vmatpush1.bf16.msra.mxu0 %v8568
  %8572 = vmatprep.subr.bf16.mxu0 0
  %8573 = vmatpush1.bf16.msra.mxu0 0
  %8574 = vmatprep.subr.bf16.mxu0 0
  %8575 = vmatpush1.bf16.msra.mxu0 0
  %8576 = vmatprep.subr.bf16.mxu0 0
  %8577 = vmatpush1.bf16.msra.mxu0 0
  %8578 = vmatprep.subr.bf16.mxu0 0
  %8579 = vmatpush1.bf16.msra.mxu0 0
  %8580 = vmatprep.subr.bf16.mxu0 0
  %8581 = vmatpush1.bf16.msra.mxu0 0
  %8582 = vmatprep.subr.bf16.mxu0 0
  %8583 = vmatpush1.bf16.msra.mxu0 0
  %8584 = vmatprep.subr.bf16.mxu0 0
  %8585 = vmatpush1.bf16.msra.mxu0 0
  %8586 = vmatprep.subr.bf16.mxu0 0
  %8587 = vmatpush1.bf16.msra.mxu0 0
  %8588 = vmatprep.subr.bf16.mxu0 0
  %8589 = vmatpush1.bf16.msra.mxu0 0
  %8590 = vmatprep.subr.bf16.mxu0 0
  %8591 = vmatpush1.bf16.msra.mxu0 0
  %8592 = vmatprep.subr.bf16.mxu0 0
  %8593 = vmatpush1.bf16.msra.mxu0 0
  %8594 = vmatprep.subr.bf16.mxu0 0
  %8595 = vmatpush1.bf16.msra.mxu0 0
  %8596 = vmatprep.subr.bf16.mxu0 0
  %8597 = vmatpush1.bf16.msra.mxu0 0
  %8598 = vmatprep.subr.bf16.mxu0 0
  %8599 = vmatpush1.bf16.msra.mxu0 0
  %8600 = vmatprep.subr.bf16.mxu0 0
  %8601 = vmatpush1.bf16.msra.mxu0 0
  %8602 = vmatprep.mubr.bf16.mxu0 0
  %8603 = vmatmul.mubr.bf16.gmra.mrb[0].mxu0 %v8565
  %v8604 = vpop.f32.mrb[0].mxu0
  %v8605 = vadd.f32 0.0, %v8604
  %v8606 = vpop.f32.mrb[0].mxu0
  %v8607 = vpop.f32.mrb[0].mxu0
  %v8608 = vpop.f32.mrb[0].mxu0
  %8609 = vdwg.mxu0
  %v8611 = vsel %vm460, %v274, 0
  %v8614 = vsel %vm464, %v7188, 0
  %8616 = vmatprep.subr.bf16.mxu0 0
  %8617 = vmatpush1.bf16.msra.mxu0 %v8614
  %8618 = vmatprep.subr.bf16.mxu0 0
  %8619 = vmatpush1.bf16.msra.mxu0 0
  %8620 = vmatprep.subr.bf16.mxu0 0
  %8621 = vmatpush1.bf16.msra.mxu0 0
  %8622 = vmatprep.subr.bf16.mxu0 0
  %8623 = vmatpush1.bf16.msra.mxu0 0
  %8624 = vmatprep.subr.bf16.mxu0 0
  %8625 = vmatpush1.bf16.msra.mxu0 0
  %8626 = vmatprep.subr.bf16.mxu0 0
  %8627 = vmatpush1.bf16.msra.mxu0 0
  %8628 = vmatprep.subr.bf16.mxu0 0
  %8629 = vmatpush1.bf16.msra.mxu0 0
  %8630 = vmatprep.subr.bf16.mxu0 0
  %8631 = vmatpush1.bf16.msra.mxu0 0
  %8632 = vmatprep.subr.bf16.mxu0 0
  %8633 = vmatpush1.bf16.msra.mxu0 0
  %8634 = vmatprep.subr.bf16.mxu0 0
  %8635 = vmatpush1.bf16.msra.mxu0 0
  %8636 = vmatprep.subr.bf16.mxu0 0
  %8637 = vmatpush1.bf16.msra.mxu0 0
  %8638 = vmatprep.subr.bf16.mxu0 0
  %8639 = vmatpush1.bf16.msra.mxu0 0
  %8640 = vmatprep.subr.bf16.mxu0 0
  %8641 = vmatpush1.bf16.msra.mxu0 0
  %8642 = vmatprep.subr.bf16.mxu0 0
  %8643 = vmatpush1.bf16.msra.mxu0 0
  %8644 = vmatprep.subr.bf16.mxu0 0
  %8645 = vmatpush1.bf16.msra.mxu0 0
  %8646 = vmatprep.subr.bf16.mxu0 0
  %8647 = vmatpush1.bf16.msra.mxu0 0
  %8648 = vmatprep.mubr.bf16.mxu0 0
  %8649 = vmatmul.mubr.bf16.gmra.mrb[0].mxu0 %v8611
  %v8650 = vpop.f32.mrb[0].mxu0
  %v8651 = vadd.f32 0.0, %v8650
  %v8652 = vpop.f32.mrb[0].mxu0
  %v8653 = vpop.f32.mrb[0].mxu0
  %v8654 = vpop.f32.mrb[0].mxu0
  %8655 = vdwg.mxu0
  %v8657 = vsel %vm460, %v275, 0
  %v8660 = vsel %vm464, %v7189, 0
  %8662 = vmatprep.subr.bf16.mxu0 0
  %8663 = vmatpush1.bf16.msra.mxu0 %v8660
  %8664 = vmatprep.subr.bf16.mxu0 0
  %8665 = vmatpush1.bf16.msra.mxu0 0
  %8666 = vmatprep.subr.bf16.mxu0 0
  %8667 = vmatpush1.bf16.msra.mxu0 0
  %8668 = vmatprep.subr.bf16.mxu0 0
  %8669 = vmatpush1.bf16.msra.mxu0 0
  %8670 = vmatprep.subr.bf16.mxu0 0
  %8671 = vmatpush1.bf16.msra.mxu0 0
  %8672 = vmatprep.subr.bf16.mxu0 0
  %8673 = vmatpush1.bf16.msra.mxu0 0
  %8674 = vmatprep.subr.bf16.mxu0 0
  %8675 = vmatpush1.bf16.msra.mxu0 0
  %8676 = vmatprep.subr.bf16.mxu0 0
  %8677 = vmatpush1.bf16.msra.mxu0 0
  %8678 = vmatprep.subr.bf16.mxu0 0
  %8679 = vmatpush1.bf16.msra.mxu0 0
  %8680 = vmatprep.subr.bf16.mxu0 0
  %8681 = vmatpush1.bf16.msra.mxu0 0
  %8682 = vmatprep.subr.bf16.mxu0 0
  %8683 = vmatpush1.bf16.msra.mxu0 0
  %8684 = vmatprep.subr.bf16.mxu0 0
  %8685 = vmatpush1.bf16.msra.mxu0 0
  %8686 = vmatprep.subr.bf16.mxu0 0
  %8687 = vmatpush1.bf16.msra.mxu0 0
  %8688 = vmatprep.subr.bf16.mxu0 0
  %8689 = vmatpush1.bf16.msra.mxu0 0
  %8690 = vmatprep.subr.bf16.mxu0 0
  %8691 = vmatpush1.bf16.msra.mxu0 0
  %8692 = vmatprep.subr.bf16.mxu0 0
  %8693 = vmatpush1.bf16.msra.mxu0 0
  %8694 = vmatprep.mubr.bf16.mxu0 0
  %8695 = vmatmul.mubr.bf16.gmra.mrb[0].mxu0 %v8657
  %v8696 = vpop.f32.mrb[0].mxu0
  %v8697 = vadd.f32 0.0, %v8696
  %v8698 = vpop.f32.mrb[0].mxu0
  %v8699 = vpop.f32.mrb[0].mxu0
  %v8700 = vpop.f32.mrb[0].mxu0
  %8701 = vdwg.mxu0
  %v8703 = vsel %vm460, %v276, 0
  %v8706 = vsel %vm464, %v7190, 0
  %8708 = vmatprep.subr.bf16.mxu0 0
  %8709 = vmatpush1.bf16.msra.mxu0 %v8706
  %8710 = vmatprep.subr.bf16.mxu0 0
  %8711 = vmatpush1.bf16.msra.mxu0 0
  %8712 = vmatprep.subr.bf16.mxu0 0
  %8713 = vmatpush1.bf16.msra.mxu0 0
  %8714 = vmatprep.subr.bf16.mxu0 0
  %8715 = vmatpush1.bf16.msra.mxu0 0
  %8716 = vmatprep.subr.bf16.mxu0 0
  %8717 = vmatpush1.bf16.msra.mxu0 0
  %8718 = vmatprep.subr.bf16.mxu0 0
  %8719 = vmatpush1.bf16.msra.mxu0 0
  %8720 = vmatprep.subr.bf16.mxu0 0
  %8721 = vmatpush1.bf16.msra.mxu0 0
  %8722 = vmatprep.subr.bf16.mxu0 0
  %8723 = vmatpush1.bf16.msra.mxu0 0
  %8724 = vmatprep.subr.bf16.mxu0 0
  %8725 = vmatpush1.bf16.msra.mxu0 0
  %8726 = vmatprep.subr.bf16.mxu0 0
  %8727 = vmatpush1.bf16.msra.mxu0 0
  %8728 = vmatprep.subr.bf16.mxu0 0
  %8729 = vmatpush1.bf16.msra.mxu0 0
  %8730 = vmatprep.subr.bf16.mxu0 0
  %8731 = vmatpush1.bf16.msra.mxu0 0
  %8732 = vmatprep.subr.bf16.mxu0 0
  %8733 = vmatpush1.bf16.msra.mxu0 0
  %8734 = vmatprep.subr.bf16.mxu0 0
  %8735 = vmatpush1.bf16.msra.mxu0 0
  %8736 = vmatprep.subr.bf16.mxu0 0
  %8737 = vmatpush1.bf16.msra.mxu0 0
  %8738 = vmatprep.subr.bf16.mxu0 0
  %8739 = vmatpush1.bf16.msra.mxu0 0
  %8740 = vmatprep.mubr.bf16.mxu0 0
  %8741 = vmatmul.mubr.bf16.gmra.mrb[0].mxu0 %v8703
  %v8742 = vpop.f32.mrb[0].mxu0
  %v8743 = vadd.f32 0.0, %v8742
  %v8744 = vpop.f32.mrb[0].mxu0
  %v8745 = vpop.f32.mrb[0].mxu0
  %v8746 = vpop.f32.mrb[0].mxu0
  %8747 = vdwg.mxu0
  %v8749 = vsel %vm460, %v277, 0
  %v8752 = vsel %vm464, %v7191, 0
  %8754 = vmatprep.subr.bf16.mxu0 0
  %8755 = vmatpush1.bf16.msra.mxu0 %v8752
  %8756 = vmatprep.subr.bf16.mxu0 0
  %8757 = vmatpush1.bf16.msra.mxu0 0
  %8758 = vmatprep.subr.bf16.mxu0 0
  %8759 = vmatpush1.bf16.msra.mxu0 0
  %8760 = vmatprep.subr.bf16.mxu0 0
  %8761 = vmatpush1.bf16.msra.mxu0 0
  %8762 = vmatprep.subr.bf16.mxu0 0
  %8763 = vmatpush1.bf16.msra.mxu0 0
  %8764 = vmatprep.subr.bf16.mxu0 0
  %8765 = vmatpush1.bf16.msra.mxu0 0
  %8766 = vmatprep.subr.bf16.mxu0 0
  %8767 = vmatpush1.bf16.msra.mxu0 0
  %8768 = vmatprep.subr.bf16.mxu0 0
  %8769 = vmatpush1.bf16.msra.mxu0 0
  %8770 = vmatprep.subr.bf16.mxu0 0
  %8771 = vmatpush1.bf16.msra.mxu0 0
  %8772 = vmatprep.subr.bf16.mxu0 0
  %8773 = vmatpush1.bf16.msra.mxu0 0
  %8774 = vmatprep.subr.bf16.mxu0 0
  %8775 = vmatpush1.bf16.msra.mxu0 0
  %8776 = vmatprep.subr.bf16.mxu0 0
  %8777 = vmatpush1.bf16.msra.mxu0 0
  %8778 = vmatprep.subr.bf16.mxu0 0
  %8779 = vmatpush1.bf16.msra.mxu0 0
  %8780 = vmatprep.subr.bf16.mxu0 0
  %8781 = vmatpush1.bf16.msra.mxu0 0
  %8782 = vmatprep.subr.bf16.mxu0 0
  %8783 = vmatpush1.bf16.msra.mxu0 0
  %8784 = vmatprep.subr.bf16.mxu0 0
  %8785 = vmatpush1.bf16.msra.mxu0 0
  %8786 = vmatprep.mubr.bf16.mxu0 0
  %8787 = vmatmul.mubr.bf16.gmra.mrb[0].mxu0 %v8749
  %v8788 = vpop.f32.mrb[0].mxu0
  %v8789 = vadd.f32 0.0, %v8788
  %v8790 = vpop.f32.mrb[0].mxu0
  %v8791 = vpop.f32.mrb[0].mxu0
  %v8792 = vpop.f32.mrb[0].mxu0
  %8793 = vdwg.mxu0
  %v8795 = vsel %vm460, %v278, 0
  %v8798 = vsel %vm464, %v7192, 0
  %8800 = vmatprep.subr.bf16.mxu0 0
  %8801 = vmatpush1.bf16.msra.mxu0 %v8798
  %8802 = vmatprep.subr.bf16.mxu0 0
  %8803 = vmatpush1.bf16.msra.mxu0 0
  %8804 = vmatprep.subr.bf16.mxu0 0
  %8805 = vmatpush1.bf16.msra.mxu0 0
  %8806 = vmatprep.subr.bf16.mxu0 0
  %8807 = vmatpush1.bf16.msra.mxu0 0
  %8808 = vmatprep.subr.bf16.mxu0 0
  %8809 = vmatpush1.bf16.msra.mxu0 0
  %8810 = vmatprep.subr.bf16.mxu0 0
  %8811 = vmatpush1.bf16.msra.mxu0 0
  %8812 = vmatprep.subr.bf16.mxu0 0
  %8813 = vmatpush1.bf16.msra.mxu0 0
  %8814 = vmatprep.subr.bf16.mxu0 0
  %8815 = vmatpush1.bf16.msra.mxu0 0
  %8816 = vmatprep.subr.bf16.mxu0 0
  %8817 = vmatpush1.bf16.msra.mxu0 0
  %8818 = vmatprep.subr.bf16.mxu0 0
  %8819 = vmatpush1.bf16.msra.mxu0 0
  %8820 = vmatprep.subr.bf16.mxu0 0
  %8821 = vmatpush1.bf16.msra.mxu0 0
  %8822 = vmatprep.subr.bf16.mxu0 0
  %8823 = vmatpush1.bf16.msra.mxu0 0
  %8824 = vmatprep.subr.bf16.mxu0 0
  %8825 = vmatpush1.bf16.msra.mxu0 0
  %8826 = vmatprep.subr.bf16.mxu0 0
  %8827 = vmatpush1.bf16.msra.mxu0 0
  %8828 = vmatprep.subr.bf16.mxu0 0
  %8829 = vmatpush1.bf16.msra.mxu0 0
  %8830 = vmatprep.subr.bf16.mxu0 0
  %8831 = vmatpush1.bf16.msra.mxu0 0
  %8832 = vmatprep.mubr.bf16.mxu0 0
  %8833 = vmatmul.mubr.bf16.gmra.mrb[0].mxu0 %v8795
  %v8834 = vpop.f32.mrb[0].mxu0
  %v8835 = vadd.f32 0.0, %v8834
  %v8836 = vpop.f32.mrb[0].mxu0
  %v8837 = vpop.f32.mrb[0].mxu0
  %v8838 = vpop.f32.mrb[0].mxu0
  %8839 = vdwg.mxu0
  %v8841 = vsel %vm460, %v279, 0
  %v8844 = vsel %vm464, %v7193, 0
  %8846 = vmatprep.subr.bf16.mxu0 0
  %8847 = vmatpush1.bf16.msra.mxu0 %v8844
  %8848 = vmatprep.subr.bf16.mxu0 0
  %8849 = vmatpush1.bf16.msra.mxu0 0
  %8850 = vmatprep.subr.bf16.mxu0 0
  %8851 = vmatpush1.bf16.msra.mxu0 0
  %8852 = vmatprep.subr.bf16.mxu0 0
  %8853 = vmatpush1.bf16.msra.mxu0 0
  %8854 = vmatprep.subr.bf16.mxu0 0
  %8855 = vmatpush1.bf16.msra.mxu0 0
  %8856 = vmatprep.subr.bf16.mxu0 0
  %8857 = vmatpush1.bf16.msra.mxu0 0
  %8858 = vmatprep.subr.bf16.mxu0 0
  %8859 = vmatpush1.bf16.msra.mxu0 0
  %8860 = vmatprep.subr.bf16.mxu0 0
  %8861 = vmatpush1.bf16.msra.mxu0 0
  %8862 = vmatprep.subr.bf16.mxu0 0
  %8863 = vmatpush1.bf16.msra.mxu0 0
  %8864 = vmatprep.subr.bf16.mxu0 0
  %8865 = vmatpush1.bf16.msra.mxu0 0
  %8866 = vmatprep.subr.bf16.mxu0 0
  %8867 = vmatpush1.bf16.msra.mxu0 0
  %8868 = vmatprep.subr.bf16.mxu0 0
  %8869 = vmatpush1.bf16.msra.mxu0 0
  %8870 = vmatprep.subr.bf16.mxu0 0
  %8871 = vmatpush1.bf16.msra.mxu0 0
  %8872 = vmatprep.subr.bf16.mxu0 0
  %8873 = vmatpush1.bf16.msra.mxu0 0
  %8874 = vmatprep.subr.bf16.mxu0 0
  %8875 = vmatpush1.bf16.msra.mxu0 0
  %8876 = vmatprep.subr.bf16.mxu0 0
  %8877 = vmatpush1.bf16.msra.mxu0 0
  %8878 = vmatprep.mubr.bf16.mxu0 0
  %8879 = vmatmul.mubr.bf16.gmra.mrb[0].mxu0 %v8841
  %v8880 = vpop.f32.mrb[0].mxu0
  %v8881 = vadd.f32 0.0, %v8880
  %v8882 = vpop.f32.mrb[0].mxu0
  %v8883 = vpop.f32.mrb[0].mxu0
  %v8884 = vpop.f32.mrb[0].mxu0
  %8885 = vdwg.mxu0
  %v8887 = vsel %vm460, %v280, 0
  %v8890 = vsel %vm464, %v7194, 0
  %8892 = vmatprep.subr.bf16.mxu0 0
  %8893 = vmatpush1.bf16.msra.mxu0 %v8890
  %8894 = vmatprep.subr.bf16.mxu0 0
  %8895 = vmatpush1.bf16.msra.mxu0 0
  %8896 = vmatprep.subr.bf16.mxu0 0
  %8897 = vmatpush1.bf16.msra.mxu0 0
  %8898 = vmatprep.subr.bf16.mxu0 0
  %8899 = vmatpush1.bf16.msra.mxu0 0
  %8900 = vmatprep.subr.bf16.mxu0 0
  %8901 = vmatpush1.bf16.msra.mxu0 0
  %8902 = vmatprep.subr.bf16.mxu0 0
  %8903 = vmatpush1.bf16.msra.mxu0 0
  %8904 = vmatprep.subr.bf16.mxu0 0
  %8905 = vmatpush1.bf16.msra.mxu0 0
  %8906 = vmatprep.subr.bf16.mxu0 0
  %8907 = vmatpush1.bf16.msra.mxu0 0
  %8908 = vmatprep.subr.bf16.mxu0 0
  %8909 = vmatpush1.bf16.msra.mxu0 0
  %8910 = vmatprep.subr.bf16.mxu0 0
  %8911 = vmatpush1.bf16.msra.mxu0 0
  %8912 = vmatprep.subr.bf16.mxu0 0
  %8913 = vmatpush1.bf16.msra.mxu0 0
  %8914 = vmatprep.subr.bf16.mxu0 0
  %8915 = vmatpush1.bf16.msra.mxu0 0
  %8916 = vmatprep.subr.bf16.mxu0 0
  %8917 = vmatpush1.bf16.msra.mxu0 0
  %8918 = vmatprep.subr.bf16.mxu0 0
  %8919 = vmatpush1.bf16.msra.mxu0 0
  %8920 = vmatprep.subr.bf16.mxu0 0
  %8921 = vmatpush1.bf16.msra.mxu0 0
  %8922 = vmatprep.subr.bf16.mxu0 0
  %8923 = vmatpush1.bf16.msra.mxu0 0
  %8924 = vmatprep.mubr.bf16.mxu0 0
  %8925 = vmatmul.mubr.bf16.gmra.mrb[0].mxu0 %v8887
  %v8926 = vpop.f32.mrb[0].mxu0
  %v8927 = vadd.f32 0.0, %v8926
  %v8928 = vpop.f32.mrb[0].mxu0
  %v8929 = vpop.f32.mrb[0].mxu0
  %v8930 = vpop.f32.mrb[0].mxu0
  %8931 = vdwg.mxu0
  %v8933 = vsel %vm460, %v281, 0
  %v8936 = vsel %vm464, %v7195, 0
  %8938 = vmatprep.subr.bf16.mxu0 0
  %8939 = vmatpush1.bf16.msra.mxu0 %v8936
  %8940 = vmatprep.subr.bf16.mxu0 0
  %8941 = vmatpush1.bf16.msra.mxu0 0
  %8942 = vmatprep.subr.bf16.mxu0 0
  %8943 = vmatpush1.bf16.msra.mxu0 0
  %8944 = vmatprep.subr.bf16.mxu0 0
  %8945 = vmatpush1.bf16.msra.mxu0 0
  %8946 = vmatprep.subr.bf16.mxu0 0
  %8947 = vmatpush1.bf16.msra.mxu0 0
  %8948 = vmatprep.subr.bf16.mxu0 0
  %8949 = vmatpush1.bf16.msra.mxu0 0
  %8950 = vmatprep.subr.bf16.mxu0 0
  %8951 = vmatpush1.bf16.msra.mxu0 0
  %8952 = vmatprep.subr.bf16.mxu0 0
  %8953 = vmatpush1.bf16.msra.mxu0 0
  %8954 = vmatprep.subr.bf16.mxu0 0
  %8955 = vmatpush1.bf16.msra.mxu0 0
  %8956 = vmatprep.subr.bf16.mxu0 0
  %8957 = vmatpush1.bf16.msra.mxu0 0
  %8958 = vmatprep.subr.bf16.mxu0 0
  %8959 = vmatpush1.bf16.msra.mxu0 0
  %8960 = vmatprep.subr.bf16.mxu0 0
  %8961 = vmatpush1.bf16.msra.mxu0 0
  %8962 = vmatprep.subr.bf16.mxu0 0
  %8963 = vmatpush1.bf16.msra.mxu0 0
  %8964 = vmatprep.subr.bf16.mxu0 0
  %8965 = vmatpush1.bf16.msra.mxu0 0
  %8966 = vmatprep.subr.bf16.mxu0 0
  %8967 = vmatpush1.bf16.msra.mxu0 0
  %8968 = vmatprep.subr.bf16.mxu0 0
  %8969 = vmatpush1.bf16.msra.mxu0 0
  %8970 = vmatprep.mubr.bf16.mxu0 0
  %8971 = vmatmul.mubr.bf16.gmra.mrb[0].mxu0 %v8933
  %v8972 = vpop.f32.mrb[0].mxu0
  %v8973 = vadd.f32 0.0, %v8972
  %v8974 = vpop.f32.mrb[0].mxu0
  %v8975 = vpop.f32.mrb[0].mxu0
  %v8976 = vpop.f32.mrb[0].mxu0
  %8977 = vdwg.mxu0
  %v8979 = vsel %vm460, %v282, 0
  %v8982 = vsel %vm464, %v7196, 0
  %8984 = vmatprep.subr.bf16.mxu0 0
  %8985 = vmatpush1.bf16.msra.mxu0 %v8982
  %8986 = vmatprep.subr.bf16.mxu0 0
  %8987 = vmatpush1.bf16.msra.mxu0 0
  %8988 = vmatprep.subr.bf16.mxu0 0
  %8989 = vmatpush1.bf16.msra.mxu0 0
  %8990 = vmatprep.subr.bf16.mxu0 0
  %8991 = vmatpush1.bf16.msra.mxu0 0
  %8992 = vmatprep.subr.bf16.mxu0 0
  %8993 = vmatpush1.bf16.msra.mxu0 0
  %8994 = vmatprep.subr.bf16.mxu0 0
  %8995 = vmatpush1.bf16.msra.mxu0 0
  %8996 = vmatprep.subr.bf16.mxu0 0
  %8997 = vmatpush1.bf16.msra.mxu0 0
  %8998 = vmatprep.subr.bf16.mxu0 0
  %8999 = vmatpush1.bf16.msra.mxu0 0
  %9000 = vmatprep.subr.bf16.mxu0 0
  %9001 = vmatpush1.bf16.msra.mxu0 0
  %9002 = vmatprep.subr.bf16.mxu0 0
  %9003 = vmatpush1.bf16.msra.mxu0 0
  %9004 = vmatprep.subr.bf16.mxu0 0
  %9005 = vmatpush1.bf16.msra.mxu0 0
  %9006 = vmatprep.subr.bf16.mxu0 0
  %9007 = vmatpush1.bf16.msra.mxu0 0
  %9008 = vmatprep.subr.bf16.mxu0 0
  %9009 = vmatpush1.bf16.msra.mxu0 0
  %9010 = vmatprep.subr.bf16.mxu0 0
  %9011 = vmatpush1.bf16.msra.mxu0 0
  %9012 = vmatprep.subr.bf16.mxu0 0
  %9013 = vmatpush1.bf16.msra.mxu0 0
  %9014 = vmatprep.subr.bf16.mxu0 0
  %9015 = vmatpush1.bf16.msra.mxu0 0
  %9016 = vmatprep.mubr.bf16.mxu0 0
  %9017 = vmatmul.mubr.bf16.gmra.mrb[0].mxu0 %v8979
  %v9018 = vpop.f32.mrb[0].mxu0
  %v9019 = vadd.f32 0.0, %v9018
  %v9020 = vpop.f32.mrb[0].mxu0
  %v9021 = vpop.f32.mrb[0].mxu0
  %v9022 = vpop.f32.mrb[0].mxu0
  %9023 = vdwg.mxu0
  %v9025 = vsel %vm460, %v283, 0
  %v9028 = vsel %vm464, %v7197, 0
  %9030 = vmatprep.subr.bf16.mxu0 0
  %9031 = vmatpush1.bf16.msra.mxu0 %v9028
  %9032 = vmatprep.subr.bf16.mxu0 0
  %9033 = vmatpush1.bf16.msra.mxu0 0
  %9034 = vmatprep.subr.bf16.mxu0 0
  %9035 = vmatpush1.bf16.msra.mxu0 0
  %9036 = vmatprep.subr.bf16.mxu0 0
  %9037 = vmatpush1.bf16.msra.mxu0 0
  %9038 = vmatprep.subr.bf16.mxu0 0
  %9039 = vmatpush1.bf16.msra.mxu0 0
  %9040 = vmatprep.subr.bf16.mxu0 0
  %9041 = vmatpush1.bf16.msra.mxu0 0
  %9042 = vmatprep.subr.bf16.mxu0 0
  %9043 = vmatpush1.bf16.msra.mxu0 0
  %9044 = vmatprep.subr.bf16.mxu0 0
  %9045 = vmatpush1.bf16.msra.mxu0 0
  %9046 = vmatprep.subr.bf16.mxu0 0
  %9047 = vmatpush1.bf16.msra.mxu0 0
  %9048 = vmatprep.subr.bf16.mxu0 0
  %9049 = vmatpush1.bf16.msra.mxu0 0
  %9050 = vmatprep.subr.bf16.mxu0 0
  %9051 = vmatpush1.bf16.msra.mxu0 0
  %9052 = vmatprep.subr.bf16.mxu0 0
  %9053 = vmatpush1.bf16.msra.mxu0 0
  %9054 = vmatprep.subr.bf16.mxu0 0
  %9055 = vmatpush1.bf16.msra.mxu0 0
  %9056 = vmatprep.subr.bf16.mxu0 0
  %9057 = vmatpush1.bf16.msra.mxu0 0
  %9058 = vmatprep.subr.bf16.mxu0 0
  %9059 = vmatpush1.bf16.msra.mxu0 0
  %9060 = vmatprep.subr.bf16.mxu0 0
  %9061 = vmatpush1.bf16.msra.mxu0 0
  %9062 = vmatprep.mubr.bf16.mxu0 0
  %9063 = vmatmul.mubr.bf16.gmra.mrb[0].mxu0 %v9025
  %v9064 = vpop.f32.mrb[0].mxu0
  %v9065 = vadd.f32 0.0, %v9064
  %v9066 = vpop.f32.mrb[0].mxu0
  %v9067 = vpop.f32.mrb[0].mxu0
  %v9068 = vpop.f32.mrb[0].mxu0
  %9069 = vdwg.mxu0
  %v9071 = vsel %vm460, %v284, 0
  %v9074 = vsel %vm464, %v7198, 0
  %9076 = vmatprep.subr.bf16.mxu0 0
  %9077 = vmatpush1.bf16.msra.mxu0 %v9074
  %9078 = vmatprep.subr.bf16.mxu0 0
  %9079 = vmatpush1.bf16.msra.mxu0 0
  %9080 = vmatprep.subr.bf16.mxu0 0
  %9081 = vmatpush1.bf16.msra.mxu0 0
  %9082 = vmatprep.subr.bf16.mxu0 0
  %9083 = vmatpush1.bf16.msra.mxu0 0
  %9084 = vmatprep.subr.bf16.mxu0 0
  %9085 = vmatpush1.bf16.msra.mxu0 0
  %9086 = vmatprep.subr.bf16.mxu0 0
  %9087 = vmatpush1.bf16.msra.mxu0 0
  %9088 = vmatprep.subr.bf16.mxu0 0
  %9089 = vmatpush1.bf16.msra.mxu0 0
  %9090 = vmatprep.subr.bf16.mxu0 0
  %9091 = vmatpush1.bf16.msra.mxu0 0
  %9092 = vmatprep.subr.bf16.mxu0 0
  %9093 = vmatpush1.bf16.msra.mxu0 0
  %9094 = vmatprep.subr.bf16.mxu0 0
  %9095 = vmatpush1.bf16.msra.mxu0 0
  %9096 = vmatprep.subr.bf16.mxu0 0
  %9097 = vmatpush1.bf16.msra.mxu0 0
  %9098 = vmatprep.subr.bf16.mxu0 0
  %9099 = vmatpush1.bf16.msra.mxu0 0
  %9100 = vmatprep.subr.bf16.mxu0 0
  %9101 = vmatpush1.bf16.msra.mxu0 0
  %9102 = vmatprep.subr.bf16.mxu0 0
  %9103 = vmatpush1.bf16.msra.mxu0 0
  %9104 = vmatprep.subr.bf16.mxu0 0
  %9105 = vmatpush1.bf16.msra.mxu0 0
  %9106 = vmatprep.subr.bf16.mxu0 0
  %9107 = vmatpush1.bf16.msra.mxu0 0
  %9108 = vmatprep.mubr.bf16.mxu0 0
  %9109 = vmatmul.mubr.bf16.gmra.mrb[0].mxu0 %v9071
  %v9110 = vpop.f32.mrb[0].mxu0
  %v9111 = vadd.f32 0.0, %v9110
  %v9112 = vpop.f32.mrb[0].mxu0
  %v9113 = vpop.f32.mrb[0].mxu0
  %v9114 = vpop.f32.mrb[0].mxu0
  %9115 = vdwg.mxu0
  %v9117 = vsel %vm460, %v285, 0
  %v9120 = vsel %vm464, %v7199, 0
  %9122 = vmatprep.subr.bf16.mxu0 0
  %9123 = vmatpush1.bf16.msra.mxu0 %v9120
  %9124 = vmatprep.subr.bf16.mxu0 0
  %9125 = vmatpush1.bf16.msra.mxu0 0
  %9126 = vmatprep.subr.bf16.mxu0 0
  %9127 = vmatpush1.bf16.msra.mxu0 0
  %9128 = vmatprep.subr.bf16.mxu0 0
  %9129 = vmatpush1.bf16.msra.mxu0 0
  %9130 = vmatprep.subr.bf16.mxu0 0
  %9131 = vmatpush1.bf16.msra.mxu0 0
  %9132 = vmatprep.subr.bf16.mxu0 0
  %9133 = vmatpush1.bf16.msra.mxu0 0
  %9134 = vmatprep.subr.bf16.mxu0 0
  %9135 = vmatpush1.bf16.msra.mxu0 0
  %9136 = vmatprep.subr.bf16.mxu0 0
  %9137 = vmatpush1.bf16.msra.mxu0 0
  %9138 = vmatprep.subr.bf16.mxu0 0
  %9139 = vmatpush1.bf16.msra.mxu0 0
  %9140 = vmatprep.subr.bf16.mxu0 0
  %9141 = vmatpush1.bf16.msra.mxu0 0
  %9142 = vmatprep.subr.bf16.mxu0 0
  %9143 = vmatpush1.bf16.msra.mxu0 0
  %9144 = vmatprep.subr.bf16.mxu0 0
  %9145 = vmatpush1.bf16.msra.mxu0 0
  %9146 = vmatprep.subr.bf16.mxu0 0
  %9147 = vmatpush1.bf16.msra.mxu0 0
  %9148 = vmatprep.subr.bf16.mxu0 0
  %9149 = vmatpush1.bf16.msra.mxu0 0
  %9150 = vmatprep.subr.bf16.mxu0 0
  %9151 = vmatpush1.bf16.msra.mxu0 0
  %9152 = vmatprep.subr.bf16.mxu0 0
  %9153 = vmatpush1.bf16.msra.mxu0 0
  %9154 = vmatprep.mubr.bf16.mxu0 0
  %9155 = vmatmul.mubr.bf16.gmra.mrb[0].mxu0 %v9117
  %v9156 = vpop.f32.mrb[0].mxu0
  %v9157 = vadd.f32 0.0, %v9156
  %v9158 = vpop.f32.mrb[0].mxu0
  %v9159 = vpop.f32.mrb[0].mxu0
  %v9160 = vpop.f32.mrb[0].mxu0
  %9161 = vdwg.mxu0
  %v9163 = vsel %vm460, %v286, 0
  %v9166 = vsel %vm464, %v7200, 0
  %9168 = vmatprep.subr.bf16.mxu0 0
  %9169 = vmatpush1.bf16.msra.mxu0 %v9166
  %9170 = vmatprep.subr.bf16.mxu0 0
  %9171 = vmatpush1.bf16.msra.mxu0 0
  %9172 = vmatprep.subr.bf16.mxu0 0
  %9173 = vmatpush1.bf16.msra.mxu0 0
  %9174 = vmatprep.subr.bf16.mxu0 0
  %9175 = vmatpush1.bf16.msra.mxu0 0
  %9176 = vmatprep.subr.bf16.mxu0 0
  %9177 = vmatpush1.bf16.msra.mxu0 0
  %9178 = vmatprep.subr.bf16.mxu0 0
  %9179 = vmatpush1.bf16.msra.mxu0 0
  %9180 = vmatprep.subr.bf16.mxu0 0
  %9181 = vmatpush1.bf16.msra.mxu0 0
  %9182 = vmatprep.subr.bf16.mxu0 0
  %9183 = vmatpush1.bf16.msra.mxu0 0
  %9184 = vmatprep.subr.bf16.mxu0 0
  %9185 = vmatpush1.bf16.msra.mxu0 0
  %9186 = vmatprep.subr.bf16.mxu0 0
  %9187 = vmatpush1.bf16.msra.mxu0 0
  %9188 = vmatprep.subr.bf16.mxu0 0
  %9189 = vmatpush1.bf16.msra.mxu0 0
  %9190 = vmatprep.subr.bf16.mxu0 0
  %9191 = vmatpush1.bf16.msra.mxu0 0
  %9192 = vmatprep.subr.bf16.mxu0 0
  %9193 = vmatpush1.bf16.msra.mxu0 0
  %9194 = vmatprep.subr.bf16.mxu0 0
  %9195 = vmatpush1.bf16.msra.mxu0 0
  %9196 = vmatprep.subr.bf16.mxu0 0
  %9197 = vmatpush1.bf16.msra.mxu0 0
  %9198 = vmatprep.subr.bf16.mxu0 0
  %9199 = vmatpush1.bf16.msra.mxu0 0
  %9200 = vmatprep.mubr.bf16.mxu0 0
  %9201 = vmatmul.mubr.bf16.gmra.mrb[0].mxu0 %v9163
  %v9202 = vpop.f32.mrb[0].mxu0
  %v9203 = vadd.f32 0.0, %v9202
  %v9204 = vpop.f32.mrb[0].mxu0
  %v9205 = vpop.f32.mrb[0].mxu0
  %v9206 = vpop.f32.mrb[0].mxu0
  %9207 = vdwg.mxu0
  %v9209 = vsel %vm460, %v287, 0
  %v9212 = vsel %vm464, %v7201, 0
  %9214 = vmatprep.subr.bf16.mxu0 0
  %9215 = vmatpush1.bf16.msra.mxu0 %v9212
  %9216 = vmatprep.subr.bf16.mxu0 0
  %9217 = vmatpush1.bf16.msra.mxu0 0
  %9218 = vmatprep.subr.bf16.mxu0 0
  %9219 = vmatpush1.bf16.msra.mxu0 0
  %9220 = vmatprep.subr.bf16.mxu0 0
  %9221 = vmatpush1.bf16.msra.mxu0 0
  %9222 = vmatprep.subr.bf16.mxu0 0
  %9223 = vmatpush1.bf16.msra.mxu0 0
  %9224 = vmatprep.subr.bf16.mxu0 0
  %9225 = vmatpush1.bf16.msra.mxu0 0
  %9226 = vmatprep.subr.bf16.mxu0 0
  %9227 = vmatpush1.bf16.msra.mxu0 0
  %9228 = vmatprep.subr.bf16.mxu0 0
  %9229 = vmatpush1.bf16.msra.mxu0 0
  %9230 = vmatprep.subr.bf16.mxu0 0
  %9231 = vmatpush1.bf16.msra.mxu0 0
  %9232 = vmatprep.subr.bf16.mxu0 0
  %9233 = vmatpush1.bf16.msra.mxu0 0
  %9234 = vmatprep.subr.bf16.mxu0 0
  %9235 = vmatpush1.bf16.msra.mxu0 0
  %9236 = vmatprep.subr.bf16.mxu0 0
  %9237 = vmatpush1.bf16.msra.mxu0 0
  %9238 = vmatprep.subr.bf16.mxu0 0
  %9239 = vmatpush1.bf16.msra.mxu0 0
  %9240 = vmatprep.subr.bf16.mxu0 0
  %9241 = vmatpush1.bf16.msra.mxu0 0
  %9242 = vmatprep.subr.bf16.mxu0 0
  %9243 = vmatpush1.bf16.msra.mxu0 0
  %9244 = vmatprep.subr.bf16.mxu0 0
  %9245 = vmatpush1.bf16.msra.mxu0 0
  %9246 = vmatprep.mubr.bf16.mxu0 0
  %9247 = vmatmul.mubr.bf16.gmra.mrb[0].mxu0 %v9209
  %v9248 = vpop.f32.mrb[0].mxu0
  %v9249 = vadd.f32 0.0, %v9248
  %v9250 = vpop.f32.mrb[0].mxu0
  %v9251 = vpop.f32.mrb[0].mxu0
  %v9252 = vpop.f32.mrb[0].mxu0
  %9253 = vdwg.mxu0
  %v9255 = vsel %vm460, %v288, 0
  %v9258 = vsel %vm464, %v7202, 0
  %9260 = vmatprep.subr.bf16.mxu0 0
  %9261 = vmatpush1.bf16.msra.mxu0 %v9258
  %9262 = vmatprep.subr.bf16.mxu0 0
  %9263 = vmatpush1.bf16.msra.mxu0 0
  %9264 = vmatprep.subr.bf16.mxu0 0
  %9265 = vmatpush1.bf16.msra.mxu0 0
  %9266 = vmatprep.subr.bf16.mxu0 0
  %9267 = vmatpush1.bf16.msra.mxu0 0
  %9268 = vmatprep.subr.bf16.mxu0 0
  %9269 = vmatpush1.bf16.msra.mxu0 0
  %9270 = vmatprep.subr.bf16.mxu0 0
  %9271 = vmatpush1.bf16.msra.mxu0 0
  %9272 = vmatprep.subr.bf16.mxu0 0
  %9273 = vmatpush1.bf16.msra.mxu0 0
  %9274 = vmatprep.subr.bf16.mxu0 0
  %9275 = vmatpush1.bf16.msra.mxu0 0
  %9276 = vmatprep.subr.bf16.mxu0 0
  %9277 = vmatpush1.bf16.msra.mxu0 0
  %9278 = vmatprep.subr.bf16.mxu0 0
  %9279 = vmatpush1.bf16.msra.mxu0 0
  %9280 = vmatprep.subr.bf16.mxu0 0
  %9281 = vmatpush1.bf16.msra.mxu0 0
  %9282 = vmatprep.subr.bf16.mxu0 0
  %9283 = vmatpush1.bf16.msra.mxu0 0
  %9284 = vmatprep.subr.bf16.mxu0 0
  %9285 = vmatpush1.bf16.msra.mxu0 0
  %9286 = vmatprep.subr.bf16.mxu0 0
  %9287 = vmatpush1.bf16.msra.mxu0 0
  %9288 = vmatprep.subr.bf16.mxu0 0
  %9289 = vmatpush1.bf16.msra.mxu0 0
  %9290 = vmatprep.subr.bf16.mxu0 0
  %9291 = vmatpush1.bf16.msra.mxu0 0
  %9292 = vmatprep.mubr.bf16.mxu0 0
  %9293 = vmatmul.mubr.bf16.gmra.mrb[0].mxu0 %v9255
  %v9294 = vpop.f32.mrb[0].mxu0
  %v9295 = vadd.f32 0.0, %v9294
  %v9296 = vpop.f32.mrb[0].mxu0
  %v9297 = vpop.f32.mrb[0].mxu0
  %v9298 = vpop.f32.mrb[0].mxu0
  %9299 = vdwg.mxu0
  %v9301 = vsel %vm460, %v289, 0
  %v9304 = vsel %vm464, %v7203, 0
  %9306 = vmatprep.subr.bf16.mxu0 0
  %9307 = vmatpush1.bf16.msra.mxu0 %v9304
  %9308 = vmatprep.subr.bf16.mxu0 0
  %9309 = vmatpush1.bf16.msra.mxu0 0
  %9310 = vmatprep.subr.bf16.mxu0 0
  %9311 = vmatpush1.bf16.msra.mxu0 0
  %9312 = vmatprep.subr.bf16.mxu0 0
  %9313 = vmatpush1.bf16.msra.mxu0 0
  %9314 = vmatprep.subr.bf16.mxu0 0
  %9315 = vmatpush1.bf16.msra.mxu0 0
  %9316 = vmatprep.subr.bf16.mxu0 0
  %9317 = vmatpush1.bf16.msra.mxu0 0
  %9318 = vmatprep.subr.bf16.mxu0 0
  %9319 = vmatpush1.bf16.msra.mxu0 0
  %9320 = vmatprep.subr.bf16.mxu0 0
  %9321 = vmatpush1.bf16.msra.mxu0 0
  %9322 = vmatprep.subr.bf16.mxu0 0
  %9323 = vmatpush1.bf16.msra.mxu0 0
  %9324 = vmatprep.subr.bf16.mxu0 0
  %9325 = vmatpush1.bf16.msra.mxu0 0
  %9326 = vmatprep.subr.bf16.mxu0 0
  %9327 = vmatpush1.bf16.msra.mxu0 0
  %9328 = vmatprep.subr.bf16.mxu0 0
  %9329 = vmatpush1.bf16.msra.mxu0 0
  %9330 = vmatprep.subr.bf16.mxu0 0
  %9331 = vmatpush1.bf16.msra.mxu0 0
  %9332 = vmatprep.subr.bf16.mxu0 0
  %9333 = vmatpush1.bf16.msra.mxu0 0
  %9334 = vmatprep.subr.bf16.mxu0 0
  %9335 = vmatpush1.bf16.msra.mxu0 0
  %9336 = vmatprep.subr.bf16.mxu0 0
  %9337 = vmatpush1.bf16.msra.mxu0 0
  %9338 = vmatprep.mubr.bf16.mxu0 0
  %9339 = vmatmul.mubr.bf16.gmra.mrb[0].mxu0 %v9301
  %v9340 = vpop.f32.mrb[0].mxu0
  %v9341 = vadd.f32 0.0, %v9340
  %v9342 = vpop.f32.mrb[0].mxu0
  %v9343 = vpop.f32.mrb[0].mxu0
  %v9344 = vpop.f32.mrb[0].mxu0
  %9345 = vdwg.mxu0
  %v9347 = vsel %vm460, %v290, 0
  %v9350 = vsel %vm464, %v7204, 0
  %9352 = vmatprep.subr.bf16.mxu0 0
  %9353 = vmatpush1.bf16.msra.mxu0 %v9350
  %9354 = vmatprep.subr.bf16.mxu0 0
  %9355 = vmatpush1.bf16.msra.mxu0 0
  %9356 = vmatprep.subr.bf16.mxu0 0
  %9357 = vmatpush1.bf16.msra.mxu0 0
  %9358 = vmatprep.subr.bf16.mxu0 0
  %9359 = vmatpush1.bf16.msra.mxu0 0
  %9360 = vmatprep.subr.bf16.mxu0 0
  %9361 = vmatpush1.bf16.msra.mxu0 0
  %9362 = vmatprep.subr.bf16.mxu0 0
  %9363 = vmatpush1.bf16.msra.mxu0 0
  %9364 = vmatprep.subr.bf16.mxu0 0
  %9365 = vmatpush1.bf16.msra.mxu0 0
  %9366 = vmatprep.subr.bf16.mxu0 0
  %9367 = vmatpush1.bf16.msra.mxu0 0
  %9368 = vmatprep.subr.bf16.mxu0 0
  %9369 = vmatpush1.bf16.msra.mxu0 0
  %9370 = vmatprep.subr.bf16.mxu0 0
  %9371 = vmatpush1.bf16.msra.mxu0 0
  %9372 = vmatprep.subr.bf16.mxu0 0
  %9373 = vmatpush1.bf16.msra.mxu0 0
  %9374 = vmatprep.subr.bf16.mxu0 0
  %9375 = vmatpush1.bf16.msra.mxu0 0
  %9376 = vmatprep.subr.bf16.mxu0 0
  %9377 = vmatpush1.bf16.msra.mxu0 0
  %9378 = vmatprep.subr.bf16.mxu0 0
  %9379 = vmatpush1.bf16.msra.mxu0 0
  %9380 = vmatprep.subr.bf16.mxu0 0
  %9381 = vmatpush1.bf16.msra.mxu0 0
  %9382 = vmatprep.subr.bf16.mxu0 0
  %9383 = vmatpush1.bf16.msra.mxu0 0
  %9384 = vmatprep.mubr.bf16.mxu0 0
  %9385 = vmatmul.mubr.bf16.gmra.mrb[0].mxu0 %v9347
  %v9386 = vpop.f32.mrb[0].mxu0
  %v9387 = vadd.f32 0.0, %v9386
  %v9388 = vpop.f32.mrb[0].mxu0
  %v9389 = vpop.f32.mrb[0].mxu0
  %v9390 = vpop.f32.mrb[0].mxu0
  %9391 = vdwg.mxu0
  %v9393 = vsel %vm460, %v291, 0
  %v9396 = vsel %vm464, %v7205, 0
  %9398 = vmatprep.subr.bf16.mxu0 0
  %9399 = vmatpush1.bf16.msra.mxu0 %v9396
  %9400 = vmatprep.subr.bf16.mxu0 0
  %9401 = vmatpush1.bf16.msra.mxu0 0
  %9402 = vmatprep.subr.bf16.mxu0 0
  %9403 = vmatpush1.bf16.msra.mxu0 0
  %9404 = vmatprep.subr.bf16.mxu0 0
  %9405 = vmatpush1.bf16.msra.mxu0 0
  %9406 = vmatprep.subr.bf16.mxu0 0
  %9407 = vmatpush1.bf16.msra.mxu0 0
  %9408 = vmatprep.subr.bf16.mxu0 0
  %9409 = vmatpush1.bf16.msra.mxu0 0
  %9410 = vmatprep.subr.bf16.mxu0 0
  %9411 = vmatpush1.bf16.msra.mxu0 0
  %9412 = vmatprep.subr.bf16.mxu0 0
  %9413 = vmatpush1.bf16.msra.mxu0 0
  %9414 = vmatprep.subr.bf16.mxu0 0
  %9415 = vmatpush1.bf16.msra.mxu0 0
  %9416 = vmatprep.subr.bf16.mxu0 0
  %9417 = vmatpush1.bf16.msra.mxu0 0
  %9418 = vmatprep.subr.bf16.mxu0 0
  %9419 = vmatpush1.bf16.msra.mxu0 0
  %9420 = vmatprep.subr.bf16.mxu0 0
  %9421 = vmatpush1.bf16.msra.mxu0 0
  %9422 = vmatprep.subr.bf16.mxu0 0
  %9423 = vmatpush1.bf16.msra.mxu0 0
  %9424 = vmatprep.subr.bf16.mxu0 0
  %9425 = vmatpush1.bf16.msra.mxu0 0
  %9426 = vmatprep.subr.bf16.mxu0 0
  %9427 = vmatpush1.bf16.msra.mxu0 0
  %9428 = vmatprep.subr.bf16.mxu0 0
  %9429 = vmatpush1.bf16.msra.mxu0 0
  %9430 = vmatprep.mubr.bf16.mxu0 0
  %9431 = vmatmul.mubr.bf16.gmra.mrb[0].mxu0 %v9393
  %v9432 = vpop.f32.mrb[0].mxu0
  %v9433 = vadd.f32 0.0, %v9432
  %v9434 = vpop.f32.mrb[0].mxu0
  %v9435 = vpop.f32.mrb[0].mxu0
  %v9436 = vpop.f32.mrb[0].mxu0
  %9437 = vdwg.mxu0
  %v9439 = vsel %vm460, %v292, 0
  %v9442 = vsel %vm464, %v7206, 0
  %9444 = vmatprep.subr.bf16.mxu0 0
  %9445 = vmatpush1.bf16.msra.mxu0 %v9442
  %9446 = vmatprep.subr.bf16.mxu0 0
  %9447 = vmatpush1.bf16.msra.mxu0 0
  %9448 = vmatprep.subr.bf16.mxu0 0
  %9449 = vmatpush1.bf16.msra.mxu0 0
  %9450 = vmatprep.subr.bf16.mxu0 0
  %9451 = vmatpush1.bf16.msra.mxu0 0
  %9452 = vmatprep.subr.bf16.mxu0 0
  %9453 = vmatpush1.bf16.msra.mxu0 0
  %9454 = vmatprep.subr.bf16.mxu0 0
  %9455 = vmatpush1.bf16.msra.mxu0 0
  %9456 = vmatprep.subr.bf16.mxu0 0
  %9457 = vmatpush1.bf16.msra.mxu0 0
  %9458 = vmatprep.subr.bf16.mxu0 0
  %9459 = vmatpush1.bf16.msra.mxu0 0
  %9460 = vmatprep.subr.bf16.mxu0 0
  %9461 = vmatpush1.bf16.msra.mxu0 0
  %9462 = vmatprep.subr.bf16.mxu0 0
  %9463 = vmatpush1.bf16.msra.mxu0 0
  %9464 = vmatprep.subr.bf16.mxu0 0
  %9465 = vmatpush1.bf16.msra.mxu0 0
  %9466 = vmatprep.subr.bf16.mxu0 0
  %9467 = vmatpush1.bf16.msra.mxu0 0
  %9468 = vmatprep.subr.bf16.mxu0 0
  %9469 = vmatpush1.bf16.msra.mxu0 0
  %9470 = vmatprep.subr.bf16.mxu0 0
  %9471 = vmatpush1.bf16.msra.mxu0 0
  %9472 = vmatprep.subr.bf16.mxu0 0
  %9473 = vmatpush1.bf16.msra.mxu0 0
  %9474 = vmatprep.subr.bf16.mxu0 0
  %9475 = vmatpush1.bf16.msra.mxu0 0
  %9476 = vmatprep.mubr.bf16.mxu0 0
  %9477 = vmatmul.mubr.bf16.gmra.mrb[0].mxu0 %v9439
  %v9478 = vpop.f32.mrb[0].mxu0
  %v9479 = vadd.f32 0.0, %v9478
  %v9480 = vpop.f32.mrb[0].mxu0
  %v9481 = vpop.f32.mrb[0].mxu0
  %v9482 = vpop.f32.mrb[0].mxu0
  %9483 = vdwg.mxu0
  %v9485 = vsel %vm460, %v293, 0
  %v9488 = vsel %vm464, %v7207, 0
  %9490 = vmatprep.subr.bf16.mxu0 0
  %9491 = vmatpush1.bf16.msra.mxu0 %v9488
  %9492 = vmatprep.subr.bf16.mxu0 0
  %9493 = vmatpush1.bf16.msra.mxu0 0
  %9494 = vmatprep.subr.bf16.mxu0 0
  %9495 = vmatpush1.bf16.msra.mxu0 0
  %9496 = vmatprep.subr.bf16.mxu0 0
  %9497 = vmatpush1.bf16.msra.mxu0 0
  %9498 = vmatprep.subr.bf16.mxu0 0
  %9499 = vmatpush1.bf16.msra.mxu0 0
  %9500 = vmatprep.subr.bf16.mxu0 0
  %9501 = vmatpush1.bf16.msra.mxu0 0
  %9502 = vmatprep.subr.bf16.mxu0 0
  %9503 = vmatpush1.bf16.msra.mxu0 0
  %9504 = vmatprep.subr.bf16.mxu0 0
  %9505 = vmatpush1.bf16.msra.mxu0 0
  %9506 = vmatprep.subr.bf16.mxu0 0
  %9507 = vmatpush1.bf16.msra.mxu0 0
  %9508 = vmatprep.subr.bf16.mxu0 0
  %9509 = vmatpush1.bf16.msra.mxu0 0
  %9510 = vmatprep.subr.bf16.mxu0 0
  %9511 = vmatpush1.bf16.msra.mxu0 0
  %9512 = vmatprep.subr.bf16.mxu0 0
  %9513 = vmatpush1.bf16.msra.mxu0 0
  %9514 = vmatprep.subr.bf16.mxu0 0
  %9515 = vmatpush1.bf16.msra.mxu0 0
  %9516 = vmatprep.subr.bf16.mxu0 0
  %9517 = vmatpush1.bf16.msra.mxu0 0
  %9518 = vmatprep.subr.bf16.mxu0 0
  %9519 = vmatpush1.bf16.msra.mxu0 0
  %9520 = vmatprep.subr.bf16.mxu0 0
  %9521 = vmatpush1.bf16.msra.mxu0 0
  %9522 = vmatprep.mubr.bf16.mxu0 0
  %9523 = vmatmul.mubr.bf16.gmra.mrb[0].mxu0 %v9485
  %v9524 = vpop.f32.mrb[0].mxu0
  %v9525 = vadd.f32 0.0, %v9524
  %v9526 = vpop.f32.mrb[0].mxu0
  %v9527 = vpop.f32.mrb[0].mxu0
  %v9528 = vpop.f32.mrb[0].mxu0
  %9529 = vdwg.mxu0
  %v9531 = vsel %vm460, %v294, 0
  %v9534 = vsel %vm464, %v7208, 0
  %9536 = vmatprep.subr.bf16.mxu0 0
  %9537 = vmatpush1.bf16.msra.mxu0 %v9534
  %9538 = vmatprep.subr.bf16.mxu0 0
  %9539 = vmatpush1.bf16.msra.mxu0 0
  %9540 = vmatprep.subr.bf16.mxu0 0
  %9541 = vmatpush1.bf16.msra.mxu0 0
  %9542 = vmatprep.subr.bf16.mxu0 0
  %9543 = vmatpush1.bf16.msra.mxu0 0
  %9544 = vmatprep.subr.bf16.mxu0 0
  %9545 = vmatpush1.bf16.msra.mxu0 0
  %9546 = vmatprep.subr.bf16.mxu0 0
  %9547 = vmatpush1.bf16.msra.mxu0 0
  %9548 = vmatprep.subr.bf16.mxu0 0
  %9549 = vmatpush1.bf16.msra.mxu0 0
  %9550 = vmatprep.subr.bf16.mxu0 0
  %9551 = vmatpush1.bf16.msra.mxu0 0
  %9552 = vmatprep.subr.bf16.mxu0 0
  %9553 = vmatpush1.bf16.msra.mxu0 0
  %9554 = vmatprep.subr.bf16.mxu0 0
  %9555 = vmatpush1.bf16.msra.mxu0 0
  %9556 = vmatprep.subr.bf16.mxu0 0
  %9557 = vmatpush1.bf16.msra.mxu0 0
  %9558 = vmatprep.subr.bf16.mxu0 0
  %9559 = vmatpush1.bf16.msra.mxu0 0
  %9560 = vmatprep.subr.bf16.mxu0 0
  %9561 = vmatpush1.bf16.msra.mxu0 0
  %9562 = vmatprep.subr.bf16.mxu0 0
  %9563 = vmatpush1.bf16.msra.mxu0 0
  %9564 = vmatprep.subr.bf16.mxu0 0
  %9565 = vmatpush1.bf16.msra.mxu0 0
  %9566 = vmatprep.subr.bf16.mxu0 0
  %9567 = vmatpush1.bf16.msra.mxu0 0
  %9568 = vmatprep.mubr.bf16.mxu0 0
  %9569 = vmatmul.mubr.bf16.gmra.mrb[0].mxu0 %v9531
  %v9570 = vpop.f32.mrb[0].mxu0
  %v9571 = vadd.f32 0.0, %v9570
  %v9572 = vpop.f32.mrb[0].mxu0
  %v9573 = vpop.f32.mrb[0].mxu0
  %v9574 = vpop.f32.mrb[0].mxu0
  %9575 = vdwg.mxu0
  %v9577 = vsel %vm460, %v295, 0
  %v9580 = vsel %vm464, %v7209, 0
  %9582 = vmatprep.subr.bf16.mxu0 0
  %9583 = vmatpush1.bf16.msra.mxu0 %v9580
  %9584 = vmatprep.subr.bf16.mxu0 0
  %9585 = vmatpush1.bf16.msra.mxu0 0
  %9586 = vmatprep.subr.bf16.mxu0 0
  %9587 = vmatpush1.bf16.msra.mxu0 0
  %9588 = vmatprep.subr.bf16.mxu0 0
  %9589 = vmatpush1.bf16.msra.mxu0 0
  %9590 = vmatprep.subr.bf16.mxu0 0
  %9591 = vmatpush1.bf16.msra.mxu0 0
  %9592 = vmatprep.subr.bf16.mxu0 0
  %9593 = vmatpush1.bf16.msra.mxu0 0
  %9594 = vmatprep.subr.bf16.mxu0 0
  %9595 = vmatpush1.bf16.msra.mxu0 0
  %9596 = vmatprep.subr.bf16.mxu0 0
  %9597 = vmatpush1.bf16.msra.mxu0 0
  %9598 = vmatprep.subr.bf16.mxu0 0
  %9599 = vmatpush1.bf16.msra.mxu0 0
  %9600 = vmatprep.subr.bf16.mxu0 0
  %9601 = vmatpush1.bf16.msra.mxu0 0
  %9602 = vmatprep.subr.bf16.mxu0 0
  %9603 = vmatpush1.bf16.msra.mxu0 0
  %9604 = vmatprep.subr.bf16.mxu0 0
  %9605 = vmatpush1.bf16.msra.mxu0 0
  %9606 = vmatprep.subr.bf16.mxu0 0
  %9607 = vmatpush1.bf16.msra.mxu0 0
  %9608 = vmatprep.subr.bf16.mxu0 0
  %9609 = vmatpush1.bf16.msra.mxu0 0
  %9610 = vmatprep.subr.bf16.mxu0 0
  %9611 = vmatpush1.bf16.msra.mxu0 0
  %9612 = vmatprep.subr.bf16.mxu0 0
  %9613 = vmatpush1.bf16.msra.mxu0 0
  %9614 = vmatprep.mubr.bf16.mxu0 0
  %9615 = vmatmul.mubr.bf16.gmra.mrb[0].mxu0 %v9577
  %v9616 = vpop.f32.mrb[0].mxu0
  %v9617 = vadd.f32 0.0, %v9616
  %v9618 = vpop.f32.mrb[0].mxu0
  %v9619 = vpop.f32.mrb[0].mxu0
  %v9620 = vpop.f32.mrb[0].mxu0
  %9621 = vdwg.mxu0
  %v9623 = vsel %vm460, %v296, 0
  %v9626 = vsel %vm464, %v7210, 0
  %9628 = vmatprep.subr.bf16.mxu0 0
  %9629 = vmatpush1.bf16.msra.mxu0 %v9626
  %9630 = vmatprep.subr.bf16.mxu0 0
  %9631 = vmatpush1.bf16.msra.mxu0 0
  %9632 = vmatprep.subr.bf16.mxu0 0
  %9633 = vmatpush1.bf16.msra.mxu0 0
  %9634 = vmatprep.subr.bf16.mxu0 0
  %9635 = vmatpush1.bf16.msra.mxu0 0
  %9636 = vmatprep.subr.bf16.mxu0 0
  %9637 = vmatpush1.bf16.msra.mxu0 0
  %9638 = vmatprep.subr.bf16.mxu0 0
  %9639 = vmatpush1.bf16.msra.mxu0 0
  %9640 = vmatprep.subr.bf16.mxu0 0
  %9641 = vmatpush1.bf16.msra.mxu0 0
  %9642 = vmatprep.subr.bf16.mxu0 0
  %9643 = vmatpush1.bf16.msra.mxu0 0
  %9644 = vmatprep.subr.bf16.mxu0 0
  %9645 = vmatpush1.bf16.msra.mxu0 0
  %9646 = vmatprep.subr.bf16.mxu0 0
  %9647 = vmatpush1.bf16.msra.mxu0 0
  %9648 = vmatprep.subr.bf16.mxu0 0
  %9649 = vmatpush1.bf16.msra.mxu0 0
  %9650 = vmatprep.subr.bf16.mxu0 0
  %9651 = vmatpush1.bf16.msra.mxu0 0
  %9652 = vmatprep.subr.bf16.mxu0 0
  %9653 = vmatpush1.bf16.msra.mxu0 0
  %9654 = vmatprep.subr.bf16.mxu0 0
  %9655 = vmatpush1.bf16.msra.mxu0 0
  %9656 = vmatprep.subr.bf16.mxu0 0
  %9657 = vmatpush1.bf16.msra.mxu0 0
  %9658 = vmatprep.subr.bf16.mxu0 0
  %9659 = vmatpush1.bf16.msra.mxu0 0
  %9660 = vmatprep.mubr.bf16.mxu0 0
  %9661 = vmatmul.mubr.bf16.gmra.mrb[0].mxu0 %v9623
  %v9662 = vpop.f32.mrb[0].mxu0
  %v9663 = vadd.f32 0.0, %v9662
  %v9664 = vpop.f32.mrb[0].mxu0
  %v9665 = vpop.f32.mrb[0].mxu0
  %v9666 = vpop.f32.mrb[0].mxu0
  %9667 = vdwg.mxu0
  %v9669 = vsel %vm460, %v297, 0
  %v9672 = vsel %vm464, %v7211, 0
  %9674 = vmatprep.subr.bf16.mxu0 0
  %9675 = vmatpush1.bf16.msra.mxu0 %v9672
  %9676 = vmatprep.subr.bf16.mxu0 0
  %9677 = vmatpush1.bf16.msra.mxu0 0
  %9678 = vmatprep.subr.bf16.mxu0 0
  %9679 = vmatpush1.bf16.msra.mxu0 0
  %9680 = vmatprep.subr.bf16.mxu0 0
  %9681 = vmatpush1.bf16.msra.mxu0 0
  %9682 = vmatprep.subr.bf16.mxu0 0
  %9683 = vmatpush1.bf16.msra.mxu0 0
  %9684 = vmatprep.subr.bf16.mxu0 0
  %9685 = vmatpush1.bf16.msra.mxu0 0
  %9686 = vmatprep.subr.bf16.mxu0 0
  %9687 = vmatpush1.bf16.msra.mxu0 0
  %9688 = vmatprep.subr.bf16.mxu0 0
  %9689 = vmatpush1.bf16.msra.mxu0 0
  %9690 = vmatprep.subr.bf16.mxu0 0
  %9691 = vmatpush1.bf16.msra.mxu0 0
  %9692 = vmatprep.subr.bf16.mxu0 0
  %9693 = vmatpush1.bf16.msra.mxu0 0
  %9694 = vmatprep.subr.bf16.mxu0 0
  %9695 = vmatpush1.bf16.msra.mxu0 0
  %9696 = vmatprep.subr.bf16.mxu0 0
  %9697 = vmatpush1.bf16.msra.mxu0 0
  %9698 = vmatprep.subr.bf16.mxu0 0
  %9699 = vmatpush1.bf16.msra.mxu0 0
  %9700 = vmatprep.subr.bf16.mxu0 0
  %9701 = vmatpush1.bf16.msra.mxu0 0
  %9702 = vmatprep.subr.bf16.mxu0 0
  %9703 = vmatpush1.bf16.msra.mxu0 0
  %9704 = vmatprep.subr.bf16.mxu0 0
  %9705 = vmatpush1.bf16.msra.mxu0 0
  %9706 = vmatprep.mubr.bf16.mxu0 0
  %9707 = vmatmul.mubr.bf16.gmra.mrb[0].mxu0 %v9669
  %v9708 = vpop.f32.mrb[0].mxu0
  %v9709 = vadd.f32 0.0, %v9708
  %v9710 = vpop.f32.mrb[0].mxu0
  %v9711 = vpop.f32.mrb[0].mxu0
  %v9712 = vpop.f32.mrb[0].mxu0
  %9713 = vdwg.mxu0
  %v9715 = vsel %vm460, %v298, 0
  %v9718 = vsel %vm464, %v7212, 0
  %9720 = vmatprep.subr.bf16.mxu0 0
  %9721 = vmatpush1.bf16.msra.mxu0 %v9718
  %9722 = vmatprep.subr.bf16.mxu0 0
  %9723 = vmatpush1.bf16.msra.mxu0 0
  %9724 = vmatprep.subr.bf16.mxu0 0
  %9725 = vmatpush1.bf16.msra.mxu0 0
  %9726 = vmatprep.subr.bf16.mxu0 0
  %9727 = vmatpush1.bf16.msra.mxu0 0
  %9728 = vmatprep.subr.bf16.mxu0 0
  %9729 = vmatpush1.bf16.msra.mxu0 0
  %9730 = vmatprep.subr.bf16.mxu0 0
  %9731 = vmatpush1.bf16.msra.mxu0 0
  %9732 = vmatprep.subr.bf16.mxu0 0
  %9733 = vmatpush1.bf16.msra.mxu0 0
  %9734 = vmatprep.subr.bf16.mxu0 0
  %9735 = vmatpush1.bf16.msra.mxu0 0
  %9736 = vmatprep.subr.bf16.mxu0 0
  %9737 = vmatpush1.bf16.msra.mxu0 0
  %9738 = vmatprep.subr.bf16.mxu0 0
  %9739 = vmatpush1.bf16.msra.mxu0 0
  %9740 = vmatprep.subr.bf16.mxu0 0
  %9741 = vmatpush1.bf16.msra.mxu0 0
  %9742 = vmatprep.subr.bf16.mxu0 0
  %9743 = vmatpush1.bf16.msra.mxu0 0
  %9744 = vmatprep.subr.bf16.mxu0 0
  %9745 = vmatpush1.bf16.msra.mxu0 0
  %9746 = vmatprep.subr.bf16.mxu0 0
  %9747 = vmatpush1.bf16.msra.mxu0 0
  %9748 = vmatprep.subr.bf16.mxu0 0
  %9749 = vmatpush1.bf16.msra.mxu0 0
  %9750 = vmatprep.subr.bf16.mxu0 0
  %9751 = vmatpush1.bf16.msra.mxu0 0
  %9752 = vmatprep.mubr.bf16.mxu0 0
  %9753 = vmatmul.mubr.bf16.gmra.mrb[0].mxu0 %v9715
  %v9754 = vpop.f32.mrb[0].mxu0
  %v9755 = vadd.f32 0.0, %v9754
  %v9756 = vpop.f32.mrb[0].mxu0
  %v9757 = vpop.f32.mrb[0].mxu0
  %v9758 = vpop.f32.mrb[0].mxu0
  %9759 = vdwg.mxu0
  %v9761 = vsel %vm460, %v299, 0
  %v9764 = vsel %vm464, %v7213, 0
  %9766 = vmatprep.subr.bf16.mxu0 0
  %9767 = vmatpush1.bf16.msra.mxu0 %v9764
  %9768 = vmatprep.subr.bf16.mxu0 0
  %9769 = vmatpush1.bf16.msra.mxu0 0
  %9770 = vmatprep.subr.bf16.mxu0 0
  %9771 = vmatpush1.bf16.msra.mxu0 0
  %9772 = vmatprep.subr.bf16.mxu0 0
  %9773 = vmatpush1.bf16.msra.mxu0 0
  %9774 = vmatprep.subr.bf16.mxu0 0
  %9775 = vmatpush1.bf16.msra.mxu0 0
  %9776 = vmatprep.subr.bf16.mxu0 0
  %9777 = vmatpush1.bf16.msra.mxu0 0
  %9778 = vmatprep.subr.bf16.mxu0 0
  %9779 = vmatpush1.bf16.msra.mxu0 0
  %9780 = vmatprep.subr.bf16.mxu0 0
  %9781 = vmatpush1.bf16.msra.mxu0 0
  %9782 = vmatprep.subr.bf16.mxu0 0
  %9783 = vmatpush1.bf16.msra.mxu0 0
  %9784 = vmatprep.subr.bf16.mxu0 0
  %9785 = vmatpush1.bf16.msra.mxu0 0
  %9786 = vmatprep.subr.bf16.mxu0 0
  %9787 = vmatpush1.bf16.msra.mxu0 0
  %9788 = vmatprep.subr.bf16.mxu0 0
  %9789 = vmatpush1.bf16.msra.mxu0 0
  %9790 = vmatprep.subr.bf16.mxu0 0
  %9791 = vmatpush1.bf16.msra.mxu0 0
  %9792 = vmatprep.subr.bf16.mxu0 0
  %9793 = vmatpush1.bf16.msra.mxu0 0
  %9794 = vmatprep.subr.bf16.mxu0 0
  %9795 = vmatpush1.bf16.msra.mxu0 0
  %9796 = vmatprep.subr.bf16.mxu0 0
  %9797 = vmatpush1.bf16.msra.mxu0 0
  %9798 = vmatprep.mubr.bf16.mxu0 0
  %9799 = vmatmul.mubr.bf16.gmra.mrb[0].mxu0 %v9761
  %v9800 = vpop.f32.mrb[0].mxu0
  %v9801 = vadd.f32 0.0, %v9800
  %v9802 = vpop.f32.mrb[0].mxu0
  %v9803 = vpop.f32.mrb[0].mxu0
  %v9804 = vpop.f32.mrb[0].mxu0
  %9805 = vdwg.mxu0
  %v9807 = vsel %vm460, %v300, 0
  %v9810 = vsel %vm464, %v7214, 0
  %9812 = vmatprep.subr.bf16.mxu0 0
  %9813 = vmatpush1.bf16.msra.mxu0 %v9810
  %9814 = vmatprep.subr.bf16.mxu0 0
  %9815 = vmatpush1.bf16.msra.mxu0 0
  %9816 = vmatprep.subr.bf16.mxu0 0
  %9817 = vmatpush1.bf16.msra.mxu0 0
  %9818 = vmatprep.subr.bf16.mxu0 0
  %9819 = vmatpush1.bf16.msra.mxu0 0
  %9820 = vmatprep.subr.bf16.mxu0 0
  %9821 = vmatpush1.bf16.msra.mxu0 0
  %9822 = vmatprep.subr.bf16.mxu0 0
  %9823 = vmatpush1.bf16.msra.mxu0 0
  %9824 = vmatprep.subr.bf16.mxu0 0
  %9825 = vmatpush1.bf16.msra.mxu0 0
  %9826 = vmatprep.subr.bf16.mxu0 0
  %9827 = vmatpush1.bf16.msra.mxu0 0
  %9828 = vmatprep.subr.bf16.mxu0 0
  %9829 = vmatpush1.bf16.msra.mxu0 0
  %9830 = vmatprep.subr.bf16.mxu0 0
  %9831 = vmatpush1.bf16.msra.mxu0 0
  %9832 = vmatprep.subr.bf16.mxu0 0
  %9833 = vmatpush1.bf16.msra.mxu0 0
  %9834 = vmatprep.subr.bf16.mxu0 0
  %9835 = vmatpush1.bf16.msra.mxu0 0
  %9836 = vmatprep.subr.bf16.mxu0 0
  %9837 = vmatpush1.bf16.msra.mxu0 0
  %9838 = vmatprep.subr.bf16.mxu0 0
  %9839 = vmatpush1.bf16.msra.mxu0 0
  %9840 = vmatprep.subr.bf16.mxu0 0
  %9841 = vmatpush1.bf16.msra.mxu0 0
  %9842 = vmatprep.subr.bf16.mxu0 0
  %9843 = vmatpush1.bf16.msra.mxu0 0
  %9844 = vmatprep.mubr.bf16.mxu0 0
  %9845 = vmatmul.mubr.bf16.gmra.mrb[0].mxu0 %v9807
  %v9846 = vpop.f32.mrb[0].mxu0
  %v9847 = vadd.f32 0.0, %v9846
  %v9848 = vpop.f32.mrb[0].mxu0
  %v9849 = vpop.f32.mrb[0].mxu0
  %v9850 = vpop.f32.mrb[0].mxu0
  %9851 = vdwg.mxu0
  %v9853 = vsel %vm460, %v301, 0
  %v9856 = vsel %vm464, %v7215, 0
  %9858 = vmatprep.subr.bf16.mxu0 0
  %9859 = vmatpush1.bf16.msra.mxu0 %v9856
  %9860 = vmatprep.subr.bf16.mxu0 0
  %9861 = vmatpush1.bf16.msra.mxu0 0
  %9862 = vmatprep.subr.bf16.mxu0 0
  %9863 = vmatpush1.bf16.msra.mxu0 0
  %9864 = vmatprep.subr.bf16.mxu0 0
  %9865 = vmatpush1.bf16.msra.mxu0 0
  %9866 = vmatprep.subr.bf16.mxu0 0
  %9867 = vmatpush1.bf16.msra.mxu0 0
  %9868 = vmatprep.subr.bf16.mxu0 0
  %9869 = vmatpush1.bf16.msra.mxu0 0
  %9870 = vmatprep.subr.bf16.mxu0 0
  %9871 = vmatpush1.bf16.msra.mxu0 0
  %9872 = vmatprep.subr.bf16.mxu0 0
  %9873 = vmatpush1.bf16.msra.mxu0 0
  %9874 = vmatprep.subr.bf16.mxu0 0
  %9875 = vmatpush1.bf16.msra.mxu0 0
  %9876 = vmatprep.subr.bf16.mxu0 0
  %9877 = vmatpush1.bf16.msra.mxu0 0
  %9878 = vmatprep.subr.bf16.mxu0 0
  %9879 = vmatpush1.bf16.msra.mxu0 0
  %9880 = vmatprep.subr.bf16.mxu0 0
  %9881 = vmatpush1.bf16.msra.mxu0 0
  %9882 = vmatprep.subr.bf16.mxu0 0
  %9883 = vmatpush1.bf16.msra.mxu0 0
  %9884 = vmatprep.subr.bf16.mxu0 0
  %9885 = vmatpush1.bf16.msra.mxu0 0
  %9886 = vmatprep.subr.bf16.mxu0 0
  %9887 = vmatpush1.bf16.msra.mxu0 0
  %9888 = vmatprep.subr.bf16.mxu0 0
  %9889 = vmatpush1.bf16.msra.mxu0 0
  %9890 = vmatprep.mubr.bf16.mxu0 0
  %9891 = vmatmul.mubr.bf16.gmra.mrb[0].mxu0 %v9853
  %v9892 = vpop.f32.mrb[0].mxu0
  %v9893 = vadd.f32 0.0, %v9892
  %v9894 = vpop.f32.mrb[0].mxu0
  %v9895 = vpop.f32.mrb[0].mxu0
  %v9896 = vpop.f32.mrb[0].mxu0
  %9897 = vdwg.mxu0
  %v9899 = vsel %vm460, %v302, 0
  %v9902 = vsel %vm464, %v7216, 0
  %9904 = vmatprep.subr.bf16.mxu0 0
  %9905 = vmatpush1.bf16.msra.mxu0 %v9902
  %9906 = vmatprep.subr.bf16.mxu0 0
  %9907 = vmatpush1.bf16.msra.mxu0 0
  %9908 = vmatprep.subr.bf16.mxu0 0
  %9909 = vmatpush1.bf16.msra.mxu0 0
  %9910 = vmatprep.subr.bf16.mxu0 0
  %9911 = vmatpush1.bf16.msra.mxu0 0
  %9912 = vmatprep.subr.bf16.mxu0 0
  %9913 = vmatpush1.bf16.msra.mxu0 0
  %9914 = vmatprep.subr.bf16.mxu0 0
  %9915 = vmatpush1.bf16.msra.mxu0 0
  %9916 = vmatprep.subr.bf16.mxu0 0
  %9917 = vmatpush1.bf16.msra.mxu0 0
  %9918 = vmatprep.subr.bf16.mxu0 0
  %9919 = vmatpush1.bf16.msra.mxu0 0
  %9920 = vmatprep.subr.bf16.mxu0 0
  %9921 = vmatpush1.bf16.msra.mxu0 0
  %9922 = vmatprep.subr.bf16.mxu0 0
  %9923 = vmatpush1.bf16.msra.mxu0 0
  %9924 = vmatprep.subr.bf16.mxu0 0
  %9925 = vmatpush1.bf16.msra.mxu0 0
  %9926 = vmatprep.subr.bf16.mxu0 0
  %9927 = vmatpush1.bf16.msra.mxu0 0
  %9928 = vmatprep.subr.bf16.mxu0 0
  %9929 = vmatpush1.bf16.msra.mxu0 0
  %9930 = vmatprep.subr.bf16.mxu0 0
  %9931 = vmatpush1.bf16.msra.mxu0 0
  %9932 = vmatprep.subr.bf16.mxu0 0
  %9933 = vmatpush1.bf16.msra.mxu0 0
  %9934 = vmatprep.subr.bf16.mxu0 0
  %9935 = vmatpush1.bf16.msra.mxu0 0
  %9936 = vmatprep.mubr.bf16.mxu0 0
  %9937 = vmatmul.mubr.bf16.gmra.mrb[0].mxu0 %v9899
  %v9938 = vpop.f32.mrb[0].mxu0
  %v9939 = vadd.f32 0.0, %v9938
  %v9940 = vpop.f32.mrb[0].mxu0
  %v9941 = vpop.f32.mrb[0].mxu0
  %v9942 = vpop.f32.mrb[0].mxu0
  %9943 = vdwg.mxu0
  %v9945 = vsel %vm460, %v303, 0
  %v9948 = vsel %vm464, %v7217, 0
  %9950 = vmatprep.subr.bf16.mxu0 0
  %9951 = vmatpush1.bf16.msra.mxu0 %v9948
  %9952 = vmatprep.subr.bf16.mxu0 0
  %9953 = vmatpush1.bf16.msra.mxu0 0
  %9954 = vmatprep.subr.bf16.mxu0 0
  %9955 = vmatpush1.bf16.msra.mxu0 0
  %9956 = vmatprep.subr.bf16.mxu0 0
  %9957 = vmatpush1.bf16.msra.mxu0 0
  %9958 = vmatprep.subr.bf16.mxu0 0
  %9959 = vmatpush1.bf16.msra.mxu0 0
  %9960 = vmatprep.subr.bf16.mxu0 0
  %9961 = vmatpush1.bf16.msra.mxu0 0
  %9962 = vmatprep.subr.bf16.mxu0 0
  %9963 = vmatpush1.bf16.msra.mxu0 0
  %9964 = vmatprep.subr.bf16.mxu0 0
  %9965 = vmatpush1.bf16.msra.mxu0 0
  %9966 = vmatprep.subr.bf16.mxu0 0
  %9967 = vmatpush1.bf16.msra.mxu0 0
  %9968 = vmatprep.subr.bf16.mxu0 0
  %9969 = vmatpush1.bf16.msra.mxu0 0
  %9970 = vmatprep.subr.bf16.mxu0 0
  %9971 = vmatpush1.bf16.msra.mxu0 0
  %9972 = vmatprep.subr.bf16.mxu0 0
  %9973 = vmatpush1.bf16.msra.mxu0 0
  %9974 = vmatprep.subr.bf16.mxu0 0
  %9975 = vmatpush1.bf16.msra.mxu0 0
  %9976 = vmatprep.subr.bf16.mxu0 0
  %9977 = vmatpush1.bf16.msra.mxu0 0
  %9978 = vmatprep.subr.bf16.mxu0 0
  %9979 = vmatpush1.bf16.msra.mxu0 0
  %9980 = vmatprep.subr.bf16.mxu0 0
  %9981 = vmatpush1.bf16.msra.mxu0 0
  %9982 = vmatprep.mubr.bf16.mxu0 0
  %9983 = vmatmul.mubr.bf16.gmra.mrb[0].mxu0 %v9945
  %v9984 = vpop.f32.mrb[0].mxu0
  %v9985 = vadd.f32 0.0, %v9984
  %v9986 = vpop.f32.mrb[0].mxu0
  %v9987 = vpop.f32.mrb[0].mxu0
  %v9988 = vpop.f32.mrb[0].mxu0
  %9989 = vdwg.mxu0
  %v9991 = vsel %vm460, %v304, 0
  %v9994 = vsel %vm464, %v7218, 0
  %9996 = vmatprep.subr.bf16.mxu0 0
  %9997 = vmatpush1.bf16.msra.mxu0 %v9994
  %9998 = vmatprep.subr.bf16.mxu0 0
  %9999 = vmatpush1.bf16.msra.mxu0 0
  %10000 = vmatprep.subr.bf16.mxu0 0
  %10001 = vmatpush1.bf16.msra.mxu0 0
  %10002 = vmatprep.subr.bf16.mxu0 0
  %10003 = vmatpush1.bf16.msra.mxu0 0
  %10004 = vmatprep.subr.bf16.mxu0 0
  %10005 = vmatpush1.bf16.msra.mxu0 0
  %10006 = vmatprep.subr.bf16.mxu0 0
  %10007 = vmatpush1.bf16.msra.mxu0 0
  %10008 = vmatprep.subr.bf16.mxu0 0
  %10009 = vmatpush1.bf16.msra.mxu0 0
  %10010 = vmatprep.subr.bf16.mxu0 0
  %10011 = vmatpush1.bf16.msra.mxu0 0
  %10012 = vmatprep.subr.bf16.mxu0 0
  %10013 = vmatpush1.bf16.msra.mxu0 0
  %10014 = vmatprep.subr.bf16.mxu0 0
  %10015 = vmatpush1.bf16.msra.mxu0 0
  %10016 = vmatprep.subr.bf16.mxu0 0
  %10017 = vmatpush1.bf16.msra.mxu0 0
  %10018 = vmatprep.subr.bf16.mxu0 0
  %10019 = vmatpush1.bf16.msra.mxu0 0
  %10020 = vmatprep.subr.bf16.mxu0 0
  %10021 = vmatpush1.bf16.msra.mxu0 0
  %10022 = vmatprep.subr.bf16.mxu0 0
  %10023 = vmatpush1.bf16.msra.mxu0 0
  %10024 = vmatprep.subr.bf16.mxu0 0
  %10025 = vmatpush1.bf16.msra.mxu0 0
  %10026 = vmatprep.subr.bf16.mxu0 0
  %10027 = vmatpush1.bf16.msra.mxu0 0
  %10028 = vmatprep.mubr.bf16.mxu0 0
  %10029 = vmatmul.mubr.bf16.gmra.mrb[0].mxu0 %v9991
  %v10030 = vpop.f32.mrb[0].mxu0
  %v10031 = vadd.f32 0.0, %v10030
  %v10032 = vpop.f32.mrb[0].mxu0
  %v10033 = vpop.f32.mrb[0].mxu0
  %v10034 = vpop.f32.mrb[0].mxu0
  %10035 = vdwg.mxu0
  %v10037 = vsel %vm460, %v305, 0
  %v10040 = vsel %vm464, %v7219, 0
  %10042 = vmatprep.subr.bf16.mxu0 0
  %10043 = vmatpush1.bf16.msra.mxu0 %v10040
  %10044 = vmatprep.subr.bf16.mxu0 0
  %10045 = vmatpush1.bf16.msra.mxu0 0
  %10046 = vmatprep.subr.bf16.mxu0 0
  %10047 = vmatpush1.bf16.msra.mxu0 0
  %10048 = vmatprep.subr.bf16.mxu0 0
  %10049 = vmatpush1.bf16.msra.mxu0 0
  %10050 = vmatprep.subr.bf16.mxu0 0
  %10051 = vmatpush1.bf16.msra.mxu0 0
  %10052 = vmatprep.subr.bf16.mxu0 0
  %10053 = vmatpush1.bf16.msra.mxu0 0
  %10054 = vmatprep.subr.bf16.mxu0 0
  %10055 = vmatpush1.bf16.msra.mxu0 0
  %10056 = vmatprep.subr.bf16.mxu0 0
  %10057 = vmatpush1.bf16.msra.mxu0 0
  %10058 = vmatprep.subr.bf16.mxu0 0
  %10059 = vmatpush1.bf16.msra.mxu0 0
  %10060 = vmatprep.subr.bf16.mxu0 0
  %10061 = vmatpush1.bf16.msra.mxu0 0
  %10062 = vmatprep.subr.bf16.mxu0 0
  %10063 = vmatpush1.bf16.msra.mxu0 0
  %10064 = vmatprep.subr.bf16.mxu0 0
  %10065 = vmatpush1.bf16.msra.mxu0 0
  %10066 = vmatprep.subr.bf16.mxu0 0
  %10067 = vmatpush1.bf16.msra.mxu0 0
  %10068 = vmatprep.subr.bf16.mxu0 0
  %10069 = vmatpush1.bf16.msra.mxu0 0
  %10070 = vmatprep.subr.bf16.mxu0 0
  %10071 = vmatpush1.bf16.msra.mxu0 0
  %10072 = vmatprep.subr.bf16.mxu0 0
  %10073 = vmatpush1.bf16.msra.mxu0 0
  %10074 = vmatprep.mubr.bf16.mxu0 0
  %10075 = vmatmul.mubr.bf16.gmra.mrb[0].mxu0 %v10037
  %v10076 = vpop.f32.mrb[0].mxu0
  %v10077 = vadd.f32 0.0, %v10076
  %v10078 = vpop.f32.mrb[0].mxu0
  %v10079 = vpop.f32.mrb[0].mxu0
  %v10080 = vpop.f32.mrb[0].mxu0
  %10081 = vdwg.mxu0
  %v10083 = vsel %vm460, %v306, 0
  %v10086 = vsel %vm464, %v7220, 0
  %10088 = vmatprep.subr.bf16.mxu0 0
  %10089 = vmatpush1.bf16.msra.mxu0 %v10086
  %10090 = vmatprep.subr.bf16.mxu0 0
  %10091 = vmatpush1.bf16.msra.mxu0 0
  %10092 = vmatprep.subr.bf16.mxu0 0
  %10093 = vmatpush1.bf16.msra.mxu0 0
  %10094 = vmatprep.subr.bf16.mxu0 0
  %10095 = vmatpush1.bf16.msra.mxu0 0
  %10096 = vmatprep.subr.bf16.mxu0 0
  %10097 = vmatpush1.bf16.msra.mxu0 0
  %10098 = vmatprep.subr.bf16.mxu0 0
  %10099 = vmatpush1.bf16.msra.mxu0 0
  %10100 = vmatprep.subr.bf16.mxu0 0
  %10101 = vmatpush1.bf16.msra.mxu0 0
  %10102 = vmatprep.subr.bf16.mxu0 0
  %10103 = vmatpush1.bf16.msra.mxu0 0
  %10104 = vmatprep.subr.bf16.mxu0 0
  %10105 = vmatpush1.bf16.msra.mxu0 0
  %10106 = vmatprep.subr.bf16.mxu0 0
  %10107 = vmatpush1.bf16.msra.mxu0 0
  %10108 = vmatprep.subr.bf16.mxu0 0
  %10109 = vmatpush1.bf16.msra.mxu0 0
  %10110 = vmatprep.subr.bf16.mxu0 0
  %10111 = vmatpush1.bf16.msra.mxu0 0
  %10112 = vmatprep.subr.bf16.mxu0 0
  %10113 = vmatpush1.bf16.msra.mxu0 0
  %10114 = vmatprep.subr.bf16.mxu0 0
  %10115 = vmatpush1.bf16.msra.mxu0 0
  %10116 = vmatprep.subr.bf16.mxu0 0
  %10117 = vmatpush1.bf16.msra.mxu0 0
  %10118 = vmatprep.subr.bf16.mxu0 0
  %10119 = vmatpush1.bf16.msra.mxu0 0
  %10120 = vmatprep.mubr.bf16.mxu0 0
  %10121 = vmatmul.mubr.bf16.gmra.mrb[0].mxu0 %v10083
  %v10122 = vpop.f32.mrb[0].mxu0
  %v10123 = vadd.f32 0.0, %v10122
  %v10124 = vpop.f32.mrb[0].mxu0
  %v10125 = vpop.f32.mrb[0].mxu0
  %v10126 = vpop.f32.mrb[0].mxu0
  %10127 = vdwg.mxu0
  %v10129 = vsel %vm460, %v307, 0
  %v10132 = vsel %vm464, %v7221, 0
  %10134 = vmatprep.subr.bf16.mxu0 0
  %10135 = vmatpush1.bf16.msra.mxu0 %v10132
  %10136 = vmatprep.subr.bf16.mxu0 0
  %10137 = vmatpush1.bf16.msra.mxu0 0
  %10138 = vmatprep.subr.bf16.mxu0 0
  %10139 = vmatpush1.bf16.msra.mxu0 0
  %10140 = vmatprep.subr.bf16.mxu0 0
  %10141 = vmatpush1.bf16.msra.mxu0 0
  %10142 = vmatprep.subr.bf16.mxu0 0
  %10143 = vmatpush1.bf16.msra.mxu0 0
  %10144 = vmatprep.subr.bf16.mxu0 0
  %10145 = vmatpush1.bf16.msra.mxu0 0
  %10146 = vmatprep.subr.bf16.mxu0 0
  %10147 = vmatpush1.bf16.msra.mxu0 0
  %10148 = vmatprep.subr.bf16.mxu0 0
  %10149 = vmatpush1.bf16.msra.mxu0 0
  %10150 = vmatprep.subr.bf16.mxu0 0
  %10151 = vmatpush1.bf16.msra.mxu0 0
  %10152 = vmatprep.subr.bf16.mxu0 0
  %10153 = vmatpush1.bf16.msra.mxu0 0
  %10154 = vmatprep.subr.bf16.mxu0 0
  %10155 = vmatpush1.bf16.msra.mxu0 0
  %10156 = vmatprep.subr.bf16.mxu0 0
  %10157 = vmatpush1.bf16.msra.mxu0 0
  %10158 = vmatprep.subr.bf16.mxu0 0
  %10159 = vmatpush1.bf16.msra.mxu0 0
  %10160 = vmatprep.subr.bf16.mxu0 0
  %10161 = vmatpush1.bf16.msra.mxu0 0
  %10162 = vmatprep.subr.bf16.mxu0 0
  %10163 = vmatpush1.bf16.msra.mxu0 0
  %10164 = vmatprep.subr.bf16.mxu0 0
  %10165 = vmatpush1.bf16.msra.mxu0 0
  %10166 = vmatprep.mubr.bf16.mxu0 0
  %10167 = vmatmul.mubr.bf16.gmra.mrb[0].mxu0 %v10129
  %v10168 = vpop.f32.mrb[0].mxu0
  %v10169 = vadd.f32 0.0, %v10168
  %v10170 = vpop.f32.mrb[0].mxu0
  %v10171 = vpop.f32.mrb[0].mxu0
  %v10172 = vpop.f32.mrb[0].mxu0
  %10173 = vdwg.mxu0
  %v10175 = vsel %vm460, %v308, 0
  %v10178 = vsel %vm464, %v7222, 0
  %10180 = vmatprep.subr.bf16.mxu0 0
  %10181 = vmatpush1.bf16.msra.mxu0 %v10178
  %10182 = vmatprep.subr.bf16.mxu0 0
  %10183 = vmatpush1.bf16.msra.mxu0 0
  %10184 = vmatprep.subr.bf16.mxu0 0
  %10185 = vmatpush1.bf16.msra.mxu0 0
  %10186 = vmatprep.subr.bf16.mxu0 0
  %10187 = vmatpush1.bf16.msra.mxu0 0
  %10188 = vmatprep.subr.bf16.mxu0 0
  %10189 = vmatpush1.bf16.msra.mxu0 0
  %10190 = vmatprep.subr.bf16.mxu0 0
  %10191 = vmatpush1.bf16.msra.mxu0 0
  %10192 = vmatprep.subr.bf16.mxu0 0
  %10193 = vmatpush1.bf16.msra.mxu0 0
  %10194 = vmatprep.subr.bf16.mxu0 0
  %10195 = vmatpush1.bf16.msra.mxu0 0
  %10196 = vmatprep.subr.bf16.mxu0 0
  %10197 = vmatpush1.bf16.msra.mxu0 0
  %10198 = vmatprep.subr.bf16.mxu0 0
  %10199 = vmatpush1.bf16.msra.mxu0 0
  %10200 = vmatprep.subr.bf16.mxu0 0
  %10201 = vmatpush1.bf16.msra.mxu0 0
  %10202 = vmatprep.subr.bf16.mxu0 0
  %10203 = vmatpush1.bf16.msra.mxu0 0
  %10204 = vmatprep.subr.bf16.mxu0 0
  %10205 = vmatpush1.bf16.msra.mxu0 0
  %10206 = vmatprep.subr.bf16.mxu0 0
  %10207 = vmatpush1.bf16.msra.mxu0 0
  %10208 = vmatprep.subr.bf16.mxu0 0
  %10209 = vmatpush1.bf16.msra.mxu0 0
  %10210 = vmatprep.subr.bf16.mxu0 0
  %10211 = vmatpush1.bf16.msra.mxu0 0
  %10212 = vmatprep.mubr.bf16.mxu0 0
  %10213 = vmatmul.mubr.bf16.gmra.mrb[0].mxu0 %v10175
  %v10214 = vpop.f32.mrb[0].mxu0
  %v10215 = vadd.f32 0.0, %v10214
  %v10216 = vpop.f32.mrb[0].mxu0
  %v10217 = vpop.f32.mrb[0].mxu0
  %v10218 = vpop.f32.mrb[0].mxu0
  %10219 = vdwg.mxu0
  %v10221 = vsel %vm460, %v309, 0
  %v10224 = vsel %vm464, %v7223, 0
  %10226 = vmatprep.subr.bf16.mxu0 0
  %10227 = vmatpush1.bf16.msra.mxu0 %v10224
  %10228 = vmatprep.subr.bf16.mxu0 0
  %10229 = vmatpush1.bf16.msra.mxu0 0
  %10230 = vmatprep.subr.bf16.mxu0 0
  %10231 = vmatpush1.bf16.msra.mxu0 0
  %10232 = vmatprep.subr.bf16.mxu0 0
  %10233 = vmatpush1.bf16.msra.mxu0 0
  %10234 = vmatprep.subr.bf16.mxu0 0
  %10235 = vmatpush1.bf16.msra.mxu0 0
  %10236 = vmatprep.subr.bf16.mxu0 0
  %10237 = vmatpush1.bf16.msra.mxu0 0
  %10238 = vmatprep.subr.bf16.mxu0 0
  %10239 = vmatpush1.bf16.msra.mxu0 0
  %10240 = vmatprep.subr.bf16.mxu0 0
  %10241 = vmatpush1.bf16.msra.mxu0 0
  %10242 = vmatprep.subr.bf16.mxu0 0
  %10243 = vmatpush1.bf16.msra.mxu0 0
  %10244 = vmatprep.subr.bf16.mxu0 0
  %10245 = vmatpush1.bf16.msra.mxu0 0
  %10246 = vmatprep.subr.bf16.mxu0 0
  %10247 = vmatpush1.bf16.msra.mxu0 0
  %10248 = vmatprep.subr.bf16.mxu0 0
  %10249 = vmatpush1.bf16.msra.mxu0 0
  %10250 = vmatprep.subr.bf16.mxu0 0
  %10251 = vmatpush1.bf16.msra.mxu0 0
  %10252 = vmatprep.subr.bf16.mxu0 0
  %10253 = vmatpush1.bf16.msra.mxu0 0
  %10254 = vmatprep.subr.bf16.mxu0 0
  %10255 = vmatpush1.bf16.msra.mxu0 0
  %10256 = vmatprep.subr.bf16.mxu0 0
  %10257 = vmatpush1.bf16.msra.mxu0 0
  %10258 = vmatprep.mubr.bf16.mxu0 0
  %10259 = vmatmul.mubr.bf16.gmra.mrb[0].mxu0 %v10221
  %v10260 = vpop.f32.mrb[0].mxu0
  %v10261 = vadd.f32 0.0, %v10260
  %v10262 = vpop.f32.mrb[0].mxu0
  %v10263 = vpop.f32.mrb[0].mxu0
  %v10264 = vpop.f32.mrb[0].mxu0
  %10265 = vdwg.mxu0
  %v10267 = vsel %vm460, %v310, 0
  %v10270 = vsel %vm464, %v7224, 0
  %10272 = vmatprep.subr.bf16.mxu0 0
  %10273 = vmatpush1.bf16.msra.mxu0 %v10270
  %10274 = vmatprep.subr.bf16.mxu0 0
  %10275 = vmatpush1.bf16.msra.mxu0 0
  %10276 = vmatprep.subr.bf16.mxu0 0
  %10277 = vmatpush1.bf16.msra.mxu0 0
  %10278 = vmatprep.subr.bf16.mxu0 0
  %10279 = vmatpush1.bf16.msra.mxu0 0
  %10280 = vmatprep.subr.bf16.mxu0 0
  %10281 = vmatpush1.bf16.msra.mxu0 0
  %10282 = vmatprep.subr.bf16.mxu0 0
  %10283 = vmatpush1.bf16.msra.mxu0 0
  %10284 = vmatprep.subr.bf16.mxu0 0
  %10285 = vmatpush1.bf16.msra.mxu0 0
  %10286 = vmatprep.subr.bf16.mxu0 0
  %10287 = vmatpush1.bf16.msra.mxu0 0
  %10288 = vmatprep.subr.bf16.mxu0 0
  %10289 = vmatpush1.bf16.msra.mxu0 0
  %10290 = vmatprep.subr.bf16.mxu0 0
  %10291 = vmatpush1.bf16.msra.mxu0 0
  %10292 = vmatprep.subr.bf16.mxu0 0
  %10293 = vmatpush1.bf16.msra.mxu0 0
  %10294 = vmatprep.subr.bf16.mxu0 0
  %10295 = vmatpush1.bf16.msra.mxu0 0
  %10296 = vmatprep.subr.bf16.mxu0 0
  %10297 = vmatpush1.bf16.msra.mxu0 0
  %10298 = vmatprep.subr.bf16.mxu0 0
  %10299 = vmatpush1.bf16.msra.mxu0 0
  %10300 = vmatprep.subr.bf16.mxu0 0
  %10301 = vmatpush1.bf16.msra.mxu0 0
  %10302 = vmatprep.subr.bf16.mxu0 0
  %10303 = vmatpush1.bf16.msra.mxu0 0
  %10304 = vmatprep.mubr.bf16.mxu0 0
  %10305 = vmatmul.mubr.bf16.gmra.mrb[0].mxu0 %v10267
  %v10306 = vpop.f32.mrb[0].mxu0
  %v10307 = vadd.f32 0.0, %v10306
  %v10308 = vpop.f32.mrb[0].mxu0
  %v10309 = vpop.f32.mrb[0].mxu0
  %v10310 = vpop.f32.mrb[0].mxu0
  %10311 = vdwg.mxu0
  %v10313 = vsel %vm460, %v311, 0
  %v10316 = vsel %vm464, %v7225, 0
  %10318 = vmatprep.subr.bf16.mxu0 0
  %10319 = vmatpush1.bf16.msra.mxu0 %v10316
  %10320 = vmatprep.subr.bf16.mxu0 0
  %10321 = vmatpush1.bf16.msra.mxu0 0
  %10322 = vmatprep.subr.bf16.mxu0 0
  %10323 = vmatpush1.bf16.msra.mxu0 0
  %10324 = vmatprep.subr.bf16.mxu0 0
  %10325 = vmatpush1.bf16.msra.mxu0 0
  %10326 = vmatprep.subr.bf16.mxu0 0
  %10327 = vmatpush1.bf16.msra.mxu0 0
  %10328 = vmatprep.subr.bf16.mxu0 0
  %10329 = vmatpush1.bf16.msra.mxu0 0
  %10330 = vmatprep.subr.bf16.mxu0 0
  %10331 = vmatpush1.bf16.msra.mxu0 0
  %10332 = vmatprep.subr.bf16.mxu0 0
  %10333 = vmatpush1.bf16.msra.mxu0 0
  %10334 = vmatprep.subr.bf16.mxu0 0
  %10335 = vmatpush1.bf16.msra.mxu0 0
  %10336 = vmatprep.subr.bf16.mxu0 0
  %10337 = vmatpush1.bf16.msra.mxu0 0
  %10338 = vmatprep.subr.bf16.mxu0 0
  %10339 = vmatpush1.bf16.msra.mxu0 0
  %10340 = vmatprep.subr.bf16.mxu0 0
  %10341 = vmatpush1.bf16.msra.mxu0 0
  %10342 = vmatprep.subr.bf16.mxu0 0
  %10343 = vmatpush1.bf16.msra.mxu0 0
  %10344 = vmatprep.subr.bf16.mxu0 0
  %10345 = vmatpush1.bf16.msra.mxu0 0
  %10346 = vmatprep.subr.bf16.mxu0 0
  %10347 = vmatpush1.bf16.msra.mxu0 0
  %10348 = vmatprep.subr.bf16.mxu0 0
  %10349 = vmatpush1.bf16.msra.mxu0 0
  %10350 = vmatprep.mubr.bf16.mxu0 0
  %10351 = vmatmul.mubr.bf16.gmra.mrb[0].mxu0 %v10313
  %v10352 = vpop.f32.mrb[0].mxu0
  %v10353 = vadd.f32 0.0, %v10352
  %v10354 = vpop.f32.mrb[0].mxu0
  %v10355 = vpop.f32.mrb[0].mxu0
  %v10356 = vpop.f32.mrb[0].mxu0
  %10357 = vdwg.mxu0
  %v10359 = vsel %vm460, %v312, 0
  %v10362 = vsel %vm464, %v7226, 0
  %10364 = vmatprep.subr.bf16.mxu0 0
  %10365 = vmatpush1.bf16.msra.mxu0 %v10362
  %10366 = vmatprep.subr.bf16.mxu0 0
  %10367 = vmatpush1.bf16.msra.mxu0 0
  %10368 = vmatprep.subr.bf16.mxu0 0
  %10369 = vmatpush1.bf16.msra.mxu0 0
  %10370 = vmatprep.subr.bf16.mxu0 0
  %10371 = vmatpush1.bf16.msra.mxu0 0
  %10372 = vmatprep.subr.bf16.mxu0 0
  %10373 = vmatpush1.bf16.msra.mxu0 0
  %10374 = vmatprep.subr.bf16.mxu0 0
  %10375 = vmatpush1.bf16.msra.mxu0 0
  %10376 = vmatprep.subr.bf16.mxu0 0
  %10377 = vmatpush1.bf16.msra.mxu0 0
  %10378 = vmatprep.subr.bf16.mxu0 0
  %10379 = vmatpush1.bf16.msra.mxu0 0
  %10380 = vmatprep.subr.bf16.mxu0 0
  %10381 = vmatpush1.bf16.msra.mxu0 0
  %10382 = vmatprep.subr.bf16.mxu0 0
  %10383 = vmatpush1.bf16.msra.mxu0 0
  %10384 = vmatprep.subr.bf16.mxu0 0
  %10385 = vmatpush1.bf16.msra.mxu0 0
  %10386 = vmatprep.subr.bf16.mxu0 0
  %10387 = vmatpush1.bf16.msra.mxu0 0
  %10388 = vmatprep.subr.bf16.mxu0 0
  %10389 = vmatpush1.bf16.msra.mxu0 0
  %10390 = vmatprep.subr.bf16.mxu0 0
  %10391 = vmatpush1.bf16.msra.mxu0 0
  %10392 = vmatprep.subr.bf16.mxu0 0
  %10393 = vmatpush1.bf16.msra.mxu0 0
  %10394 = vmatprep.subr.bf16.mxu0 0
  %10395 = vmatpush1.bf16.msra.mxu0 0
  %10396 = vmatprep.mubr.bf16.mxu0 0
  %10397 = vmatmul.mubr.bf16.gmra.mrb[0].mxu0 %v10359
  %v10398 = vpop.f32.mrb[0].mxu0
  %v10399 = vadd.f32 0.0, %v10398
  %v10400 = vpop.f32.mrb[0].mxu0
  %v10401 = vpop.f32.mrb[0].mxu0
  %v10402 = vpop.f32.mrb[0].mxu0
  %10403 = vdwg.mxu0
  %v10405 = vsel %vm460, %v313, 0
  %v10408 = vsel %vm464, %v7227, 0
  %10410 = vmatprep.subr.bf16.mxu0 0
  %10411 = vmatpush1.bf16.msra.mxu0 %v10408
  %10412 = vmatprep.subr.bf16.mxu0 0
  %10413 = vmatpush1.bf16.msra.mxu0 0
  %10414 = vmatprep.subr.bf16.mxu0 0
  %10415 = vmatpush1.bf16.msra.mxu0 0
  %10416 = vmatprep.subr.bf16.mxu0 0
  %10417 = vmatpush1.bf16.msra.mxu0 0
  %10418 = vmatprep.subr.bf16.mxu0 0
  %10419 = vmatpush1.bf16.msra.mxu0 0
  %10420 = vmatprep.subr.bf16.mxu0 0
  %10421 = vmatpush1.bf16.msra.mxu0 0
  %10422 = vmatprep.subr.bf16.mxu0 0
  %10423 = vmatpush1.bf16.msra.mxu0 0
  %10424 = vmatprep.subr.bf16.mxu0 0
  %10425 = vmatpush1.bf16.msra.mxu0 0
  %10426 = vmatprep.subr.bf16.mxu0 0
  %10427 = vmatpush1.bf16.msra.mxu0 0
  %10428 = vmatprep.subr.bf16.mxu0 0
  %10429 = vmatpush1.bf16.msra.mxu0 0
  %10430 = vmatprep.subr.bf16.mxu0 0
  %10431 = vmatpush1.bf16.msra.mxu0 0
  %10432 = vmatprep.subr.bf16.mxu0 0
  %10433 = vmatpush1.bf16.msra.mxu0 0
  %10434 = vmatprep.subr.bf16.mxu0 0
  %10435 = vmatpush1.bf16.msra.mxu0 0
  %10436 = vmatprep.subr.bf16.mxu0 0
  %10437 = vmatpush1.bf16.msra.mxu0 0
  %10438 = vmatprep.subr.bf16.mxu0 0
  %10439 = vmatpush1.bf16.msra.mxu0 0
  %10440 = vmatprep.subr.bf16.mxu0 0
  %10441 = vmatpush1.bf16.msra.mxu0 0
  %10442 = vmatprep.mubr.bf16.mxu0 0
  %10443 = vmatmul.mubr.bf16.gmra.mrb[0].mxu0 %v10405
  %v10444 = vpop.f32.mrb[0].mxu0
  %v10445 = vadd.f32 0.0, %v10444
  %v10446 = vpop.f32.mrb[0].mxu0
  %v10447 = vpop.f32.mrb[0].mxu0
  %v10448 = vpop.f32.mrb[0].mxu0
  %10449 = vdwg.mxu0
  %v10451 = vsel %vm460, %v314, 0
  %v10454 = vsel %vm464, %v7228, 0
  %10456 = vmatprep.subr.bf16.mxu0 0
  %10457 = vmatpush1.bf16.msra.mxu0 %v10454
  %10458 = vmatprep.subr.bf16.mxu0 0
  %10459 = vmatpush1.bf16.msra.mxu0 0
  %10460 = vmatprep.subr.bf16.mxu0 0
  %10461 = vmatpush1.bf16.msra.mxu0 0
  %10462 = vmatprep.subr.bf16.mxu0 0
  %10463 = vmatpush1.bf16.msra.mxu0 0
  %10464 = vmatprep.subr.bf16.mxu0 0
  %10465 = vmatpush1.bf16.msra.mxu0 0
  %10466 = vmatprep.subr.bf16.mxu0 0
  %10467 = vmatpush1.bf16.msra.mxu0 0
  %10468 = vmatprep.subr.bf16.mxu0 0
  %10469 = vmatpush1.bf16.msra.mxu0 0
  %10470 = vmatprep.subr.bf16.mxu0 0
  %10471 = vmatpush1.bf16.msra.mxu0 0
  %10472 = vmatprep.subr.bf16.mxu0 0
  %10473 = vmatpush1.bf16.msra.mxu0 0
  %10474 = vmatprep.subr.bf16.mxu0 0
  %10475 = vmatpush1.bf16.msra.mxu0 0
  %10476 = vmatprep.subr.bf16.mxu0 0
  %10477 = vmatpush1.bf16.msra.mxu0 0
  %10478 = vmatprep.subr.bf16.mxu0 0
  %10479 = vmatpush1.bf16.msra.mxu0 0
  %10480 = vmatprep.subr.bf16.mxu0 0
  %10481 = vmatpush1.bf16.msra.mxu0 0
  %10482 = vmatprep.subr.bf16.mxu0 0
  %10483 = vmatpush1.bf16.msra.mxu0 0
  %10484 = vmatprep.subr.bf16.mxu0 0
  %10485 = vmatpush1.bf16.msra.mxu0 0
  %10486 = vmatprep.subr.bf16.mxu0 0
  %10487 = vmatpush1.bf16.msra.mxu0 0
  %10488 = vmatprep.mubr.bf16.mxu0 0
  %10489 = vmatmul.mubr.bf16.gmra.mrb[0].mxu0 %v10451
  %v10490 = vpop.f32.mrb[0].mxu0
  %v10491 = vadd.f32 0.0, %v10490
  %v10492 = vpop.f32.mrb[0].mxu0
  %v10493 = vpop.f32.mrb[0].mxu0
  %v10494 = vpop.f32.mrb[0].mxu0
  %10495 = vdwg.mxu0
  %v10497 = vsel %vm460, %v315, 0
  %v10500 = vsel %vm464, %v7229, 0
  %10502 = vmatprep.subr.bf16.mxu0 0
  %10503 = vmatpush1.bf16.msra.mxu0 %v10500
  %10504 = vmatprep.subr.bf16.mxu0 0
  %10505 = vmatpush1.bf16.msra.mxu0 0
  %10506 = vmatprep.subr.bf16.mxu0 0
  %10507 = vmatpush1.bf16.msra.mxu0 0
  %10508 = vmatprep.subr.bf16.mxu0 0
  %10509 = vmatpush1.bf16.msra.mxu0 0
  %10510 = vmatprep.subr.bf16.mxu0 0
  %10511 = vmatpush1.bf16.msra.mxu0 0
  %10512 = vmatprep.subr.bf16.mxu0 0
  %10513 = vmatpush1.bf16.msra.mxu0 0
  %10514 = vmatprep.subr.bf16.mxu0 0
  %10515 = vmatpush1.bf16.msra.mxu0 0
  %10516 = vmatprep.subr.bf16.mxu0 0
  %10517 = vmatpush1.bf16.msra.mxu0 0
  %10518 = vmatprep.subr.bf16.mxu0 0
  %10519 = vmatpush1.bf16.msra.mxu0 0
  %10520 = vmatprep.subr.bf16.mxu0 0
  %10521 = vmatpush1.bf16.msra.mxu0 0
  %10522 = vmatprep.subr.bf16.mxu0 0
  %10523 = vmatpush1.bf16.msra.mxu0 0
  %10524 = vmatprep.subr.bf16.mxu0 0
  %10525 = vmatpush1.bf16.msra.mxu0 0
  %10526 = vmatprep.subr.bf16.mxu0 0
  %10527 = vmatpush1.bf16.msra.mxu0 0
  %10528 = vmatprep.subr.bf16.mxu0 0
  %10529 = vmatpush1.bf16.msra.mxu0 0
  %10530 = vmatprep.subr.bf16.mxu0 0
  %10531 = vmatpush1.bf16.msra.mxu0 0
  %10532 = vmatprep.subr.bf16.mxu0 0
  %10533 = vmatpush1.bf16.msra.mxu0 0
  %10534 = vmatprep.mubr.bf16.mxu0 0
  %10535 = vmatmul.mubr.bf16.gmra.mrb[0].mxu0 %v10497
  %v10536 = vpop.f32.mrb[0].mxu0
  %v10537 = vadd.f32 0.0, %v10536
  %v10538 = vpop.f32.mrb[0].mxu0
  %v10539 = vpop.f32.mrb[0].mxu0
  %v10540 = vpop.f32.mrb[0].mxu0
  %10541 = vdwg.mxu0
  %v10542 = vld [vmem:[#allocation2] sm:$0xff]
  %v10543 = vld [vmem:[#allocation2 + $0x8] sm:$0xff]
  %v10544 = vld [vmem:[#allocation2 + $0x10] sm:$0xff]
  %v10545 = vld [vmem:[#allocation2 + $0x18] sm:$0xff]
  %v10546 = vld [vmem:[#allocation2 + $0x20] sm:$0xff]
  %v10547 = vld [vmem:[#allocation2 + $0x28] sm:$0xff]
  %v10548 = vld [vmem:[#allocation2 + $0x30] sm:$0xff]
  %v10549 = vld [vmem:[#allocation2 + $0x38] sm:$0xff]
  %v10550 = vld [vmem:[#allocation2 + $0x40] sm:$0xff]
  %v10551 = vld [vmem:[#allocation2 + $0x48] sm:$0xff]
  %v10552 = vld [vmem:[#allocation2 + $0x50] sm:$0xff]
  %v10553 = vld [vmem:[#allocation2 + $0x58] sm:$0xff]
  %v10554 = vld [vmem:[#allocation2 + $0x60] sm:$0xff]
  %v10555 = vld [vmem:[#allocation2 + $0x68] sm:$0xff]
  %v10556 = vld [vmem:[#allocation2 + $0x70] sm:$0xff]
  %v10557 = vld [vmem:[#allocation2 + $0x78] sm:$0xff]
  %v10558 = vld [vmem:[#allocation2 + $0x80] sm:$0xff]
  %v10559 = vld [vmem:[#allocation2 + $0x88] sm:$0xff]
  %v10560 = vld [vmem:[#allocation2 + $0x90] sm:$0xff]
  %v10561 = vld [vmem:[#allocation2 + $0x98] sm:$0xff]
  %v10562 = vld [vmem:[#allocation2 + $0xa0] sm:$0xff]
  %v10563 = vld [vmem:[#allocation2 + $0xa8] sm:$0xff]
  %v10564 = vld [vmem:[#allocation2 + $0xb0] sm:$0xff]
  %v10565 = vld [vmem:[#allocation2 + $0xb8] sm:$0xff]
  %v10566 = vld [vmem:[#allocation2 + $0xc0] sm:$0xff]
  %v10567 = vld [vmem:[#allocation2 + $0xc8] sm:$0xff]
  %v10568 = vld [vmem:[#allocation2 + $0xd0] sm:$0xff]
  %v10569 = vld [vmem:[#allocation2 + $0xd8] sm:$0xff]
  %v10570 = vld [vmem:[#allocation2 + $0xe0] sm:$0xff]
  %v10571 = vld [vmem:[#allocation2 + $0xe8] sm:$0xff]
  %v10572 = vld [vmem:[#allocation2 + $0xf0] sm:$0xff]
  %v10573 = vld [vmem:[#allocation2 + $0xf8] sm:$0xff]
  %v10574 = vld [vmem:[#allocation2 + $0x100] sm:$0xff]
  %v10575 = vld [vmem:[#allocation2 + $0x108] sm:$0xff]
  %v10576 = vld [vmem:[#allocation2 + $0x110] sm:$0xff]
  %v10577 = vld [vmem:[#allocation2 + $0x118] sm:$0xff]
  %v10578 = vld [vmem:[#allocation2 + $0x120] sm:$0xff]
  %v10579 = vld [vmem:[#allocation2 + $0x128] sm:$0xff]
  %v10580 = vld [vmem:[#allocation2 + $0x130] sm:$0xff]
  %v10581 = vld [vmem:[#allocation2 + $0x138] sm:$0xff]
  %v10582 = vld [vmem:[#allocation2 + $0x140] sm:$0xff]
  %v10583 = vld [vmem:[#allocation2 + $0x148] sm:$0xff]
  %v10584 = vld [vmem:[#allocation2 + $0x150] sm:$0xff]
  %v10585 = vld [vmem:[#allocation2 + $0x158] sm:$0xff]
  %v10586 = vld [vmem:[#allocation2 + $0x160] sm:$0xff]
  %v10587 = vld [vmem:[#allocation2 + $0x168] sm:$0xff]
  %v10588 = vld [vmem:[#allocation2 + $0x170] sm:$0xff]
  %v10589 = vld [vmem:[#allocation2 + $0x178] sm:$0xff]
  %v10590 = vld [vmem:[#allocation2 + $0x180] sm:$0xff]
  %v10591 = vld [vmem:[#allocation2 + $0x188] sm:$0xff]
  %v10592 = vld [vmem:[#allocation2 + $0x190] sm:$0xff]
  %v10593 = vld [vmem:[#allocation2 + $0x198] sm:$0xff]
  %v10594 = vld [vmem:[#allocation2 + $0x1a0] sm:$0xff]
  %v10595 = vld [vmem:[#allocation2 + $0x1a8] sm:$0xff]
  %v10596 = vld [vmem:[#allocation2 + $0x1b0] sm:$0xff]
  %v10597 = vld [vmem:[#allocation2 + $0x1b8] sm:$0xff]
  %v10598 = vld [vmem:[#allocation2 + $0x1c0] sm:$0xff]
  %v10599 = vld [vmem:[#allocation2 + $0x1c8] sm:$0xff]
  %v10600 = vld [vmem:[#allocation2 + $0x1d0] sm:$0xff]
  %v10601 = vld [vmem:[#allocation2 + $0x1d8] sm:$0xff]
  %v10602 = vld [vmem:[#allocation2 + $0x1e0] sm:$0xff]
  %v10603 = vld [vmem:[#allocation2 + $0x1e8] sm:$0xff]
  %v10604 = vld [vmem:[#allocation2 + $0x1f0] sm:$0xff]
  %v10605 = vld [vmem:[#allocation2 + $0x1f8] sm:$0xff]
  %v10606 = vld [vmem:[#allocation2 + $0x200] sm:$0xff]
  %v10607 = vld [vmem:[#allocation2 + $0x208] sm:$0xff]
  %v10608 = vld [vmem:[#allocation2 + $0x210] sm:$0xff]
  %v10609 = vld [vmem:[#allocation2 + $0x218] sm:$0xff]
  %v10610 = vld [vmem:[#allocation2 + $0x220] sm:$0xff]
  %v10611 = vld [vmem:[#allocation2 + $0x228] sm:$0xff]
  %v10612 = vld [vmem:[#allocation2 + $0x230] sm:$0xff]
  %v10613 = vld [vmem:[#allocation2 + $0x238] sm:$0xff]
  %v10614 = vsub.f32 %v503, %v7271
  %v10615 = vsub.f32 %v549, %v7317
  %v10616 = vsub.f32 %v595, %v7363
  %v10617 = vsub.f32 %v641, %v7409
  %v10618 = vsub.f32 %v687, %v7455
  %v10619 = vsub.f32 %v733, %v7501
  %v10620 = vsub.f32 %v779, %v7547
  %v10621 = vsub.f32 %v825, %v7593
  %v10622 = vsub.f32 %v871, %v7639
  %v10623 = vsub.f32 %v917, %v7685
  %v10624 = vsub.f32 %v963, %v7731
  %v10625 = vsub.f32 %v1009, %v7777
  %v10626 = vsub.f32 %v1055, %v7823
  %v10627 = vsub.f32 %v1101, %v7869
  %v10628 = vsub.f32 %v1147, %v7915
  %v10629 = vsub.f32 %v1193, %v7961
  %v10630 = vsub.f32 %v1239, %v8007
  %v10631 = vsub.f32 %v1285, %v8053
  %v10632 = vsub.f32 %v1331, %v8099
  %v10633 = vsub.f32 %v1377, %v8145
  %v10634 = vsub.f32 %v1423, %v8191
  %v10635 = vsub.f32 %v1469, %v8237
  %v10636 = vsub.f32 %v1515, %v8283
  %v10637 = vsub.f32 %v1561, %v8329
  %v10638 = vsub.f32 %v1607, %v8375
  %v10639 = vsub.f32 %v1653, %v8421
  %v10640 = vsub.f32 %v1699, %v8467
  %v10641 = vsub.f32 %v1745, %v8513
  %v10642 = vsub.f32 %v1791, %v8559
  %v10643 = vsub.f32 %v1837, %v8605
  %v10644 = vsub.f32 %v1883, %v8651
  %v10645 = vsub.f32 %v1929, %v8697
  %v10646 = vsub.f32 %v1975, %v8743
  %v10647 = vsub.f32 %v2021, %v8789
  %v10648 = vsub.f32 %v2067, %v8835
  %v10649 = vsub.f32 %v2113, %v8881
  %v10650 = vsub.f32 %v2159, %v8927
  %v10651 = vsub.f32 %v2205, %v8973
  %v10652 = vsub.f32 %v2251, %v9019
  %v10653 = vsub.f32 %v2297, %v9065
  %v10654 = vsub.f32 %v2343, %v9111
  %v10655 = vsub.f32 %v2389, %v9157
  %v10656 = vsub.f32 %v2435, %v9203
  %v10657 = vsub.f32 %v2481, %v9249
  %v10658 = vsub.f32 %v2527, %v9295
  %v10659 = vsub.f32 %v2573, %v9341
  %v10660 = vsub.f32 %v2619, %v9387
  %v10661 = vsub.f32 %v2665, %v9433
  %v10662 = vsub.f32 %v2711, %v9479
  %v10663 = vsub.f32 %v2757, %v9525
  %v10664 = vsub.f32 %v2803, %v9571
  %v10665 = vsub.f32 %v2849, %v9617
  %v10666 = vsub.f32 %v2895, %v9663
  %v10667 = vsub.f32 %v2941, %v9709
  %v10668 = vsub.f32 %v2987, %v9755
  %v10669 = vsub.f32 %v3033, %v9801
  %v10670 = vsub.f32 %v3079, %v9847
  %v10671 = vsub.f32 %v3125, %v9893
  %v10672 = vsub.f32 %v3171, %v9939
  %v10673 = vsub.f32 %v3217, %v9985
  %v10674 = vsub.f32 %v3263, %v10031
  %v10675 = vsub.f32 %v3309, %v10077
  %v10676 = vsub.f32 %v3355, %v10123
  %v10677 = vsub.f32 %v3401, %v10169
  %v10678 = vsub.f32 %v3447, %v10215
  %v10679 = vsub.f32 %v3493, %v10261
  %v10680 = vsub.f32 %v3539, %v10307
  %v10681 = vsub.f32 %v3585, %v10353
  %v10682 = vsub.f32 %v3631, %v10399
  %v10683 = vsub.f32 %v3677, %v10445
  %v10684 = vsub.f32 %v3723, %v10491
  %v10685 = vsub.f32 %v3769, %v10537
  %v10686 = vadd.f32 %v10542, %v10614
  %v10687 = vadd.f32 %v10543, %v10615
  %v10688 = vadd.f32 %v10544, %v10616
  %v10689 = vadd.f32 %v10545, %v10617
  %v10690 = vadd.f32 %v10546, %v10618
  %v10691 = vadd.f32 %v10547, %v10619
  %v10692 = vadd.f32 %v10548, %v10620
  %v10693 = vadd.f32 %v10549, %v10621
  %v10694 = vadd.f32 %v10550, %v10622
  %v10695 = vadd.f32 %v10551, %v10623
  %v10696 = vadd.f32 %v10552, %v10624
  %v10697 = vadd.f32 %v10553, %v10625
  %v10698 = vadd.f32 %v10554, %v10626
  %v10699 = vadd.f32 %v10555, %v10627
  %v10700 = vadd.f32 %v10556, %v10628
  %v10701 = vadd.f32 %v10557, %v10629
  %v10702 = vadd.f32 %v10558, %v10630
  %v10703 = vadd.f32 %v10559, %v10631
  %v10704 = vadd.f32 %v10560, %v10632
  %v10705 = vadd.f32 %v10561, %v10633
  %v10706 = vadd.f32 %v10562, %v10634
  %v10707 = vadd.f32 %v10563, %v10635
  %v10708 = vadd.f32 %v10564, %v10636
  %v10709 = vadd.f32 %v10565, %v10637
  %v10710 = vadd.f32 %v10566, %v10638
  %v10711 = vadd.f32 %v10567, %v10639
  %v10712 = vadd.f32 %v10568, %v10640
  %v10713 = vadd.f32 %v10569, %v10641
  %v10714 = vadd.f32 %v10570, %v10642
  %v10715 = vadd.f32 %v10571, %v10643
  %v10716 = vadd.f32 %v10572, %v10644
  %v10717 = vadd.f32 %v10573, %v10645
  %v10718 = vadd.f32 %v10574, %v10646
  %v10719 = vadd.f32 %v10575, %v10647
  %v10720 = vadd.f32 %v10576, %v10648
  %v10721 = vadd.f32 %v10577, %v10649
  %v10722 = vadd.f32 %v10578, %v10650
  %v10723 = vadd.f32 %v10579, %v10651
  %v10724 = vadd.f32 %v10580, %v10652
  %v10725 = vadd.f32 %v10581, %v10653
  %v10726 = vadd.f32 %v10582, %v10654
  %v10727 = vadd.f32 %v10583, %v10655
  %v10728 = vadd.f32 %v10584, %v10656
  %v10729 = vadd.f32 %v10585, %v10657
  %v10730 = vadd.f32 %v10586, %v10658
  %v10731 = vadd.f32 %v10587, %v10659
  %v10732 = vadd.f32 %v10588, %v10660
  %v10733 = vadd.f32 %v10589, %v10661
  %v10734 = vadd.f32 %v10590, %v10662
  %v10735 = vadd.f32 %v10591, %v10663
  %v10736 = vadd.f32 %v10592, %v10664
  %v10737 = vadd.f32 %v10593, %v10665
  %v10738 = vadd.f32 %v10594, %v10666
  %v10739 = vadd.f32 %v10595, %v10667
  %v10740 = vadd.f32 %v10596, %v10668
  %v10741 = vadd.f32 %v10597, %v10669
  %v10742 = vadd.f32 %v10598, %v10670
  %v10743 = vadd.f32 %v10599, %v10671
  %v10744 = vadd.f32 %v10600, %v10672
  %v10745 = vadd.f32 %v10601, %v10673
  %v10746 = vadd.f32 %v10602, %v10674
  %v10747 = vadd.f32 %v10603, %v10675
  %v10748 = vadd.f32 %v10604, %v10676
  %v10749 = vadd.f32 %v10605, %v10677
  %v10750 = vadd.f32 %v10606, %v10678
  %v10751 = vadd.f32 %v10607, %v10679
  %v10752 = vadd.f32 %v10608, %v10680
  %v10753 = vadd.f32 %v10609, %v10681
  %v10754 = vadd.f32 %v10610, %v10682
  %v10755 = vadd.f32 %v10611, %v10683
  %v10756 = vadd.f32 %v10612, %v10684
  %v10757 = vadd.f32 %v10613, %v10685
  %10758 = vst.msk [vmem:[#allocation2] sm:$0xff] %vm460, %v10686
  %10759 = vst.msk [vmem:[#allocation2 + $0x8] sm:$0xff] %vm460, %v10687
  %10760 = vst.msk [vmem:[#allocation2 + $0x10] sm:$0xff] %vm460, %v10688
  %10761 = vst.msk [vmem:[#allocation2 + $0x18] sm:$0xff] %vm460, %v10689
  %10762 = vst.msk [vmem:[#allocation2 + $0x20] sm:$0xff] %vm460, %v10690
  %10763 = vst.msk [vmem:[#allocation2 + $0x28] sm:$0xff] %vm460, %v10691
  %10764 = vst.msk [vmem:[#allocation2 + $0x30] sm:$0xff] %vm460, %v10692
  %10765 = vst.msk [vmem:[#allocation2 + $0x38] sm:$0xff] %vm460, %v10693
  %10766 = vst.msk [vmem:[#allocation2 + $0x40] sm:$0xff] %vm460, %v10694
  %10767 = vst.msk [vmem:[#allocation2 + $0x48] sm:$0xff] %vm460, %v10695
  %10768 = vst.msk [vmem:[#allocation2 + $0x50] sm:$0xff] %vm460, %v10696
  %10769 = vst.msk [vmem:[#allocation2 + $0x58] sm:$0xff] %vm460, %v10697
  %10770 = vst.msk [vmem:[#allocation2 + $0x60] sm:$0xff] %vm460, %v10698
  %10771 = vst.msk [vmem:[#allocation2 + $0x68] sm:$0xff] %vm460, %v10699
  %10772 = vst.msk [vmem:[#allocation2 + $0x70] sm:$0xff] %vm460, %v10700
  %10773 = vst.msk [vmem:[#allocation2 + $0x78] sm:$0xff] %vm460, %v10701
  %10774 = vst.msk [vmem:[#allocation2 + $0x80] sm:$0xff] %vm460, %v10702
  %10775 = vst.msk [vmem:[#allocation2 + $0x88] sm:$0xff] %vm460, %v10703
  %10776 = vst.msk [vmem:[#allocation2 + $0x90] sm:$0xff] %vm460, %v10704
  %10777 = vst.msk [vmem:[#allocation2 + $0x98] sm:$0xff] %vm460, %v10705
  %10778 = vst.msk [vmem:[#allocation2 + $0xa0] sm:$0xff] %vm460, %v10706
  %10779 = vst.msk [vmem:[#allocation2 + $0xa8] sm:$0xff] %vm460, %v10707
  %10780 = vst.msk [vmem:[#allocation2 + $0xb0] sm:$0xff] %vm460, %v10708
  %10781 = vst.msk [vmem:[#allocation2 + $0xb8] sm:$0xff] %vm460, %v10709
  %10782 = vst.msk [vmem:[#allocation2 + $0xc0] sm:$0xff] %vm460, %v10710
  %10783 = vst.msk [vmem:[#allocation2 + $0xc8] sm:$0xff] %vm460, %v10711
  %10784 = vst.msk [vmem:[#allocation2 + $0xd0] sm:$0xff] %vm460, %v10712
  %10785 = vst.msk [vmem:[#allocation2 + $0xd8] sm:$0xff] %vm460, %v10713
  %10786 = vst.msk [vmem:[#allocation2 + $0xe0] sm:$0xff] %vm460, %v10714
  %10787 = vst.msk [vmem:[#allocation2 + $0xe8] sm:$0xff] %vm460, %v10715
  %10788 = vst.msk [vmem:[#allocation2 + $0xf0] sm:$0xff] %vm460, %v10716
  %10789 = vst.msk [vmem:[#allocation2 + $0xf8] sm:$0xff] %vm460, %v10717
  %10790 = vst.msk [vmem:[#allocation2 + $0x100] sm:$0xff] %vm460, %v10718
  %10791 = vst.msk [vmem:[#allocation2 + $0x108] sm:$0xff] %vm460, %v10719
  %10792 = vst.msk [vmem:[#allocation2 + $0x110] sm:$0xff] %vm460, %v10720
  %10793 = vst.msk [vmem:[#allocation2 + $0x118] sm:$0xff] %vm460, %v10721
  %10794 = vst.msk [vmem:[#allocation2 + $0x120] sm:$0xff] %vm460, %v10722
  %10795 = vst.msk [vmem:[#allocation2 + $0x128] sm:$0xff] %vm460, %v10723
  %10796 = vst.msk [vmem:[#allocation2 + $0x130] sm:$0xff] %vm460, %v10724
  %10797 = vst.msk [vmem:[#allocation2 + $0x138] sm:$0xff] %vm460, %v10725
  %10798 = vst.msk [vmem:[#allocation2 + $0x140] sm:$0xff] %vm460, %v10726
  %10799 = vst.msk [vmem:[#allocation2 + $0x148] sm:$0xff] %vm460, %v10727
  %10800 = vst.msk [vmem:[#allocation2 + $0x150] sm:$0xff] %vm460, %v10728
  %10801 = vst.msk [vmem:[#allocation2 + $0x158] sm:$0xff] %vm460, %v10729
  %10802 = vst.msk [vmem:[#allocation2 + $0x160] sm:$0xff] %vm460, %v10730
  %10803 = vst.msk [vmem:[#allocation2 + $0x168] sm:$0xff] %vm460, %v10731
  %10804 = vst.msk [vmem:[#allocation2 + $0x170] sm:$0xff] %vm460, %v10732
  %10805 = vst.msk [vmem:[#allocation2 + $0x178] sm:$0xff] %vm460, %v10733
  %10806 = vst.msk [vmem:[#allocation2 + $0x180] sm:$0xff] %vm460, %v10734
  %10807 = vst.msk [vmem:[#allocation2 + $0x188] sm:$0xff] %vm460, %v10735
  %10808 = vst.msk [vmem:[#allocation2 + $0x190] sm:$0xff] %vm460, %v10736
  %10809 = vst.msk [vmem:[#allocation2 + $0x198] sm:$0xff] %vm460, %v10737
  %10810 = vst.msk [vmem:[#allocation2 + $0x1a0] sm:$0xff] %vm460, %v10738
  %10811 = vst.msk [vmem:[#allocation2 + $0x1a8] sm:$0xff] %vm460, %v10739
  %10812 = vst.msk [vmem:[#allocation2 + $0x1b0] sm:$0xff] %vm460, %v10740
  %10813 = vst.msk [vmem:[#allocation2 + $0x1b8] sm:$0xff] %vm460, %v10741
  %10814 = vst.msk [vmem:[#allocation2 + $0x1c0] sm:$0xff] %vm460, %v10742
  %10815 = vst.msk [vmem:[#allocation2 + $0x1c8] sm:$0xff] %vm460, %v10743
  %10816 = vst.msk [vmem:[#allocation2 + $0x1d0] sm:$0xff] %vm460, %v10744
  %10817 = vst.msk [vmem:[#allocation2 + $0x1d8] sm:$0xff] %vm460, %v10745
  %10818 = vst.msk [vmem:[#allocation2 + $0x1e0] sm:$0xff] %vm460, %v10746
  %10819 = vst.msk [vmem:[#allocation2 + $0x1e8] sm:$0xff] %vm460, %v10747
  %10820 = vst.msk [vmem:[#allocation2 + $0x1f0] sm:$0xff] %vm460, %v10748
  %10821 = vst.msk [vmem:[#allocation2 + $0x1f8] sm:$0xff] %vm460, %v10749
  %10822 = vst.msk [vmem:[#allocation2 + $0x200] sm:$0xff] %vm460, %v10750
  %10823 = vst.msk [vmem:[#allocation2 + $0x208] sm:$0xff] %vm460, %v10751
  %10824 = vst.msk [vmem:[#allocation2 + $0x210] sm:$0xff] %vm460, %v10752
  %10825 = vst.msk [vmem:[#allocation2 + $0x218] sm:$0xff] %vm460, %v10753
  %10826 = vst.msk [vmem:[#allocation2 + $0x220] sm:$0xff] %vm460, %v10754
  %10827 = vst.msk [vmem:[#allocation2 + $0x228] sm:$0xff] %vm460, %v10755
  %10828 = vst.msk [vmem:[#allocation2 + $0x230] sm:$0xff] %vm460, %v10756
  %10829 = vst.msk [vmem:[#allocation2 + $0x238] sm:$0xff] %vm460, %v10757
  %v10830 = vld [vmem:[#allocation3] sm:$0xff]
  %v10831 = vld [vmem:[#allocation3 + $0x8] sm:$0xff]
  %v10832 = vld [vmem:[#allocation3 + $0x10] sm:$0xff]
  %v10833 = vld [vmem:[#allocation3 + $0x18] sm:$0xff]
  %v10834 = vld [vmem:[#allocation3 + $0x20] sm:$0xff]
  %v10835 = vld [vmem:[#allocation3 + $0x28] sm:$0xff]
  %v10836 = vld [vmem:[#allocation3 + $0x30] sm:$0xff]
  %v10837 = vld [vmem:[#allocation3 + $0x38] sm:$0xff]
  %v10838 = vld [vmem:[#allocation3 + $0x40] sm:$0xff]
  %v10839 = vld [vmem:[#allocation3 + $0x48] sm:$0xff]
  %v10840 = vld [vmem:[#allocation3 + $0x50] sm:$0xff]
  %v10841 = vld [vmem:[#allocation3 + $0x58] sm:$0xff]
  %v10842 = vld [vmem:[#allocation3 + $0x60] sm:$0xff]
  %v10843 = vld [vmem:[#allocation3 + $0x68] sm:$0xff]
  %v10844 = vld [vmem:[#allocation3 + $0x70] sm:$0xff]
  %v10845 = vld [vmem:[#allocation3 + $0x78] sm:$0xff]
  %v10846 = vld [vmem:[#allocation3 + $0x80] sm:$0xff]
  %v10847 = vld [vmem:[#allocation3 + $0x88] sm:$0xff]
  %v10848 = vld [vmem:[#allocation3 + $0x90] sm:$0xff]
  %v10849 = vld [vmem:[#allocation3 + $0x98] sm:$0xff]
  %v10850 = vld [vmem:[#allocation3 + $0xa0] sm:$0xff]
  %v10851 = vld [vmem:[#allocation3 + $0xa8] sm:$0xff]
  %v10852 = vld [vmem:[#allocation3 + $0xb0] sm:$0xff]
  %v10853 = vld [vmem:[#allocation3 + $0xb8] sm:$0xff]
  %v10854 = vld [vmem:[#allocation3 + $0xc0] sm:$0xff]
  %v10855 = vld [vmem:[#allocation3 + $0xc8] sm:$0xff]
  %v10856 = vld [vmem:[#allocation3 + $0xd0] sm:$0xff]
  %v10857 = vld [vmem:[#allocation3 + $0xd8] sm:$0xff]
  %v10858 = vld [vmem:[#allocation3 + $0xe0] sm:$0xff]
  %v10859 = vld [vmem:[#allocation3 + $0xe8] sm:$0xff]
  %v10860 = vld [vmem:[#allocation3 + $0xf0] sm:$0xff]
  %v10861 = vld [vmem:[#allocation3 + $0xf8] sm:$0xff]
  %v10862 = vld [vmem:[#allocation3 + $0x100] sm:$0xff]
  %v10863 = vld [vmem:[#allocation3 + $0x108] sm:$0xff]
  %v10864 = vld [vmem:[#allocation3 + $0x110] sm:$0xff]
  %v10865 = vld [vmem:[#allocation3 + $0x118] sm:$0xff]
  %v10866 = vld [vmem:[#allocation3 + $0x120] sm:$0xff]
  %v10867 = vld [vmem:[#allocation3 + $0x128] sm:$0xff]
  %v10868 = vld [vmem:[#allocation3 + $0x130] sm:$0xff]
  %v10869 = vld [vmem:[#allocation3 + $0x138] sm:$0xff]
  %v10870 = vld [vmem:[#allocation3 + $0x140] sm:$0xff]
  %v10871 = vld [vmem:[#allocation3 + $0x148] sm:$0xff]
  %v10872 = vld [vmem:[#allocation3 + $0x150] sm:$0xff]
  %v10873 = vld [vmem:[#allocation3 + $0x158] sm:$0xff]
  %v10874 = vld [vmem:[#allocation3 + $0x160] sm:$0xff]
  %v10875 = vld [vmem:[#allocation3 + $0x168] sm:$0xff]
  %v10876 = vld [vmem:[#allocation3 + $0x170] sm:$0xff]
  %v10877 = vld [vmem:[#allocation3 + $0x178] sm:$0xff]
  %v10878 = vld [vmem:[#allocation3 + $0x180] sm:$0xff]
  %v10879 = vld [vmem:[#allocation3 + $0x188] sm:$0xff]
  %v10880 = vld [vmem:[#allocation3 + $0x190] sm:$0xff]
  %v10881 = vld [vmem:[#allocation3 + $0x198] sm:$0xff]
  %v10882 = vld [vmem:[#allocation3 + $0x1a0] sm:$0xff]
  %v10883 = vld [vmem:[#allocation3 + $0x1a8] sm:$0xff]
  %v10884 = vld [vmem:[#allocation3 + $0x1b0] sm:$0xff]
  %v10885 = vld [vmem:[#allocation3 + $0x1b8] sm:$0xff]
  %v10886 = vld [vmem:[#allocation3 + $0x1c0] sm:$0xff]
  %v10887 = vld [vmem:[#allocation3 + $0x1c8] sm:$0xff]
  %v10888 = vld [vmem:[#allocation3 + $0x1d0] sm:$0xff]
  %v10889 = vld [vmem:[#allocation3 + $0x1d8] sm:$0xff]
  %v10890 = vld [vmem:[#allocation3 + $0x1e0] sm:$0xff]
  %v10891 = vld [vmem:[#allocation3 + $0x1e8] sm:$0xff]
  %v10892 = vld [vmem:[#allocation3 + $0x1f0] sm:$0xff]
  %v10893 = vld [vmem:[#allocation3 + $0x1f8] sm:$0xff]
  %v10894 = vld [vmem:[#allocation3 + $0x200] sm:$0xff]
  %v10895 = vld [vmem:[#allocation3 + $0x208] sm:$0xff]
  %v10896 = vld [vmem:[#allocation3 + $0x210] sm:$0xff]
  %v10897 = vld [vmem:[#allocation3 + $0x218] sm:$0xff]
  %v10898 = vld [vmem:[#allocation3 + $0x220] sm:$0xff]
  %v10899 = vld [vmem:[#allocation3 + $0x228] sm:$0xff]
  %v10900 = vld [vmem:[#allocation3 + $0x230] sm:$0xff]
  %v10901 = vld [vmem:[#allocation3 + $0x238] sm:$0xff]
  %v10902 = vadd.f32 %v503, %v3887
  %v10903 = vadd.f32 %v549, %v3933
  %v10904 = vadd.f32 %v595, %v3979
  %v10905 = vadd.f32 %v641, %v4025
  %v10906 = vadd.f32 %v687, %v4071
  %v10907 = vadd.f32 %v733, %v4117
  %v10908 = vadd.f32 %v779, %v4163
  %v10909 = vadd.f32 %v825, %v4209
  %v10910 = vadd.f32 %v871, %v4255
  %v10911 = vadd.f32 %v917, %v4301
  %v10912 = vadd.f32 %v963, %v4347
  %v10913 = vadd.f32 %v1009, %v4393
  %v10914 = vadd.f32 %v1055, %v4439
  %v10915 = vadd.f32 %v1101, %v4485
  %v10916 = vadd.f32 %v1147, %v4531
  %v10917 = vadd.f32 %v1193, %v4577
  %v10918 = vadd.f32 %v1239, %v4623
  %v10919 = vadd.f32 %v1285, %v4669
  %v10920 = vadd.f32 %v1331, %v4715
  %v10921 = vadd.f32 %v1377, %v4761
  %v10922 = vadd.f32 %v1423, %v4807
  %v10923 = vadd.f32 %v1469, %v4853
  %v10924 = vadd.f32 %v1515, %v4899
  %v10925 = vadd.f32 %v1561, %v4945
  %v10926 = vadd.f32 %v1607, %v4991
  %v10927 = vadd.f32 %v1653, %v5037
  %v10928 = vadd.f32 %v1699, %v5083
  %v10929 = vadd.f32 %v1745, %v5129
  %v10930 = vadd.f32 %v1791, %v5175
  %v10931 = vadd.f32 %v1837, %v5221
  %v10932 = vadd.f32 %v1883, %v5267
  %v10933 = vadd.f32 %v1929, %v5313
  %v10934 = vadd.f32 %v1975, %v5359
  %v10935 = vadd.f32 %v2021, %v5405
  %v10936 = vadd.f32 %v2067, %v5451
  %v10937 = vadd.f32 %v2113, %v5497
  %v10938 = vadd.f32 %v2159, %v5543
  %v10939 = vadd.f32 %v2205, %v5589
  %v10940 = vadd.f32 %v2251, %v5635
  %v10941 = vadd.f32 %v2297, %v5681
  %v10942 = vadd.f32 %v2343, %v5727
  %v10943 = vadd.f32 %v2389, %v5773
  %v10944 = vadd.f32 %v2435, %v5819
  %v10945 = vadd.f32 %v2481, %v5865
  %v10946 = vadd.f32 %v2527, %v5911
  %v10947 = vadd.f32 %v2573, %v5957
  %v10948 = vadd.f32 %v2619, %v6003
  %v10949 = vadd.f32 %v2665, %v6049
  %v10950 = vadd.f32 %v2711, %v6095
  %v10951 = vadd.f32 %v2757, %v6141
  %v10952 = vadd.f32 %v2803, %v6187
  %v10953 = vadd.f32 %v2849, %v6233
  %v10954 = vadd.f32 %v2895, %v6279
  %v10955 = vadd.f32 %v2941, %v6325
  %v10956 = vadd.f32 %v2987, %v6371
  %v10957 = vadd.f32 %v3033, %v6417
  %v10958 = vadd.f32 %v3079, %v6463
  %v10959 = vadd.f32 %v3125, %v6509
  %v10960 = vadd.f32 %v3171, %v6555
  %v10961 = vadd.f32 %v3217, %v6601
  %v10962 = vadd.f32 %v3263, %v6647
  %v10963 = vadd.f32 %v3309, %v6693
  %v10964 = vadd.f32 %v3355, %v6739
  %v10965 = vadd.f32 %v3401, %v6785
  %v10966 = vadd.f32 %v3447, %v6831
  %v10967 = vadd.f32 %v3493, %v6877
  %v10968 = vadd.f32 %v3539, %v6923
  %v10969 = vadd.f32 %v3585, %v6969
  %v10970 = vadd.f32 %v3631, %v7015
  %v10971 = vadd.f32 %v3677, %v7061
  %v10972 = vadd.f32 %v3723, %v7107
  %v10973 = vadd.f32 %v3769, %v7153
  %v10974 = vadd.f32 %v10830, %v10902
  %v10975 = vadd.f32 %v10831, %v10903
  %v10976 = vadd.f32 %v10832, %v10904
  %v10977 = vadd.f32 %v10833, %v10905
  %v10978 = vadd.f32 %v10834, %v10906
  %v10979 = vadd.f32 %v10835, %v10907
  %v10980 = vadd.f32 %v10836, %v10908
  %v10981 = vadd.f32 %v10837, %v10909
  %v10982 = vadd.f32 %v10838, %v10910
  %v10983 = vadd.f32 %v10839, %v10911
  %v10984 = vadd.f32 %v10840, %v10912
  %v10985 = vadd.f32 %v10841, %v10913
  %v10986 = vadd.f32 %v10842, %v10914
  %v10987 = vadd.f32 %v10843, %v10915
  %v10988 = vadd.f32 %v10844, %v10916
  %v10989 = vadd.f32 %v10845, %v10917
  %v10990 = vadd.f32 %v10846, %v10918
  %v10991 = vadd.f32 %v10847, %v10919
  %v10992 = vadd.f32 %v10848, %v10920
  %v10993 = vadd.f32 %v10849, %v10921
  %v10994 = vadd.f32 %v10850, %v10922
  %v10995 = vadd.f32 %v10851, %v10923
  %v10996 = vadd.f32 %v10852, %v10924
  %v10997 = vadd.f32 %v10853, %v10925
  %v10998 = vadd.f32 %v10854, %v10926
  %v10999 = vadd.f32 %v10855, %v10927
  %v11000 = vadd.f32 %v10856, %v10928
  %v11001 = vadd.f32 %v10857, %v10929
  %v11002 = vadd.f32 %v10858, %v10930
  %v11003 = vadd.f32 %v10859, %v10931
  %v11004 = vadd.f32 %v10860, %v10932
  %v11005 = vadd.f32 %v10861, %v10933
  %v11006 = vadd.f32 %v10862, %v10934
  %v11007 = vadd.f32 %v10863, %v10935
  %v11008 = vadd.f32 %v10864, %v10936
  %v11009 = vadd.f32 %v10865, %v10937
  %v11010 = vadd.f32 %v10866, %v10938
  %v11011 = vadd.f32 %v10867, %v10939
  %v11012 = vadd.f32 %v10868, %v10940
  %v11013 = vadd.f32 %v10869, %v10941
  %v11014 = vadd.f32 %v10870, %v10942
  %v11015 = vadd.f32 %v10871, %v10943
  %v11016 = vadd.f32 %v10872, %v10944
  %v11017 = vadd.f32 %v10873, %v10945
  %v11018 = vadd.f32 %v10874, %v10946
  %v11019 = vadd.f32 %v10875, %v10947
  %v11020 = vadd.f32 %v10876, %v10948
  %v11021 = vadd.f32 %v10877, %v10949
  %v11022 = vadd.f32 %v10878, %v10950
  %v11023 = vadd.f32 %v10879, %v10951
  %v11024 = vadd.f32 %v10880, %v10952
  %v11025 = vadd.f32 %v10881, %v10953
  %v11026 = vadd.f32 %v10882, %v10954
  %v11027 = vadd.f32 %v10883, %v10955
  %v11028 = vadd.f32 %v10884, %v10956
  %v11029 = vadd.f32 %v10885, %v10957
  %v11030 = vadd.f32 %v10886, %v10958
  %v11031 = vadd.f32 %v10887, %v10959
  %v11032 = vadd.f32 %v10888, %v10960
  %v11033 = vadd.f32 %v10889, %v10961
  %v11034 = vadd.f32 %v10890, %v10962
  %v11035 = vadd.f32 %v10891, %v10963
  %v11036 = vadd.f32 %v10892, %v10964
  %v11037 = vadd.f32 %v10893, %v10965
  %v11038 = vadd.f32 %v10894, %v10966
  %v11039 = vadd.f32 %v10895, %v10967
  %v11040 = vadd.f32 %v10896, %v10968
  %v11041 = vadd.f32 %v10897, %v10969
  %v11042 = vadd.f32 %v10898, %v10970
  %v11043 = vadd.f32 %v10899, %v10971
  %v11044 = vadd.f32 %v10900, %v10972
  %v11045 = vadd.f32 %v10901, %v10973
  %11046 = vst.msk [vmem:[#allocation3] sm:$0xff] %vm460, %v10974
  %11047 = vst.msk [vmem:[#allocation3 + $0x8] sm:$0xff] %vm460, %v10975
  %11048 = vst.msk [vmem:[#allocation3 + $0x10] sm:$0xff] %vm460, %v10976
  %11049 = vst.msk [vmem:[#allocation3 + $0x18] sm:$0xff] %vm460, %v10977
  %11050 = vst.msk [vmem:[#allocation3 + $0x20] sm:$0xff] %vm460, %v10978
  %11051 = vst.msk [vmem:[#allocation3 + $0x28] sm:$0xff] %vm460, %v10979
  %11052 = vst.msk [vmem:[#allocation3 + $0x30] sm:$0xff] %vm460, %v10980
  %11053 = vst.msk [vmem:[#allocation3 + $0x38] sm:$0xff] %vm460, %v10981
  %11054 = vst.msk [vmem:[#allocation3 + $0x40] sm:$0xff] %vm460, %v10982
  %11055 = vst.msk [vmem:[#allocation3 + $0x48] sm:$0xff] %vm460, %v10983
  %11056 = vst.msk [vmem:[#allocation3 + $0x50] sm:$0xff] %vm460, %v10984
  %11057 = vst.msk [vmem:[#allocation3 + $0x58] sm:$0xff] %vm460, %v10985
  %11058 = vst.msk [vmem:[#allocation3 + $0x60] sm:$0xff] %vm460, %v10986
  %11059 = vst.msk [vmem:[#allocation3 + $0x68] sm:$0xff] %vm460, %v10987
  %11060 = vst.msk [vmem:[#allocation3 + $0x70] sm:$0xff] %vm460, %v10988
  %11061 = vst.msk [vmem:[#allocation3 + $0x78] sm:$0xff] %vm460, %v10989
  %11062 = vst.msk [vmem:[#allocation3 + $0x80] sm:$0xff] %vm460, %v10990
  %11063 = vst.msk [vmem:[#allocation3 + $0x88] sm:$0xff] %vm460, %v10991
  %11064 = vst.msk [vmem:[#allocation3 + $0x90] sm:$0xff] %vm460, %v10992
  %11065 = vst.msk [vmem:[#allocation3 + $0x98] sm:$0xff] %vm460, %v10993
  %11066 = vst.msk [vmem:[#allocation3 + $0xa0] sm:$0xff] %vm460, %v10994
  %11067 = vst.msk [vmem:[#allocation3 + $0xa8] sm:$0xff] %vm460, %v10995
  %11068 = vst.msk [vmem:[#allocation3 + $0xb0] sm:$0xff] %vm460, %v10996
  %11069 = vst.msk [vmem:[#allocation3 + $0xb8] sm:$0xff] %vm460, %v10997
  %11070 = vst.msk [vmem:[#allocation3 + $0xc0] sm:$0xff] %vm460, %v10998
  %11071 = vst.msk [vmem:[#allocation3 + $0xc8] sm:$0xff] %vm460, %v10999
  %11072 = vst.msk [vmem:[#allocation3 + $0xd0] sm:$0xff] %vm460, %v11000
  %11073 = vst.msk [vmem:[#allocation3 + $0xd8] sm:$0xff] %vm460, %v11001
  %11074 = vst.msk [vmem:[#allocation3 + $0xe0] sm:$0xff] %vm460, %v11002
  %11075 = vst.msk [vmem:[#allocation3 + $0xe8] sm:$0xff] %vm460, %v11003
  %11076 = vst.msk [vmem:[#allocation3 + $0xf0] sm:$0xff] %vm460, %v11004
  %11077 = vst.msk [vmem:[#allocation3 + $0xf8] sm:$0xff] %vm460, %v11005
  %11078 = vst.msk [vmem:[#allocation3 + $0x100] sm:$0xff] %vm460, %v11006
  %11079 = vst.msk [vmem:[#allocation3 + $0x108] sm:$0xff] %vm460, %v11007
  %11080 = vst.msk [vmem:[#allocation3 + $0x110] sm:$0xff] %vm460, %v11008
  %11081 = vst.msk [vmem:[#allocation3 + $0x118] sm:$0xff] %vm460, %v11009
  %11082 = vst.msk [vmem:[#allocation3 + $0x120] sm:$0xff] %vm460, %v11010
  %11083 = vst.msk [vmem:[#allocation3 + $0x128] sm:$0xff] %vm460, %v11011
  %11084 = vst.msk [vmem:[#allocation3 + $0x130] sm:$0xff] %vm460, %v11012
  %11085 = vst.msk [vmem:[#allocation3 + $0x138] sm:$0xff] %vm460, %v11013
  %11086 = vst.msk [vmem:[#allocation3 + $0x140] sm:$0xff] %vm460, %v11014
  %11087 = vst.msk [vmem:[#allocation3 + $0x148] sm:$0xff] %vm460, %v11015
  %11088 = vst.msk [vmem:[#allocation3 + $0x150] sm:$0xff] %vm460, %v11016
  %11089 = vst.msk [vmem:[#allocation3 + $0x158] sm:$0xff] %vm460, %v11017
  %11090 = vst.msk [vmem:[#allocation3 + $0x160] sm:$0xff] %vm460, %v11018
  %11091 = vst.msk [vmem:[#allocation3 + $0x168] sm:$0xff] %vm460, %v11019
  %11092 = vst.msk [vmem:[#allocation3 + $0x170] sm:$0xff] %vm460, %v11020
  %11093 = vst.msk [vmem:[#allocation3 + $0x178] sm:$0xff] %vm460, %v11021
  %11094 = vst.msk [vmem:[#allocation3 + $0x180] sm:$0xff] %vm460, %v11022
  %11095 = vst.msk [vmem:[#allocation3 + $0x188] sm:$0xff] %vm460, %v11023
  %11096 = vst.msk [vmem:[#allocation3 + $0x190] sm:$0xff] %vm460, %v11024
  %11097 = vst.msk [vmem:[#allocation3 + $0x198] sm:$0xff] %vm460, %v11025
  %11098 = vst.msk [vmem:[#allocation3 + $0x1a0] sm:$0xff] %vm460, %v11026
  %11099 = vst.msk [vmem:[#allocation3 + $0x1a8] sm:$0xff] %vm460, %v11027
  %11100 = vst.msk [vmem:[#allocation3 + $0x1b0] sm:$0xff] %vm460, %v11028
  %11101 = vst.msk [vmem:[#allocation3 + $0x1b8] sm:$0xff] %vm460, %v11029
  %11102 = vst.msk [vmem:[#allocation3 + $0x1c0] sm:$0xff] %vm460, %v11030
  %11103 = vst.msk [vmem:[#allocation3 + $0x1c8] sm:$0xff] %vm460, %v11031
  %11104 = vst.msk [vmem:[#allocation3 + $0x1d0] sm:$0xff] %vm460, %v11032
  %11105 = vst.msk [vmem:[#allocation3 + $0x1d8] sm:$0xff] %vm460, %v11033
  %11106 = vst.msk [vmem:[#allocation3 + $0x1e0] sm:$0xff] %vm460, %v11034
  %11107 = vst.msk [vmem:[#allocation3 + $0x1e8] sm:$0xff] %vm460, %v11035
  %11108 = vst.msk [vmem:[#allocation3 + $0x1f0] sm:$0xff] %vm460, %v11036
  %11109 = vst.msk [vmem:[#allocation3 + $0x1f8] sm:$0xff] %vm460, %v11037
  %11110 = vst.msk [vmem:[#allocation3 + $0x200] sm:$0xff] %vm460, %v11038
  %11111 = vst.msk [vmem:[#allocation3 + $0x208] sm:$0xff] %vm460, %v11039
  %11112 = vst.msk [vmem:[#allocation3 + $0x210] sm:$0xff] %vm460, %v11040
  %11113 = vst.msk [vmem:[#allocation3 + $0x218] sm:$0xff] %vm460, %v11041
  %11114 = vst.msk [vmem:[#allocation3 + $0x220] sm:$0xff] %vm460, %v11042
  %11115 = vst.msk [vmem:[#allocation3 + $0x228] sm:$0xff] %vm460, %v11043
  %11116 = vst.msk [vmem:[#allocation3 + $0x230] sm:$0xff] %vm460, %v11044
  %11117 = vst.msk [vmem:[#allocation3 + $0x238] sm:$0xff] %vm460, %v11045
  // Predicated region
  $region26: #{spectral_conv2d.1} parent=0 // pred_check
    %p11118 = pneg %p23
  $region27: #{spectral_conv2d.1} parent=0 // pred_check_branch
    %11120 = sbr.rel (%p11118) target = $region29
  $region28: #{spectral_conv2d.1} parent=0 // pred_region
    %v11121 = vld [vmem:[#allocation2] sm:$0xff]
    %v11122 = vld [vmem:[#allocation2 + $0x8] sm:$0xff]
    %v11123 = vld [vmem:[#allocation2 + $0x10] sm:$0xff]
    %v11124 = vld [vmem:[#allocation2 + $0x18] sm:$0xff]
    %v11125 = vld [vmem:[#allocation2 + $0x20] sm:$0xff]
    %v11126 = vld [vmem:[#allocation2 + $0x28] sm:$0xff]
    %v11127 = vld [vmem:[#allocation2 + $0x30] sm:$0xff]
    %v11128 = vld [vmem:[#allocation2 + $0x38] sm:$0xff]
    %v11129 = vld [vmem:[#allocation2 + $0x40] sm:$0xff]
    %v11130 = vld [vmem:[#allocation2 + $0x48] sm:$0xff]
    %v11131 = vld [vmem:[#allocation2 + $0x50] sm:$0xff]
    %v11132 = vld [vmem:[#allocation2 + $0x58] sm:$0xff]
    %v11133 = vld [vmem:[#allocation2 + $0x60] sm:$0xff]
    %v11134 = vld [vmem:[#allocation2 + $0x68] sm:$0xff]
    %v11135 = vld [vmem:[#allocation2 + $0x70] sm:$0xff]
    %v11136 = vld [vmem:[#allocation2 + $0x78] sm:$0xff]
    %v11137 = vld [vmem:[#allocation2 + $0x80] sm:$0xff]
    %v11138 = vld [vmem:[#allocation2 + $0x88] sm:$0xff]
    %v11139 = vld [vmem:[#allocation2 + $0x90] sm:$0xff]
    %v11140 = vld [vmem:[#allocation2 + $0x98] sm:$0xff]
    %v11141 = vld [vmem:[#allocation2 + $0xa0] sm:$0xff]
    %v11142 = vld [vmem:[#allocation2 + $0xa8] sm:$0xff]
    %v11143 = vld [vmem:[#allocation2 + $0xb0] sm:$0xff]
    %v11144 = vld [vmem:[#allocation2 + $0xb8] sm:$0xff]
    %v11145 = vld [vmem:[#allocation2 + $0xc0] sm:$0xff]
    %v11146 = vld [vmem:[#allocation2 + $0xc8] sm:$0xff]
    %v11147 = vld [vmem:[#allocation2 + $0xd0] sm:$0xff]
    %v11148 = vld [vmem:[#allocation2 + $0xd8] sm:$0xff]
    %v11149 = vld [vmem:[#allocation2 + $0xe0] sm:$0xff]
    %v11150 = vld [vmem:[#allocation2 + $0xe8] sm:$0xff]
    %v11151 = vld [vmem:[#allocation2 + $0xf0] sm:$0xff]
    %v11152 = vld [vmem:[#allocation2 + $0xf8] sm:$0xff]
    %v11153 = vld [vmem:[#allocation2 + $0x100] sm:$0xff]
    %v11154 = vld [vmem:[#allocation2 + $0x108] sm:$0xff]
    %v11155 = vld [vmem:[#allocation2 + $0x110] sm:$0xff]
    %v11156 = vld [vmem:[#allocation2 + $0x118] sm:$0xff]
    %v11157 = vld [vmem:[#allocation2 + $0x120] sm:$0xff]
    %v11158 = vld [vmem:[#allocation2 + $0x128] sm:$0xff]
    %v11159 = vld [vmem:[#allocation2 + $0x130] sm:$0xff]
    %v11160 = vld [vmem:[#allocation2 + $0x138] sm:$0xff]
    %v11161 = vld [vmem:[#allocation2 + $0x140] sm:$0xff]
    %v11162 = vld [vmem:[#allocation2 + $0x148] sm:$0xff]
    %v11163 = vld [vmem:[#allocation2 + $0x150] sm:$0xff]
    %v11164 = vld [vmem:[#allocation2 + $0x158] sm:$0xff]
    %v11165 = vld [vmem:[#allocation2 + $0x160] sm:$0xff]
    %v11166 = vld [vmem:[#allocation2 + $0x168] sm:$0xff]
    %v11167 = vld [vmem:[#allocation2 + $0x170] sm:$0xff]
    %v11168 = vld [vmem:[#allocation2 + $0x178] sm:$0xff]
    %v11169 = vld [vmem:[#allocation2 + $0x180] sm:$0xff]
    %v11170 = vld [vmem:[#allocation2 + $0x188] sm:$0xff]
    %v11171 = vld [vmem:[#allocation2 + $0x190] sm:$0xff]
    %v11172 = vld [vmem:[#allocation2 + $0x198] sm:$0xff]
    %v11173 = vld [vmem:[#allocation2 + $0x1a0] sm:$0xff]
    %v11174 = vld [vmem:[#allocation2 + $0x1a8] sm:$0xff]
    %v11175 = vld [vmem:[#allocation2 + $0x1b0] sm:$0xff]
    %v11176 = vld [vmem:[#allocation2 + $0x1b8] sm:$0xff]
    %v11177 = vld [vmem:[#allocation2 + $0x1c0] sm:$0xff]
    %v11178 = vld [vmem:[#allocation2 + $0x1c8] sm:$0xff]
    %v11179 = vld [vmem:[#allocation2 + $0x1d0] sm:$0xff]
    %v11180 = vld [vmem:[#allocation2 + $0x1d8] sm:$0xff]
    %v11181 = vld [vmem:[#allocation2 + $0x1e0] sm:$0xff]
    %v11182 = vld [vmem:[#allocation2 + $0x1e8] sm:$0xff]
    %v11183 = vld [vmem:[#allocation2 + $0x1f0] sm:$0xff]
    %v11184 = vld [vmem:[#allocation2 + $0x1f8] sm:$0xff]
    %v11185 = vld [vmem:[#allocation2 + $0x200] sm:$0xff]
    %v11186 = vld [vmem:[#allocation2 + $0x208] sm:$0xff]
    %v11187 = vld [vmem:[#allocation2 + $0x210] sm:$0xff]
    %v11188 = vld [vmem:[#allocation2 + $0x218] sm:$0xff]
    %v11189 = vld [vmem:[#allocation2 + $0x220] sm:$0xff]
    %v11190 = vld [vmem:[#allocation2 + $0x228] sm:$0xff]
    %v11191 = vld [vmem:[#allocation2 + $0x230] sm:$0xff]
    %v11192 = vld [vmem:[#allocation2 + $0x238] sm:$0xff]
    %11193 = vst.msk [vmem:[%s5] sm:$0xff] %vm460, %v11121
    %11194 = vst.msk [vmem:[%s5 + $0x8] sm:$0xff] %vm460, %v11122
    %11195 = vst.msk [vmem:[%s5 + $0x10] sm:$0xff] %vm460, %v11123
    %11196 = vst.msk [vmem:[%s5 + $0x18] sm:$0xff] %vm460, %v11124
    %11197 = vst.msk [vmem:[%s5 + $0x20] sm:$0xff] %vm460, %v11125
    %11198 = vst.msk [vmem:[%s5 + $0x28] sm:$0xff] %vm460, %v11126
    %11199 = vst.msk [vmem:[%s5 + $0x30] sm:$0xff] %vm460, %v11127
    %11200 = vst.msk [vmem:[%s5 + $0x38] sm:$0xff] %vm460, %v11128
    %11201 = vst.msk [vmem:[%s5 + $0x40] sm:$0xff] %vm460, %v11129
    %11202 = vst.msk [vmem:[%s5 + $0x48] sm:$0xff] %vm460, %v11130
    %11203 = vst.msk [vmem:[%s5 + $0x50] sm:$0xff] %vm460, %v11131
    %11204 = vst.msk [vmem:[%s5 + $0x58] sm:$0xff] %vm460, %v11132
    %11205 = vst.msk [vmem:[%s5 + $0x60] sm:$0xff] %vm460, %v11133
    %11206 = vst.msk [vmem:[%s5 + $0x68] sm:$0xff] %vm460, %v11134
    %11207 = vst.msk [vmem:[%s5 + $0x70] sm:$0xff] %vm460, %v11135
    %11208 = vst.msk [vmem:[%s5 + $0x78] sm:$0xff] %vm460, %v11136
    %11209 = vst.msk [vmem:[%s5 + $0x80] sm:$0xff] %vm460, %v11137
    %11210 = vst.msk [vmem:[%s5 + $0x88] sm:$0xff] %vm460, %v11138
    %11211 = vst.msk [vmem:[%s5 + $0x90] sm:$0xff] %vm460, %v11139
    %11212 = vst.msk [vmem:[%s5 + $0x98] sm:$0xff] %vm460, %v11140
    %11213 = vst.msk [vmem:[%s5 + $0xa0] sm:$0xff] %vm460, %v11141
    %11214 = vst.msk [vmem:[%s5 + $0xa8] sm:$0xff] %vm460, %v11142
    %11215 = vst.msk [vmem:[%s5 + $0xb0] sm:$0xff] %vm460, %v11143
    %11216 = vst.msk [vmem:[%s5 + $0xb8] sm:$0xff] %vm460, %v11144
    %11217 = vst.msk [vmem:[%s5 + $0xc0] sm:$0xff] %vm460, %v11145
    %11218 = vst.msk [vmem:[%s5 + $0xc8] sm:$0xff] %vm460, %v11146
    %11219 = vst.msk [vmem:[%s5 + $0xd0] sm:$0xff] %vm460, %v11147
    %11220 = vst.msk [vmem:[%s5 + $0xd8] sm:$0xff] %vm460, %v11148
    %11221 = vst.msk [vmem:[%s5 + $0xe0] sm:$0xff] %vm460, %v11149
    %11222 = vst.msk [vmem:[%s5 + $0xe8] sm:$0xff] %vm460, %v11150
    %11223 = vst.msk [vmem:[%s5 + $0xf0] sm:$0xff] %vm460, %v11151
    %11224 = vst.msk [vmem:[%s5 + $0xf8] sm:$0xff] %vm460, %v11152
    %11225 = vst.msk [vmem:[%s5 + $0x100] sm:$0xff] %vm460, %v11153
    %11226 = vst.msk [vmem:[%s5 + $0x108] sm:$0xff] %vm460, %v11154
    %11227 = vst.msk [vmem:[%s5 + $0x110] sm:$0xff] %vm460, %v11155
    %11228 = vst.msk [vmem:[%s5 + $0x118] sm:$0xff] %vm460, %v11156
    %11229 = vst.msk [vmem:[%s5 + $0x120] sm:$0xff] %vm460, %v11157
    %11230 = vst.msk [vmem:[%s5 + $0x128] sm:$0xff] %vm460, %v11158
    %11231 = vst.msk [vmem:[%s5 + $0x130] sm:$0xff] %vm460, %v11159
    %11232 = vst.msk [vmem:[%s5 + $0x138] sm:$0xff] %vm460, %v11160
    %11233 = vst.msk [vmem:[%s5 + $0x140] sm:$0xff] %vm460, %v11161
    %11234 = vst.msk [vmem:[%s5 + $0x148] sm:$0xff] %vm460, %v11162
    %11235 = vst.msk [vmem:[%s5 + $0x150] sm:$0xff] %vm460, %v11163
    %11236 = vst.msk [vmem:[%s5 + $0x158] sm:$0xff] %vm460, %v11164
    %11237 = vst.msk [vmem:[%s5 + $0x160] sm:$0xff] %vm460, %v11165
    %11238 = vst.msk [vmem:[%s5 + $0x168] sm:$0xff] %vm460, %v11166
    %11239 = vst.msk [vmem:[%s5 + $0x170] sm:$0xff] %vm460, %v11167
    %11240 = vst.msk [vmem:[%s5 + $0x178] sm:$0xff] %vm460, %v11168
    %11241 = vst.msk [vmem:[%s5 + $0x180] sm:$0xff] %vm460, %v11169
    %11242 = vst.msk [vmem:[%s5 + $0x188] sm:$0xff] %vm460, %v11170
    %11243 = vst.msk [vmem:[%s5 + $0x190] sm:$0xff] %vm460, %v11171
    %11244 = vst.msk [vmem:[%s5 + $0x198] sm:$0xff] %vm460, %v11172
    %11245 = vst.msk [vmem:[%s5 + $0x1a0] sm:$0xff] %vm460, %v11173
    %11246 = vst.msk [vmem:[%s5 + $0x1a8] sm:$0xff] %vm460, %v11174
    %11247 = vst.msk [vmem:[%s5 + $0x1b0] sm:$0xff] %vm460, %v11175
    %11248 = vst.msk [vmem:[%s5 + $0x1b8] sm:$0xff] %vm460, %v11176
    %11249 = vst.msk [vmem:[%s5 + $0x1c0] sm:$0xff] %vm460, %v11177
    %11250 = vst.msk [vmem:[%s5 + $0x1c8] sm:$0xff] %vm460, %v11178
    %11251 = vst.msk [vmem:[%s5 + $0x1d0] sm:$0xff] %vm460, %v11179
    %11252 = vst.msk [vmem:[%s5 + $0x1d8] sm:$0xff] %vm460, %v11180
    %11253 = vst.msk [vmem:[%s5 + $0x1e0] sm:$0xff] %vm460, %v11181
    %11254 = vst.msk [vmem:[%s5 + $0x1e8] sm:$0xff] %vm460, %v11182
    %11255 = vst.msk [vmem:[%s5 + $0x1f0] sm:$0xff] %vm460, %v11183
    %11256 = vst.msk [vmem:[%s5 + $0x1f8] sm:$0xff] %vm460, %v11184
    %11257 = vst.msk [vmem:[%s5 + $0x200] sm:$0xff] %vm460, %v11185
    %11258 = vst.msk [vmem:[%s5 + $0x208] sm:$0xff] %vm460, %v11186
    %11259 = vst.msk [vmem:[%s5 + $0x210] sm:$0xff] %vm460, %v11187
    %11260 = vst.msk [vmem:[%s5 + $0x218] sm:$0xff] %vm460, %v11188
    %11261 = vst.msk [vmem:[%s5 + $0x220] sm:$0xff] %vm460, %v11189
    %11262 = vst.msk [vmem:[%s5 + $0x228] sm:$0xff] %vm460, %v11190
    %11263 = vst.msk [vmem:[%s5 + $0x230] sm:$0xff] %vm460, %v11191
    %11264 = vst.msk [vmem:[%s5 + $0x238] sm:$0xff] %vm460, %v11192
    %v11265 = vld [vmem:[#allocation3] sm:$0xff]
    %v11266 = vld [vmem:[#allocation3 + $0x8] sm:$0xff]
    %v11267 = vld [vmem:[#allocation3 + $0x10] sm:$0xff]
    %v11268 = vld [vmem:[#allocation3 + $0x18] sm:$0xff]
    %v11269 = vld [vmem:[#allocation3 + $0x20] sm:$0xff]
    %v11270 = vld [vmem:[#allocation3 + $0x28] sm:$0xff]
    %v11271 = vld [vmem:[#allocation3 + $0x30] sm:$0xff]
    %v11272 = vld [vmem:[#allocation3 + $0x38] sm:$0xff]
    %v11273 = vld [vmem:[#allocation3 + $0x40] sm:$0xff]
    %v11274 = vld [vmem:[#allocation3 + $0x48] sm:$0xff]
    %v11275 = vld [vmem:[#allocation3 + $0x50] sm:$0xff]
    %v11276 = vld [vmem:[#allocation3 + $0x58] sm:$0xff]
    %v11277 = vld [vmem:[#allocation3 + $0x60] sm:$0xff]
    %v11278 = vld [vmem:[#allocation3 + $0x68] sm:$0xff]
    %v11279 = vld [vmem:[#allocation3 + $0x70] sm:$0xff]
    %v11280 = vld [vmem:[#allocation3 + $0x78] sm:$0xff]
    %v11281 = vld [vmem:[#allocation3 + $0x80] sm:$0xff]
    %v11282 = vld [vmem:[#allocation3 + $0x88] sm:$0xff]
    %v11283 = vld [vmem:[#allocation3 + $0x90] sm:$0xff]
    %v11284 = vld [vmem:[#allocation3 + $0x98] sm:$0xff]
    %v11285 = vld [vmem:[#allocation3 + $0xa0] sm:$0xff]
    %v11286 = vld [vmem:[#allocation3 + $0xa8] sm:$0xff]
    %v11287 = vld [vmem:[#allocation3 + $0xb0] sm:$0xff]
    %v11288 = vld [vmem:[#allocation3 + $0xb8] sm:$0xff]
    %v11289 = vld [vmem:[#allocation3 + $0xc0] sm:$0xff]
    %v11290 = vld [vmem:[#allocation3 + $0xc8] sm:$0xff]
    %v11291 = vld [vmem:[#allocation3 + $0xd0] sm:$0xff]
    %v11292 = vld [vmem:[#allocation3 + $0xd8] sm:$0xff]
    %v11293 = vld [vmem:[#allocation3 + $0xe0] sm:$0xff]
    %v11294 = vld [vmem:[#allocation3 + $0xe8] sm:$0xff]
    %v11295 = vld [vmem:[#allocation3 + $0xf0] sm:$0xff]
    %v11296 = vld [vmem:[#allocation3 + $0xf8] sm:$0xff]
    %v11297 = vld [vmem:[#allocation3 + $0x100] sm:$0xff]
    %v11298 = vld [vmem:[#allocation3 + $0x108] sm:$0xff]
    %v11299 = vld [vmem:[#allocation3 + $0x110] sm:$0xff]
    %v11300 = vld [vmem:[#allocation3 + $0x118] sm:$0xff]
    %v11301 = vld [vmem:[#allocation3 + $0x120] sm:$0xff]
    %v11302 = vld [vmem:[#allocation3 + $0x128] sm:$0xff]
    %v11303 = vld [vmem:[#allocation3 + $0x130] sm:$0xff]
    %v11304 = vld [vmem:[#allocation3 + $0x138] sm:$0xff]
    %v11305 = vld [vmem:[#allocation3 + $0x140] sm:$0xff]
    %v11306 = vld [vmem:[#allocation3 + $0x148] sm:$0xff]
    %v11307 = vld [vmem:[#allocation3 + $0x150] sm:$0xff]
    %v11308 = vld [vmem:[#allocation3 + $0x158] sm:$0xff]
    %v11309 = vld [vmem:[#allocation3 + $0x160] sm:$0xff]
    %v11310 = vld [vmem:[#allocation3 + $0x168] sm:$0xff]
    %v11311 = vld [vmem:[#allocation3 + $0x170] sm:$0xff]
    %v11312 = vld [vmem:[#allocation3 + $0x178] sm:$0xff]
    %v11313 = vld [vmem:[#allocation3 + $0x180] sm:$0xff]
    %v11314 = vld [vmem:[#allocation3 + $0x188] sm:$0xff]
    %v11315 = vld [vmem:[#allocation3 + $0x190] sm:$0xff]
    %v11316 = vld [vmem:[#allocation3 + $0x198] sm:$0xff]
    %v11317 = vld [vmem:[#allocation3 + $0x1a0] sm:$0xff]
    %v11318 = vld [vmem:[#allocation3 + $0x1a8] sm:$0xff]
    %v11319 = vld [vmem:[#allocation3 + $0x1b0] sm:$0xff]
    %v11320 = vld [vmem:[#allocation3 + $0x1b8] sm:$0xff]
    %v11321 = vld [vmem:[#allocation3 + $0x1c0] sm:$0xff]
    %v11322 = vld [vmem:[#allocation3 + $0x1c8] sm:$0xff]
    %v11323 = vld [vmem:[#allocation3 + $0x1d0] sm:$0xff]
    %v11324 = vld [vmem:[#allocation3 + $0x1d8] sm:$0xff]
    %v11325 = vld [vmem:[#allocation3 + $0x1e0] sm:$0xff]
    %v11326 = vld [vmem:[#allocation3 + $0x1e8] sm:$0xff]
    %v11327 = vld [vmem:[#allocation3 + $0x1f0] sm:$0xff]
    %v11328 = vld [vmem:[#allocation3 + $0x1f8] sm:$0xff]
    %v11329 = vld [vmem:[#allocation3 + $0x200] sm:$0xff]
    %v11330 = vld [vmem:[#allocation3 + $0x208] sm:$0xff]
    %v11331 = vld [vmem:[#allocation3 + $0x210] sm:$0xff]
    %v11332 = vld [vmem:[#allocation3 + $0x218] sm:$0xff]
    %v11333 = vld [vmem:[#allocation3 + $0x220] sm:$0xff]
    %v11334 = vld [vmem:[#allocation3 + $0x228] sm:$0xff]
    %v11335 = vld [vmem:[#allocation3 + $0x230] sm:$0xff]
    %v11336 = vld [vmem:[#allocation3 + $0x238] sm:$0xff]
    %11337 = vst.msk [vmem:[%s6] sm:$0xff] %vm460, %v11265
    %11338 = vst.msk [vmem:[%s6 + $0x8] sm:$0xff] %vm460, %v11266
    %11339 = vst.msk [vmem:[%s6 + $0x10] sm:$0xff] %vm460, %v11267
    %11340 = vst.msk [vmem:[%s6 + $0x18] sm:$0xff] %vm460, %v11268
    %11341 = vst.msk [vmem:[%s6 + $0x20] sm:$0xff] %vm460, %v11269
    %11342 = vst.msk [vmem:[%s6 + $0x28] sm:$0xff] %vm460, %v11270
    %11343 = vst.msk [vmem:[%s6 + $0x30] sm:$0xff] %vm460, %v11271
    %11344 = vst.msk [vmem:[%s6 + $0x38] sm:$0xff] %vm460, %v11272
    %11345 = vst.msk [vmem:[%s6 + $0x40] sm:$0xff] %vm460, %v11273
    %11346 = vst.msk [vmem:[%s6 + $0x48] sm:$0xff] %vm460, %v11274
    %11347 = vst.msk [vmem:[%s6 + $0x50] sm:$0xff] %vm460, %v11275
    %11348 = vst.msk [vmem:[%s6 + $0x58] sm:$0xff] %vm460, %v11276
    %11349 = vst.msk [vmem:[%s6 + $0x60] sm:$0xff] %vm460, %v11277
    %11350 = vst.msk [vmem:[%s6 + $0x68] sm:$0xff] %vm460, %v11278
    %11351 = vst.msk [vmem:[%s6 + $0x70] sm:$0xff] %vm460, %v11279
    %11352 = vst.msk [vmem:[%s6 + $0x78] sm:$0xff] %vm460, %v11280
    %11353 = vst.msk [vmem:[%s6 + $0x80] sm:$0xff] %vm460, %v11281
    %11354 = vst.msk [vmem:[%s6 + $0x88] sm:$0xff] %vm460, %v11282
    %11355 = vst.msk [vmem:[%s6 + $0x90] sm:$0xff] %vm460, %v11283
    %11356 = vst.msk [vmem:[%s6 + $0x98] sm:$0xff] %vm460, %v11284
    %11357 = vst.msk [vmem:[%s6 + $0xa0] sm:$0xff] %vm460, %v11285
    %11358 = vst.msk [vmem:[%s6 + $0xa8] sm:$0xff] %vm460, %v11286
    %11359 = vst.msk [vmem:[%s6 + $0xb0] sm:$0xff] %vm460, %v11287
    %11360 = vst.msk [vmem:[%s6 + $0xb8] sm:$0xff] %vm460, %v11288
    %11361 = vst.msk [vmem:[%s6 + $0xc0] sm:$0xff] %vm460, %v11289
    %11362 = vst.msk [vmem:[%s6 + $0xc8] sm:$0xff] %vm460, %v11290
    %11363 = vst.msk [vmem:[%s6 + $0xd0] sm:$0xff] %vm460, %v11291
    %11364 = vst.msk [vmem:[%s6 + $0xd8] sm:$0xff] %vm460, %v11292
    %11365 = vst.msk [vmem:[%s6 + $0xe0] sm:$0xff] %vm460, %v11293
    %11366 = vst.msk [vmem:[%s6 + $0xe8] sm:$0xff] %vm460, %v11294
    %11367 = vst.msk [vmem:[%s6 + $0xf0] sm:$0xff] %vm460, %v11295
    %11368 = vst.msk [vmem:[%s6 + $0xf8] sm:$0xff] %vm460, %v11296
    %11369 = vst.msk [vmem:[%s6 + $0x100] sm:$0xff] %vm460, %v11297
    %11370 = vst.msk [vmem:[%s6 + $0x108] sm:$0xff] %vm460, %v11298
    %11371 = vst.msk [vmem:[%s6 + $0x110] sm:$0xff] %vm460, %v11299
    %11372 = vst.msk [vmem:[%s6 + $0x118] sm:$0xff] %vm460, %v11300
    %11373 = vst.msk [vmem:[%s6 + $0x120] sm:$0xff] %vm460, %v11301
    %11374 = vst.msk [vmem:[%s6 + $0x128] sm:$0xff] %vm460, %v11302
    %11375 = vst.msk [vmem:[%s6 + $0x130] sm:$0xff] %vm460, %v11303
    %11376 = vst.msk [vmem:[%s6 + $0x138] sm:$0xff] %vm460, %v11304
    %11377 = vst.msk [vmem:[%s6 + $0x140] sm:$0xff] %vm460, %v11305
    %11378 = vst.msk [vmem:[%s6 + $0x148] sm:$0xff] %vm460, %v11306
    %11379 = vst.msk [vmem:[%s6 + $0x150] sm:$0xff] %vm460, %v11307
    %11380 = vst.msk [vmem:[%s6 + $0x158] sm:$0xff] %vm460, %v11308
    %11381 = vst.msk [vmem:[%s6 + $0x160] sm:$0xff] %vm460, %v11309
    %11382 = vst.msk [vmem:[%s6 + $0x168] sm:$0xff] %vm460, %v11310
    %11383 = vst.msk [vmem:[%s6 + $0x170] sm:$0xff] %vm460, %v11311
    %11384 = vst.msk [vmem:[%s6 + $0x178] sm:$0xff] %vm460, %v11312
    %11385 = vst.msk [vmem:[%s6 + $0x180] sm:$0xff] %vm460, %v11313
    %11386 = vst.msk [vmem:[%s6 + $0x188] sm:$0xff] %vm460, %v11314
    %11387 = vst.msk [vmem:[%s6 + $0x190] sm:$0xff] %vm460, %v11315
    %11388 = vst.msk [vmem:[%s6 + $0x198] sm:$0xff] %vm460, %v11316
    %11389 = vst.msk [vmem:[%s6 + $0x1a0] sm:$0xff] %vm460, %v11317
    %11390 = vst.msk [vmem:[%s6 + $0x1a8] sm:$0xff] %vm460, %v11318
    %11391 = vst.msk [vmem:[%s6 + $0x1b0] sm:$0xff] %vm460, %v11319
    %11392 = vst.msk [vmem:[%s6 + $0x1b8] sm:$0xff] %vm460, %v11320
    %11393 = vst.msk [vmem:[%s6 + $0x1c0] sm:$0xff] %vm460, %v11321
    %11394 = vst.msk [vmem:[%s6 + $0x1c8] sm:$0xff] %vm460, %v11322
    %11395 = vst.msk [vmem:[%s6 + $0x1d0] sm:$0xff] %vm460, %v11323
    %11396 = vst.msk [vmem:[%s6 + $0x1d8] sm:$0xff] %vm460, %v11324
    %11397 = vst.msk [vmem:[%s6 + $0x1e0] sm:$0xff] %vm460, %v11325
    %11398 = vst.msk [vmem:[%s6 + $0x1e8] sm:$0xff] %vm460, %v11326
    %11399 = vst.msk [vmem:[%s6 + $0x1f0] sm:$0xff] %vm460, %v11327
    %11400 = vst.msk [vmem:[%s6 + $0x1f8] sm:$0xff] %vm460, %v11328
    %11401 = vst.msk [vmem:[%s6 + $0x200] sm:$0xff] %vm460, %v11329
    %11402 = vst.msk [vmem:[%s6 + $0x208] sm:$0xff] %vm460, %v11330
    %11403 = vst.msk [vmem:[%s6 + $0x210] sm:$0xff] %vm460, %v11331
    %11404 = vst.msk [vmem:[%s6 + $0x218] sm:$0xff] %vm460, %v11332
    %11405 = vst.msk [vmem:[%s6 + $0x220] sm:$0xff] %vm460, %v11333
    %11406 = vst.msk [vmem:[%s6 + $0x228] sm:$0xff] %vm460, %v11334
    %11407 = vst.msk [vmem:[%s6 + $0x230] sm:$0xff] %vm460, %v11335
    %11408 = vst.msk [vmem:[%s6 + $0x238] sm:$0xff] %vm460, %v11336
  $region29: #{spectral_conv2d.1} parent=0 // pred_fallthru
    _
  // Predicated region
  $region30: #{spectral_conv2d.1} parent=0 // pred_check
    _
  $region31: #{spectral_conv2d.1} parent=0 // pred_check_branch
    %11410 = sbr.rel (0) target = $region33
  $region32: #{spectral_conv2d.1} parent=0 // pred_region
    _
  $region33: #{spectral_conv2d.1} parent=0 // pred_fallthru
    _
  // Predicated region
  $region34: #{spectral_conv2d.1} parent=0 // pred_check
    _
  $region35: #{spectral_conv2d.1} parent=0 // pred_check_branch
    %11412 = sbr.rel (0) target = $region37
  $region36: #{spectral_conv2d.1} parent=0 // pred_region
    _
  $region37: #{spectral_conv2d.1} parent=0 // pred_fallthru
    _
  // Predicated region
  $region38: #{spectral_conv2d.1} parent=0 // pred_check
    _
  $region39: #{spectral_conv2d.1} parent=0 // pred_check_branch
    %11414 = sbr.rel (0) target = $region41
  $region40: #{spectral_conv2d.1} parent=0 // pred_region
    _
  $region41: #{spectral_conv2d.1} parent=0 // pred_fallthru
    _
  // Predicated region
  $region42: #{spectral_conv2d.1} parent=0 // pred_check
    _
  $region43: #{spectral_conv2d.1} parent=0 // pred_check_branch
    %11416 = sbr.rel (0) target = $region45
  $region44: #{spectral_conv2d.1} parent=0 // pred_region
    _
  $region45: #{spectral_conv2d.1} parent=0 // pred_fallthru
    _

</llo_original>
